<compile_context>
chip_gen: v7x
topology: tpu7x:2x2x1
jax: 0.10.0
libtpu: 0.0.40
codegen_flags: <defaults>
</compile_context>

<pallas_src>
import functools

import jax
import jax.numpy as jnp
from jax import lax
from jax.experimental import pallas as pl
from jax.experimental.pallas import tpu as pltpu


# ----------------------------------------------------------------------------
# In-kernel 3x3 "same" conv (no bias) + ReLU, reading a zero-padded f32 value.
# ----------------------------------------------------------------------------
def _conv3x3_relu_write(xpad, w_ref, write_fn, H, W, cin, cout):
    """xpad:     (H+2, W+2, cin) f32 value whose 1-pixel border is zero.
       w_ref:    (9*cin, cout) f32 ref; row order = (dy*3 + dx)*cin + c.
       write_fn: callback(row_or_None, value) storing the f32 result.
                 row_or_None is None for a full (H, W, cout) write, else a row
                 index with a (W, cout) value."""
    w = w_ref[...]

    if cin == 1:
        # K=9 is too small to feed the MXU; 9 broadcast FMAs on the VPU instead.
        acc = jnp.zeros((H * W, cout), jnp.float32)
        for dy in range(3):
            for dx in range(3):
                k = dy * 3 + dx
                tap = xpad[dy:dy + H, dx:dx + W, :].reshape(H * W, 1)
                acc = acc + tap * w[k:k + 1, :]
        write_fn(None, jnp.maximum(acc, 0.0).reshape(H, W, cout))
        return

    wb = w.astype(jnp.bfloat16)
    if W % 8 == 0:
        # Full im2col: one (H*W, 9*cin) x (9*cin, cout) bf16 MXU matmul.
        cols = [xpad[dy:dy + H, dx:dx + W, :].reshape(H * W, cin)
                for dy in range(3) for dx in range(3)]
        patch = jnp.concatenate(cols, axis=-1).astype(jnp.bfloat16)
        acc = jnp.dot(patch, wb, preferred_element_type=jnp.float32)
        write_fn(None, jnp.maximum(acc, 0.0).reshape(H, W, cout))
    else:
        # Tiny spatial levels (W in {2, 4}): one K=9*cin matmul per output row.
        for h in range(H):
            cols = []
            for dy in range(3):
                row = xpad[h + dy]                      # (W+2, cin)
                for dx in range(3):
                    cols.append(row[dx:dx + W, :])
            patch = jnp.concatenate(cols, axis=-1).astype(jnp.bfloat16)
            acc = jnp.dot(patch, wb, preferred_element_type=jnp.float32)
            write_fn(h, jnp.maximum(acc, 0.0))


def _double_conv_body(x_val, w1_ref, w2_ref, o_ref, pad1_ref, pad2_ref,
                      H, W, cin, cmid, cout):
    """conv3x3+ReLU twice, intermediates kept in VMEM scratch."""
    # SAME padding of the level input, done in VMEM (no HBM pad tensors).
    pad1_ref[...] = jnp.zeros_like(pad1_ref)
    pad1_ref[1:H + 1, 1:W + 1, :] = x_val
    pad2_ref[...] = jnp.zeros_like(pad2_ref)

    def write_mid(h, v):                      # conv1 output -> padded scratch 2
        if h is None:
            pad2_ref[1:H + 1, 1:W + 1, :] = v
        else:
            pad2_ref[1 + h, 1:W + 1, :] = v

    _conv3x3_relu_write(pad1_ref[...], w1_ref, write_mid, H, W, cin, cmid)

    def write_out(h, v):                      # conv2 output -> level output
        if h is None:
            o_ref[0] = v.astype(o_ref.dtype)
        else:
            o_ref[0, h] = v.astype(o_ref.dtype)

    _conv3x3_relu_write(pad2_ref[...], w2_ref, write_out, H, W, cmid, cout)


# ----------------------------------------------------------------------------
# Level kernels: "inc" (no pool) and "down" (2x2 max-pool fused in front).
# ----------------------------------------------------------------------------
def _inc_kernel(x_ref, w1_ref, w2_ref, o_ref, pad1_ref, pad2_ref,
                *, H, W, cin, cmid, cout):
    # x_ref: (1, H, W, cin)
    _double_conv_body(x_ref[0], w1_ref, w2_ref, o_ref, pad1_ref, pad2_ref,
                      H, W, cin, cmid, cout)


def _down_kernel(xw_ref, w1_ref, w2_ref, o_ref, pad1_ref, pad2_ref,
                 *, H, W, cin, cmid, cout):
    # xw_ref: (1, 2, 2, H, W, cin) -- 2x2 pool window exposed on leading dims.
    v = xw_ref[0]
    pooled = jnp.maximum(jnp.maximum(v[0, 0], v[0, 1]),
                         jnp.maximum(v[1, 0], v[1, 1]))          # (H, W, cin)
    _double_conv_body(pooled, w1_ref, w2_ref, o_ref, pad1_ref, pad2_ref,
                      H, W, cin, cmid, cout)


# ----------------------------------------------------------------------------
# Wrappers
# ----------------------------------------------------------------------------
def _im2col_w(w):
    """(3,3,cin,cout) HWIO -> (9*cin, cout), row index = (3*dy+dx)*cin + c."""
    kh, kw, cin, cout = w.shape
    return w.reshape(kh * kw * cin, cout)


def _expose_pool_window(x):
    """(N,H,W,C) -> (N,2,2,H//2,W//2,C): 2x2 window on leading dims (XLA glue)."""
    N, H, W, C = x.shape
    Ho, Wo = H // 2, W // 2
    return x.reshape(N, Ho, 2, Wo, 2, C).transpose(0, 2, 4, 1, 3, 5)


def _double_conv_level(x, w1, w2, *, pool_first):
    """One fused encoder level: [maxpool2] + conv3x3+ReLU + conv3x3+ReLU."""
    if pool_first:
        N, _, _, H, W, cin = x.shape
    else:
        N, H, W, cin = x.shape
    cmid, cout = w1.shape[-1], w2.shape[-1]

    kernel = functools.partial(_down_kernel if pool_first else _inc_kernel,
                               H=H, W=W, cin=cin, cmid=cmid, cout=cout)
    if pool_first:
        x_spec = pl.BlockSpec((1, 2, 2, H, W, cin),
                              lambda n: (n, 0, 0, 0, 0, 0))
    else:
        x_spec = pl.BlockSpec((1, H, W, cin), lambda n: (n, 0, 0, 0))

    return pl.pallas_call(
        kernel,
        out_shape=jax.ShapeDtypeStruct((N, H, W, cout), x.dtype),
        grid=(N,),
        in_specs=[x_spec,
                  pl.BlockSpec((9 * cin, cmid), lambda n: (0, 0)),
                  pl.BlockSpec((9 * cmid, cout), lambda n: (0, 0))],
        out_specs=pl.BlockSpec((1, H, W, cout), lambda n: (n, 0, 0, 0)),
        scratch_shapes=[pltpu.VMEM((H + 2, W + 2, cin), jnp.float32),
                        pltpu.VMEM((H + 2, W + 2, cmid), jnp.float32)],
        compiler_params=pltpu.CompilerParams(
            dimension_semantics=("parallel",)),
    )(x, w1, w2)


def unet_encoder(x_nchw, params):
    """Mirrors UNetEncoder.forward (use_bn=False, conv bias=False)."""
    x = jnp.transpose(x_nchw, (0, 2, 3, 1))                  # NCHW -> NHWC
    w = {k: (_im2col_w(a), _im2col_w(b)) for k, (a, b) in params.items()}
    x1 = _double_conv_level(x, *w["inc"], pool_first=False)
    x2 = _double_conv_level(_expose_pool_window(x1), *w["down1"], pool_first=True)
    x3 = _double_conv_level(_expose_pool_window(x2), *w["down2"], pool_first=True)
    x4 = _double_conv_level(_expose_pool_window(x3), *w["down3"], pool_first=True)
    to_nchw = lambda t: jnp.transpose(t, (0, 3, 1, 2))        # back to PyTorch layout
    return tuple(to_nchw(t) for t in (x1, x2, x3, x4))


def init_params(key, n_channels=1, base_ch=16):
    # DoubleConv(in, out): conv1 in->out, conv2 out->out (mid_ch defaults to out).
    specs = [("inc",   n_channels,  base_ch),
             ("down1", base_ch,     base_ch * 2),
             ("down2", base_ch * 2, base_ch * 4),
             ("down3", base_ch * 4, base_ch * 8)]
    params = {}
    for i, (name, cin, cout) in enumerate(specs):
        k1, k2 = jax.random.split(jax.random.fold_in(key, i))
        w1 = jax.random.normal(k1, (3, 3, cin, cout), jnp.float32) * (2.0 / (9 * cin)) ** 0.5
        w2 = jax.random.normal(k2, (3, 3, cout, cout), jnp.float32) * (2.0 / (9 * cout)) ** 0.5
        params[name] = (w1, w2)
    return params


# ----------------------------------------------------------------------------
# Pure-JAX reference (for correctness check)
# ----------------------------------------------------------------------------
def _conv_ref(x, w):
    return jax.nn.relu(lax.conv_general_dilated(
        x, w, window_strides=(1, 1), padding="SAME",
        dimension_numbers=("NHWC", "HWIO", "NHWC"),
        precision=lax.Precision.HIGHEST))


def _pool_ref(x):
    return lax.reduce_window(x, -jnp.inf, lax.max,
                             (1, 2, 2, 1), (1, 2, 2, 1), "VALID")


def unet_encoder_ref(x_nchw, params):
    x = jnp.transpose(x_nchw, (0, 2, 3, 1))
    dc = lambda t, w1, w2: _conv_ref(_conv_ref(t, w1), w2)
    x1 = dc(x, *params["inc"])
    x2 = dc(_pool_ref(x1), *params["down1"])
    x3 = dc(_pool_ref(x2), *params["down2"])
    x4 = dc(_pool_ref(x3), *params["down3"])
    to_nchw = lambda t: jnp.transpose(t, (0, 3, 1, 2))
    return tuple(to_nchw(t) for t in (x1, x2, x3, x4))


if __name__ == "__main__":
    key = jax.random.PRNGKey(0)
    kx, kp = jax.random.split(key)

    N, C, H, W = 2, 1, 16, 16          # n_channels=1, small spatial
    base_ch = 16
    x = jax.random.normal(kx, (N, C, H, W), jnp.float32)
    params = init_params(kp, n_channels=C, base_ch=base_ch)

    outs = jax.block_until_ready(jax.jit(unet_encoder)(x, params))

    refs = unet_encoder_ref(x, params)
    expected_shapes = [(N, base_ch, 16, 16), (N, base_ch * 2, 8, 8),
                       (N, base_ch * 4, 4, 4), (N, base_ch * 8, 2, 2)]
    for o, r, s in zip(outs, refs, expected_shapes):
        assert o.shape == s, (o.shape, s)
        assert jnp.allclose(o, r, rtol=5e-2, atol=5e-2), \
            f"max abs diff {jnp.max(jnp.abs(o - r))}"

    print("KERNEL_OK")
</pallas_src>

<mosaic_0001>
module attributes {stable_mosaic.version = 11 : i64} {
  func.func @_inc_kernel(%arg0: i32, %arg1: memref<1x16x16x1xf32, #tpu.memory_space<vmem>>, %arg2: memref<9x16xf32, #tpu.memory_space<vmem>>, %arg3: memref<144x16xf32, #tpu.memory_space<vmem>>, %arg4: memref<1x16x16x16xf32, #tpu.memory_space<vmem>>, %arg5: memref<18x18x1xf32, #tpu.memory_space<vmem>>, %arg6: memref<18x18x16xf32, #tpu.memory_space<vmem>>) attributes {dimension_semantics = [#tpu.dimension_semantics<parallel>], iteration_bounds = array<i64: 2>, scalar_prefetch = 0 : i64, scratch_operands = 2 : i64, tpu.core_type = #tpu.core_type<tc>, window_params = [{transform_indices = @transform_0, window_bounds = array<i64: 1, 16, 16, 1>}, {pipeline_mode = #tpu.pipeline_mode<synchronous>, transform_indices = @transform_1, window_bounds = array<i64: 9, 16>}, {pipeline_mode = #tpu.pipeline_mode<synchronous>, transform_indices = @transform_2, window_bounds = array<i64: 144, 16>}, {transform_indices = @transform_3, window_bounds = array<i64: 1, 16, 16, 16>}]} {
    %c0 = arith.constant 0 : index
    %c0_0 = arith.constant 0 : index
    %c0_1 = arith.constant 0 : index
    %c0_2 = arith.constant 0 : index
    %0 = vector.load %arg1[%c0, %c0_0, %c0_1, %c0_2] : memref<1x16x16x1xf32, #tpu.memory_space<vmem>>, vector<1x16x16x1xf32>
    %1 = vector.shape_cast %0 : vector<1x16x16x1xf32> to vector<16x16x1xf32>
    %cst = arith.constant 0.000000e+00 : f32
    %2 = vector.broadcast %cst : f32 to vector<18x18x1xf32>
    %c0_3 = arith.constant 0 : index
    %c0_4 = arith.constant 0 : index
    %c0_5 = arith.constant 0 : index
    %3 = vector.load %arg5[%c0_3, %c0_4, %c0_5] : memref<18x18x1xf32, #tpu.memory_space<vmem>>, vector<18x18x1xf32>
    tpu.vector_store %arg5[%c0_3, %c0_4, %c0_5], %2 {strides = array<i32>} : memref<18x18x1xf32, #tpu.memory_space<vmem>>, vector<18x18x1xf32>,
    %c1 = arith.constant 1 : index
    %c1_6 = arith.constant 1 : index
    %c0_7 = arith.constant 0 : index
    %4 = vector.load %arg5[%c1, %c1_6, %c0_7] : memref<18x18x1xf32, #tpu.memory_space<vmem>>, vector<16x16x1xf32>
    tpu.vector_store %arg5[%c1, %c1_6, %c0_7], %1 {strides = array<i32>} : memref<18x18x1xf32, #tpu.memory_space<vmem>>, vector<16x16x1xf32>,
    %cst_8 = arith.constant 0.000000e+00 : f32
    %5 = vector.broadcast %cst_8 : f32 to vector<18x18x16xf32>
    %c0_9 = arith.constant 0 : index
    %c0_10 = arith.constant 0 : index
    %c0_11 = arith.constant 0 : index
    %6 = vector.load %arg6[%c0_9, %c0_10, %c0_11] : memref<18x18x16xf32, #tpu.memory_space<vmem>>, vector<18x18x16xf32>
    tpu.vector_store %arg6[%c0_9, %c0_10, %c0_11], %5 {strides = array<i32>} : memref<18x18x16xf32, #tpu.memory_space<vmem>>, vector<18x18x16xf32>,
    %c0_12 = arith.constant 0 : index
    %c0_13 = arith.constant 0 : index
    %c0_14 = arith.constant 0 : index
    %7 = vector.load %arg5[%c0_12, %c0_13, %c0_14] : memref<18x18x1xf32, #tpu.memory_space<vmem>>, vector<18x18x1xf32>
    %c0_15 = arith.constant 0 : index
    %c0_16 = arith.constant 0 : index
    %8 = vector.load %arg2[%c0_15, %c0_16] : memref<9x16xf32, #tpu.memory_space<vmem>>, vector<9x16xf32>
    %cst_17 = arith.constant 0.000000e+00 : f32
    %9 = vector.broadcast %cst_17 : f32 to vector<256x16xf32>
    %10 = vector.extract_strided_slice %7 {offsets = [0, 0, 0], sizes = [16, 16, 1], strides = [1, 1, 1]} : vector<18x18x1xf32> to vector<16x16x1xf32>
    %11 = vector.shape_cast %10 : vector<16x16x1xf32> to vector<256x1xf32>
    %12 = vector.extract_strided_slice %8 {offsets = [0, 0], sizes = [1, 16], strides = [1, 1]} : vector<9x16xf32> to vector<1x16xf32>
    %13 = vector.broadcast %11 : vector<256x1xf32> to vector<256x16xf32>
    %14 = vector.broadcast %12 : vector<1x16xf32> to vector<256x16xf32>
    %15 = arith.mulf %13, %14 : vector<256x16xf32>
    %16 = arith.addf %9, %15 : vector<256x16xf32>
    %17 = vector.extract_strided_slice %7 {offsets = [0, 1, 0], sizes = [16, 16, 1], strides = [1, 1, 1]} : vector<18x18x1xf32> to vector<16x16x1xf32>
    %18 = vector.shape_cast %17 : vector<16x16x1xf32> to vector<256x1xf32>
    %19 = vector.extract_strided_slice %8 {offsets = [1, 0], sizes = [1, 16], strides = [1, 1]} : vector<9x16xf32> to vector<1x16xf32>
    %20 = vector.broadcast %18 : vector<256x1xf32> to vector<256x16xf32>
    %21 = vector.broadcast %19 : vector<1x16xf32> to vector<256x16xf32>
    %22 = arith.mulf %20, %21 : vector<256x16xf32>
    %23 = arith.addf %16, %22 : vector<256x16xf32>
    %24 = vector.extract_strided_slice %7 {offsets = [0, 2, 0], sizes = [16, 16, 1], strides = [1, 1, 1]} : vector<18x18x1xf32> to vector<16x16x1xf32>
    %25 = vector.shape_cast %24 : vector<16x16x1xf32> to vector<256x1xf32>
    %26 = vector.extract_strided_slice %8 {offsets = [2, 0], sizes = [1, 16], strides = [1, 1]} : vector<9x16xf32> to vector<1x16xf32>
    %27 = vector.broadcast %25 : vector<256x1xf32> to vector<256x16xf32>
    %28 = vector.broadcast %26 : vector<1x16xf32> to vector<256x16xf32>
    %29 = arith.mulf %27, %28 : vector<256x16xf32>
    %30 = arith.addf %23, %29 : vector<256x16xf32>
    %31 = vector.extract_strided_slice %7 {offsets = [1, 0, 0], sizes = [16, 16, 1], strides = [1, 1, 1]} : vector<18x18x1xf32> to vector<16x16x1xf32>
    %32 = vector.shape_cast %31 : vector<16x16x1xf32> to vector<256x1xf32>
    %33 = vector.extract_strided_slice %8 {offsets = [3, 0], sizes = [1, 16], strides = [1, 1]} : vector<9x16xf32> to vector<1x16xf32>
    %34 = vector.broadcast %32 : vector<256x1xf32> to vector<256x16xf32>
    %35 = vector.broadcast %33 : vector<1x16xf32> to vector<256x16xf32>
    %36 = arith.mulf %34, %35 : vector<256x16xf32>
    %37 = arith.addf %30, %36 : vector<256x16xf32>
    %38 = vector.extract_strided_slice %7 {offsets = [1, 1, 0], sizes = [16, 16, 1], strides = [1, 1, 1]} : vector<18x18x1xf32> to vector<16x16x1xf32>
    %39 = vector.shape_cast %38 : vector<16x16x1xf32> to vector<256x1xf32>
    %40 = vector.extract_strided_slice %8 {offsets = [4, 0], sizes = [1, 16], strides = [1, 1]} : vector<9x16xf32> to vector<1x16xf32>
    %41 = vector.broadcast %39 : vector<256x1xf32> to vector<256x16xf32>
    %42 = vector.broadcast %40 : vector<1x16xf32> to vector<256x16xf32>
    %43 = arith.mulf %41, %42 : vector<256x16xf32>
    %44 = arith.addf %37, %43 : vector<256x16xf32>
    %45 = vector.extract_strided_slice %7 {offsets = [1, 2, 0], sizes = [16, 16, 1], strides = [1, 1, 1]} : vector<18x18x1xf32> to vector<16x16x1xf32>
    %46 = vector.shape_cast %45 : vector<16x16x1xf32> to vector<256x1xf32>
    %47 = vector.extract_strided_slice %8 {offsets = [5, 0], sizes = [1, 16], strides = [1, 1]} : vector<9x16xf32> to vector<1x16xf32>
    %48 = vector.broadcast %46 : vector<256x1xf32> to vector<256x16xf32>
    %49 = vector.broadcast %47 : vector<1x16xf32> to vector<256x16xf32>
    %50 = arith.mulf %48, %49 : vector<256x16xf32>
    %51 = arith.addf %44, %50 : vector<256x16xf32>
    %52 = vector.extract_strided_slice %7 {offsets = [2, 0, 0], sizes = [16, 16, 1], strides = [1, 1, 1]} : vector<18x18x1xf32> to vector<16x16x1xf32>
    %53 = vector.shape_cast %52 : vector<16x16x1xf32> to vector<256x1xf32>
    %54 = vector.extract_strided_slice %8 {offsets = [6, 0], sizes = [1, 16], strides = [1, 1]} : vector<9x16xf32> to vector<1x16xf32>
    %55 = vector.broadcast %53 : vector<256x1xf32> to vector<256x16xf32>
    %56 = vector.broadcast %54 : vector<1x16xf32> to vector<256x16xf32>
    %57 = arith.mulf %55, %56 : vector<256x16xf32>
    %58 = arith.addf %51, %57 : vector<256x16xf32>
    %59 = vector.extract_strided_slice %7 {offsets = [2, 1, 0], sizes = [16, 16, 1], strides = [1, 1, 1]} : vector<18x18x1xf32> to vector<16x16x1xf32>
    %60 = vector.shape_cast %59 : vector<16x16x1xf32> to vector<256x1xf32>
    %61 = vector.extract_strided_slice %8 {offsets = [7, 0], sizes = [1, 16], strides = [1, 1]} : vector<9x16xf32> to vector<1x16xf32>
    %62 = vector.broadcast %60 : vector<256x1xf32> to vector<256x16xf32>
    %63 = vector.broadcast %61 : vector<1x16xf32> to vector<256x16xf32>
    %64 = arith.mulf %62, %63 : vector<256x16xf32>
    %65 = arith.addf %58, %64 : vector<256x16xf32>
    %66 = vector.extract_strided_slice %7 {offsets = [2, 2, 0], sizes = [16, 16, 1], strides = [1, 1, 1]} : vector<18x18x1xf32> to vector<16x16x1xf32>
    %67 = vector.shape_cast %66 : vector<16x16x1xf32> to vector<256x1xf32>
    %68 = vector.extract_strided_slice %8 {offsets = [8, 0], sizes = [1, 16], strides = [1, 1]} : vector<9x16xf32> to vector<1x16xf32>
    %69 = vector.broadcast %67 : vector<256x1xf32> to vector<256x16xf32>
    %70 = vector.broadcast %68 : vector<1x16xf32> to vector<256x16xf32>
    %71 = arith.mulf %69, %70 : vector<256x16xf32>
    %72 = arith.addf %65, %71 : vector<256x16xf32>
    %cst_18 = arith.constant 0.000000e+00 : f32
    %73 = vector.broadcast %cst_18 : f32 to vector<256x16xf32>
    %74 = arith.maximumf %72, %73 : vector<256x16xf32>
    %75 = vector.shape_cast %74 : vector<256x16xf32> to vector<16x16x16xf32>
    %c1_19 = arith.constant 1 : index
    %c1_20 = arith.constant 1 : index
    %c0_21 = arith.constant 0 : index
    %76 = vector.load %arg6[%c1_19, %c1_20, %c0_21] : memref<18x18x16xf32, #tpu.memory_space<vmem>>, vector<16x16x16xf32>
    tpu.vector_store %arg6[%c1_19, %c1_20, %c0_21], %75 {strides = array<i32>} : memref<18x18x16xf32, #tpu.memory_space<vmem>>, vector<16x16x16xf32>,
    %c0_22 = arith.constant 0 : index
    %c0_23 = arith.constant 0 : index
    %c0_24 = arith.constant 0 : index
    %77 = vector.load %arg6[%c0_22, %c0_23, %c0_24] : memref<18x18x16xf32, #tpu.memory_space<vmem>>, vector<18x18x16xf32>
    %c0_25 = arith.constant 0 : index
    %c0_26 = arith.constant 0 : index
    %78 = vector.load %arg3[%c0_25, %c0_26] : memref<144x16xf32, #tpu.memory_space<vmem>>, vector<144x16xf32>
    %79 = arith.truncf %78 : vector<144x16xf32> to vector<144x16xbf16>
    %80 = vector.extract_strided_slice %77 {offsets = [0, 0, 0], sizes = [16, 16, 16], strides = [1, 1, 1]} : vector<18x18x16xf32> to vector<16x16x16xf32>
    %81 = vector.shape_cast %80 : vector<16x16x16xf32> to vector<256x16xf32>
    %82 = vector.extract_strided_slice %77 {offsets = [0, 1, 0], sizes = [16, 16, 16], strides = [1, 1, 1]} : vector<18x18x16xf32> to vector<16x16x16xf32>
    %83 = vector.shape_cast %82 : vector<16x16x16xf32> to vector<256x16xf32>
    %84 = vector.extract_strided_slice %77 {offsets = [0, 2, 0], sizes = [16, 16, 16], strides = [1, 1, 1]} : vector<18x18x16xf32> to vector<16x16x16xf32>
    %85 = vector.shape_cast %84 : vector<16x16x16xf32> to vector<256x16xf32>
    %86 = vector.extract_strided_slice %77 {offsets = [1, 0, 0], sizes = [16, 16, 16], strides = [1, 1, 1]} : vector<18x18x16xf32> to vector<16x16x16xf32>
    %87 = vector.shape_cast %86 : vector<16x16x16xf32> to vector<256x16xf32>
    %88 = vector.extract_strided_slice %77 {offsets = [1, 1, 0], sizes = [16, 16, 16], strides = [1, 1, 1]} : vector<18x18x16xf32> to vector<16x16x16xf32>
    %89 = vector.shape_cast %88 : vector<16x16x16xf32> to vector<256x16xf32>
    %90 = vector.extract_strided_slice %77 {offsets = [1, 2, 0], sizes = [16, 16, 16], strides = [1, 1, 1]} : vector<18x18x16xf32> to vector<16x16x16xf32>
    %91 = vector.shape_cast %90 : vector<16x16x16xf32> to vector<256x16xf32>
    %92 = vector.extract_strided_slice %77 {offsets = [2, 0, 0], sizes = [16, 16, 16], strides = [1, 1, 1]} : vector<18x18x16xf32> to vector<16x16x16xf32>
    %93 = vector.shape_cast %92 : vector<16x16x16xf32> to vector<256x16xf32>
    %94 = vector.extract_strided_slice %77 {offsets = [2, 1, 0], sizes = [16, 16, 16], strides = [1, 1, 1]} : vector<18x18x16xf32> to vector<16x16x16xf32>
    %95 = vector.shape_cast %94 : vector<16x16x16xf32> to vector<256x16xf32>
    %96 = vector.extract_strided_slice %77 {offsets = [2, 2, 0], sizes = [16, 16, 16], strides = [1, 1, 1]} : vector<18x18x16xf32> to vector<16x16x16xf32>
    %97 = vector.shape_cast %96 : vector<16x16x16xf32> to vector<256x16xf32>
    %98 = tpu.concatenate %81, %83, %85, %87, %89, %91, %93, %95, %97 in 1 : vector<256x16xf32>, vector<256x16xf32>, vector<256x16xf32>, vector<256x16xf32>, vector<256x16xf32>, vector<256x16xf32>, vector<256x16xf32>, vector<256x16xf32>, vector<256x16xf32> -> vector<256x144xf32>
    %99 = arith.truncf %98 : vector<256x144xf32> to vector<256x144xbf16>
    %cst_27 = arith.constant dense<0.000000e+00> : vector<256x16xf32>
    %100 = tpu.matmul %99, %79, %cst_27 {dimension_numbers = #tpu.dot_dimension_numbers<[1], [0], [0], [1], [0, 0, 1, 1], [], []>} : vector<256x144xbf16>, vector<144x16xbf16>, vector<256x16xf32> -> vector<256x16xf32>
    %cst_28 = arith.constant 0.000000e+00 : f32
    %101 = vector.broadcast %cst_28 : f32 to vector<256x16xf32>
    %102 = arith.maximumf %100, %101 : vector<256x16xf32>
    %103 = vector.shape_cast %102 : vector<256x16xf32> to vector<16x16x16xf32>
    %c0_29 = arith.constant 0 : index
    %c0_30 = arith.constant 0 : index
    %c0_31 = arith.constant 0 : index
    %c0_32 = arith.constant 0 : index
    %104 = vector.load %arg4[%c0_29, %c0_30, %c0_31, %c0_32] : memref<1x16x16x16xf32, #tpu.memory_space<vmem>>, vector<1x16x16x16xf32>
    %105 = vector.shape_cast %104 : vector<1x16x16x16xf32> to vector<16x16x16xf32>
    %106 = vector.shape_cast %103 : vector<16x16x16xf32> to vector<1x16x16x16xf32>
    tpu.vector_store %arg4[%c0_29, %c0_30, %c0_31, %c0_32], %106 {strides = array<i32>} : memref<1x16x16x16xf32, #tpu.memory_space<vmem>>, vector<1x16x16x16xf32>,
    return
  }
  func.func @transform_0(%arg0: i32) -> (i32, i32, i32, i32) {
    %c0_i32 = arith.constant 0 : i32
    %c0_i32_0 = arith.constant 0 : i32
    %c0_i32_1 = arith.constant 0 : i32
    %c0_i32_2 = arith.constant 0 : i32
    return %arg0, %c0_i32, %c0_i32_0, %c0_i32_1 : i32, i32, i32, i32
  }
  func.func @transform_1(%arg0: i32) -> (i32, i32) {
    %c0_i32 = arith.constant 0 : i32
    %c0_i32_0 = arith.constant 0 : i32
    %c0_i32_1 = arith.constant 0 : i32
    return %c0_i32, %c0_i32_0 : i32, i32
  }
  func.func @transform_2(%arg0: i32) -> (i32, i32) {
    %c0_i32 = arith.constant 0 : i32
    %c0_i32_0 = arith.constant 0 : i32
    %c0_i32_1 = arith.constant 0 : i32
    return %c0_i32, %c0_i32_0 : i32, i32
  }
  func.func @transform_3(%arg0: i32) -> (i32, i32, i32, i32) {
    %c0_i32 = arith.constant 0 : i32
    %c0_i32_0 = arith.constant 0 : i32
    %c0_i32_1 = arith.constant 0 : i32
    %c0_i32_2 = arith.constant 0 : i32
    return %arg0, %c0_i32, %c0_i32_0, %c0_i32_1 : i32, i32, i32, i32
  }
}

module attributes {stable_mosaic.version = 11 : i64} {
  func.func @_down_kernel(%arg0: i32, %arg1: memref<1x2x2x8x8x16xf32, #tpu.memory_space<vmem>>, %arg2: memref<144x32xf32, #tpu.memory_space<vmem>>, %arg3: memref<288x32xf32, #tpu.memory_space<vmem>>, %arg4: memref<1x8x8x32xf32, #tpu.memory_space<vmem>>, %arg5: memref<10x10x16xf32, #tpu.memory_space<vmem>>, %arg6: memref<10x10x32xf32, #tpu.memory_space<vmem>>) attributes {dimension_semantics = [#tpu.dimension_semantics<parallel>], iteration_bounds = array<i64: 2>, scalar_prefetch = 0 : i64, scratch_operands = 2 : i64, tpu.core_type = #tpu.core_type<tc>, window_params = [{transform_indices = @transform_0, window_bounds = array<i64: 1, 2, 2, 8, 8, 16>}, {pipeline_mode = #tpu.pipeline_mode<synchronous>, transform_indices = @transform_1, window_bounds = array<i64: 144, 32>}, {pipeline_mode = #tpu.pipeline_mode<synchronous>, transform_indices = @transform_2, window_bounds = array<i64: 288, 32>}, {transform_indices = @transform_3, window_bounds = array<i64: 1, 8, 8, 32>}]} {
    %c0 = arith.constant 0 : index
    %c0_0 = arith.constant 0 : index
    %c0_1 = arith.constant 0 : index
    %c0_2 = arith.constant 0 : index
    %c0_3 = arith.constant 0 : index
    %c0_4 = arith.constant 0 : index
    %0 = vector.load %arg1[%c0, %c0_0, %c0_1, %c0_2, %c0_3, %c0_4] : memref<1x2x2x8x8x16xf32, #tpu.memory_space<vmem>>, vector<1x2x2x8x8x16xf32>
    %1 = vector.shape_cast %0 : vector<1x2x2x8x8x16xf32> to vector<2x2x8x8x16xf32>
    %2 = vector.extract_strided_slice %1 {offsets = [0, 0, 0, 0, 0], sizes = [1, 1, 8, 8, 16], strides = [1, 1, 1, 1, 1]} : vector<2x2x8x8x16xf32> to vector<1x1x8x8x16xf32>
    %3 = vector.shape_cast %2 : vector<1x1x8x8x16xf32> to vector<8x8x16xf32>
    %4 = vector.extract_strided_slice %1 {offsets = [0, 1, 0, 0, 0], sizes = [1, 1, 8, 8, 16], strides = [1, 1, 1, 1, 1]} : vector<2x2x8x8x16xf32> to vector<1x1x8x8x16xf32>
    %5 = vector.shape_cast %4 : vector<1x1x8x8x16xf32> to vector<8x8x16xf32>
    %6 = arith.maximumf %3, %5 : vector<8x8x16xf32>
    %7 = vector.extract_strided_slice %1 {offsets = [1, 0, 0, 0, 0], sizes = [1, 1, 8, 8, 16], strides = [1, 1, 1, 1, 1]} : vector<2x2x8x8x16xf32> to vector<1x1x8x8x16xf32>
    %8 = vector.shape_cast %7 : vector<1x1x8x8x16xf32> to vector<8x8x16xf32>
    %9 = vector.extract_strided_slice %1 {offsets = [1, 1, 0, 0, 0], sizes = [1, 1, 8, 8, 16], strides = [1, 1, 1, 1, 1]} : vector<2x2x8x8x16xf32> to vector<1x1x8x8x16xf32>
    %10 = vector.shape_cast %9 : vector<1x1x8x8x16xf32> to vector<8x8x16xf32>
    %11 = arith.maximumf %8, %10 : vector<8x8x16xf32>
    %12 = arith.maximumf %6, %11 : vector<8x8x16xf32>
    %cst = arith.constant 0.000000e+00 : f32
    %13 = vector.broadcast %cst : f32 to vector<10x10x16xf32>
    %c0_5 = arith.constant 0 : index
    %c0_6 = arith.constant 0 : index
    %c0_7 = arith.constant 0 : index
    %14 = vector.load %arg5[%c0_5, %c0_6, %c0_7] : memref<10x10x16xf32, #tpu.memory_space<vmem>>, vector<10x10x16xf32>
    tpu.vector_store %arg5[%c0_5, %c0_6, %c0_7], %13 {strides = array<i32>} : memref<10x10x16xf32, #tpu.memory_space<vmem>>, vector<10x10x16xf32>,
    %c1 = arith.constant 1 : index
    %c1_8 = arith.constant 1 : index
    %c0_9 = arith.constant 0 : index
    %15 = vector.load %arg5[%c1, %c1_8, %c0_9] : memref<10x10x16xf32, #tpu.memory_space<vmem>>, vector<8x8x16xf32>
    tpu.vector_store %arg5[%c1, %c1_8, %c0_9], %12 {strides = array<i32>} : memref<10x10x16xf32, #tpu.memory_space<vmem>>, vector<8x8x16xf32>,
    %cst_10 = arith.constant 0.000000e+00 : f32
    %16 = vector.broadcast %cst_10 : f32 to vector<10x10x32xf32>
    %c0_11 = arith.constant 0 : index
    %c0_12 = arith.constant 0 : index
    %c0_13 = arith.constant 0 : index
    %17 = vector.load %arg6[%c0_11, %c0_12, %c0_13] : memref<10x10x32xf32, #tpu.memory_space<vmem>>, vector<10x10x32xf32>
    tpu.vector_store %arg6[%c0_11, %c0_12, %c0_13], %16 {strides = array<i32>} : memref<10x10x32xf32, #tpu.memory_space<vmem>>, vector<10x10x32xf32>,
    %c0_14 = arith.constant 0 : index
    %c0_15 = arith.constant 0 : index
    %c0_16 = arith.constant 0 : index
    %18 = vector.load %arg5[%c0_14, %c0_15, %c0_16] : memref<10x10x16xf32, #tpu.memory_space<vmem>>, vector<10x10x16xf32>
    %c0_17 = arith.constant 0 : index
    %c0_18 = arith.constant 0 : index
    %19 = vector.load %arg2[%c0_17, %c0_18] : memref<144x32xf32, #tpu.memory_space<vmem>>, vector<144x32xf32>
    %20 = arith.truncf %19 : vector<144x32xf32> to vector<144x32xbf16>
    %21 = vector.extract_strided_slice %18 {offsets = [0, 0, 0], sizes = [8, 8, 16], strides = [1, 1, 1]} : vector<10x10x16xf32> to vector<8x8x16xf32>
    %22 = vector.shape_cast %21 : vector<8x8x16xf32> to vector<64x16xf32>
    %23 = vector.extract_strided_slice %18 {offsets = [0, 1, 0], sizes = [8, 8, 16], strides = [1, 1, 1]} : vector<10x10x16xf32> to vector<8x8x16xf32>
    %24 = vector.shape_cast %23 : vector<8x8x16xf32> to vector<64x16xf32>
    %25 = vector.extract_strided_slice %18 {offsets = [0, 2, 0], sizes = [8, 8, 16], strides = [1, 1, 1]} : vector<10x10x16xf32> to vector<8x8x16xf32>
    %26 = vector.shape_cast %25 : vector<8x8x16xf32> to vector<64x16xf32>
    %27 = vector.extract_strided_slice %18 {offsets = [1, 0, 0], sizes = [8, 8, 16], strides = [1, 1, 1]} : vector<10x10x16xf32> to vector<8x8x16xf32>
    %28 = vector.shape_cast %27 : vector<8x8x16xf32> to vector<64x16xf32>
    %29 = vector.extract_strided_slice %18 {offsets = [1, 1, 0], sizes = [8, 8, 16], strides = [1, 1, 1]} : vector<10x10x16xf32> to vector<8x8x16xf32>
    %30 = vector.shape_cast %29 : vector<8x8x16xf32> to vector<64x16xf32>
    %31 = vector.extract_strided_slice %18 {offsets = [1, 2, 0], sizes = [8, 8, 16], strides = [1, 1, 1]} : vector<10x10x16xf32> to vector<8x8x16xf32>
    %32 = vector.shape_cast %31 : vector<8x8x16xf32> to vector<64x16xf32>
    %33 = vector.extract_strided_slice %18 {offsets = [2, 0, 0], sizes = [8, 8, 16], strides = [1, 1, 1]} : vector<10x10x16xf32> to vector<8x8x16xf32>
    %34 = vector.shape_cast %33 : vector<8x8x16xf32> to vector<64x16xf32>
    %35 = vector.extract_strided_slice %18 {offsets = [2, 1, 0], sizes = [8, 8, 16], strides = [1, 1, 1]} : vector<10x10x16xf32> to vector<8x8x16xf32>
    %36 = vector.shape_cast %35 : vector<8x8x16xf32> to vector<64x16xf32>
    %37 = vector.extract_strided_slice %18 {offsets = [2, 2, 0], sizes = [8, 8, 16], strides = [1, 1, 1]} : vector<10x10x16xf32> to vector<8x8x16xf32>
    %38 = vector.shape_cast %37 : vector<8x8x16xf32> to vector<64x16xf32>
    %39 = tpu.concatenate %22, %24, %26, %28, %30, %32, %34, %36, %38 in 1 : vector<64x16xf32>, vector<64x16xf32>, vector<64x16xf32>, vector<64x16xf32>, vector<64x16xf32>, vector<64x16xf32>, vector<64x16xf32>, vector<64x16xf32>, vector<64x16xf32> -> vector<64x144xf32>
    %40 = arith.truncf %39 : vector<64x144xf32> to vector<64x144xbf16>
    %cst_19 = arith.constant dense<0.000000e+00> : vector<64x32xf32>
    %41 = tpu.matmul %40, %20, %cst_19 {dimension_numbers = #tpu.dot_dimension_numbers<[1], [0], [0], [1], [0, 0, 1, 1], [], []>} : vector<64x144xbf16>, vector<144x32xbf16>, vector<64x32xf32> -> vector<64x32xf32>
    %cst_20 = arith.constant 0.000000e+00 : f32
    %42 = vector.broadcast %cst_20 : f32 to vector<64x32xf32>
    %43 = arith.maximumf %41, %42 : vector<64x32xf32>
    %44 = vector.shape_cast %43 : vector<64x32xf32> to vector<8x8x32xf32>
    %c1_21 = arith.constant 1 : index
    %c1_22 = arith.constant 1 : index
    %c0_23 = arith.constant 0 : index
    %45 = vector.load %arg6[%c1_21, %c1_22, %c0_23] : memref<10x10x32xf32, #tpu.memory_space<vmem>>, vector<8x8x32xf32>
    tpu.vector_store %arg6[%c1_21, %c1_22, %c0_23], %44 {strides = array<i32>} : memref<10x10x32xf32, #tpu.memory_space<vmem>>, vector<8x8x32xf32>,
    %c0_24 = arith.constant 0 : index
    %c0_25 = arith.constant 0 : index
    %c0_26 = arith.constant 0 : index
    %46 = vector.load %arg6[%c0_24, %c0_25, %c0_26] : memref<10x10x32xf32, #tpu.memory_space<vmem>>, vector<10x10x32xf32>
    %c0_27 = arith.constant 0 : index
    %c0_28 = arith.constant 0 : index
    %47 = vector.load %arg3[%c0_27, %c0_28] : memref<288x32xf32, #tpu.memory_space<vmem>>, vector<288x32xf32>
    %48 = arith.truncf %47 : vector<288x32xf32> to vector<288x32xbf16>
    %49 = vector.extract_strided_slice %46 {offsets = [0, 0, 0], sizes = [8, 8, 32], strides = [1, 1, 1]} : vector<10x10x32xf32> to vector<8x8x32xf32>
    %50 = vector.shape_cast %49 : vector<8x8x32xf32> to vector<64x32xf32>
    %51 = vector.extract_strided_slice %46 {offsets = [0, 1, 0], sizes = [8, 8, 32], strides = [1, 1, 1]} : vector<10x10x32xf32> to vector<8x8x32xf32>
    %52 = vector.shape_cast %51 : vector<8x8x32xf32> to vector<64x32xf32>
    %53 = vector.extract_strided_slice %46 {offsets = [0, 2, 0], sizes = [8, 8, 32], strides = [1, 1, 1]} : vector<10x10x32xf32> to vector<8x8x32xf32>
    %54 = vector.shape_cast %53 : vector<8x8x32xf32> to vector<64x32xf32>
    %55 = vector.extract_strided_slice %46 {offsets = [1, 0, 0], sizes = [8, 8, 32], strides = [1, 1, 1]} : vector<10x10x32xf32> to vector<8x8x32xf32>
    %56 = vector.shape_cast %55 : vector<8x8x32xf32> to vector<64x32xf32>
    %57 = vector.extract_strided_slice %46 {offsets = [1, 1, 0], sizes = [8, 8, 32], strides = [1, 1, 1]} : vector<10x10x32xf32> to vector<8x8x32xf32>
    %58 = vector.shape_cast %57 : vector<8x8x32xf32> to vector<64x32xf32>
    %59 = vector.extract_strided_slice %46 {offsets = [1, 2, 0], sizes = [8, 8, 32], strides = [1, 1, 1]} : vector<10x10x32xf32> to vector<8x8x32xf32>
    %60 = vector.shape_cast %59 : vector<8x8x32xf32> to vector<64x32xf32>
    %61 = vector.extract_strided_slice %46 {offsets = [2, 0, 0], sizes = [8, 8, 32], strides = [1, 1, 1]} : vector<10x10x32xf32> to vector<8x8x32xf32>
    %62 = vector.shape_cast %61 : vector<8x8x32xf32> to vector<64x32xf32>
    %63 = vector.extract_strided_slice %46 {offsets = [2, 1, 0], sizes = [8, 8, 32], strides = [1, 1, 1]} : vector<10x10x32xf32> to vector<8x8x32xf32>
    %64 = vector.shape_cast %63 : vector<8x8x32xf32> to vector<64x32xf32>
    %65 = vector.extract_strided_slice %46 {offsets = [2, 2, 0], sizes = [8, 8, 32], strides = [1, 1, 1]} : vector<10x10x32xf32> to vector<8x8x32xf32>
    %66 = vector.shape_cast %65 : vector<8x8x32xf32> to vector<64x32xf32>
    %67 = tpu.concatenate %50, %52, %54, %56, %58, %60, %62, %64, %66 in 1 : vector<64x32xf32>, vector<64x32xf32>, vector<64x32xf32>, vector<64x32xf32>, vector<64x32xf32>, vector<64x32xf32>, vector<64x32xf32>, vector<64x32xf32>, vector<64x32xf32> -> vector<64x288xf32>
    %68 = arith.truncf %67 : vector<64x288xf32> to vector<64x288xbf16>
    %cst_29 = arith.constant dense<0.000000e+00> : vector<64x32xf32>
    %69 = tpu.matmul %68, %48, %cst_29 {dimension_numbers = #tpu.dot_dimension_numbers<[1], [0], [0], [1], [0, 0, 1, 1], [], []>} : vector<64x288xbf16>, vector<288x32xbf16>, vector<64x32xf32> -> vector<64x32xf32>
    %cst_30 = arith.constant 0.000000e+00 : f32
    %70 = vector.broadcast %cst_30 : f32 to vector<64x32xf32>
    %71 = arith.maximumf %69, %70 : vector<64x32xf32>
    %72 = vector.shape_cast %71 : vector<64x32xf32> to vector<8x8x32xf32>
    %c0_31 = arith.constant 0 : index
    %c0_32 = arith.constant 0 : index
    %c0_33 = arith.constant 0 : index
    %c0_34 = arith.constant 0 : index
    %73 = vector.load %arg4[%c0_31, %c0_32, %c0_33, %c0_34] : memref<1x8x8x32xf32, #tpu.memory_space<vmem>>, vector<1x8x8x32xf32>
    %74 = vector.shape_cast %73 : vector<1x8x8x32xf32> to vector<8x8x32xf32>
    %75 = vector.shape_cast %72 : vector<8x8x32xf32> to vector<1x8x8x32xf32>
    tpu.vector_store %arg4[%c0_31, %c0_32, %c0_33, %c0_34], %75 {strides = array<i32>} : memref<1x8x8x32xf32, #tpu.memory_space<vmem>>, vector<1x8x8x32xf32>,
    return
  }
  func.func @transform_0(%arg0: i32) -> (i32, i32, i32, i32, i32, i32) {
    %c0_i32 = arith.constant 0 : i32
    %c0_i32_0 = arith.constant 0 : i32
    %c0_i32_1 = arith.constant 0 : i32
    %c0_i32_2 = arith.constant 0 : i32
    %c0_i32_3 = arith.constant 0 : i32
    %c0_i32_4 = arith.constant 0 : i32
    return %arg0, %c0_i32, %c0_i32_0, %c0_i32_1, %c0_i32_2, %c0_i32_3 : i32, i32, i32, i32, i32, i32
  }
  func.func @transform_1(%arg0: i32) -> (i32, i32) {
    %c0_i32 = arith.constant 0 : i32
    %c0_i32_0 = arith.constant 0 : i32
    %c0_i32_1 = arith.constant 0 : i32
    return %c0_i32, %c0_i32_0 : i32, i32
  }
  func.func @transform_2(%arg0: i32) -> (i32, i32) {
    %c0_i32 = arith.constant 0 : i32
    %c0_i32_0 = arith.constant 0 : i32
    %c0_i32_1 = arith.constant 0 : i32
    return %c0_i32, %c0_i32_0 : i32, i32
  }
  func.func @transform_3(%arg0: i32) -> (i32, i32, i32, i32) {
    %c0_i32 = arith.constant 0 : i32
    %c0_i32_0 = arith.constant 0 : i32
    %c0_i32_1 = arith.constant 0 : i32
    %c0_i32_2 = arith.constant 0 : i32
    return %arg0, %c0_i32, %c0_i32_0, %c0_i32_1 : i32, i32, i32, i32
  }
}

module attributes {stable_mosaic.version = 11 : i64} {
  func.func @_down_kernel(%arg0: i32, %arg1: memref<1x2x2x4x4x32xf32, #tpu.memory_space<vmem>>, %arg2: memref<288x64xf32, #tpu.memory_space<vmem>>, %arg3: memref<576x64xf32, #tpu.memory_space<vmem>>, %arg4: memref<1x4x4x64xf32, #tpu.memory_space<vmem>>, %arg5: memref<6x6x32xf32, #tpu.memory_space<vmem>>, %arg6: memref<6x6x64xf32, #tpu.memory_space<vmem>>) attributes {dimension_semantics = [#tpu.dimension_semantics<parallel>], iteration_bounds = array<i64: 2>, scalar_prefetch = 0 : i64, scratch_operands = 2 : i64, tpu.core_type = #tpu.core_type<tc>, window_params = [{transform_indices = @transform_0, window_bounds = array<i64: 1, 2, 2, 4, 4, 32>}, {pipeline_mode = #tpu.pipeline_mode<synchronous>, transform_indices = @transform_1, window_bounds = array<i64: 288, 64>}, {pipeline_mode = #tpu.pipeline_mode<synchronous>, transform_indices = @transform_2, window_bounds = array<i64: 576, 64>}, {transform_indices = @transform_3, window_bounds = array<i64: 1, 4, 4, 64>}]} {
    %c0 = arith.constant 0 : index
    %c0_0 = arith.constant 0 : index
    %c0_1 = arith.constant 0 : index
    %c0_2 = arith.constant 0 : index
    %c0_3 = arith.constant 0 : index
    %c0_4 = arith.constant 0 : index
    %0 = vector.load %arg1[%c0, %c0_0, %c0_1, %c0_2, %c0_3, %c0_4] : memref<1x2x2x4x4x32xf32, #tpu.memory_space<vmem>>, vector<1x2x2x4x4x32xf32>
    %1 = vector.shape_cast %0 : vector<1x2x2x4x4x32xf32> to vector<2x2x4x4x32xf32>
    %2 = vector.extract_strided_slice %1 {offsets = [0, 0, 0, 0, 0], sizes = [1, 1, 4, 4, 32], strides = [1, 1, 1, 1, 1]} : vector<2x2x4x4x32xf32> to vector<1x1x4x4x32xf32>
    %3 = vector.shape_cast %2 : vector<1x1x4x4x32xf32> to vector<4x4x32xf32>
    %4 = vector.extract_strided_slice %1 {offsets = [0, 1, 0, 0, 0], sizes = [1, 1, 4, 4, 32], strides = [1, 1, 1, 1, 1]} : vector<2x2x4x4x32xf32> to vector<1x1x4x4x32xf32>
    %5 = vector.shape_cast %4 : vector<1x1x4x4x32xf32> to vector<4x4x32xf32>
    %6 = arith.maximumf %3, %5 : vector<4x4x32xf32>
    %7 = vector.extract_strided_slice %1 {offsets = [1, 0, 0, 0, 0], sizes = [1, 1, 4, 4, 32], strides = [1, 1, 1, 1, 1]} : vector<2x2x4x4x32xf32> to vector<1x1x4x4x32xf32>
    %8 = vector.shape_cast %7 : vector<1x1x4x4x32xf32> to vector<4x4x32xf32>
    %9 = vector.extract_strided_slice %1 {offsets = [1, 1, 0, 0, 0], sizes = [1, 1, 4, 4, 32], strides = [1, 1, 1, 1, 1]} : vector<2x2x4x4x32xf32> to vector<1x1x4x4x32xf32>
    %10 = vector.shape_cast %9 : vector<1x1x4x4x32xf32> to vector<4x4x32xf32>
    %11 = arith.maximumf %8, %10 : vector<4x4x32xf32>
    %12 = arith.maximumf %6, %11 : vector<4x4x32xf32>
    %cst = arith.constant 0.000000e+00 : f32
    %13 = vector.broadcast %cst : f32 to vector<6x6x32xf32>
    %c0_5 = arith.constant 0 : index
    %c0_6 = arith.constant 0 : index
    %c0_7 = arith.constant 0 : index
    %14 = vector.load %arg5[%c0_5, %c0_6, %c0_7] : memref<6x6x32xf32, #tpu.memory_space<vmem>>, vector<6x6x32xf32>
    tpu.vector_store %arg5[%c0_5, %c0_6, %c0_7], %13 {strides = array<i32>} : memref<6x6x32xf32, #tpu.memory_space<vmem>>, vector<6x6x32xf32>,
    %c1 = arith.constant 1 : index
    %c1_8 = arith.constant 1 : index
    %c0_9 = arith.constant 0 : index
    %15 = vector.load %arg5[%c1, %c1_8, %c0_9] : memref<6x6x32xf32, #tpu.memory_space<vmem>>, vector<4x4x32xf32>
    tpu.vector_store %arg5[%c1, %c1_8, %c0_9], %12 {strides = array<i32>} : memref<6x6x32xf32, #tpu.memory_space<vmem>>, vector<4x4x32xf32>,
    %cst_10 = arith.constant 0.000000e+00 : f32
    %16 = vector.broadcast %cst_10 : f32 to vector<6x6x64xf32>
    %c0_11 = arith.constant 0 : index
    %c0_12 = arith.constant 0 : index
    %c0_13 = arith.constant 0 : index
    %17 = vector.load %arg6[%c0_11, %c0_12, %c0_13] : memref<6x6x64xf32, #tpu.memory_space<vmem>>, vector<6x6x64xf32>
    tpu.vector_store %arg6[%c0_11, %c0_12, %c0_13], %16 {strides = array<i32>} : memref<6x6x64xf32, #tpu.memory_space<vmem>>, vector<6x6x64xf32>,
    %c0_14 = arith.constant 0 : index
    %c0_15 = arith.constant 0 : index
    %c0_16 = arith.constant 0 : index
    %18 = vector.load %arg5[%c0_14, %c0_15, %c0_16] : memref<6x6x32xf32, #tpu.memory_space<vmem>>, vector<6x6x32xf32>
    %c0_17 = arith.constant 0 : index
    %c0_18 = arith.constant 0 : index
    %19 = vector.load %arg2[%c0_17, %c0_18] : memref<288x64xf32, #tpu.memory_space<vmem>>, vector<288x64xf32>
    %20 = arith.truncf %19 : vector<288x64xf32> to vector<288x64xbf16>
    %21 = vector.extract_strided_slice %18 {offsets = [0, 0, 0], sizes = [1, 6, 32], strides = [1, 1, 1]} : vector<6x6x32xf32> to vector<1x6x32xf32>
    %22 = vector.shape_cast %21 : vector<1x6x32xf32> to vector<6x32xf32>
    %23 = vector.extract_strided_slice %22 {offsets = [0, 0], sizes = [4, 32], strides = [1, 1]} : vector<6x32xf32> to vector<4x32xf32>
    %24 = vector.extract_strided_slice %22 {offsets = [1, 0], sizes = [4, 32], strides = [1, 1]} : vector<6x32xf32> to vector<4x32xf32>
    %25 = vector.extract_strided_slice %22 {offsets = [2, 0], sizes = [4, 32], strides = [1, 1]} : vector<6x32xf32> to vector<4x32xf32>
    %26 = vector.extract_strided_slice %18 {offsets = [1, 0, 0], sizes = [1, 6, 32], strides = [1, 1, 1]} : vector<6x6x32xf32> to vector<1x6x32xf32>
    %27 = vector.shape_cast %26 : vector<1x6x32xf32> to vector<6x32xf32>
    %28 = vector.extract_strided_slice %27 {offsets = [0, 0], sizes = [4, 32], strides = [1, 1]} : vector<6x32xf32> to vector<4x32xf32>
    %29 = vector.extract_strided_slice %27 {offsets = [1, 0], sizes = [4, 32], strides = [1, 1]} : vector<6x32xf32> to vector<4x32xf32>
    %30 = vector.extract_strided_slice %27 {offsets = [2, 0], sizes = [4, 32], strides = [1, 1]} : vector<6x32xf32> to vector<4x32xf32>
    %31 = vector.extract_strided_slice %18 {offsets = [2, 0, 0], sizes = [1, 6, 32], strides = [1, 1, 1]} : vector<6x6x32xf32> to vector<1x6x32xf32>
    %32 = vector.shape_cast %31 : vector<1x6x32xf32> to vector<6x32xf32>
    %33 = vector.extract_strided_slice %32 {offsets = [0, 0], sizes = [4, 32], strides = [1, 1]} : vector<6x32xf32> to vector<4x32xf32>
    %34 = vector.extract_strided_slice %32 {offsets = [1, 0], sizes = [4, 32], strides = [1, 1]} : vector<6x32xf32> to vector<4x32xf32>
    %35 = vector.extract_strided_slice %32 {offsets = [2, 0], sizes = [4, 32], strides = [1, 1]} : vector<6x32xf32> to vector<4x32xf32>
    %36 = tpu.concatenate %23, %24, %25, %28, %29, %30, %33, %34, %35 in 1 : vector<4x32xf32>, vector<4x32xf32>, vector<4x32xf32>, vector<4x32xf32>, vector<4x32xf32>, vector<4x32xf32>, vector<4x32xf32>, vector<4x32xf32>, vector<4x32xf32> -> vector<4x288xf32>
    %37 = arith.truncf %36 : vector<4x288xf32> to vector<4x288xbf16>
    %cst_19 = arith.constant dense<0.000000e+00> : vector<4x64xf32>
    %38 = tpu.matmul %37, %20, %cst_19 {dimension_numbers = #tpu.dot_dimension_numbers<[1], [0], [0], [1], [0, 0, 1, 1], [], []>} : vector<4x288xbf16>, vector<288x64xbf16>, vector<4x64xf32> -> vector<4x64xf32>
    %cst_20 = arith.constant 0.000000e+00 : f32
    %39 = vector.broadcast %cst_20 : f32 to vector<4x64xf32>
    %40 = arith.maximumf %38, %39 : vector<4x64xf32>
    %c1_21 = arith.constant 1 : index
    %c1_22 = arith.constant 1 : index
    %c0_23 = arith.constant 0 : index
    %41 = vector.load %arg6[%c1_21, %c1_22, %c0_23] : memref<6x6x64xf32, #tpu.memory_space<vmem>>, vector<1x4x64xf32>
    %42 = vector.shape_cast %41 : vector<1x4x64xf32> to vector<4x64xf32>
    %43 = vector.shape_cast %40 : vector<4x64xf32> to vector<1x4x64xf32>
    tpu.vector_store %arg6[%c1_21, %c1_22, %c0_23], %43 {strides = array<i32>} : memref<6x6x64xf32, #tpu.memory_space<vmem>>, vector<1x4x64xf32>,
    %44 = vector.extract_strided_slice %18 {offsets = [1, 0, 0], sizes = [1, 6, 32], strides = [1, 1, 1]} : vector<6x6x32xf32> to vector<1x6x32xf32>
    %45 = vector.shape_cast %44 : vector<1x6x32xf32> to vector<6x32xf32>
    %46 = vector.extract_strided_slice %45 {offsets = [0, 0], sizes = [4, 32], strides = [1, 1]} : vector<6x32xf32> to vector<4x32xf32>
    %47 = vector.extract_strided_slice %45 {offsets = [1, 0], sizes = [4, 32], strides = [1, 1]} : vector<6x32xf32> to vector<4x32xf32>
    %48 = vector.extract_strided_slice %45 {offsets = [2, 0], sizes = [4, 32], strides = [1, 1]} : vector<6x32xf32> to vector<4x32xf32>
    %49 = vector.extract_strided_slice %18 {offsets = [2, 0, 0], sizes = [1, 6, 32], strides = [1, 1, 1]} : vector<6x6x32xf32> to vector<1x6x32xf32>
    %50 = vector.shape_cast %49 : vector<1x6x32xf32> to vector<6x32xf32>
    %51 = vector.extract_strided_slice %50 {offsets = [0, 0], sizes = [4, 32], strides = [1, 1]} : vector<6x32xf32> to vector<4x32xf32>
    %52 = vector.extract_strided_slice %50 {offsets = [1, 0], sizes = [4, 32], strides = [1, 1]} : vector<6x32xf32> to vector<4x32xf32>
    %53 = vector.extract_strided_slice %50 {offsets = [2, 0], sizes = [4, 32], strides = [1, 1]} : vector<6x32xf32> to vector<4x32xf32>
    %54 = vector.extract_strided_slice %18 {offsets = [3, 0, 0], sizes = [1, 6, 32], strides = [1, 1, 1]} : vector<6x6x32xf32> to vector<1x6x32xf32>
    %55 = vector.shape_cast %54 : vector<1x6x32xf32> to vector<6x32xf32>
    %56 = vector.extract_strided_slice %55 {offsets = [0, 0], sizes = [4, 32], strides = [1, 1]} : vector<6x32xf32> to vector<4x32xf32>
    %57 = vector.extract_strided_slice %55 {offsets = [1, 0], sizes = [4, 32], strides = [1, 1]} : vector<6x32xf32> to vector<4x32xf32>
    %58 = vector.extract_strided_slice %55 {offsets = [2, 0], sizes = [4, 32], strides = [1, 1]} : vector<6x32xf32> to vector<4x32xf32>
    %59 = tpu.concatenate %46, %47, %48, %51, %52, %53, %56, %57, %58 in 1 : vector<4x32xf32>, vector<4x32xf32>, vector<4x32xf32>, vector<4x32xf32>, vector<4x32xf32>, vector<4x32xf32>, vector<4x32xf32>, vector<4x32xf32>, vector<4x32xf32> -> vector<4x288xf32>
    %60 = arith.truncf %59 : vector<4x288xf32> to vector<4x288xbf16>
    %cst_24 = arith.constant dense<0.000000e+00> : vector<4x64xf32>
    %61 = tpu.matmul %60, %20, %cst_24 {dimension_numbers = #tpu.dot_dimension_numbers<[1], [0], [0], [1], [0, 0, 1, 1], [], []>} : vector<4x288xbf16>, vector<288x64xbf16>, vector<4x64xf32> -> vector<4x64xf32>
    %cst_25 = arith.constant 0.000000e+00 : f32
    %62 = vector.broadcast %cst_25 : f32 to vector<4x64xf32>
    %63 = arith.maximumf %61, %62 : vector<4x64xf32>
    %c2 = arith.constant 2 : index
    %c1_26 = arith.constant 1 : index
    %c0_27 = arith.constant 0 : index
    %64 = vector.load %arg6[%c2, %c1_26, %c0_27] : memref<6x6x64xf32, #tpu.memory_space<vmem>>, vector<1x4x64xf32>
    %65 = vector.shape_cast %64 : vector<1x4x64xf32> to vector<4x64xf32>
    %66 = vector.shape_cast %63 : vector<4x64xf32> to vector<1x4x64xf32>
    tpu.vector_store %arg6[%c2, %c1_26, %c0_27], %66 {strides = array<i32>} : memref<6x6x64xf32, #tpu.memory_space<vmem>>, vector<1x4x64xf32>,
    %67 = vector.extract_strided_slice %18 {offsets = [2, 0, 0], sizes = [1, 6, 32], strides = [1, 1, 1]} : vector<6x6x32xf32> to vector<1x6x32xf32>
    %68 = vector.shape_cast %67 : vector<1x6x32xf32> to vector<6x32xf32>
    %69 = vector.extract_strided_slice %68 {offsets = [0, 0], sizes = [4, 32], strides = [1, 1]} : vector<6x32xf32> to vector<4x32xf32>
    %70 = vector.extract_strided_slice %68 {offsets = [1, 0], sizes = [4, 32], strides = [1, 1]} : vector<6x32xf32> to vector<4x32xf32>
    %71 = vector.extract_strided_slice %68 {offsets = [2, 0], sizes = [4, 32], strides = [1, 1]} : vector<6x32xf32> to vector<4x32xf32>
    %72 = vector.extract_strided_slice %18 {offsets = [3, 0, 0], sizes = [1, 6, 32], strides = [1, 1, 1]} : vector<6x6x32xf32> to vector<1x6x32xf32>
    %73 = vector.shape_cast %72 : vector<1x6x32xf32> to vector<6x32xf32>
    %74 = vector.extract_strided_slice %73 {offsets = [0, 0], sizes = [4, 32], strides = [1, 1]} : vector<6x32xf32> to vector<4x32xf32>
    %75 = vector.extract_strided_slice %73 {offsets = [1, 0], sizes = [4, 32], strides = [1, 1]} : vector<6x32xf32> to vector<4x32xf32>
    %76 = vector.extract_strided_slice %73 {offsets = [2, 0], sizes = [4, 32], strides = [1, 1]} : vector<6x32xf32> to vector<4x32xf32>
    %77 = vector.extract_strided_slice %18 {offsets = [4, 0, 0], sizes = [1, 6, 32], strides = [1, 1, 1]} : vector<6x6x32xf32> to vector<1x6x32xf32>
    %78 = vector.shape_cast %77 : vector<1x6x32xf32> to vector<6x32xf32>
    %79 = vector.extract_strided_slice %78 {offsets = [0, 0], sizes = [4, 32], strides = [1, 1]} : vector<6x32xf32> to vector<4x32xf32>
    %80 = vector.extract_strided_slice %78 {offsets = [1, 0], sizes = [4, 32], strides = [1, 1]} : vector<6x32xf32> to vector<4x32xf32>
    %81 = vector.extract_strided_slice %78 {offsets = [2, 0], sizes = [4, 32], strides = [1, 1]} : vector<6x32xf32> to vector<4x32xf32>
    %82 = tpu.concatenate %69, %70, %71, %74, %75, %76, %79, %80, %81 in 1 : vector<4x32xf32>, vector<4x32xf32>, vector<4x32xf32>, vector<4x32xf32>, vector<4x32xf32>, vector<4x32xf32>, vector<4x32xf32>, vector<4x32xf32>, vector<4x32xf32> -> vector<4x288xf32>
    %83 = arith.truncf %82 : vector<4x288xf32> to vector<4x288xbf16>
    %cst_28 = arith.constant dense<0.000000e+00> : vector<4x64xf32>
    %84 = tpu.matmul %83, %20, %cst_28 {dimension_numbers = #tpu.dot_dimension_numbers<[1], [0], [0], [1], [0, 0, 1, 1], [], []>} : vector<4x288xbf16>, vector<288x64xbf16>, vector<4x64xf32> -> vector<4x64xf32>
    %cst_29 = arith.constant 0.000000e+00 : f32
    %85 = vector.broadcast %cst_29 : f32 to vector<4x64xf32>
    %86 = arith.maximumf %84, %85 : vector<4x64xf32>
    %c3 = arith.constant 3 : index
    %c1_30 = arith.constant 1 : index
    %c0_31 = arith.constant 0 : index
    %87 = vector.load %arg6[%c3, %c1_30, %c0_31] : memref<6x6x64xf32, #tpu.memory_space<vmem>>, vector<1x4x64xf32>
    %88 = vector.shape_cast %87 : vector<1x4x64xf32> to vector<4x64xf32>
    %89 = vector.shape_cast %86 : vector<4x64xf32> to vector<1x4x64xf32>
    tpu.vector_store %arg6[%c3, %c1_30, %c0_31], %89 {strides = array<i32>} : memref<6x6x64xf32, #tpu.memory_space<vmem>>, vector<1x4x64xf32>,
    %90 = vector.extract_strided_slice %18 {offsets = [3, 0, 0], sizes = [1, 6, 32], strides = [1, 1, 1]} : vector<6x6x32xf32> to vector<1x6x32xf32>
    %91 = vector.shape_cast %90 : vector<1x6x32xf32> to vector<6x32xf32>
    %92 = vector.extract_strided_slice %91 {offsets = [0, 0], sizes = [4, 32], strides = [1, 1]} : vector<6x32xf32> to vector<4x32xf32>
    %93 = vector.extract_strided_slice %91 {offsets = [1, 0], sizes = [4, 32], strides = [1, 1]} : vector<6x32xf32> to vector<4x32xf32>
    %94 = vector.extract_strided_slice %91 {offsets = [2, 0], sizes = [4, 32], strides = [1, 1]} : vector<6x32xf32> to vector<4x32xf32>
    %95 = vector.extract_strided_slice %18 {offsets = [4, 0, 0], sizes = [1, 6, 32], strides = [1, 1, 1]} : vector<6x6x32xf32> to vector<1x6x32xf32>
    %96 = vector.shape_cast %95 : vector<1x6x32xf32> to vector<6x32xf32>
    %97 = vector.extract_strided_slice %96 {offsets = [0, 0], sizes = [4, 32], strides = [1, 1]} : vector<6x32xf32> to vector<4x32xf32>
    %98 = vector.extract_strided_slice %96 {offsets = [1, 0], sizes = [4, 32], strides = [1, 1]} : vector<6x32xf32> to vector<4x32xf32>
    %99 = vector.extract_strided_slice %96 {offsets = [2, 0], sizes = [4, 32], strides = [1, 1]} : vector<6x32xf32> to vector<4x32xf32>
    %100 = vector.extract_strided_slice %18 {offsets = [5, 0, 0], sizes = [1, 6, 32], strides = [1, 1, 1]} : vector<6x6x32xf32> to vector<1x6x32xf32>
    %101 = vector.shape_cast %100 : vector<1x6x32xf32> to vector<6x32xf32>
    %102 = vector.extract_strided_slice %101 {offsets = [0, 0], sizes = [4, 32], strides = [1, 1]} : vector<6x32xf32> to vector<4x32xf32>
    %103 = vector.extract_strided_slice %101 {offsets = [1, 0], sizes = [4, 32], strides = [1, 1]} : vector<6x32xf32> to vector<4x32xf32>
    %104 = vector.extract_strided_slice %101 {offsets = [2, 0], sizes = [4, 32], strides = [1, 1]} : vector<6x32xf32> to vector<4x32xf32>
    %105 = tpu.concatenate %92, %93, %94, %97, %98, %99, %102, %103, %104 in 1 : vector<4x32xf32>, vector<4x32xf32>, vector<4x32xf32>, vector<4x32xf32>, vector<4x32xf32>, vector<4x32xf32>, vector<4x32xf32>, vector<4x32xf32>, vector<4x32xf32> -> vector<4x288xf32>
    %106 = arith.truncf %105 : vector<4x288xf32> to vector<4x288xbf16>
    %cst_32 = arith.constant dense<0.000000e+00> : vector<4x64xf32>
    %107 = tpu.matmul %106, %20, %cst_32 {dimension_numbers = #tpu.dot_dimension_numbers<[1], [0], [0], [1], [0, 0, 1, 1], [], []>} : vector<4x288xbf16>, vector<288x64xbf16>, vector<4x64xf32> -> vector<4x64xf32>
    %cst_33 = arith.constant 0.000000e+00 : f32
    %108 = vector.broadcast %cst_33 : f32 to vector<4x64xf32>
    %109 = arith.maximumf %107, %108 : vector<4x64xf32>
    %c4 = arith.constant 4 : index
    %c1_34 = arith.constant 1 : index
    %c0_35 = arith.constant 0 : index
    %110 = vector.load %arg6[%c4, %c1_34, %c0_35] : memref<6x6x64xf32, #tpu.memory_space<vmem>>, vector<1x4x64xf32>
    %111 = vector.shape_cast %110 : vector<1x4x64xf32> to vector<4x64xf32>
    %112 = vector.shape_cast %109 : vector<4x64xf32> to vector<1x4x64xf32>
    tpu.vector_store %arg6[%c4, %c1_34, %c0_35], %112 {strides = array<i32>} : memref<6x6x64xf32, #tpu.memory_space<vmem>>, vector<1x4x64xf32>,
    %c0_36 = arith.constant 0 : index
    %c0_37 = arith.constant 0 : index
    %c0_38 = arith.constant 0 : index
    %113 = vector.load %arg6[%c0_36, %c0_37, %c0_38] : memref<6x6x64xf32, #tpu.memory_space<vmem>>, vector<6x6x64xf32>
    %c0_39 = arith.constant 0 : index
    %c0_40 = arith.constant 0 : index
    %114 = vector.load %arg3[%c0_39, %c0_40] : memref<576x64xf32, #tpu.memory_space<vmem>>, vector<576x64xf32>
    %115 = arith.truncf %114 : vector<576x64xf32> to vector<576x64xbf16>
    %116 = vector.extract_strided_slice %113 {offsets = [0, 0, 0], sizes = [1, 6, 64], strides = [1, 1, 1]} : vector<6x6x64xf32> to vector<1x6x64xf32>
    %117 = vector.shape_cast %116 : vector<1x6x64xf32> to vector<6x64xf32>
    %118 = vector.extract_strided_slice %117 {offsets = [0, 0], sizes = [4, 64], strides = [1, 1]} : vector<6x64xf32> to vector<4x64xf32>
    %119 = vector.extract_strided_slice %117 {offsets = [1, 0], sizes = [4, 64], strides = [1, 1]} : vector<6x64xf32> to vector<4x64xf32>
    %120 = vector.extract_strided_slice %117 {offsets = [2, 0], sizes = [4, 64], strides = [1, 1]} : vector<6x64xf32> to vector<4x64xf32>
    %121 = vector.extract_strided_slice %113 {offsets = [1, 0, 0], sizes = [1, 6, 64], strides = [1, 1, 1]} : vector<6x6x64xf32> to vector<1x6x64xf32>
    %122 = vector.shape_cast %121 : vector<1x6x64xf32> to vector<6x64xf32>
    %123 = vector.extract_strided_slice %122 {offsets = [0, 0], sizes = [4, 64], strides = [1, 1]} : vector<6x64xf32> to vector<4x64xf32>
    %124 = vector.extract_strided_slice %122 {offsets = [1, 0], sizes = [4, 64], strides = [1, 1]} : vector<6x64xf32> to vector<4x64xf32>
    %125 = vector.extract_strided_slice %122 {offsets = [2, 0], sizes = [4, 64], strides = [1, 1]} : vector<6x64xf32> to vector<4x64xf32>
    %126 = vector.extract_strided_slice %113 {offsets = [2, 0, 0], sizes = [1, 6, 64], strides = [1, 1, 1]} : vector<6x6x64xf32> to vector<1x6x64xf32>
    %127 = vector.shape_cast %126 : vector<1x6x64xf32> to vector<6x64xf32>
    %128 = vector.extract_strided_slice %127 {offsets = [0, 0], sizes = [4, 64], strides = [1, 1]} : vector<6x64xf32> to vector<4x64xf32>
    %129 = vector.extract_strided_slice %127 {offsets = [1, 0], sizes = [4, 64], strides = [1, 1]} : vector<6x64xf32> to vector<4x64xf32>
    %130 = vector.extract_strided_slice %127 {offsets = [2, 0], sizes = [4, 64], strides = [1, 1]} : vector<6x64xf32> to vector<4x64xf32>
    %131 = tpu.concatenate %118, %119, %120, %123, %124, %125, %128, %129, %130 in 1 : vector<4x64xf32>, vector<4x64xf32>, vector<4x64xf32>, vector<4x64xf32>, vector<4x64xf32>, vector<4x64xf32>, vector<4x64xf32>, vector<4x64xf32>, vector<4x64xf32> -> vector<4x576xf32>
    %132 = arith.truncf %131 : vector<4x576xf32> to vector<4x576xbf16>
    %cst_41 = arith.constant dense<0.000000e+00> : vector<4x64xf32>
    %133 = tpu.matmul %132, %115, %cst_41 {dimension_numbers = #tpu.dot_dimension_numbers<[1], [0], [0], [1], [0, 0, 1, 1], [], []>} : vector<4x576xbf16>, vector<576x64xbf16>, vector<4x64xf32> -> vector<4x64xf32>
    %cst_42 = arith.constant 0.000000e+00 : f32
    %134 = vector.broadcast %cst_42 : f32 to vector<4x64xf32>
    %135 = arith.maximumf %133, %134 : vector<4x64xf32>
    %c0_43 = arith.constant 0 : index
    %c0_44 = arith.constant 0 : index
    %c0_45 = arith.constant 0 : index
    %c0_46 = arith.constant 0 : index
    %136 = vector.load %arg4[%c0_43, %c0_44, %c0_45, %c0_46] : memref<1x4x4x64xf32, #tpu.memory_space<vmem>>, vector<1x1x4x64xf32>
    %137 = vector.shape_cast %136 : vector<1x1x4x64xf32> to vector<4x64xf32>
    %138 = vector.shape_cast %135 : vector<4x64xf32> to vector<1x1x4x64xf32>
    tpu.vector_store %arg4[%c0_43, %c0_44, %c0_45, %c0_46], %138 {strides = array<i32>} : memref<1x4x4x64xf32, #tpu.memory_space<vmem>>, vector<1x1x4x64xf32>,
    %139 = vector.extract_strided_slice %113 {offsets = [1, 0, 0], sizes = [1, 6, 64], strides = [1, 1, 1]} : vector<6x6x64xf32> to vector<1x6x64xf32>
    %140 = vector.shape_cast %139 : vector<1x6x64xf32> to vector<6x64xf32>
    %141 = vector.extract_strided_slice %140 {offsets = [0, 0], sizes = [4, 64], strides = [1, 1]} : vector<6x64xf32> to vector<4x64xf32>
    %142 = vector.extract_strided_slice %140 {offsets = [1, 0], sizes = [4, 64], strides = [1, 1]} : vector<6x64xf32> to vector<4x64xf32>
    %143 = vector.extract_strided_slice %140 {offsets = [2, 0], sizes = [4, 64], strides = [1, 1]} : vector<6x64xf32> to vector<4x64xf32>
    %144 = vector.extract_strided_slice %113 {offsets = [2, 0, 0], sizes = [1, 6, 64], strides = [1, 1, 1]} : vector<6x6x64xf32> to vector<1x6x64xf32>
    %145 = vector.shape_cast %144 : vector<1x6x64xf32> to vector<6x64xf32>
    %146 = vector.extract_strided_slice %145 {offsets = [0, 0], sizes = [4, 64], strides = [1, 1]} : vector<6x64xf32> to vector<4x64xf32>
    %147 = vector.extract_strided_slice %145 {offsets = [1, 0], sizes = [4, 64], strides = [1, 1]} : vector<6x64xf32> to vector<4x64xf32>
    %148 = vector.extract_strided_slice %145 {offsets = [2, 0], sizes = [4, 64], strides = [1, 1]} : vector<6x64xf32> to vector<4x64xf32>
    %149 = vector.extract_strided_slice %113 {offsets = [3, 0, 0], sizes = [1, 6, 64], strides = [1, 1, 1]} : vector<6x6x64xf32> to vector<1x6x64xf32>
    %150 = vector.shape_cast %149 : vector<1x6x64xf32> to vector<6x64xf32>
    %151 = vector.extract_strided_slice %150 {offsets = [0, 0], sizes = [4, 64], strides = [1, 1]} : vector<6x64xf32> to vector<4x64xf32>
    %152 = vector.extract_strided_slice %150 {offsets = [1, 0], sizes = [4, 64], strides = [1, 1]} : vector<6x64xf32> to vector<4x64xf32>
    %153 = vector.extract_strided_slice %150 {offsets = [2, 0], sizes = [4, 64], strides = [1, 1]} : vector<6x64xf32> to vector<4x64xf32>
    %154 = tpu.concatenate %141, %142, %143, %146, %147, %148, %151, %152, %153 in 1 : vector<4x64xf32>, vector<4x64xf32>, vector<4x64xf32>, vector<4x64xf32>, vector<4x64xf32>, vector<4x64xf32>, vector<4x64xf32>, vector<4x64xf32>, vector<4x64xf32> -> vector<4x576xf32>
    %155 = arith.truncf %154 : vector<4x576xf32> to vector<4x576xbf16>
    %cst_47 = arith.constant dense<0.000000e+00> : vector<4x64xf32>
    %156 = tpu.matmul %155, %115, %cst_47 {dimension_numbers = #tpu.dot_dimension_numbers<[1], [0], [0], [1], [0, 0, 1, 1], [], []>} : vector<4x576xbf16>, vector<576x64xbf16>, vector<4x64xf32> -> vector<4x64xf32>
    %cst_48 = arith.constant 0.000000e+00 : f32
    %157 = vector.broadcast %cst_48 : f32 to vector<4x64xf32>
    %158 = arith.maximumf %156, %157 : vector<4x64xf32>
    %c0_49 = arith.constant 0 : index
    %c1_50 = arith.constant 1 : index
    %c0_51 = arith.constant 0 : index
    %c0_52 = arith.constant 0 : index
    %159 = vector.load %arg4[%c0_49, %c1_50, %c0_51, %c0_52] : memref<1x4x4x64xf32, #tpu.memory_space<vmem>>, vector<1x1x4x64xf32>
    %160 = vector.shape_cast %159 : vector<1x1x4x64xf32> to vector<4x64xf32>
    %161 = vector.shape_cast %158 : vector<4x64xf32> to vector<1x1x4x64xf32>
    tpu.vector_store %arg4[%c0_49, %c1_50, %c0_51, %c0_52], %161 {strides = array<i32>} : memref<1x4x4x64xf32, #tpu.memory_space<vmem>>, vector<1x1x4x64xf32>,
    %162 = vector.extract_strided_slice %113 {offsets = [2, 0, 0], sizes = [1, 6, 64], strides = [1, 1, 1]} : vector<6x6x64xf32> to vector<1x6x64xf32>
    %163 = vector.shape_cast %162 : vector<1x6x64xf32> to vector<6x64xf32>
    %164 = vector.extract_strided_slice %163 {offsets = [0, 0], sizes = [4, 64], strides = [1, 1]} : vector<6x64xf32> to vector<4x64xf32>
    %165 = vector.extract_strided_slice %163 {offsets = [1, 0], sizes = [4, 64], strides = [1, 1]} : vector<6x64xf32> to vector<4x64xf32>
    %166 = vector.extract_strided_slice %163 {offsets = [2, 0], sizes = [4, 64], strides = [1, 1]} : vector<6x64xf32> to vector<4x64xf32>
    %167 = vector.extract_strided_slice %113 {offsets = [3, 0, 0], sizes = [1, 6, 64], strides = [1, 1, 1]} : vector<6x6x64xf32> to vector<1x6x64xf32>
    %168 = vector.shape_cast %167 : vector<1x6x64xf32> to vector<6x64xf32>
    %169 = vector.extract_strided_slice %168 {offsets = [0, 0], sizes = [4, 64], strides = [1, 1]} : vector<6x64xf32> to vector<4x64xf32>
    %170 = vector.extract_strided_slice %168 {offsets = [1, 0], sizes = [4, 64], strides = [1, 1]} : vector<6x64xf32> to vector<4x64xf32>
    %171 = vector.extract_strided_slice %168 {offsets = [2, 0], sizes = [4, 64], strides = [1, 1]} : vector<6x64xf32> to vector<4x64xf32>
    %172 = vector.extract_strided_slice %113 {offsets = [4, 0, 0], sizes = [1, 6, 64], strides = [1, 1, 1]} : vector<6x6x64xf32> to vector<1x6x64xf32>
    %173 = vector.shape_cast %172 : vector<1x6x64xf32> to vector<6x64xf32>
    %174 = vector.extract_strided_slice %173 {offsets = [0, 0], sizes = [4, 64], strides = [1, 1]} : vector<6x64xf32> to vector<4x64xf32>
    %175 = vector.extract_strided_slice %173 {offsets = [1, 0], sizes = [4, 64], strides = [1, 1]} : vector<6x64xf32> to vector<4x64xf32>
    %176 = vector.extract_strided_slice %173 {offsets = [2, 0], sizes = [4, 64], strides = [1, 1]} : vector<6x64xf32> to vector<4x64xf32>
    %177 = tpu.concatenate %164, %165, %166, %169, %170, %171, %174, %175, %176 in 1 : vector<4x64xf32>, vector<4x64xf32>, vector<4x64xf32>, vector<4x64xf32>, vector<4x64xf32>, vector<4x64xf32>, vector<4x64xf32>, vector<4x64xf32>, vector<4x64xf32> -> vector<4x576xf32>
    %178 = arith.truncf %177 : vector<4x576xf32> to vector<4x576xbf16>
    %cst_53 = arith.constant dense<0.000000e+00> : vector<4x64xf32>
    %179 = tpu.matmul %178, %115, %cst_53 {dimension_numbers = #tpu.dot_dimension_numbers<[1], [0], [0], [1], [0, 0, 1, 1], [], []>} : vector<4x576xbf16>, vector<576x64xbf16>, vector<4x64xf32> -> vector<4x64xf32>
    %cst_54 = arith.constant 0.000000e+00 : f32
    %180 = vector.broadcast %cst_54 : f32 to vector<4x64xf32>
    %181 = arith.maximumf %179, %180 : vector<4x64xf32>
    %c0_55 = arith.constant 0 : index
    %c2_56 = arith.constant 2 : index
    %c0_57 = arith.constant 0 : index
    %c0_58 = arith.constant 0 : index
    %182 = vector.load %arg4[%c0_55, %c2_56, %c0_57, %c0_58] : memref<1x4x4x64xf32, #tpu.memory_space<vmem>>, vector<1x1x4x64xf32>
    %183 = vector.shape_cast %182 : vector<1x1x4x64xf32> to vector<4x64xf32>
    %184 = vector.shape_cast %181 : vector<4x64xf32> to vector<1x1x4x64xf32>
    tpu.vector_store %arg4[%c0_55, %c2_56, %c0_57, %c0_58], %184 {strides = array<i32>} : memref<1x4x4x64xf32, #tpu.memory_space<vmem>>, vector<1x1x4x64xf32>,
    %185 = vector.extract_strided_slice %113 {offsets = [3, 0, 0], sizes = [1, 6, 64], strides = [1, 1, 1]} : vector<6x6x64xf32> to vector<1x6x64xf32>
    %186 = vector.shape_cast %185 : vector<1x6x64xf32> to vector<6x64xf32>
    %187 = vector.extract_strided_slice %186 {offsets = [0, 0], sizes = [4, 64], strides = [1, 1]} : vector<6x64xf32> to vector<4x64xf32>
    %188 = vector.extract_strided_slice %186 {offsets = [1, 0], sizes = [4, 64], strides = [1, 1]} : vector<6x64xf32> to vector<4x64xf32>
    %189 = vector.extract_strided_slice %186 {offsets = [2, 0], sizes = [4, 64], strides = [1, 1]} : vector<6x64xf32> to vector<4x64xf32>
    %190 = vector.extract_strided_slice %113 {offsets = [4, 0, 0], sizes = [1, 6, 64], strides = [1, 1, 1]} : vector<6x6x64xf32> to vector<1x6x64xf32>
    %191 = vector.shape_cast %190 : vector<1x6x64xf32> to vector<6x64xf32>
    %192 = vector.extract_strided_slice %191 {offsets = [0, 0], sizes = [4, 64], strides = [1, 1]} : vector<6x64xf32> to vector<4x64xf32>
    %193 = vector.extract_strided_slice %191 {offsets = [1, 0], sizes = [4, 64], strides = [1, 1]} : vector<6x64xf32> to vector<4x64xf32>
    %194 = vector.extract_strided_slice %191 {offsets = [2, 0], sizes = [4, 64], strides = [1, 1]} : vector<6x64xf32> to vector<4x64xf32>
    %195 = vector.extract_strided_slice %113 {offsets = [5, 0, 0], sizes = [1, 6, 64], strides = [1, 1, 1]} : vector<6x6x64xf32> to vector<1x6x64xf32>
    %196 = vector.shape_cast %195 : vector<1x6x64xf32> to vector<6x64xf32>
    %197 = vector.extract_strided_slice %196 {offsets = [0, 0], sizes = [4, 64], strides = [1, 1]} : vector<6x64xf32> to vector<4x64xf32>
    %198 = vector.extract_strided_slice %196 {offsets = [1, 0], sizes = [4, 64], strides = [1, 1]} : vector<6x64xf32> to vector<4x64xf32>
    %199 = vector.extract_strided_slice %196 {offsets = [2, 0], sizes = [4, 64], strides = [1, 1]} : vector<6x64xf32> to vector<4x64xf32>
    %200 = tpu.concatenate %187, %188, %189, %192, %193, %194, %197, %198, %199 in 1 : vector<4x64xf32>, vector<4x64xf32>, vector<4x64xf32>, vector<4x64xf32>, vector<4x64xf32>, vector<4x64xf32>, vector<4x64xf32>, vector<4x64xf32>, vector<4x64xf32> -> vector<4x576xf32>
    %201 = arith.truncf %200 : vector<4x576xf32> to vector<4x576xbf16>
    %cst_59 = arith.constant dense<0.000000e+00> : vector<4x64xf32>
    %202 = tpu.matmul %201, %115, %cst_59 {dimension_numbers = #tpu.dot_dimension_numbers<[1], [0], [0], [1], [0, 0, 1, 1], [], []>} : vector<4x576xbf16>, vector<576x64xbf16>, vector<4x64xf32> -> vector<4x64xf32>
    %cst_60 = arith.constant 0.000000e+00 : f32
    %203 = vector.broadcast %cst_60 : f32 to vector<4x64xf32>
    %204 = arith.maximumf %202, %203 : vector<4x64xf32>
    %c0_61 = arith.constant 0 : index
    %c3_62 = arith.constant 3 : index
    %c0_63 = arith.constant 0 : index
    %c0_64 = arith.constant 0 : index
    %205 = vector.load %arg4[%c0_61, %c3_62, %c0_63, %c0_64] : memref<1x4x4x64xf32, #tpu.memory_space<vmem>>, vector<1x1x4x64xf32>
    %206 = vector.shape_cast %205 : vector<1x1x4x64xf32> to vector<4x64xf32>
    %207 = vector.shape_cast %204 : vector<4x64xf32> to vector<1x1x4x64xf32>
    tpu.vector_store %arg4[%c0_61, %c3_62, %c0_63, %c0_64], %207 {strides = array<i32>} : memref<1x4x4x64xf32, #tpu.memory_space<vmem>>, vector<1x1x4x64xf32>,
    return
  }
  func.func @transform_0(%arg0: i32) -> (i32, i32, i32, i32, i32, i32) {
    %c0_i32 = arith.constant 0 : i32
    %c0_i32_0 = arith.constant 0 : i32
    %c0_i32_1 = arith.constant 0 : i32
    %c0_i32_2 = arith.constant 0 : i32
    %c0_i32_3 = arith.constant 0 : i32
    %c0_i32_4 = arith.constant 0 : i32
    return %arg0, %c0_i32, %c0_i32_0, %c0_i32_1, %c0_i32_2, %c0_i32_3 : i32, i32, i32, i32, i32, i32
  }
  func.func @transform_1(%arg0: i32) -> (i32, i32) {
    %c0_i32 = arith.constant 0 : i32
    %c0_i32_0 = arith.constant 0 : i32
    %c0_i32_1 = arith.constant 0 : i32
    return %c0_i32, %c0_i32_0 : i32, i32
  }
  func.func @transform_2(%arg0: i32) -> (i32, i32) {
    %c0_i32 = arith.constant 0 : i32
    %c0_i32_0 = arith.constant 0 : i32
    %c0_i32_1 = arith.constant 0 : i32
    return %c0_i32, %c0_i32_0 : i32, i32
  }
  func.func @transform_3(%arg0: i32) -> (i32, i32, i32, i32) {
    %c0_i32 = arith.constant 0 : i32
    %c0_i32_0 = arith.constant 0 : i32
    %c0_i32_1 = arith.constant 0 : i32
    %c0_i32_2 = arith.constant 0 : i32
    return %arg0, %c0_i32, %c0_i32_0, %c0_i32_1 : i32, i32, i32, i32
  }
}

module attributes {stable_mosaic.version = 11 : i64} {
  func.func @_down_kernel(%arg0: i32, %arg1: memref<1x2x2x2x2x64xf32, #tpu.memory_space<vmem>>, %arg2: memref<576x128xf32, #tpu.memory_space<vmem>>, %arg3: memref<1152x128xf32, #tpu.memory_space<vmem>>, %arg4: memref<1x2x2x128xf32, #tpu.memory_space<vmem>>, %arg5: memref<4x4x64xf32, #tpu.memory_space<vmem>>, %arg6: memref<4x4x128xf32, #tpu.memory_space<vmem>>) attributes {dimension_semantics = [#tpu.dimension_semantics<parallel>], iteration_bounds = array<i64: 2>, scalar_prefetch = 0 : i64, scratch_operands = 2 : i64, tpu.core_type = #tpu.core_type<tc>, window_params = [{transform_indices = @transform_0, window_bounds = array<i64: 1, 2, 2, 2, 2, 64>}, {pipeline_mode = #tpu.pipeline_mode<synchronous>, transform_indices = @transform_1, window_bounds = array<i64: 576, 128>}, {pipeline_mode = #tpu.pipeline_mode<synchronous>, transform_indices = @transform_2, window_bounds = array<i64: 1152, 128>}, {transform_indices = @transform_3, window_bounds = array<i64: 1, 2, 2, 128>}]} {
    %c0 = arith.constant 0 : index
    %c0_0 = arith.constant 0 : index
    %c0_1 = arith.constant 0 : index
    %c0_2 = arith.constant 0 : index
    %c0_3 = arith.constant 0 : index
    %c0_4 = arith.constant 0 : index
    %0 = vector.load %arg1[%c0, %c0_0, %c0_1, %c0_2, %c0_3, %c0_4] : memref<1x2x2x2x2x64xf32, #tpu.memory_space<vmem>>, vector<1x2x2x2x2x64xf32>
    %1 = vector.shape_cast %0 : vector<1x2x2x2x2x64xf32> to vector<2x2x2x2x64xf32>
    %2 = vector.extract_strided_slice %1 {offsets = [0, 0, 0, 0, 0], sizes = [1, 1, 2, 2, 64], strides = [1, 1, 1, 1, 1]} : vector<2x2x2x2x64xf32> to vector<1x1x2x2x64xf32>
    %3 = vector.shape_cast %2 : vector<1x1x2x2x64xf32> to vector<2x2x64xf32>
    %4 = vector.extract_strided_slice %1 {offsets = [0, 1, 0, 0, 0], sizes = [1, 1, 2, 2, 64], strides = [1, 1, 1, 1, 1]} : vector<2x2x2x2x64xf32> to vector<1x1x2x2x64xf32>
    %5 = vector.shape_cast %4 : vector<1x1x2x2x64xf32> to vector<2x2x64xf32>
    %6 = arith.maximumf %3, %5 : vector<2x2x64xf32>
    %7 = vector.extract_strided_slice %1 {offsets = [1, 0, 0, 0, 0], sizes = [1, 1, 2, 2, 64], strides = [1, 1, 1, 1, 1]} : vector<2x2x2x2x64xf32> to vector<1x1x2x2x64xf32>
    %8 = vector.shape_cast %7 : vector<1x1x2x2x64xf32> to vector<2x2x64xf32>
    %9 = vector.extract_strided_slice %1 {offsets = [1, 1, 0, 0, 0], sizes = [1, 1, 2, 2, 64], strides = [1, 1, 1, 1, 1]} : vector<2x2x2x2x64xf32> to vector<1x1x2x2x64xf32>
    %10 = vector.shape_cast %9 : vector<1x1x2x2x64xf32> to vector<2x2x64xf32>
    %11 = arith.maximumf %8, %10 : vector<2x2x64xf32>
    %12 = arith.maximumf %6, %11 : vector<2x2x64xf32>
    %cst = arith.constant 0.000000e+00 : f32
    %13 = vector.broadcast %cst : f32 to vector<4x4x64xf32>
    %c0_5 = arith.constant 0 : index
    %c0_6 = arith.constant 0 : index
    %c0_7 = arith.constant 0 : index
    %14 = vector.load %arg5[%c0_5, %c0_6, %c0_7] : memref<4x4x64xf32, #tpu.memory_space<vmem>>, vector<4x4x64xf32>
    tpu.vector_store %arg5[%c0_5, %c0_6, %c0_7], %13 {strides = array<i32>} : memref<4x4x64xf32, #tpu.memory_space<vmem>>, vector<4x4x64xf32>,
    %c1 = arith.constant 1 : index
    %c1_8 = arith.constant 1 : index
    %c0_9 = arith.constant 0 : index
    %15 = vector.load %arg5[%c1, %c1_8, %c0_9] : memref<4x4x64xf32, #tpu.memory_space<vmem>>, vector<2x2x64xf32>
    tpu.vector_store %arg5[%c1, %c1_8, %c0_9], %12 {strides = array<i32>} : memref<4x4x64xf32, #tpu.memory_space<vmem>>, vector<2x2x64xf32>,
    %cst_10 = arith.constant 0.000000e+00 : f32
    %16 = vector.broadcast %cst_10 : f32 to vector<4x4x128xf32>
    %c0_11 = arith.constant 0 : index
    %c0_12 = arith.constant 0 : index
    %c0_13 = arith.constant 0 : index
    %17 = vector.load %arg6[%c0_11, %c0_12, %c0_13] : memref<4x4x128xf32, #tpu.memory_space<vmem>>, vector<4x4x128xf32>
    tpu.vector_store %arg6[%c0_11, %c0_12, %c0_13], %16 {strides = array<i32>} : memref<4x4x128xf32, #tpu.memory_space<vmem>>, vector<4x4x128xf32>,
    %c0_14 = arith.constant 0 : index
    %c0_15 = arith.constant 0 : index
    %c0_16 = arith.constant 0 : index
    %18 = vector.load %arg5[%c0_14, %c0_15, %c0_16] : memref<4x4x64xf32, #tpu.memory_space<vmem>>, vector<4x4x64xf32>
    %c0_17 = arith.constant 0 : index
    %c0_18 = arith.constant 0 : index
    %19 = vector.load %arg2[%c0_17, %c0_18] : memref<576x128xf32, #tpu.memory_space<vmem>>, vector<576x128xf32>
    %20 = arith.truncf %19 : vector<576x128xf32> to vector<576x128xbf16>
    %21 = vector.extract_strided_slice %18 {offsets = [0, 0, 0], sizes = [1, 4, 64], strides = [1, 1, 1]} : vector<4x4x64xf32> to vector<1x4x64xf32>
    %22 = vector.shape_cast %21 : vector<1x4x64xf32> to vector<4x64xf32>
    %23 = vector.extract_strided_slice %22 {offsets = [0, 0], sizes = [2, 64], strides = [1, 1]} : vector<4x64xf32> to vector<2x64xf32>
    %24 = vector.extract_strided_slice %22 {offsets = [1, 0], sizes = [2, 64], strides = [1, 1]} : vector<4x64xf32> to vector<2x64xf32>
    %25 = vector.extract_strided_slice %22 {offsets = [2, 0], sizes = [2, 64], strides = [1, 1]} : vector<4x64xf32> to vector<2x64xf32>
    %26 = vector.extract_strided_slice %18 {offsets = [1, 0, 0], sizes = [1, 4, 64], strides = [1, 1, 1]} : vector<4x4x64xf32> to vector<1x4x64xf32>
    %27 = vector.shape_cast %26 : vector<1x4x64xf32> to vector<4x64xf32>
    %28 = vector.extract_strided_slice %27 {offsets = [0, 0], sizes = [2, 64], strides = [1, 1]} : vector<4x64xf32> to vector<2x64xf32>
    %29 = vector.extract_strided_slice %27 {offsets = [1, 0], sizes = [2, 64], strides = [1, 1]} : vector<4x64xf32> to vector<2x64xf32>
    %30 = vector.extract_strided_slice %27 {offsets = [2, 0], sizes = [2, 64], strides = [1, 1]} : vector<4x64xf32> to vector<2x64xf32>
    %31 = vector.extract_strided_slice %18 {offsets = [2, 0, 0], sizes = [1, 4, 64], strides = [1, 1, 1]} : vector<4x4x64xf32> to vector<1x4x64xf32>
    %32 = vector.shape_cast %31 : vector<1x4x64xf32> to vector<4x64xf32>
    %33 = vector.extract_strided_slice %32 {offsets = [0, 0], sizes = [2, 64], strides = [1, 1]} : vector<4x64xf32> to vector<2x64xf32>
    %34 = vector.extract_strided_slice %32 {offsets = [1, 0], sizes = [2, 64], strides = [1, 1]} : vector<4x64xf32> to vector<2x64xf32>
    %35 = vector.extract_strided_slice %32 {offsets = [2, 0], sizes = [2, 64], strides = [1, 1]} : vector<4x64xf32> to vector<2x64xf32>
    %36 = tpu.concatenate %23, %24, %25, %28, %29, %30, %33, %34, %35 in 1 : vector<2x64xf32>, vector<2x64xf32>, vector<2x64xf32>, vector<2x64xf32>, vector<2x64xf32>, vector<2x64xf32>, vector<2x64xf32>, vector<2x64xf32>, vector<2x64xf32> -> vector<2x576xf32>
    %37 = arith.truncf %36 : vector<2x576xf32> to vector<2x576xbf16>
    %cst_19 = arith.constant dense<0.000000e+00> : vector<2x128xf32>
    %38 = tpu.matmul %37, %20, %cst_19 {dimension_numbers = #tpu.dot_dimension_numbers<[1], [0], [0], [1], [0, 0, 1, 1], [], []>} : vector<2x576xbf16>, vector<576x128xbf16>, vector<2x128xf32> -> vector<2x128xf32>
    %cst_20 = arith.constant 0.000000e+00 : f32
    %39 = vector.broadcast %cst_20 : f32 to vector<2x128xf32>
    %40 = arith.maximumf %38, %39 : vector<2x128xf32>
    %c1_21 = arith.constant 1 : index
    %c1_22 = arith.constant 1 : index
    %c0_23 = arith.constant 0 : index
    %41 = vector.load %arg6[%c1_21, %c1_22, %c0_23] : memref<4x4x128xf32, #tpu.memory_space<vmem>>, vector<1x2x128xf32>
    %42 = vector.shape_cast %41 : vector<1x2x128xf32> to vector<2x128xf32>
    %43 = vector.shape_cast %40 : vector<2x128xf32> to vector<1x2x128xf32>
    tpu.vector_store %arg6[%c1_21, %c1_22, %c0_23], %43 {strides = array<i32>} : memref<4x4x128xf32, #tpu.memory_space<vmem>>, vector<1x2x128xf32>,
    %44 = vector.extract_strided_slice %18 {offsets = [1, 0, 0], sizes = [1, 4, 64], strides = [1, 1, 1]} : vector<4x4x64xf32> to vector<1x4x64xf32>
    %45 = vector.shape_cast %44 : vector<1x4x64xf32> to vector<4x64xf32>
    %46 = vector.extract_strided_slice %45 {offsets = [0, 0], sizes = [2, 64], strides = [1, 1]} : vector<4x64xf32> to vector<2x64xf32>
    %47 = vector.extract_strided_slice %45 {offsets = [1, 0], sizes = [2, 64], strides = [1, 1]} : vector<4x64xf32> to vector<2x64xf32>
    %48 = vector.extract_strided_slice %45 {offsets = [2, 0], sizes = [2, 64], strides = [1, 1]} : vector<4x64xf32> to vector<2x64xf32>
    %49 = vector.extract_strided_slice %18 {offsets = [2, 0, 0], sizes = [1, 4, 64], strides = [1, 1, 1]} : vector<4x4x64xf32> to vector<1x4x64xf32>
    %50 = vector.shape_cast %49 : vector<1x4x64xf32> to vector<4x64xf32>
    %51 = vector.extract_strided_slice %50 {offsets = [0, 0], sizes = [2, 64], strides = [1, 1]} : vector<4x64xf32> to vector<2x64xf32>
    %52 = vector.extract_strided_slice %50 {offsets = [1, 0], sizes = [2, 64], strides = [1, 1]} : vector<4x64xf32> to vector<2x64xf32>
    %53 = vector.extract_strided_slice %50 {offsets = [2, 0], sizes = [2, 64], strides = [1, 1]} : vector<4x64xf32> to vector<2x64xf32>
    %54 = vector.extract_strided_slice %18 {offsets = [3, 0, 0], sizes = [1, 4, 64], strides = [1, 1, 1]} : vector<4x4x64xf32> to vector<1x4x64xf32>
    %55 = vector.shape_cast %54 : vector<1x4x64xf32> to vector<4x64xf32>
    %56 = vector.extract_strided_slice %55 {offsets = [0, 0], sizes = [2, 64], strides = [1, 1]} : vector<4x64xf32> to vector<2x64xf32>
    %57 = vector.extract_strided_slice %55 {offsets = [1, 0], sizes = [2, 64], strides = [1, 1]} : vector<4x64xf32> to vector<2x64xf32>
    %58 = vector.extract_strided_slice %55 {offsets = [2, 0], sizes = [2, 64], strides = [1, 1]} : vector<4x64xf32> to vector<2x64xf32>
    %59 = tpu.concatenate %46, %47, %48, %51, %52, %53, %56, %57, %58 in 1 : vector<2x64xf32>, vector<2x64xf32>, vector<2x64xf32>, vector<2x64xf32>, vector<2x64xf32>, vector<2x64xf32>, vector<2x64xf32>, vector<2x64xf32>, vector<2x64xf32> -> vector<2x576xf32>
    %60 = arith.truncf %59 : vector<2x576xf32> to vector<2x576xbf16>
    %cst_24 = arith.constant dense<0.000000e+00> : vector<2x128xf32>
    %61 = tpu.matmul %60, %20, %cst_24 {dimension_numbers = #tpu.dot_dimension_numbers<[1], [0], [0], [1], [0, 0, 1, 1], [], []>} : vector<2x576xbf16>, vector<576x128xbf16>, vector<2x128xf32> -> vector<2x128xf32>
    %cst_25 = arith.constant 0.000000e+00 : f32
    %62 = vector.broadcast %cst_25 : f32 to vector<2x128xf32>
    %63 = arith.maximumf %61, %62 : vector<2x128xf32>
    %c2 = arith.constant 2 : index
    %c1_26 = arith.constant 1 : index
    %c0_27 = arith.constant 0 : index
    %64 = vector.load %arg6[%c2, %c1_26, %c0_27] : memref<4x4x128xf32, #tpu.memory_space<vmem>>, vector<1x2x128xf32>
    %65 = vector.shape_cast %64 : vector<1x2x128xf32> to vector<2x128xf32>
    %66 = vector.shape_cast %63 : vector<2x128xf32> to vector<1x2x128xf32>
    tpu.vector_store %arg6[%c2, %c1_26, %c0_27], %66 {strides = array<i32>} : memref<4x4x128xf32, #tpu.memory_space<vmem>>, vector<1x2x128xf32>,
    %c0_28 = arith.constant 0 : index
    %c0_29 = arith.constant 0 : index
    %c0_30 = arith.constant 0 : index
    %67 = vector.load %arg6[%c0_28, %c0_29, %c0_30] : memref<4x4x128xf32, #tpu.memory_space<vmem>>, vector<4x4x128xf32>
    %c0_31 = arith.constant 0 : index
    %c0_32 = arith.constant 0 : index
    %68 = vector.load %arg3[%c0_31, %c0_32] : memref<1152x128xf32, #tpu.memory_space<vmem>>, vector<1152x128xf32>
    %69 = arith.truncf %68 : vector<1152x128xf32> to vector<1152x128xbf16>
    %70 = vector.extract_strided_slice %67 {offsets = [0, 0, 0], sizes = [1, 4, 128], strides = [1, 1, 1]} : vector<4x4x128xf32> to vector<1x4x128xf32>
    %71 = vector.shape_cast %70 : vector<1x4x128xf32> to vector<4x128xf32>
    %72 = vector.extract_strided_slice %71 {offsets = [0, 0], sizes = [2, 128], strides = [1, 1]} : vector<4x128xf32> to vector<2x128xf32>
    %73 = vector.extract_strided_slice %71 {offsets = [1, 0], sizes = [2, 128], strides = [1, 1]} : vector<4x128xf32> to vector<2x128xf32>
    %74 = vector.extract_strided_slice %71 {offsets = [2, 0], sizes = [2, 128], strides = [1, 1]} : vector<4x128xf32> to vector<2x128xf32>
    %75 = vector.extract_strided_slice %67 {offsets = [1, 0, 0], sizes = [1, 4, 128], strides = [1, 1, 1]} : vector<4x4x128xf32> to vector<1x4x128xf32>
    %76 = vector.shape_cast %75 : vector<1x4x128xf32> to vector<4x128xf32>
    %77 = vector.extract_strided_slice %76 {offsets = [0, 0], sizes = [2, 128], strides = [1, 1]} : vector<4x128xf32> to vector<2x128xf32>
    %78 = vector.extract_strided_slice %76 {offsets = [1, 0], sizes = [2, 128], strides = [1, 1]} : vector<4x128xf32> to vector<2x128xf32>
    %79 = vector.extract_strided_slice %76 {offsets = [2, 0], sizes = [2, 128], strides = [1, 1]} : vector<4x128xf32> to vector<2x128xf32>
    %80 = vector.extract_strided_slice %67 {offsets = [2, 0, 0], sizes = [1, 4, 128], strides = [1, 1, 1]} : vector<4x4x128xf32> to vector<1x4x128xf32>
    %81 = vector.shape_cast %80 : vector<1x4x128xf32> to vector<4x128xf32>
    %82 = vector.extract_strided_slice %81 {offsets = [0, 0], sizes = [2, 128], strides = [1, 1]} : vector<4x128xf32> to vector<2x128xf32>
    %83 = vector.extract_strided_slice %81 {offsets = [1, 0], sizes = [2, 128], strides = [1, 1]} : vector<4x128xf32> to vector<2x128xf32>
    %84 = vector.extract_strided_slice %81 {offsets = [2, 0], sizes = [2, 128], strides = [1, 1]} : vector<4x128xf32> to vector<2x128xf32>
    %85 = tpu.concatenate %72, %73, %74, %77, %78, %79, %82, %83, %84 in 1 : vector<2x128xf32>, vector<2x128xf32>, vector<2x128xf32>, vector<2x128xf32>, vector<2x128xf32>, vector<2x128xf32>, vector<2x128xf32>, vector<2x128xf32>, vector<2x128xf32> -> vector<2x1152xf32>
    %86 = arith.truncf %85 : vector<2x1152xf32> to vector<2x1152xbf16>
    %cst_33 = arith.constant dense<0.000000e+00> : vector<2x128xf32>
    %87 = tpu.matmul %86, %69, %cst_33 {dimension_numbers = #tpu.dot_dimension_numbers<[1], [0], [0], [1], [0, 0, 1, 1], [], []>} : vector<2x1152xbf16>, vector<1152x128xbf16>, vector<2x128xf32> -> vector<2x128xf32>
    %cst_34 = arith.constant 0.000000e+00 : f32
    %88 = vector.broadcast %cst_34 : f32 to vector<2x128xf32>
    %89 = arith.maximumf %87, %88 : vector<2x128xf32>
    %c0_35 = arith.constant 0 : index
    %c0_36 = arith.constant 0 : index
    %c0_37 = arith.constant 0 : index
    %c0_38 = arith.constant 0 : index
    %90 = vector.load %arg4[%c0_35, %c0_36, %c0_37, %c0_38] : memref<1x2x2x128xf32, #tpu.memory_space<vmem>>, vector<1x1x2x128xf32>
    %91 = vector.shape_cast %90 : vector<1x1x2x128xf32> to vector<2x128xf32>
    %92 = vector.shape_cast %89 : vector<2x128xf32> to vector<1x1x2x128xf32>
    tpu.vector_store %arg4[%c0_35, %c0_36, %c0_37, %c0_38], %92 {strides = array<i32>} : memref<1x2x2x128xf32, #tpu.memory_space<vmem>>, vector<1x1x2x128xf32>,
    %93 = vector.extract_strided_slice %67 {offsets = [1, 0, 0], sizes = [1, 4, 128], strides = [1, 1, 1]} : vector<4x4x128xf32> to vector<1x4x128xf32>
    %94 = vector.shape_cast %93 : vector<1x4x128xf32> to vector<4x128xf32>
    %95 = vector.extract_strided_slice %94 {offsets = [0, 0], sizes = [2, 128], strides = [1, 1]} : vector<4x128xf32> to vector<2x128xf32>
    %96 = vector.extract_strided_slice %94 {offsets = [1, 0], sizes = [2, 128], strides = [1, 1]} : vector<4x128xf32> to vector<2x128xf32>
    %97 = vector.extract_strided_slice %94 {offsets = [2, 0], sizes = [2, 128], strides = [1, 1]} : vector<4x128xf32> to vector<2x128xf32>
    %98 = vector.extract_strided_slice %67 {offsets = [2, 0, 0], sizes = [1, 4, 128], strides = [1, 1, 1]} : vector<4x4x128xf32> to vector<1x4x128xf32>
    %99 = vector.shape_cast %98 : vector<1x4x128xf32> to vector<4x128xf32>
    %100 = vector.extract_strided_slice %99 {offsets = [0, 0], sizes = [2, 128], strides = [1, 1]} : vector<4x128xf32> to vector<2x128xf32>
    %101 = vector.extract_strided_slice %99 {offsets = [1, 0], sizes = [2, 128], strides = [1, 1]} : vector<4x128xf32> to vector<2x128xf32>
    %102 = vector.extract_strided_slice %99 {offsets = [2, 0], sizes = [2, 128], strides = [1, 1]} : vector<4x128xf32> to vector<2x128xf32>
    %103 = vector.extract_strided_slice %67 {offsets = [3, 0, 0], sizes = [1, 4, 128], strides = [1, 1, 1]} : vector<4x4x128xf32> to vector<1x4x128xf32>
    %104 = vector.shape_cast %103 : vector<1x4x128xf32> to vector<4x128xf32>
    %105 = vector.extract_strided_slice %104 {offsets = [0, 0], sizes = [2, 128], strides = [1, 1]} : vector<4x128xf32> to vector<2x128xf32>
    %106 = vector.extract_strided_slice %104 {offsets = [1, 0], sizes = [2, 128], strides = [1, 1]} : vector<4x128xf32> to vector<2x128xf32>
    %107 = vector.extract_strided_slice %104 {offsets = [2, 0], sizes = [2, 128], strides = [1, 1]} : vector<4x128xf32> to vector<2x128xf32>
    %108 = tpu.concatenate %95, %96, %97, %100, %101, %102, %105, %106, %107 in 1 : vector<2x128xf32>, vector<2x128xf32>, vector<2x128xf32>, vector<2x128xf32>, vector<2x128xf32>, vector<2x128xf32>, vector<2x128xf32>, vector<2x128xf32>, vector<2x128xf32> -> vector<2x1152xf32>
    %109 = arith.truncf %108 : vector<2x1152xf32> to vector<2x1152xbf16>
    %cst_39 = arith.constant dense<0.000000e+00> : vector<2x128xf32>
    %110 = tpu.matmul %109, %69, %cst_39 {dimension_numbers = #tpu.dot_dimension_numbers<[1], [0], [0], [1], [0, 0, 1, 1], [], []>} : vector<2x1152xbf16>, vector<1152x128xbf16>, vector<2x128xf32> -> vector<2x128xf32>
    %cst_40 = arith.constant 0.000000e+00 : f32
    %111 = vector.broadcast %cst_40 : f32 to vector<2x128xf32>
    %112 = arith.maximumf %110, %111 : vector<2x128xf32>
    %c0_41 = arith.constant 0 : index
    %c1_42 = arith.constant 1 : index
    %c0_43 = arith.constant 0 : index
    %c0_44 = arith.constant 0 : index
    %113 = vector.load %arg4[%c0_41, %c1_42, %c0_43, %c0_44] : memref<1x2x2x128xf32, #tpu.memory_space<vmem>>, vector<1x1x2x128xf32>
    %114 = vector.shape_cast %113 : vector<1x1x2x128xf32> to vector<2x128xf32>
    %115 = vector.shape_cast %112 : vector<2x128xf32> to vector<1x1x2x128xf32>
    tpu.vector_store %arg4[%c0_41, %c1_42, %c0_43, %c0_44], %115 {strides = array<i32>} : memref<1x2x2x128xf32, #tpu.memory_space<vmem>>, vector<1x1x2x128xf32>,
    return
  }
  func.func @transform_0(%arg0: i32) -> (i32, i32, i32, i32, i32, i32) {
    %c0_i32 = arith.constant 0 : i32
    %c0_i32_0 = arith.constant 0 : i32
    %c0_i32_1 = arith.constant 0 : i32
    %c0_i32_2 = arith.constant 0 : i32
    %c0_i32_3 = arith.constant 0 : i32
    %c0_i32_4 = arith.constant 0 : i32
    return %arg0, %c0_i32, %c0_i32_0, %c0_i32_1, %c0_i32_2, %c0_i32_3 : i32, i32, i32, i32, i32, i32
  }
  func.func @transform_1(%arg0: i32) -> (i32, i32) {
    %c0_i32 = arith.constant 0 : i32
    %c0_i32_0 = arith.constant 0 : i32
    %c0_i32_1 = arith.constant 0 : i32
    return %c0_i32, %c0_i32_0 : i32, i32
  }
  func.func @transform_2(%arg0: i32) -> (i32, i32) {
    %c0_i32 = arith.constant 0 : i32
    %c0_i32_0 = arith.constant 0 : i32
    %c0_i32_1 = arith.constant 0 : i32
    return %c0_i32, %c0_i32_0 : i32, i32
  }
  func.func @transform_3(%arg0: i32) -> (i32, i32, i32, i32) {
    %c0_i32 = arith.constant 0 : i32
    %c0_i32_0 = arith.constant 0 : i32
    %c0_i32_1 = arith.constant 0 : i32
    %c0_i32_2 = arith.constant 0 : i32
    return %arg0, %c0_i32, %c0_i32_0, %c0_i32_1 : i32, i32, i32, i32
  }
}

</mosaic_0001>

<llo_original>
// kernel: unet_encoder.5
$region0: #{unet_encoder.5}
  #allocation0 [shape = 'u32[]', space=smem, size = 0x4, offset = 0x4, fixed_abs, tag = 'smem constant byte address 0x4 - core index']
  #allocation1 [shape = 'u32[144,128]{1,0:T(1,128)}', space=vmem, size = 0x12000, scoped, tag = 'internal scratch']
  #allocation2 [shape = 'f32[10,10,16]{2,1,0:T(8,128)}', space=vmem, size = 0x14000, scoped, tag = 'scratch operand']
  #allocation3 [shape = 'f32[10,10,32]{2,1,0:T(8,128)}', space=vmem, size = 0x14000, scoped, tag = 'scratch operand']
  %s0 = inlined_call_operand.vmem [shape: f32[2,2,2,8,8,16], index: 0, kind: input, shape index: {}]
  %s1 = inlined_call_operand.vmem [shape: f32[144,32], index: 1, kind: input, shape index: {}]
  %s2 = inlined_call_operand.vmem [shape: f32[288,32], index: 2, kind: input, shape index: {}]
  %s3 = inlined_call_operand.vmem [shape: f32[2,8,8,32], index: 3, kind: output, shape index: {}]
  %s4 = sld [smem:[#allocation0]]
  $region45: #{unet_encoder.5} parent=0
    _
  %s6 = ssub.s32 1, %s4
  %s7 = scalar_select 0, %s6, %s4
  loop: start=0, step=1, limit=4
  $region2: #{unet_encoder.5} parent=0 // loop_pre_header
    _
  $region3: #{unet_encoder.5} parent=0 // loop_header
    %s9 = sphi 0, %s13
    %p10 = scmp.ge.s32.totalorder %s9, 4
    %s19 = sphi 0, %s21
    %s22 = sphi 0, %s19
    %s23 = sphi 0, %s22
    %s39 = sphi 0, %s23
    %s43 = sphi 0, %s43
    %s45 = sphi 0, %s43
    %s46 = sphi 0, %s45
    %s60 = sphi 0, %s46
    %s64 = sphi 0, %s64
    %s66 = sphi 0, %s64
    %s67 = sphi 0, %s66
    %s81 = sphi 0, %s67
    %s87 = sphi 0, %s89
    %s90 = sphi 0, %s87
    %s91 = sphi 0, %s90
    %s107 = sphi 0, %s91
  $region4: #{unet_encoder.5} parent=0 // loop_header_branch
    %12 = sbr.rel (%p10) target = $region8
  $region5: #{unet_encoder.5} parent=0 // loop_body
    %s14 = ssub.s32 %s9, 1
    %s15 = ssub.s32 %s9, 2
    %s16 = sadd.s32 %s9, 1
    %s17 = ssub.s32 %s9, %s16
    %p18 = scmp.eq.s32.totalorder %s17, 0
    %s20 = sadd.s32 %s19, 1
    %s21 = scalar_select %p18, %s19, %s20
    %p24 = pneg %p18
    %p25 = scmp.eq.s32.totalorder %s9, 1
    %p26 = por %p24, %p25
    %p27 = scmp.ne.s32.totalorder %s19, %s22
    %p28 = scmp.eq.s32.totalorder %s9, 0
    %p29 = por %p27, %p28
    %p30 = scmp.ne.s32.totalorder %s19, %s22
    %p31 = scmp.eq.s32.totalorder %s14, 1
    %p32 = por %p30, %p31
    %p33 = scmp.ne.s32.totalorder %s22, %s23
    %p34 = scmp.eq.s32.totalorder %s14, 0
    %p35 = por %p33, %p34
    %p36 = scmp.ne.s32.totalorder %s22, %s23
    %p37 = scmp.eq.s32.totalorder %s15, 1
    %p38 = por %p36, %p37
    %p40 = scmp.ne.s32.totalorder %s23, %s39
    %p41 = scmp.eq.s32.totalorder %s15, 0
    %p42 = por %p40, %p41
    %s44 = sadd.s32 %s43, 1
    %p47 = scmp.eq.s32.totalorder %s9, 1
    %p48 = scmp.ne.s32.totalorder %s43, %s45
    %p49 = scmp.eq.s32.totalorder %s9, 0
    %p50 = por %p48, %p49
    %p51 = scmp.ne.s32.totalorder %s43, %s45
    %p52 = scmp.eq.s32.totalorder %s14, 1
    %p53 = por %p51, %p52
    %p54 = scmp.ne.s32.totalorder %s45, %s46
    %p55 = scmp.eq.s32.totalorder %s14, 0
    %p56 = por %p54, %p55
    %p57 = scmp.ne.s32.totalorder %s45, %s46
    %p58 = scmp.eq.s32.totalorder %s15, 1
    %p59 = por %p57, %p58
    %p61 = scmp.ne.s32.totalorder %s46, %s60
    %p62 = scmp.eq.s32.totalorder %s15, 0
    %p63 = por %p61, %p62
    %s65 = sadd.s32 %s64, 1
    %p68 = scmp.eq.s32.totalorder %s9, 1
    %p69 = scmp.ne.s32.totalorder %s64, %s66
    %p70 = scmp.eq.s32.totalorder %s9, 0
    %p71 = por %p69, %p70
    %p72 = scmp.ne.s32.totalorder %s64, %s66
    %p73 = scmp.eq.s32.totalorder %s14, 1
    %p74 = por %p72, %p73
    %p75 = scmp.ne.s32.totalorder %s66, %s67
    %p76 = scmp.eq.s32.totalorder %s14, 0
    %p77 = por %p75, %p76
    %p78 = scmp.ne.s32.totalorder %s66, %s67
    %p79 = scmp.eq.s32.totalorder %s15, 1
    %p80 = por %p78, %p79
    %p82 = scmp.ne.s32.totalorder %s67, %s81
    %p83 = scmp.eq.s32.totalorder %s15, 0
    %p84 = por %p82, %p83
    %s85 = ssub.s32 %s9, %s16
    %p86 = scmp.eq.s32.totalorder %s85, 0
    %s88 = sadd.s32 %s87, 1
    %s89 = scalar_select %p86, %s87, %s88
    %p92 = pneg %p86
    %p93 = scmp.eq.s32.totalorder %s9, 1
    %p94 = por %p92, %p93
    %p95 = scmp.ne.s32.totalorder %s87, %s90
    %p96 = scmp.eq.s32.totalorder %s9, 0
    %p97 = por %p95, %p96
    %p98 = scmp.ne.s32.totalorder %s87, %s90
    %p99 = scmp.eq.s32.totalorder %s14, 1
    %p100 = por %p98, %p99
    %p101 = scmp.ne.s32.totalorder %s90, %s91
    %p102 = scmp.eq.s32.totalorder %s14, 0
    %p103 = por %p101, %p102
    %p104 = scmp.ne.s32.totalorder %s90, %s91
    %p105 = scmp.eq.s32.totalorder %s15, 1
    %p106 = por %p104, %p105
    %p108 = scmp.ne.s32.totalorder %s91, %s107
    %p109 = scmp.eq.s32.totalorder %s15, 0
    %p110 = por %p108, %p109
    %p111 = scmp.le.s32.totalorder 1, %s9
    %p112 = scmp.lt.s32.totalorder %s9, 3
    %p113 = pnand %p111, %p112
    %p114 = pneg %p113
    // Predicated region
    $region9: #{unet_encoder.5} parent=5 // pred_check
      _
    $region10: #{unet_encoder.5} parent=5 // pred_check_branch
      %116 = sbr.rel (%p113) target = $region12
    $region11: #{unet_encoder.5} parent=5 // pred_region
      %s117 = ssub.s32 %s9, 1
      // Predicated region
      $region13: #{unet_encoder.5} parent=11 // pred_check
        %p118 = pneg %p56
      $region14: #{unet_encoder.5} parent=11 // pred_check_branch
        %120 = sbr.rel (%p118) target = $region16
      $region15: #{unet_encoder.5} parent=11 // pred_region
        _
      $region16: #{unet_encoder.5} parent=11 // pred_fallthru
        _
      // Predicated region
      $region17: #{unet_encoder.5} parent=11 // pred_check
        %p121 = pneg %p77
      $region18: #{unet_encoder.5} parent=11 // pred_check_branch
        %123 = sbr.rel (%p121) target = $region20
      $region19: #{unet_encoder.5} parent=11 // pred_region
        _
      $region20: #{unet_encoder.5} parent=11 // pred_fallthru
        _
    $region12: #{unet_encoder.5} parent=5 // pred_fallthru
      _
    %p124 = scmp.lt.s32.totalorder %s9, 2
    // Predicated region
    $region21: #{unet_encoder.5} parent=5 // pred_check
      %p125 = pneg %p124
    $region22: #{unet_encoder.5} parent=5 // pred_check_branch
      %127 = sbr.rel (%p125) target = $region24
    $region23: #{unet_encoder.5} parent=5 // pred_region
      // Predicated region
      $region25: #{unet_encoder.5} parent=23 // pred_check
        %p128 = pneg %p29
      $region26: #{unet_encoder.5} parent=23 // pred_check_branch
        %130 = sbr.rel (%p128) target = $region28
      $region27: #{unet_encoder.5} parent=23 // pred_region
        %p131 = scmp.lt.s32.totalorder %s9, 1
        %s132 = scalar_select %p131, %s9, 1
        %s133 = smul.addr %s132, 32
        %s134 = smul.addr %s133, 8
        %s135 = scalar_lea.vmem %s0, %s134
      $region28: #{unet_encoder.5} parent=23 // pred_fallthru
        _
    $region24: #{unet_encoder.5} parent=5 // pred_fallthru
      _
    %p136 = scmp.le.s32.totalorder 1, %s9
    %p137 = scmp.lt.s32.totalorder %s9, 3
    %p138 = pnand %p136, %p137
    %p139 = pneg %p138
    // Predicated region
    $region29: #{unet_encoder.5} parent=5 // pred_check
      _
    $region30: #{unet_encoder.5} parent=5 // pred_check_branch
      %141 = sbr.rel (%p138) target = $region32
    $region31: #{unet_encoder.5} parent=5 // pred_region
      %s142 = ssub.s32 %s9, 1
      %p143 = scmp.lt.s32.totalorder %s14, 1
      %s144 = scalar_select %p143, %s14, 1
      %s145 = smul.addr %s144, 32
      %s146 = smul.addr %s145, 8
      %s147 = scalar_lea.vmem %s0, %s146
      %p148 = pneg %p35
      %p149 = pneg %p32
      %p150 = pneg %p56
      %p151 = pneg %p53
      %p152 = pneg %p77
      %p153 = pneg %p74
      %p154 = pneg %p103
      %p155 = pneg %p100
      %p156 = scmp.lt.s32.totalorder %s14, 1
      %s157 = scalar_select %p156, %s14, 1
      %s158 = smul.addr %s157, 8
      %s159 = smul.addr %s158, 8
      %s160 = scalar_lea.vmem %s3, %s159
      %p161 = scmp.lt.s32.totalorder %s14, 1
      %s162 = scalar_select %p161, %s14, 1
      %s163 = smul.addr %s162, 32
      %s164 = smul.addr %s163, 8
      %s165 = scalar_lea.vmem %s0, %s164
      %p166 = scmp.lt.s32.totalorder %s14, 1
      %s167 = scalar_select %p166, %s14, 1
      %s168 = smul.addr %s167, 8
      %s169 = smul.addr %s168, 8
      %s170 = scalar_lea.vmem %s3, %s169
      %v172 = vld [vmem:[%s165] sm:$0xff]
      %v173 = vld [vmem:[%s165 + $0x8] sm:$0xff]
      %v174 = vld [vmem:[%s165 + $0x10] sm:$0xff]
      %v175 = vld [vmem:[%s165 + $0x18] sm:$0xff]
      %v176 = vld [vmem:[%s165 + $0x20] sm:$0xff]
      %v177 = vld [vmem:[%s165 + $0x28] sm:$0xff]
      %v178 = vld [vmem:[%s165 + $0x30] sm:$0xff]
      %v179 = vld [vmem:[%s165 + $0x38] sm:$0xff]
      %v180 = vld [vmem:[%s165 + $0x40] sm:$0xff]
      %v181 = vld [vmem:[%s165 + $0x48] sm:$0xff]
      %v182 = vld [vmem:[%s165 + $0x50] sm:$0xff]
      %v183 = vld [vmem:[%s165 + $0x58] sm:$0xff]
      %v184 = vld [vmem:[%s165 + $0x60] sm:$0xff]
      %v185 = vld [vmem:[%s165 + $0x68] sm:$0xff]
      %v186 = vld [vmem:[%s165 + $0x70] sm:$0xff]
      %v187 = vld [vmem:[%s165 + $0x78] sm:$0xff]
      %v188 = vld [vmem:[%s165 + $0x80] sm:$0xff]
      %v189 = vld [vmem:[%s165 + $0x88] sm:$0xff]
      %v190 = vld [vmem:[%s165 + $0x90] sm:$0xff]
      %v191 = vld [vmem:[%s165 + $0x98] sm:$0xff]
      %v192 = vld [vmem:[%s165 + $0xa0] sm:$0xff]
      %v193 = vld [vmem:[%s165 + $0xa8] sm:$0xff]
      %v194 = vld [vmem:[%s165 + $0xb0] sm:$0xff]
      %v195 = vld [vmem:[%s165 + $0xb8] sm:$0xff]
      %v196 = vld [vmem:[%s165 + $0xc0] sm:$0xff]
      %v197 = vld [vmem:[%s165 + $0xc8] sm:$0xff]
      %v198 = vld [vmem:[%s165 + $0xd0] sm:$0xff]
      %v199 = vld [vmem:[%s165 + $0xd8] sm:$0xff]
      %v200 = vld [vmem:[%s165 + $0xe0] sm:$0xff]
      %v201 = vld [vmem:[%s165 + $0xe8] sm:$0xff]
      %v202 = vld [vmem:[%s165 + $0xf0] sm:$0xff]
      %v203 = vld [vmem:[%s165 + $0xf8] sm:$0xff]
      %v204 = vmax.f32 %v172, %v180
      %v205 = vmax.f32 %v173, %v181
      %v206 = vmax.f32 %v174, %v182
      %v207 = vmax.f32 %v175, %v183
      %v208 = vmax.f32 %v176, %v184
      %v209 = vmax.f32 %v177, %v185
      %v210 = vmax.f32 %v178, %v186
      %v211 = vmax.f32 %v179, %v187
      %v212 = vmax.f32 %v188, %v196
      %v213 = vmax.f32 %v189, %v197
      %v214 = vmax.f32 %v190, %v198
      %v215 = vmax.f32 %v191, %v199
      %v216 = vmax.f32 %v192, %v200
      %v217 = vmax.f32 %v193, %v201
      %v218 = vmax.f32 %v194, %v202
      %v219 = vmax.f32 %v195, %v203
      %v220 = vmax.f32 %v204, %v212
      %v221 = vmax.f32 %v205, %v213
      %v222 = vmax.f32 %v206, %v214
      %v223 = vmax.f32 %v207, %v215
      %v224 = vmax.f32 %v208, %v216
      %v225 = vmax.f32 %v209, %v217
      %v226 = vmax.f32 %v210, %v218
      %v227 = vmax.f32 %v211, %v219
      %vm228 = vcmask 130048
      %229 = vst.msk [vmem:[#allocation2] sm:$0xff] %vm228, 0.0
      %vm230 = vcmask 123904
      %231 = vst.msk [vmem:[#allocation2 + $0x8] sm:$0x3] %vm230, 0.0
      %232 = vst.msk [vmem:[#allocation2 + $0x10] sm:$0xff] %vm228, 0.0
      %233 = vst.msk [vmem:[#allocation2 + $0x18] sm:$0x3] %vm230, 0.0
      %234 = vst.msk [vmem:[#allocation2 + $0x20] sm:$0xff] %vm228, 0.0
      %235 = vst.msk [vmem:[#allocation2 + $0x28] sm:$0x3] %vm230, 0.0
      %236 = vst.msk [vmem:[#allocation2 + $0x30] sm:$0xff] %vm228, 0.0
      %237 = vst.msk [vmem:[#allocation2 + $0x38] sm:$0x3] %vm230, 0.0
      %238 = vst.msk [vmem:[#allocation2 + $0x40] sm:$0xff] %vm228, 0.0
      %239 = vst.msk [vmem:[#allocation2 + $0x48] sm:$0x3] %vm230, 0.0
      %240 = vst.msk [vmem:[#allocation2 + $0x50] sm:$0xff] %vm228, 0.0
      %241 = vst.msk [vmem:[#allocation2 + $0x58] sm:$0x3] %vm230, 0.0
      %242 = vst.msk [vmem:[#allocation2 + $0x60] sm:$0xff] %vm228, 0.0
      %243 = vst.msk [vmem:[#allocation2 + $0x68] sm:$0x3] %vm230, 0.0
      %244 = vst.msk [vmem:[#allocation2 + $0x70] sm:$0xff] %vm228, 0.0
      %245 = vst.msk [vmem:[#allocation2 + $0x78] sm:$0x3] %vm230, 0.0
      %246 = vst.msk [vmem:[#allocation2 + $0x80] sm:$0xff] %vm228, 0.0
      %247 = vst.msk [vmem:[#allocation2 + $0x88] sm:$0x3] %vm230, 0.0
      %248 = vst.msk [vmem:[#allocation2 + $0x90] sm:$0xff] %vm228, 0.0
      %249 = vst.msk [vmem:[#allocation2 + $0x98] sm:$0x3] %vm230, 0.0
      %s250 = scalar_lea.vmem [#allocation2], 16
      %251 = vst.msk [vmem:[%s250 + $0x1] sm:$0xff] %vm228, %v220
      %252 = vst.msk [vmem:[%s250 + $0x11] sm:$0xff] %vm228, %v221
      %253 = vst.msk [vmem:[%s250 + $0x21] sm:$0xff] %vm228, %v222
      %254 = vst.msk [vmem:[%s250 + $0x31] sm:$0xff] %vm228, %v223
      %255 = vst.msk [vmem:[%s250 + $0x41] sm:$0xff] %vm228, %v224
      %256 = vst.msk [vmem:[%s250 + $0x51] sm:$0xff] %vm228, %v225
      %257 = vst.msk [vmem:[%s250 + $0x61] sm:$0xff] %vm228, %v226
      %258 = vst.msk [vmem:[%s250 + $0x71] sm:$0xff] %vm228, %v227
      %vm259 = vcmask 261120
      %260 = vst.msk [vmem:[#allocation3] sm:$0xff] %vm259, 0.0
      %vm261 = vcmask 254976
      %262 = vst.msk [vmem:[#allocation3 + $0x8] sm:$0x3] %vm261, 0.0
      %263 = vst.msk [vmem:[#allocation3 + $0x10] sm:$0xff] %vm259, 0.0
      %264 = vst.msk [vmem:[#allocation3 + $0x18] sm:$0x3] %vm261, 0.0
      %265 = vst.msk [vmem:[#allocation3 + $0x20] sm:$0xff] %vm259, 0.0
      %266 = vst.msk [vmem:[#allocation3 + $0x28] sm:$0x3] %vm261, 0.0
      %267 = vst.msk [vmem:[#allocation3 + $0x30] sm:$0xff] %vm259, 0.0
      %268 = vst.msk [vmem:[#allocation3 + $0x38] sm:$0x3] %vm261, 0.0
      %269 = vst.msk [vmem:[#allocation3 + $0x40] sm:$0xff] %vm259, 0.0
      %270 = vst.msk [vmem:[#allocation3 + $0x48] sm:$0x3] %vm261, 0.0
      %271 = vst.msk [vmem:[#allocation3 + $0x50] sm:$0xff] %vm259, 0.0
      %272 = vst.msk [vmem:[#allocation3 + $0x58] sm:$0x3] %vm261, 0.0
      %273 = vst.msk [vmem:[#allocation3 + $0x60] sm:$0xff] %vm259, 0.0
      %274 = vst.msk [vmem:[#allocation3 + $0x68] sm:$0x3] %vm261, 0.0
      %275 = vst.msk [vmem:[#allocation3 + $0x70] sm:$0xff] %vm259, 0.0
      %276 = vst.msk [vmem:[#allocation3 + $0x78] sm:$0x3] %vm261, 0.0
      %277 = vst.msk [vmem:[#allocation3 + $0x80] sm:$0xff] %vm259, 0.0
      %278 = vst.msk [vmem:[#allocation3 + $0x88] sm:$0x3] %vm261, 0.0
      %279 = vst.msk [vmem:[#allocation3 + $0x90] sm:$0xff] %vm259, 0.0
      %280 = vst.msk [vmem:[#allocation3 + $0x98] sm:$0x3] %vm261, 0.0
      %v281 = vld [vmem:[#allocation2] sm:$0xff]
      %v282 = vld [vmem:[#allocation2 + $0x8] sm:$0x3]
      %v283 = vld [vmem:[#allocation2 + $0x10] sm:$0xff]
      %v284 = vld [vmem:[#allocation2 + $0x18] sm:$0x3]
      %v285 = vld [vmem:[#allocation2 + $0x20] sm:$0xff]
      %v286 = vld [vmem:[#allocation2 + $0x28] sm:$0x3]
      %v287 = vld [vmem:[#allocation2 + $0x30] sm:$0xff]
      %v288 = vld [vmem:[#allocation2 + $0x38] sm:$0x3]
      %v289 = vld [vmem:[#allocation2 + $0x40] sm:$0xff]
      %v290 = vld [vmem:[#allocation2 + $0x48] sm:$0x3]
      %v291 = vld [vmem:[#allocation2 + $0x50] sm:$0xff]
      %v292 = vld [vmem:[#allocation2 + $0x58] sm:$0x3]
      %v293 = vld [vmem:[#allocation2 + $0x60] sm:$0xff]
      %v294 = vld [vmem:[#allocation2 + $0x68] sm:$0x3]
      %v295 = vld [vmem:[#allocation2 + $0x70] sm:$0xff]
      %v296 = vld [vmem:[#allocation2 + $0x78] sm:$0x3]
      %v297 = vld [vmem:[#allocation2 + $0x80] sm:$0xff]
      %v298 = vld [vmem:[#allocation2 + $0x88] sm:$0x3]
      %v299 = vld [vmem:[#allocation2 + $0x90] sm:$0xff]
      %v300 = vld [vmem:[#allocation2 + $0x98] sm:$0x3]
      %v301 = vld [vmem:[%s1] sm:$0xff]
      %v302 = vld [vmem:[%s1 + $0x8] sm:$0xff]
      %v303 = vld [vmem:[%s1 + $0x10] sm:$0xff]
      %v304 = vld [vmem:[%s1 + $0x18] sm:$0xff]
      %v305 = vld [vmem:[%s1 + $0x20] sm:$0xff]
      %v306 = vld [vmem:[%s1 + $0x28] sm:$0xff]
      %v307 = vld [vmem:[%s1 + $0x30] sm:$0xff]
      %v308 = vld [vmem:[%s1 + $0x38] sm:$0xff]
      %v309 = vld [vmem:[%s1 + $0x40] sm:$0xff]
      %v310 = vld [vmem:[%s1 + $0x48] sm:$0xff]
      %v311 = vld [vmem:[%s1 + $0x50] sm:$0xff]
      %v312 = vld [vmem:[%s1 + $0x58] sm:$0xff]
      %v313 = vld [vmem:[%s1 + $0x60] sm:$0xff]
      %v314 = vld [vmem:[%s1 + $0x68] sm:$0xff]
      %v315 = vld [vmem:[%s1 + $0x70] sm:$0xff]
      %v316 = vld [vmem:[%s1 + $0x78] sm:$0xff]
      %v317 = vld [vmem:[%s1 + $0x80] sm:$0xff]
      %v318 = vld [vmem:[%s1 + $0x88] sm:$0xff]
      %v319 = vpack.c.bf16 %v302, %v301
      %v320 = vpack.c.bf16 %v304, %v303
      %v321 = vpack.c.bf16 %v306, %v305
      %v322 = vpack.c.bf16 %v308, %v307
      %v323 = vpack.c.bf16 %v310, %v309
      %v324 = vpack.c.bf16 %v312, %v311
      %v325 = vpack.c.bf16 %v314, %v313
      %v326 = vpack.c.bf16 %v316, %v315
      %v327 = vpack.c.bf16 %v318, %v317
      %vm344 = vcmask 1046528
      %v345 = vrot.slane %v281, 1
      %v346 = vrot.slane %v282, 1
      %v347 = vsel %vm344, %v345, %v346
      %v348 = vrot.slane %v283, 1
      %v349 = vrot.slane %v284, 1
      %v350 = vsel %vm344, %v348, %v349
      %v351 = vrot.slane %v285, 1
      %v352 = vrot.slane %v286, 1
      %v353 = vsel %vm344, %v351, %v352
      %v354 = vrot.slane %v287, 1
      %v355 = vrot.slane %v288, 1
      %v356 = vsel %vm344, %v354, %v355
      %v357 = vrot.slane %v289, 1
      %v358 = vrot.slane %v290, 1
      %v359 = vsel %vm344, %v357, %v358
      %v360 = vrot.slane %v291, 1
      %v361 = vrot.slane %v292, 1
      %v362 = vsel %vm344, %v360, %v361
      %v363 = vrot.slane %v293, 1
      %v364 = vrot.slane %v294, 1
      %v365 = vsel %vm344, %v363, %v364
      %v366 = vrot.slane %v295, 1
      %v367 = vrot.slane %v296, 1
      %v368 = vsel %vm344, %v366, %v367
      %vm369 = vcmask 1045504
      %v370 = vrot.slane %v281, 2
      %v371 = vrot.slane %v282, 2
      %v372 = vsel %vm369, %v370, %v371
      %v373 = vrot.slane %v283, 2
      %v374 = vrot.slane %v284, 2
      %v375 = vsel %vm369, %v373, %v374
      %v376 = vrot.slane %v285, 2
      %v377 = vrot.slane %v286, 2
      %v378 = vsel %vm369, %v376, %v377
      %v379 = vrot.slane %v287, 2
      %v380 = vrot.slane %v288, 2
      %v381 = vsel %vm369, %v379, %v380
      %v382 = vrot.slane %v289, 2
      %v383 = vrot.slane %v290, 2
      %v384 = vsel %vm369, %v382, %v383
      %v385 = vrot.slane %v291, 2
      %v386 = vrot.slane %v292, 2
      %v387 = vsel %vm369, %v385, %v386
      %v388 = vrot.slane %v293, 2
      %v389 = vrot.slane %v294, 2
      %v390 = vsel %vm369, %v388, %v389
      %v391 = vrot.slane %v295, 2
      %v392 = vrot.slane %v296, 2
      %v393 = vsel %vm369, %v391, %v392
      %v396 = vrot.slane %v297, 1
      %v397 = vrot.slane %v298, 1
      %v398 = vsel %vm344, %v396, %v397
      %v399 = vrot.slane %v297, 2
      %v400 = vrot.slane %v298, 2
      %v401 = vsel %vm369, %v399, %v400
      %v404 = vrot.slane %v299, 1
      %v405 = vrot.slane %v300, 1
      %v406 = vsel %vm344, %v404, %v405
      %v407 = vrot.slane %v299, 2
      %v408 = vrot.slane %v300, 2
      %v409 = vsel %vm369, %v407, %v408
      %418 = vrot.lane.b32.xlu0 %v347, 16
      %v419 = vpop.permute.xlu0 %418
      %420 = vrot.lane.b32.xlu0 %v350, 16
      %v421 = vpop.permute.xlu0 %420
      %422 = vrot.lane.b32.xlu0 %v353, 16
      %v423 = vpop.permute.xlu0 %422
      %424 = vrot.lane.b32.xlu0 %v356, 16
      %v425 = vpop.permute.xlu0 %424
      %426 = vrot.lane.b32.xlu0 %v359, 16
      %v427 = vpop.permute.xlu0 %426
      %428 = vrot.lane.b32.xlu0 %v362, 16
      %v429 = vpop.permute.xlu0 %428
      %430 = vrot.lane.b32.xlu0 %v365, 16
      %v431 = vpop.permute.xlu0 %430
      %432 = vrot.lane.b32.xlu0 %v368, 16
      %v433 = vpop.permute.xlu0 %432
      %442 = vrot.lane.b32.xlu0 %v372, 32
      %v443 = vpop.permute.xlu0 %442
      %444 = vrot.lane.b32.xlu0 %v375, 32
      %v445 = vpop.permute.xlu0 %444
      %446 = vrot.lane.b32.xlu0 %v378, 32
      %v447 = vpop.permute.xlu0 %446
      %448 = vrot.lane.b32.xlu0 %v381, 32
      %v449 = vpop.permute.xlu0 %448
      %450 = vrot.lane.b32.xlu0 %v384, 32
      %v451 = vpop.permute.xlu0 %450
      %452 = vrot.lane.b32.xlu0 %v387, 32
      %v453 = vpop.permute.xlu0 %452
      %454 = vrot.lane.b32.xlu0 %v390, 32
      %v455 = vpop.permute.xlu0 %454
      %456 = vrot.lane.b32.xlu0 %v393, 32
      %v457 = vpop.permute.xlu0 %456
      %466 = vrot.lane.b32.xlu0 %v283, 48
      %v467 = vpop.permute.xlu0 %466
      %468 = vrot.lane.b32.xlu0 %v285, 48
      %v469 = vpop.permute.xlu0 %468
      %470 = vrot.lane.b32.xlu0 %v287, 48
      %v471 = vpop.permute.xlu0 %470
      %472 = vrot.lane.b32.xlu0 %v289, 48
      %v473 = vpop.permute.xlu0 %472
      %474 = vrot.lane.b32.xlu0 %v291, 48
      %v475 = vpop.permute.xlu0 %474
      %476 = vrot.lane.b32.xlu0 %v293, 48
      %v477 = vpop.permute.xlu0 %476
      %478 = vrot.lane.b32.xlu0 %v295, 48
      %v479 = vpop.permute.xlu0 %478
      %480 = vrot.lane.b32.xlu0 %v297, 48
      %v481 = vpop.permute.xlu0 %480
      %490 = vrot.lane.b32.xlu0 %v350, 64
      %v491 = vpop.permute.xlu0 %490
      %492 = vrot.lane.b32.xlu0 %v353, 64
      %v493 = vpop.permute.xlu0 %492
      %494 = vrot.lane.b32.xlu0 %v356, 64
      %v495 = vpop.permute.xlu0 %494
      %496 = vrot.lane.b32.xlu0 %v359, 64
      %v497 = vpop.permute.xlu0 %496
      %498 = vrot.lane.b32.xlu0 %v362, 64
      %v499 = vpop.permute.xlu0 %498
      %500 = vrot.lane.b32.xlu0 %v365, 64
      %v501 = vpop.permute.xlu0 %500
      %502 = vrot.lane.b32.xlu0 %v368, 64
      %v503 = vpop.permute.xlu0 %502
      %504 = vrot.lane.b32.xlu0 %v398, 64
      %v505 = vpop.permute.xlu0 %504
      %514 = vrot.lane.b32.xlu0 %v375, 80
      %v515 = vpop.permute.xlu0 %514
      %516 = vrot.lane.b32.xlu0 %v378, 80
      %v517 = vpop.permute.xlu0 %516
      %518 = vrot.lane.b32.xlu0 %v381, 80
      %v519 = vpop.permute.xlu0 %518
      %520 = vrot.lane.b32.xlu0 %v384, 80
      %v521 = vpop.permute.xlu0 %520
      %522 = vrot.lane.b32.xlu0 %v387, 80
      %v523 = vpop.permute.xlu0 %522
      %524 = vrot.lane.b32.xlu0 %v390, 80
      %v525 = vpop.permute.xlu0 %524
      %526 = vrot.lane.b32.xlu0 %v393, 80
      %v527 = vpop.permute.xlu0 %526
      %528 = vrot.lane.b32.xlu0 %v401, 80
      %v529 = vpop.permute.xlu0 %528
      %538 = vrot.lane.b32.xlu0 %v285, 96
      %v539 = vpop.permute.xlu0 %538
      %540 = vrot.lane.b32.xlu0 %v287, 96
      %v541 = vpop.permute.xlu0 %540
      %542 = vrot.lane.b32.xlu0 %v289, 96
      %v543 = vpop.permute.xlu0 %542
      %544 = vrot.lane.b32.xlu0 %v291, 96
      %v545 = vpop.permute.xlu0 %544
      %546 = vrot.lane.b32.xlu0 %v293, 96
      %v547 = vpop.permute.xlu0 %546
      %548 = vrot.lane.b32.xlu0 %v295, 96
      %v549 = vpop.permute.xlu0 %548
      %550 = vrot.lane.b32.xlu0 %v297, 96
      %v551 = vpop.permute.xlu0 %550
      %552 = vrot.lane.b32.xlu0 %v299, 96
      %v553 = vpop.permute.xlu0 %552
      %562 = vrot.lane.b32.xlu0 %v353, 112
      %v563 = vpop.permute.xlu0 %562
      %564 = vrot.lane.b32.xlu0 %v356, 112
      %v565 = vpop.permute.xlu0 %564
      %566 = vrot.lane.b32.xlu0 %v359, 112
      %v567 = vpop.permute.xlu0 %566
      %568 = vrot.lane.b32.xlu0 %v362, 112
      %v569 = vpop.permute.xlu0 %568
      %570 = vrot.lane.b32.xlu0 %v365, 112
      %v571 = vpop.permute.xlu0 %570
      %572 = vrot.lane.b32.xlu0 %v368, 112
      %v573 = vpop.permute.xlu0 %572
      %574 = vrot.lane.b32.xlu0 %v398, 112
      %v575 = vpop.permute.xlu0 %574
      %576 = vrot.lane.b32.xlu0 %v406, 112
      %v577 = vpop.permute.xlu0 %576
      %v586 = vsel %vm228, %v281, %v419
      %v587 = vsel %vm228, %v283, %v421
      %v588 = vsel %vm228, %v285, %v423
      %v589 = vsel %vm228, %v287, %v425
      %v590 = vsel %vm228, %v289, %v427
      %v591 = vsel %vm228, %v291, %v429
      %v592 = vsel %vm228, %v293, %v431
      %v593 = vsel %vm228, %v295, %v433
      %v594 = vsel %vm259, %v586, %v443
      %v595 = vsel %vm259, %v587, %v445
      %v596 = vsel %vm259, %v588, %v447
      %v597 = vsel %vm259, %v589, %v449
      %v598 = vsel %vm259, %v590, %v451
      %v599 = vsel %vm259, %v591, %v453
      %v600 = vsel %vm259, %v592, %v455
      %v601 = vsel %vm259, %v593, %v457
      %vm602 = vcmask 392192
      %v603 = vsel %vm602, %v594, %v467
      %v604 = vsel %vm602, %v595, %v469
      %v605 = vsel %vm602, %v596, %v471
      %v606 = vsel %vm602, %v597, %v473
      %v607 = vsel %vm602, %v598, %v475
      %v608 = vsel %vm602, %v599, %v477
      %v609 = vsel %vm602, %v600, %v479
      %v610 = vsel %vm602, %v601, %v481
      %vm611 = vcmask 523264
      %v612 = vsel %vm611, %v603, %v491
      %v613 = vsel %vm611, %v604, %v493
      %v614 = vsel %vm611, %v605, %v495
      %v615 = vsel %vm611, %v606, %v497
      %v616 = vsel %vm611, %v607, %v499
      %v617 = vsel %vm611, %v608, %v501
      %v618 = vsel %vm611, %v609, %v503
      %v619 = vsel %vm611, %v610, %v505
      %vm620 = vcmask 654336
      %v621 = vsel %vm620, %v612, %v515
      %v622 = vsel %vm620, %v613, %v517
      %v623 = vsel %vm620, %v614, %v519
      %v624 = vsel %vm620, %v615, %v521
      %v625 = vsel %vm620, %v616, %v523
      %v626 = vsel %vm620, %v617, %v525
      %v627 = vsel %vm620, %v618, %v527
      %v628 = vsel %vm620, %v619, %v529
      %vm629 = vcmask 785408
      %v630 = vsel %vm629, %v621, %v539
      %v631 = vsel %vm629, %v622, %v541
      %v632 = vsel %vm629, %v623, %v543
      %v633 = vsel %vm629, %v624, %v545
      %v634 = vsel %vm629, %v625, %v547
      %v635 = vsel %vm629, %v626, %v549
      %v636 = vsel %vm629, %v627, %v551
      %v637 = vsel %vm629, %v628, %v553
      %vm638 = vcmask 916480
      %v639 = vsel %vm638, %v630, %v563
      %v640 = vsel %vm638, %v631, %v565
      %v641 = vsel %vm638, %v632, %v567
      %v642 = vsel %vm638, %v633, %v569
      %v643 = vsel %vm638, %v634, %v571
      %v644 = vsel %vm638, %v635, %v573
      %v645 = vsel %vm638, %v636, %v575
      %v646 = vsel %vm638, %v637, %v577
      %v647 = vpack.c.bf16 %v640, %v639
      %v648 = vpack.c.bf16 %v381, %v378
      %v649 = vpack.c.bf16 %v642, %v641
      %v650 = vpack.c.bf16 %v387, %v384
      %v651 = vpack.c.bf16 %v644, %v643
      %v652 = vpack.c.bf16 %v393, %v390
      %v653 = vpack.c.bf16 %v646, %v645
      %v654 = vpack.c.bf16 %v409, %v401
      %v656 = vsel %vm228, %v648, 0
      %v659 = vsel %vm228, %v650, 0
      %v662 = vsel %vm228, %v652, 0
      %v665 = vsel %vm228, %v654, 0
      %667 = vmatprep.subr.bf16.mxu0 0
      %668 = vmatpush1.bf16.msra.mxu0 %v319
      %669 = vmatprep.subr.bf16.mxu0 0
      %670 = vmatpush1.bf16.msra.mxu0 %v320
      %671 = vmatprep.subr.bf16.mxu0 0
      %672 = vmatpush1.bf16.msra.mxu0 %v321
      %673 = vmatprep.subr.bf16.mxu0 0
      %674 = vmatpush1.bf16.msra.mxu0 %v322
      %675 = vmatprep.subr.bf16.mxu0 0
      %676 = vmatpush1.bf16.msra.mxu0 %v323
      %677 = vmatprep.subr.bf16.mxu0 0
      %678 = vmatpush1.bf16.msra.mxu0 %v324
      %679 = vmatprep.subr.bf16.mxu0 0
      %680 = vmatpush1.bf16.msra.mxu0 %v325
      %681 = vmatprep.subr.bf16.mxu0 0
      %682 = vmatpush1.bf16.msra.mxu0 %v326
      %683 = vmatprep.subr.bf16.mxu0 0
      %684 = vmatpush1.bf16.msra.mxu0 %v327
      %685 = vmatprep.subr.bf16.mxu0 0
      %686 = vmatpush1.bf16.msra.mxu0 0
      %687 = vmatprep.subr.bf16.mxu0 0
      %688 = vmatpush1.bf16.msra.mxu0 0
      %689 = vmatprep.subr.bf16.mxu0 0
      %690 = vmatpush1.bf16.msra.mxu0 0
      %691 = vmatprep.subr.bf16.mxu0 0
      %692 = vmatpush1.bf16.msra.mxu0 0
      %693 = vmatprep.subr.bf16.mxu0 0
      %694 = vmatpush1.bf16.msra.mxu0 0
      %695 = vmatprep.subr.bf16.mxu0 0
      %696 = vmatpush1.bf16.msra.mxu0 0
      %697 = vmatprep.subr.bf16.mxu0 0
      %698 = vmatpush1.bf16.msra.mxu0 0
      %699 = vmatprep.mubr.bf16.mxu0 %v656
      %700 = vmatmul.mubr.bf16.gmra.mrb[0].mxu0 %v647
      %v701 = vpop.f32.mrb[0].mxu0
      %v702 = vadd.f32 0.0, %v701
      %v703 = vpop.f32.mrb[0].mxu0
      %v704 = vpop.f32.mrb[0].mxu0
      %v705 = vadd.f32 0.0, %v704
      %v706 = vpop.f32.mrb[0].mxu0
      %707 = vmatprep.mubr.bf16.mxu0 %v659
      %708 = vmatmul.mubr.bf16.gmra.mrb[0].mxu0 %v649
      %v709 = vpop.f32.mrb[0].mxu0
      %v710 = vadd.f32 0.0, %v709
      %v711 = vpop.f32.mrb[0].mxu0
      %v712 = vpop.f32.mrb[0].mxu0
      %v713 = vadd.f32 0.0, %v712
      %v714 = vpop.f32.mrb[0].mxu0
      %715 = vmatprep.mubr.bf16.mxu0 %v662
      %716 = vmatmul.mubr.bf16.gmra.mrb[0].mxu0 %v651
      %v717 = vpop.f32.mrb[0].mxu0
      %v718 = vadd.f32 0.0, %v717
      %v719 = vpop.f32.mrb[0].mxu0
      %v720 = vpop.f32.mrb[0].mxu0
      %v721 = vadd.f32 0.0, %v720
      %v722 = vpop.f32.mrb[0].mxu0
      %723 = vmatprep.mubr.bf16.mxu0 %v665
      %724 = vmatmul.mubr.bf16.gmra.mrb[0].mxu0 %v653
      %v725 = vpop.f32.mrb[0].mxu0
      %v726 = vadd.f32 0.0, %v725
      %v727 = vpop.f32.mrb[0].mxu0
      %v728 = vpop.f32.mrb[0].mxu0
      %v729 = vadd.f32 0.0, %v728
      %v730 = vpop.f32.mrb[0].mxu0
      %731 = vdwg.mxu0
      %v732 = vmax.f32 %v702, 0.0
      %v733 = vmax.f32 %v705, 0.0
      %v734 = vmax.f32 %v710, 0.0
      %v735 = vmax.f32 %v713, 0.0
      %v736 = vmax.f32 %v718, 0.0
      %v737 = vmax.f32 %v721, 0.0
      %v738 = vmax.f32 %v726, 0.0
      %v739 = vmax.f32 %v729, 0.0
      %s740 = scalar_lea.vmem [#allocation3], 16
      %741 = vst.msk [vmem:[%s740 + $0x1] sm:$0xff] %vm259, %v732
      %742 = vst.msk [vmem:[%s740 + $0x11] sm:$0xff] %vm259, %v733
      %743 = vst.msk [vmem:[%s740 + $0x21] sm:$0xff] %vm259, %v734
      %744 = vst.msk [vmem:[%s740 + $0x31] sm:$0xff] %vm259, %v735
      %745 = vst.msk [vmem:[%s740 + $0x41] sm:$0xff] %vm259, %v736
      %746 = vst.msk [vmem:[%s740 + $0x51] sm:$0xff] %vm259, %v737
      %747 = vst.msk [vmem:[%s740 + $0x61] sm:$0xff] %vm259, %v738
      %748 = vst.msk [vmem:[%s740 + $0x71] sm:$0xff] %vm259, %v739
      %v749 = vld [vmem:[#allocation3] sm:$0xff]
      %v750 = vld [vmem:[#allocation3 + $0x8] sm:$0x3]
      %v751 = vld [vmem:[#allocation3 + $0x10] sm:$0xff]
      %v752 = vld [vmem:[#allocation3 + $0x18] sm:$0x3]
      %v753 = vld [vmem:[#allocation3 + $0x20] sm:$0xff]
      %v754 = vld [vmem:[#allocation3 + $0x28] sm:$0x3]
      %v755 = vld [vmem:[#allocation3 + $0x30] sm:$0xff]
      %v756 = vld [vmem:[#allocation3 + $0x38] sm:$0x3]
      %v757 = vld [vmem:[#allocation3 + $0x40] sm:$0xff]
      %v758 = vld [vmem:[#allocation3 + $0x48] sm:$0x3]
      %v759 = vld [vmem:[#allocation3 + $0x50] sm:$0xff]
      %v760 = vld [vmem:[#allocation3 + $0x58] sm:$0x3]
      %v761 = vld [vmem:[#allocation3 + $0x60] sm:$0xff]
      %v762 = vld [vmem:[#allocation3 + $0x68] sm:$0x3]
      %v763 = vld [vmem:[#allocation3 + $0x70] sm:$0xff]
      %v764 = vld [vmem:[#allocation3 + $0x78] sm:$0x3]
      %v765 = vld [vmem:[#allocation3 + $0x80] sm:$0xff]
      %v766 = vld [vmem:[#allocation3 + $0x88] sm:$0x3]
      %v767 = vld [vmem:[#allocation3 + $0x90] sm:$0xff]
      %v768 = vld [vmem:[#allocation3 + $0x98] sm:$0x3]
      %v769 = vld [vmem:[%s2] sm:$0xff]
      %v770 = vld [vmem:[%s2 + $0x8] sm:$0xff]
      %v771 = vld [vmem:[%s2 + $0x10] sm:$0xff]
      %v772 = vld [vmem:[%s2 + $0x18] sm:$0xff]
      %v773 = vld [vmem:[%s2 + $0x20] sm:$0xff]
      %v774 = vld [vmem:[%s2 + $0x28] sm:$0xff]
      %v775 = vld [vmem:[%s2 + $0x30] sm:$0xff]
      %v776 = vld [vmem:[%s2 + $0x38] sm:$0xff]
      %v777 = vld [vmem:[%s2 + $0x40] sm:$0xff]
      %v778 = vld [vmem:[%s2 + $0x48] sm:$0xff]
      %v779 = vld [vmem:[%s2 + $0x50] sm:$0xff]
      %v780 = vld [vmem:[%s2 + $0x58] sm:$0xff]
      %v781 = vld [vmem:[%s2 + $0x60] sm:$0xff]
      %v782 = vld [vmem:[%s2 + $0x68] sm:$0xff]
      %v783 = vld [vmem:[%s2 + $0x70] sm:$0xff]
      %v784 = vld [vmem:[%s2 + $0x78] sm:$0xff]
      %v785 = vld [vmem:[%s2 + $0x80] sm:$0xff]
      %v786 = vld [vmem:[%s2 + $0x88] sm:$0xff]
      %v787 = vld [vmem:[%s2 + $0x90] sm:$0xff]
      %v788 = vld [vmem:[%s2 + $0x98] sm:$0xff]
      %v789 = vld [vmem:[%s2 + $0xa0] sm:$0xff]
      %v790 = vld [vmem:[%s2 + $0xa8] sm:$0xff]
      %v791 = vld [vmem:[%s2 + $0xb0] sm:$0xff]
      %v792 = vld [vmem:[%s2 + $0xb8] sm:$0xff]
      %v793 = vld [vmem:[%s2 + $0xc0] sm:$0xff]
      %v794 = vld [vmem:[%s2 + $0xc8] sm:$0xff]
      %v795 = vld [vmem:[%s2 + $0xd0] sm:$0xff]
      %v796 = vld [vmem:[%s2 + $0xd8] sm:$0xff]
      %v797 = vld [vmem:[%s2 + $0xe0] sm:$0xff]
      %v798 = vld [vmem:[%s2 + $0xe8] sm:$0xff]
      %v799 = vld [vmem:[%s2 + $0xf0] sm:$0xff]
      %v800 = vld [vmem:[%s2 + $0xf8] sm:$0xff]
      %v801 = vld [vmem:[%s2 + $0x100] sm:$0xff]
      %v802 = vld [vmem:[%s2 + $0x108] sm:$0xff]
      %v803 = vld [vmem:[%s2 + $0x110] sm:$0xff]
      %v804 = vld [vmem:[%s2 + $0x118] sm:$0xff]
      %v805 = vpack.c.bf16 %v770, %v769
      %v806 = vpack.c.bf16 %v772, %v771
      %v807 = vpack.c.bf16 %v774, %v773
      %v808 = vpack.c.bf16 %v776, %v775
      %v809 = vpack.c.bf16 %v778, %v777
      %v810 = vpack.c.bf16 %v780, %v779
      %v811 = vpack.c.bf16 %v782, %v781
      %v812 = vpack.c.bf16 %v784, %v783
      %v813 = vpack.c.bf16 %v786, %v785
      %v814 = vpack.c.bf16 %v788, %v787
      %v815 = vpack.c.bf16 %v790, %v789
      %v816 = vpack.c.bf16 %v792, %v791
      %v817 = vpack.c.bf16 %v794, %v793
      %v818 = vpack.c.bf16 %v796, %v795
      %v819 = vpack.c.bf16 %v798, %v797
      %v820 = vpack.c.bf16 %v800, %v799
      %v821 = vpack.c.bf16 %v802, %v801
      %v822 = vpack.c.bf16 %v804, %v803
      %v839 = vrot.slane %v749, 1
      %v840 = vrot.slane %v750, 1
      %v841 = vsel %vm344, %v839, %v840
      %v842 = vrot.slane %v751, 1
      %v843 = vrot.slane %v752, 1
      %v844 = vsel %vm344, %v842, %v843
      %v845 = vrot.slane %v753, 1
      %v846 = vrot.slane %v754, 1
      %v847 = vsel %vm344, %v845, %v846
      %v848 = vrot.slane %v755, 1
      %v849 = vrot.slane %v756, 1
      %v850 = vsel %vm344, %v848, %v849
      %v851 = vrot.slane %v757, 1
      %v852 = vrot.slane %v758, 1
      %v853 = vsel %vm344, %v851, %v852
      %v854 = vrot.slane %v759, 1
      %v855 = vrot.slane %v760, 1
      %v856 = vsel %vm344, %v854, %v855
      %v857 = vrot.slane %v761, 1
      %v858 = vrot.slane %v762, 1
      %v859 = vsel %vm344, %v857, %v858
      %v860 = vrot.slane %v763, 1
      %v861 = vrot.slane %v764, 1
      %v862 = vsel %vm344, %v860, %v861
      %v863 = vrot.slane %v749, 2
      %v864 = vrot.slane %v750, 2
      %v865 = vsel %vm369, %v863, %v864
      %v866 = vrot.slane %v751, 2
      %v867 = vrot.slane %v752, 2
      %v868 = vsel %vm369, %v866, %v867
      %v869 = vrot.slane %v753, 2
      %v870 = vrot.slane %v754, 2
      %v871 = vsel %vm369, %v869, %v870
      %v872 = vrot.slane %v755, 2
      %v873 = vrot.slane %v756, 2
      %v874 = vsel %vm369, %v872, %v873
      %v875 = vrot.slane %v757, 2
      %v876 = vrot.slane %v758, 2
      %v877 = vsel %vm369, %v875, %v876
      %v878 = vrot.slane %v759, 2
      %v879 = vrot.slane %v760, 2
      %v880 = vsel %vm369, %v878, %v879
      %v881 = vrot.slane %v761, 2
      %v882 = vrot.slane %v762, 2
      %v883 = vsel %vm369, %v881, %v882
      %v884 = vrot.slane %v763, 2
      %v885 = vrot.slane %v764, 2
      %v886 = vsel %vm369, %v884, %v885
      %v889 = vrot.slane %v765, 1
      %v890 = vrot.slane %v766, 1
      %v891 = vsel %vm344, %v889, %v890
      %v900 = vrot.slane %v765, 2
      %v901 = vrot.slane %v766, 2
      %v902 = vsel %vm369, %v900, %v901
      %v905 = vrot.slane %v767, 1
      %v906 = vrot.slane %v768, 1
      %v907 = vsel %vm344, %v905, %v906
      %v908 = vrot.slane %v767, 2
      %v909 = vrot.slane %v768, 2
      %v910 = vsel %vm369, %v908, %v909
      %919 = vrot.lane.b32.xlu0 %v841, 32
      %v920 = vpop.permute.xlu0 %919
      %921 = vrot.lane.b32.xlu0 %v844, 32
      %v922 = vpop.permute.xlu0 %921
      %923 = vrot.lane.b32.xlu0 %v847, 32
      %v924 = vpop.permute.xlu0 %923
      %925 = vrot.lane.b32.xlu0 %v850, 32
      %v926 = vpop.permute.xlu0 %925
      %927 = vrot.lane.b32.xlu0 %v853, 32
      %v928 = vpop.permute.xlu0 %927
      %929 = vrot.lane.b32.xlu0 %v856, 32
      %v930 = vpop.permute.xlu0 %929
      %931 = vrot.lane.b32.xlu0 %v859, 32
      %v932 = vpop.permute.xlu0 %931
      %933 = vrot.lane.b32.xlu0 %v862, 32
      %v934 = vpop.permute.xlu0 %933
      %943 = vrot.lane.b32.xlu0 %v865, 64
      %v944 = vpop.permute.xlu0 %943
      %945 = vrot.lane.b32.xlu0 %v868, 64
      %v946 = vpop.permute.xlu0 %945
      %947 = vrot.lane.b32.xlu0 %v871, 64
      %v948 = vpop.permute.xlu0 %947
      %949 = vrot.lane.b32.xlu0 %v874, 64
      %v950 = vpop.permute.xlu0 %949
      %951 = vrot.lane.b32.xlu0 %v877, 64
      %v952 = vpop.permute.xlu0 %951
      %953 = vrot.lane.b32.xlu0 %v880, 64
      %v954 = vpop.permute.xlu0 %953
      %955 = vrot.lane.b32.xlu0 %v883, 64
      %v956 = vpop.permute.xlu0 %955
      %957 = vrot.lane.b32.xlu0 %v886, 64
      %v958 = vpop.permute.xlu0 %957
      %967 = vrot.lane.b32.xlu0 %v751, 96
      %v968 = vpop.permute.xlu0 %967
      %969 = vrot.lane.b32.xlu0 %v753, 96
      %v970 = vpop.permute.xlu0 %969
      %971 = vrot.lane.b32.xlu0 %v755, 96
      %v972 = vpop.permute.xlu0 %971
      %973 = vrot.lane.b32.xlu0 %v757, 96
      %v974 = vpop.permute.xlu0 %973
      %975 = vrot.lane.b32.xlu0 %v759, 96
      %v976 = vpop.permute.xlu0 %975
      %977 = vrot.lane.b32.xlu0 %v761, 96
      %v978 = vpop.permute.xlu0 %977
      %979 = vrot.lane.b32.xlu0 %v763, 96
      %v980 = vpop.permute.xlu0 %979
      %981 = vrot.lane.b32.xlu0 %v765, 96
      %v982 = vpop.permute.xlu0 %981
      %991 = vrot.lane.b32.xlu0 %v868, 32
      %v992 = vpop.permute.xlu0 %991
      %993 = vrot.lane.b32.xlu0 %v871, 32
      %v994 = vpop.permute.xlu0 %993
      %995 = vrot.lane.b32.xlu0 %v874, 32
      %v996 = vpop.permute.xlu0 %995
      %997 = vrot.lane.b32.xlu0 %v877, 32
      %v998 = vpop.permute.xlu0 %997
      %999 = vrot.lane.b32.xlu0 %v880, 32
      %v1000 = vpop.permute.xlu0 %999
      %1001 = vrot.lane.b32.xlu0 %v883, 32
      %v1002 = vpop.permute.xlu0 %1001
      %1003 = vrot.lane.b32.xlu0 %v886, 32
      %v1004 = vpop.permute.xlu0 %1003
      %1005 = vrot.lane.b32.xlu0 %v902, 32
      %v1006 = vpop.permute.xlu0 %1005
      %1015 = vrot.lane.b32.xlu0 %v753, 64
      %v1016 = vpop.permute.xlu0 %1015
      %1017 = vrot.lane.b32.xlu0 %v755, 64
      %v1018 = vpop.permute.xlu0 %1017
      %1019 = vrot.lane.b32.xlu0 %v757, 64
      %v1020 = vpop.permute.xlu0 %1019
      %1021 = vrot.lane.b32.xlu0 %v759, 64
      %v1022 = vpop.permute.xlu0 %1021
      %1023 = vrot.lane.b32.xlu0 %v761, 64
      %v1024 = vpop.permute.xlu0 %1023
      %1025 = vrot.lane.b32.xlu0 %v763, 64
      %v1026 = vpop.permute.xlu0 %1025
      %1027 = vrot.lane.b32.xlu0 %v765, 64
      %v1028 = vpop.permute.xlu0 %1027
      %1029 = vrot.lane.b32.xlu0 %v767, 64
      %v1030 = vpop.permute.xlu0 %1029
      %1039 = vrot.lane.b32.xlu0 %v847, 96
      %v1040 = vpop.permute.xlu0 %1039
      %1041 = vrot.lane.b32.xlu0 %v850, 96
      %v1042 = vpop.permute.xlu0 %1041
      %1043 = vrot.lane.b32.xlu0 %v853, 96
      %v1044 = vpop.permute.xlu0 %1043
      %1045 = vrot.lane.b32.xlu0 %v856, 96
      %v1046 = vpop.permute.xlu0 %1045
      %1047 = vrot.lane.b32.xlu0 %v859, 96
      %v1048 = vpop.permute.xlu0 %1047
      %1049 = vrot.lane.b32.xlu0 %v862, 96
      %v1050 = vpop.permute.xlu0 %1049
      %1051 = vrot.lane.b32.xlu0 %v891, 96
      %v1052 = vpop.permute.xlu0 %1051
      %1053 = vrot.lane.b32.xlu0 %v907, 96
      %v1054 = vpop.permute.xlu0 %1053
      %v1063 = vsel %vm259, %v749, %v920
      %v1064 = vsel %vm259, %v751, %v922
      %v1065 = vsel %vm259, %v753, %v924
      %v1066 = vsel %vm259, %v755, %v926
      %v1067 = vsel %vm259, %v757, %v928
      %v1068 = vsel %vm259, %v759, %v930
      %v1069 = vsel %vm259, %v761, %v932
      %v1070 = vsel %vm259, %v763, %v934
      %v1071 = vsel %vm611, %v1063, %v944
      %v1072 = vsel %vm611, %v1064, %v946
      %v1073 = vsel %vm611, %v1065, %v948
      %v1074 = vsel %vm611, %v1066, %v950
      %v1075 = vsel %vm611, %v1067, %v952
      %v1076 = vsel %vm611, %v1068, %v954
      %v1077 = vsel %vm611, %v1069, %v956
      %v1078 = vsel %vm611, %v1070, %v958
      %v1079 = vsel %vm629, %v1071, %v968
      %v1080 = vsel %vm629, %v1072, %v970
      %v1081 = vsel %vm629, %v1073, %v972
      %v1082 = vsel %vm629, %v1074, %v974
      %v1083 = vsel %vm629, %v1075, %v976
      %v1084 = vsel %vm629, %v1076, %v978
      %v1085 = vsel %vm629, %v1077, %v980
      %v1086 = vsel %vm629, %v1078, %v982
      %v1087 = vsel %vm259, %v844, %v992
      %v1088 = vsel %vm259, %v847, %v994
      %v1089 = vsel %vm259, %v850, %v996
      %v1090 = vsel %vm259, %v853, %v998
      %v1091 = vsel %vm259, %v856, %v1000
      %v1092 = vsel %vm259, %v859, %v1002
      %v1093 = vsel %vm259, %v862, %v1004
      %v1094 = vsel %vm259, %v891, %v1006
      %v1095 = vsel %vm611, %v1087, %v1016
      %v1096 = vsel %vm611, %v1088, %v1018
      %v1097 = vsel %vm611, %v1089, %v1020
      %v1098 = vsel %vm611, %v1090, %v1022
      %v1099 = vsel %vm611, %v1091, %v1024
      %v1100 = vsel %vm611, %v1092, %v1026
      %v1101 = vsel %vm611, %v1093, %v1028
      %v1102 = vsel %vm611, %v1094, %v1030
      %v1103 = vsel %vm629, %v1095, %v1040
      %v1104 = vsel %vm629, %v1096, %v1042
      %v1105 = vsel %vm629, %v1097, %v1044
      %v1106 = vsel %vm629, %v1098, %v1046
      %v1107 = vsel %vm629, %v1099, %v1048
      %v1108 = vsel %vm629, %v1100, %v1050
      %v1109 = vsel %vm629, %v1101, %v1052
      %v1110 = vsel %vm629, %v1102, %v1054
      %v1111 = vpack.c.bf16 %v1080, %v1079
      %v1112 = vpack.c.bf16 %v1104, %v1103
      %v1113 = vpack.c.bf16 %v874, %v871
      %v1114 = vpack.c.bf16 %v1082, %v1081
      %v1115 = vpack.c.bf16 %v1106, %v1105
      %v1116 = vpack.c.bf16 %v880, %v877
      %v1117 = vpack.c.bf16 %v1084, %v1083
      %v1118 = vpack.c.bf16 %v1108, %v1107
      %v1119 = vpack.c.bf16 %v886, %v883
      %v1120 = vpack.c.bf16 %v1086, %v1085
      %v1121 = vpack.c.bf16 %v1110, %v1109
      %v1122 = vpack.c.bf16 %v910, %v902
      %v1124 = vsel %vm259, %v1113, 0
      %v1127 = vsel %vm259, %v1116, 0
      %v1130 = vsel %vm259, %v1119, 0
      %v1133 = vsel %vm259, %v1122, 0
      %1135 = vmatprep.subr.bf16.mxu0 0
      %1136 = vmatpush1.bf16.msra.mxu0 %v805
      %1137 = vmatprep.subr.bf16.mxu0 0
      %1138 = vmatpush1.bf16.msra.mxu0 %v806
      %1139 = vmatprep.subr.bf16.mxu0 0
      %1140 = vmatpush1.bf16.msra.mxu0 %v807
      %1141 = vmatprep.subr.bf16.mxu0 0
      %1142 = vmatpush1.bf16.msra.mxu0 %v808
      %1143 = vmatprep.subr.bf16.mxu0 0
      %1144 = vmatpush1.bf16.msra.mxu0 %v809
      %1145 = vmatprep.subr.bf16.mxu0 0
      %1146 = vmatpush1.bf16.msra.mxu0 %v810
      %1147 = vmatprep.subr.bf16.mxu0 0
      %1148 = vmatpush1.bf16.msra.mxu0 %v811
      %1149 = vmatprep.subr.bf16.mxu0 0
      %1150 = vmatpush1.bf16.msra.mxu0 %v812
      %1151 = vmatprep.subr.bf16.mxu0 0
      %1152 = vmatpush1.bf16.msra.mxu0 %v813
      %1153 = vmatprep.subr.bf16.mxu0 0
      %1154 = vmatpush1.bf16.msra.mxu0 %v814
      %1155 = vmatprep.subr.bf16.mxu0 0
      %1156 = vmatpush1.bf16.msra.mxu0 %v815
      %1157 = vmatprep.subr.bf16.mxu0 0
      %1158 = vmatpush1.bf16.msra.mxu0 %v816
      %1159 = vmatprep.subr.bf16.mxu0 0
      %1160 = vmatpush1.bf16.msra.mxu0 %v817
      %1161 = vmatprep.subr.bf16.mxu0 0
      %1162 = vmatpush1.bf16.msra.mxu0 %v818
      %1163 = vmatprep.subr.bf16.mxu0 0
      %1164 = vmatpush1.bf16.msra.mxu0 %v819
      %1165 = vmatprep.subr.bf16.mxu0 0
      %1166 = vmatpush1.bf16.msra.mxu0 %v820
      %1167 = vmatprep.mubr.bf16.mxu0 %v1112
      %1168 = vmatmul.mubr.bf16.gmra.mrb[0].mxu0 %v1111
      %v1169 = vpop.f32.mrb[0].mxu0
      %v1170 = vadd.f32 0.0, %v1169
      %v1171 = vpop.f32.mrb[0].mxu0
      %v1172 = vpop.f32.mrb[0].mxu0
      %v1173 = vadd.f32 0.0, %v1172
      %v1174 = vpop.f32.mrb[0].mxu0
      %1175 = vmatprep.mubr.bf16.mxu0 %v1115
      %1176 = vmatmul.mubr.bf16.gmra.mrb[0].mxu0 %v1114
      %v1177 = vpop.f32.mrb[0].mxu0
      %v1178 = vadd.f32 0.0, %v1177
      %v1179 = vpop.f32.mrb[0].mxu0
      %v1180 = vpop.f32.mrb[0].mxu0
      %v1181 = vadd.f32 0.0, %v1180
      %v1182 = vpop.f32.mrb[0].mxu0
      %1183 = vmatprep.mubr.bf16.mxu0 %v1118
      %1184 = vmatmul.mubr.bf16.gmra.mrb[0].mxu0 %v1117
      %v1185 = vpop.f32.mrb[0].mxu0
      %v1186 = vadd.f32 0.0, %v1185
      %v1187 = vpop.f32.mrb[0].mxu0
      %v1188 = vpop.f32.mrb[0].mxu0
      %v1189 = vadd.f32 0.0, %v1188
      %v1190 = vpop.f32.mrb[0].mxu0
      %1191 = vmatprep.mubr.bf16.mxu0 %v1121
      %1192 = vmatmul.mubr.bf16.gmra.mrb[0].mxu0 %v1120
      %v1193 = vpop.f32.mrb[0].mxu0
      %v1194 = vadd.f32 0.0, %v1193
      %v1195 = vpop.f32.mrb[0].mxu0
      %v1196 = vpop.f32.mrb[0].mxu0
      %v1197 = vadd.f32 0.0, %v1196
      %v1198 = vpop.f32.mrb[0].mxu0
      %1199 = vdwg.mxu0
      %1200 = vmatprep.subr.bf16.mxu0 0
      %1201 = vmatpush1.bf16.msra.mxu0 %v821
      %1202 = vmatprep.subr.bf16.mxu0 0
      %1203 = vmatpush1.bf16.msra.mxu0 %v822
      %1204 = vmatprep.subr.bf16.mxu0 0
      %1205 = vmatpush1.bf16.msra.mxu0 0
      %1206 = vmatprep.subr.bf16.mxu0 0
      %1207 = vmatpush1.bf16.msra.mxu0 0
      %1208 = vmatprep.subr.bf16.mxu0 0
      %1209 = vmatpush1.bf16.msra.mxu0 0
      %1210 = vmatprep.subr.bf16.mxu0 0
      %1211 = vmatpush1.bf16.msra.mxu0 0
      %1212 = vmatprep.subr.bf16.mxu0 0
      %1213 = vmatpush1.bf16.msra.mxu0 0
      %1214 = vmatprep.subr.bf16.mxu0 0
      %1215 = vmatpush1.bf16.msra.mxu0 0
      %1216 = vmatprep.subr.bf16.mxu0 0
      %1217 = vmatpush1.bf16.msra.mxu0 0
      %1218 = vmatprep.subr.bf16.mxu0 0
      %1219 = vmatpush1.bf16.msra.mxu0 0
      %1220 = vmatprep.subr.bf16.mxu0 0
      %1221 = vmatpush1.bf16.msra.mxu0 0
      %1222 = vmatprep.subr.bf16.mxu0 0
      %1223 = vmatpush1.bf16.msra.mxu0 0
      %1224 = vmatprep.subr.bf16.mxu0 0
      %1225 = vmatpush1.bf16.msra.mxu0 0
      %1226 = vmatprep.subr.bf16.mxu0 0
      %1227 = vmatpush1.bf16.msra.mxu0 0
      %1228 = vmatprep.subr.bf16.mxu0 0
      %1229 = vmatpush1.bf16.msra.mxu0 0
      %1230 = vmatprep.subr.bf16.mxu0 0
      %1231 = vmatpush1.bf16.msra.mxu0 0
      %1232 = vmatprep.mubr.bf16.mxu0 0
      %1233 = vmatmul.mubr.bf16.gmra.mrb[0].mxu0 %v1124
      %v1234 = vpop.f32.mrb[0].mxu0
      %v1235 = vadd.f32 %v1170, %v1234
      %v1236 = vpop.f32.mrb[0].mxu0
      %v1237 = vpop.f32.mrb[0].mxu0
      %v1238 = vadd.f32 %v1173, %v1237
      %v1239 = vpop.f32.mrb[0].mxu0
      %1240 = vmatprep.mubr.bf16.mxu0 0
      %1241 = vmatmul.mubr.bf16.gmra.mrb[0].mxu0 %v1127
      %v1242 = vpop.f32.mrb[0].mxu0
      %v1243 = vadd.f32 %v1178, %v1242
      %v1244 = vpop.f32.mrb[0].mxu0
      %v1245 = vpop.f32.mrb[0].mxu0
      %v1246 = vadd.f32 %v1181, %v1245
      %v1247 = vpop.f32.mrb[0].mxu0
      %1248 = vmatprep.mubr.bf16.mxu0 0
      %1249 = vmatmul.mubr.bf16.gmra.mrb[0].mxu0 %v1130
      %v1250 = vpop.f32.mrb[0].mxu0
      %v1251 = vadd.f32 %v1186, %v1250
      %v1252 = vpop.f32.mrb[0].mxu0
      %v1253 = vpop.f32.mrb[0].mxu0
      %v1254 = vadd.f32 %v1189, %v1253
      %v1255 = vpop.f32.mrb[0].mxu0
      %1256 = vmatprep.mubr.bf16.mxu0 0
      %1257 = vmatmul.mubr.bf16.gmra.mrb[0].mxu0 %v1133
      %v1258 = vpop.f32.mrb[0].mxu0
      %v1259 = vadd.f32 %v1194, %v1258
      %v1260 = vpop.f32.mrb[0].mxu0
      %v1261 = vpop.f32.mrb[0].mxu0
      %v1262 = vadd.f32 %v1197, %v1261
      %v1263 = vpop.f32.mrb[0].mxu0
      %1264 = vdwg.mxu0
      %v1265 = vmax.f32 %v1235, 0.0
      %v1266 = vmax.f32 %v1238, 0.0
      %v1267 = vmax.f32 %v1243, 0.0
      %v1268 = vmax.f32 %v1246, 0.0
      %v1269 = vmax.f32 %v1251, 0.0
      %v1270 = vmax.f32 %v1254, 0.0
      %v1271 = vmax.f32 %v1259, 0.0
      %v1272 = vmax.f32 %v1262, 0.0
      %1273 = vst.msk [vmem:[%s170] sm:$0xff] %vm259, %v1265
      %1274 = vst.msk [vmem:[%s170 + $0x8] sm:$0xff] %vm259, %v1266
      %1275 = vst.msk [vmem:[%s170 + $0x10] sm:$0xff] %vm259, %v1267
      %1276 = vst.msk [vmem:[%s170 + $0x18] sm:$0xff] %vm259, %v1268
      %1277 = vst.msk [vmem:[%s170 + $0x20] sm:$0xff] %vm259, %v1269
      %1278 = vst.msk [vmem:[%s170 + $0x28] sm:$0xff] %vm259, %v1270
      %1279 = vst.msk [vmem:[%s170 + $0x30] sm:$0xff] %vm259, %v1271
      %1280 = vst.msk [vmem:[%s170 + $0x38] sm:$0xff] %vm259, %v1272
      %p1281 = scmp.lt.s32.totalorder %s14, 1
      %s1282 = scalar_select %p1281, %s14, 1
      %s1283 = smul.addr %s1282, 8
      %s1284 = smul.addr %s1283, 8
      %s1285 = scalar_lea.vmem %s3, %s1284
      // Predicated region
      $region33: #{unet_encoder.5} parent=31 // pred_check
        %p1286 = pneg %p100
      $region34: #{unet_encoder.5} parent=31 // pred_check_branch
        %1288 = sbr.rel (%p1286) target = $region36
      $region35: #{unet_encoder.5} parent=31 // pred_region
        _
      $region36: #{unet_encoder.5} parent=31 // pred_fallthru
        _
    $region32: #{unet_encoder.5} parent=5 // pred_fallthru
      _
    %p1289 = scmp.le.s32.totalorder 2, %s9
    // Predicated region
    $region37: #{unet_encoder.5} parent=5 // pred_check
      %p1290 = pneg %p1289
    $region38: #{unet_encoder.5} parent=5 // pred_check_branch
      %1292 = sbr.rel (%p1290) target = $region40
    $region39: #{unet_encoder.5} parent=5 // pred_region
      %s1293 = ssub.s32 %s9, 2
      // Predicated region
      $region41: #{unet_encoder.5} parent=39 // pred_check
        %p1294 = pneg %p106
      $region42: #{unet_encoder.5} parent=39 // pred_check_branch
        %1296 = sbr.rel (%p1294) target = $region44
      $region43: #{unet_encoder.5} parent=39 // pred_region
        %p1297 = scmp.lt.s32.totalorder %s15, 1
        %s1298 = scalar_select %p1297, %s15, 1
        %s1299 = smul.addr %s1298, 8
        %s1300 = smul.addr %s1299, 8
        %s1301 = scalar_lea.vmem %s3, %s1300
      $region44: #{unet_encoder.5} parent=39 // pred_fallthru
        _
    $region40: #{unet_encoder.5} parent=5 // pred_fallthru
      _
  $region6: #{unet_encoder.5} parent=0 // loop_footer
    %s13 = sadd.s32 1, %s9
  $region7: #{unet_encoder.5} parent=0 // loop_footer_branch
    %8 = sbr.rel target = $region3
  $region8: #{unet_encoder.5} parent=0 // loop_exit
    _

// kernel: unet_encoder.6
$region0: #{unet_encoder.6}
  #allocation0 [shape = 'u32[]', space=smem, size = 0x4, offset = 0x4, fixed_abs, tag = 'smem constant byte address 0x4 - core index']
  #allocation1 [shape = 'u32[144,128]{1,0:T(1,128)}', space=vmem, size = 0x12000, scoped, tag = 'internal scratch']
  #allocation2 [shape = 'f32[6,6,32]{2,1,0:T(8,128)}', space=vmem, size = 0x6000, scoped, tag = 'scratch operand']
  #allocation3 [shape = 'f32[6,6,64]{2,1,0:T(8,128)}', space=vmem, size = 0x6000, scoped, tag = 'scratch operand']
  %s0 = inlined_call_operand.vmem [shape: f32[2,2,2,4,4,32], index: 0, kind: input, shape index: {}]
  %s1 = inlined_call_operand.vmem [shape: f32[288,64], index: 1, kind: input, shape index: {}]
  %s2 = inlined_call_operand.vmem [shape: f32[576,64], index: 2, kind: input, shape index: {}]
  %s3 = inlined_call_operand.vmem [shape: f32[2,4,4,64], index: 3, kind: output, shape index: {}]
  %s4 = sld [smem:[#allocation0]]
  $region45: #{unet_encoder.6} parent=0
    _
  %s6 = ssub.s32 1, %s4
  %s7 = scalar_select 0, %s6, %s4
  loop: start=0, step=1, limit=4
  $region2: #{unet_encoder.6} parent=0 // loop_pre_header
    _
  $region3: #{unet_encoder.6} parent=0 // loop_header
    %s9 = sphi 0, %s13
    %p10 = scmp.ge.s32.totalorder %s9, 4
    %s19 = sphi 0, %s21
    %s22 = sphi 0, %s19
    %s23 = sphi 0, %s22
    %s39 = sphi 0, %s23
    %s43 = sphi 0, %s43
    %s45 = sphi 0, %s43
    %s46 = sphi 0, %s45
    %s60 = sphi 0, %s46
    %s64 = sphi 0, %s64
    %s66 = sphi 0, %s64
    %s67 = sphi 0, %s66
    %s81 = sphi 0, %s67
    %s87 = sphi 0, %s89
    %s90 = sphi 0, %s87
    %s91 = sphi 0, %s90
    %s107 = sphi 0, %s91
  $region4: #{unet_encoder.6} parent=0 // loop_header_branch
    %12 = sbr.rel (%p10) target = $region8
  $region5: #{unet_encoder.6} parent=0 // loop_body
    %s14 = ssub.s32 %s9, 1
    %s15 = ssub.s32 %s9, 2
    %s16 = sadd.s32 %s9, 1
    %s17 = ssub.s32 %s9, %s16
    %p18 = scmp.eq.s32.totalorder %s17, 0
    %s20 = sadd.s32 %s19, 1
    %s21 = scalar_select %p18, %s19, %s20
    %p24 = pneg %p18
    %p25 = scmp.eq.s32.totalorder %s9, 1
    %p26 = por %p24, %p25
    %p27 = scmp.ne.s32.totalorder %s19, %s22
    %p28 = scmp.eq.s32.totalorder %s9, 0
    %p29 = por %p27, %p28
    %p30 = scmp.ne.s32.totalorder %s19, %s22
    %p31 = scmp.eq.s32.totalorder %s14, 1
    %p32 = por %p30, %p31
    %p33 = scmp.ne.s32.totalorder %s22, %s23
    %p34 = scmp.eq.s32.totalorder %s14, 0
    %p35 = por %p33, %p34
    %p36 = scmp.ne.s32.totalorder %s22, %s23
    %p37 = scmp.eq.s32.totalorder %s15, 1
    %p38 = por %p36, %p37
    %p40 = scmp.ne.s32.totalorder %s23, %s39
    %p41 = scmp.eq.s32.totalorder %s15, 0
    %p42 = por %p40, %p41
    %s44 = sadd.s32 %s43, 1
    %p47 = scmp.eq.s32.totalorder %s9, 1
    %p48 = scmp.ne.s32.totalorder %s43, %s45
    %p49 = scmp.eq.s32.totalorder %s9, 0
    %p50 = por %p48, %p49
    %p51 = scmp.ne.s32.totalorder %s43, %s45
    %p52 = scmp.eq.s32.totalorder %s14, 1
    %p53 = por %p51, %p52
    %p54 = scmp.ne.s32.totalorder %s45, %s46
    %p55 = scmp.eq.s32.totalorder %s14, 0
    %p56 = por %p54, %p55
    %p57 = scmp.ne.s32.totalorder %s45, %s46
    %p58 = scmp.eq.s32.totalorder %s15, 1
    %p59 = por %p57, %p58
    %p61 = scmp.ne.s32.totalorder %s46, %s60
    %p62 = scmp.eq.s32.totalorder %s15, 0
    %p63 = por %p61, %p62
    %s65 = sadd.s32 %s64, 1
    %p68 = scmp.eq.s32.totalorder %s9, 1
    %p69 = scmp.ne.s32.totalorder %s64, %s66
    %p70 = scmp.eq.s32.totalorder %s9, 0
    %p71 = por %p69, %p70
    %p72 = scmp.ne.s32.totalorder %s64, %s66
    %p73 = scmp.eq.s32.totalorder %s14, 1
    %p74 = por %p72, %p73
    %p75 = scmp.ne.s32.totalorder %s66, %s67
    %p76 = scmp.eq.s32.totalorder %s14, 0
    %p77 = por %p75, %p76
    %p78 = scmp.ne.s32.totalorder %s66, %s67
    %p79 = scmp.eq.s32.totalorder %s15, 1
    %p80 = por %p78, %p79
    %p82 = scmp.ne.s32.totalorder %s67, %s81
    %p83 = scmp.eq.s32.totalorder %s15, 0
    %p84 = por %p82, %p83
    %s85 = ssub.s32 %s9, %s16
    %p86 = scmp.eq.s32.totalorder %s85, 0
    %s88 = sadd.s32 %s87, 1
    %s89 = scalar_select %p86, %s87, %s88
    %p92 = pneg %p86
    %p93 = scmp.eq.s32.totalorder %s9, 1
    %p94 = por %p92, %p93
    %p95 = scmp.ne.s32.totalorder %s87, %s90
    %p96 = scmp.eq.s32.totalorder %s9, 0
    %p97 = por %p95, %p96
    %p98 = scmp.ne.s32.totalorder %s87, %s90
    %p99 = scmp.eq.s32.totalorder %s14, 1
    %p100 = por %p98, %p99
    %p101 = scmp.ne.s32.totalorder %s90, %s91
    %p102 = scmp.eq.s32.totalorder %s14, 0
    %p103 = por %p101, %p102
    %p104 = scmp.ne.s32.totalorder %s90, %s91
    %p105 = scmp.eq.s32.totalorder %s15, 1
    %p106 = por %p104, %p105
    %p108 = scmp.ne.s32.totalorder %s91, %s107
    %p109 = scmp.eq.s32.totalorder %s15, 0
    %p110 = por %p108, %p109
    %p111 = scmp.le.s32.totalorder 1, %s9
    %p112 = scmp.lt.s32.totalorder %s9, 3
    %p113 = pnand %p111, %p112
    %p114 = pneg %p113
    // Predicated region
    $region9: #{unet_encoder.6} parent=5 // pred_check
      _
    $region10: #{unet_encoder.6} parent=5 // pred_check_branch
      %116 = sbr.rel (%p113) target = $region12
    $region11: #{unet_encoder.6} parent=5 // pred_region
      %s117 = ssub.s32 %s9, 1
      // Predicated region
      $region13: #{unet_encoder.6} parent=11 // pred_check
        %p118 = pneg %p56
      $region14: #{unet_encoder.6} parent=11 // pred_check_branch
        %120 = sbr.rel (%p118) target = $region16
      $region15: #{unet_encoder.6} parent=11 // pred_region
        _
      $region16: #{unet_encoder.6} parent=11 // pred_fallthru
        _
      // Predicated region
      $region17: #{unet_encoder.6} parent=11 // pred_check
        %p121 = pneg %p77
      $region18: #{unet_encoder.6} parent=11 // pred_check_branch
        %123 = sbr.rel (%p121) target = $region20
      $region19: #{unet_encoder.6} parent=11 // pred_region
        _
      $region20: #{unet_encoder.6} parent=11 // pred_fallthru
        _
    $region12: #{unet_encoder.6} parent=5 // pred_fallthru
      _
    %p124 = scmp.lt.s32.totalorder %s9, 2
    // Predicated region
    $region21: #{unet_encoder.6} parent=5 // pred_check
      %p125 = pneg %p124
    $region22: #{unet_encoder.6} parent=5 // pred_check_branch
      %127 = sbr.rel (%p125) target = $region24
    $region23: #{unet_encoder.6} parent=5 // pred_region
      // Predicated region
      $region25: #{unet_encoder.6} parent=23 // pred_check
        %p128 = pneg %p29
      $region26: #{unet_encoder.6} parent=23 // pred_check_branch
        %130 = sbr.rel (%p128) target = $region28
      $region27: #{unet_encoder.6} parent=23 // pred_region
        %p131 = scmp.lt.s32.totalorder %s9, 1
        %s132 = scalar_select %p131, %s9, 1
        %s133 = smul.addr %s132, 16
        %s134 = smul.addr %s133, 4
        %s135 = scalar_lea.vmem %s0, %s134
      $region28: #{unet_encoder.6} parent=23 // pred_fallthru
        _
    $region24: #{unet_encoder.6} parent=5 // pred_fallthru
      _
    %p136 = scmp.le.s32.totalorder 1, %s9
    %p137 = scmp.lt.s32.totalorder %s9, 3
    %p138 = pnand %p136, %p137
    %p139 = pneg %p138
    // Predicated region
    $region29: #{unet_encoder.6} parent=5 // pred_check
      _
    $region30: #{unet_encoder.6} parent=5 // pred_check_branch
      %141 = sbr.rel (%p138) target = $region32
    $region31: #{unet_encoder.6} parent=5 // pred_region
      %s142 = ssub.s32 %s9, 1
      %p143 = scmp.lt.s32.totalorder %s14, 1
      %s144 = scalar_select %p143, %s14, 1
      %s145 = smul.addr %s144, 16
      %s146 = smul.addr %s145, 4
      %s147 = scalar_lea.vmem %s0, %s146
      %p148 = pneg %p35
      %p149 = pneg %p32
      %p150 = pneg %p56
      %p151 = pneg %p53
      %p152 = pneg %p77
      %p153 = pneg %p74
      %p154 = pneg %p103
      %p155 = pneg %p100
      %p156 = scmp.lt.s32.totalorder %s14, 1
      %s157 = scalar_select %p156, %s14, 1
      %s158 = smul.addr %s157, 4
      %s159 = smul.addr %s158, 4
      %s160 = scalar_lea.vmem %s3, %s159
      %p161 = scmp.lt.s32.totalorder %s14, 1
      %s162 = scalar_select %p161, %s14, 1
      %s163 = smul.addr %s162, 16
      %s164 = smul.addr %s163, 4
      %s165 = scalar_lea.vmem %s0, %s164
      %p166 = scmp.lt.s32.totalorder %s14, 1
      %s167 = scalar_select %p166, %s14, 1
      %s168 = smul.addr %s167, 4
      %s169 = smul.addr %s168, 4
      %s170 = scalar_lea.vmem %s3, %s169
      %v172 = vld [vmem:[%s165] sm:$0xf]
      %v173 = vld [vmem:[%s165 + $0x4] sm:$0xf]
      %v174 = vld [vmem:[%s165 + $0x8] sm:$0xf]
      %v175 = vld [vmem:[%s165 + $0xc] sm:$0xf]
      %v176 = vld [vmem:[%s165 + $0x10] sm:$0xf]
      %v177 = vld [vmem:[%s165 + $0x14] sm:$0xf]
      %v178 = vld [vmem:[%s165 + $0x18] sm:$0xf]
      %v179 = vld [vmem:[%s165 + $0x1c] sm:$0xf]
      %v180 = vld [vmem:[%s165 + $0x20] sm:$0xf]
      %v181 = vld [vmem:[%s165 + $0x24] sm:$0xf]
      %v182 = vld [vmem:[%s165 + $0x28] sm:$0xf]
      %v183 = vld [vmem:[%s165 + $0x2c] sm:$0xf]
      %v184 = vld [vmem:[%s165 + $0x30] sm:$0xf]
      %v185 = vld [vmem:[%s165 + $0x34] sm:$0xf]
      %v186 = vld [vmem:[%s165 + $0x38] sm:$0xf]
      %v187 = vld [vmem:[%s165 + $0x3c] sm:$0xf]
      %v188 = vmax.f32 %v172, %v176
      %v189 = vmax.f32 %v173, %v177
      %v190 = vmax.f32 %v174, %v178
      %v191 = vmax.f32 %v175, %v179
      %v192 = vmax.f32 %v180, %v184
      %v193 = vmax.f32 %v181, %v185
      %v194 = vmax.f32 %v182, %v186
      %v195 = vmax.f32 %v183, %v187
      %v196 = vmax.f32 %v188, %v192
      %v197 = vmax.f32 %v189, %v193
      %v198 = vmax.f32 %v190, %v194
      %v199 = vmax.f32 %v191, %v195
      %vm200 = vcmask 259072
      %201 = vst.msk [vmem:[#allocation2] sm:$0x3f] %vm200, 0.0
      %202 = vst.msk [vmem:[#allocation2 + $0x8] sm:$0x3f] %vm200, 0.0
      %203 = vst.msk [vmem:[#allocation2 + $0x10] sm:$0x3f] %vm200, 0.0
      %204 = vst.msk [vmem:[#allocation2 + $0x18] sm:$0x3f] %vm200, 0.0
      %205 = vst.msk [vmem:[#allocation2 + $0x20] sm:$0x3f] %vm200, 0.0
      %206 = vst.msk [vmem:[#allocation2 + $0x28] sm:$0x3f] %vm200, 0.0
      %s207 = scalar_lea.vmem [#allocation2], 8
      %vm208 = vcmask 257024
      %209 = vst.msk [vmem:[%s207 + $0x1] sm:$0xf] %vm208, %v196
      %210 = vst.msk [vmem:[%s207 + $0x9] sm:$0xf] %vm208, %v197
      %211 = vst.msk [vmem:[%s207 + $0x11] sm:$0xf] %vm208, %v198
      %212 = vst.msk [vmem:[%s207 + $0x19] sm:$0xf] %vm208, %v199
      %vm213 = vcmask 521216
      %214 = vst.msk [vmem:[#allocation3] sm:$0x3f] %vm213, 0.0
      %215 = vst.msk [vmem:[#allocation3 + $0x8] sm:$0x3f] %vm213, 0.0
      %216 = vst.msk [vmem:[#allocation3 + $0x10] sm:$0x3f] %vm213, 0.0
      %217 = vst.msk [vmem:[#allocation3 + $0x18] sm:$0x3f] %vm213, 0.0
      %218 = vst.msk [vmem:[#allocation3 + $0x20] sm:$0x3f] %vm213, 0.0
      %219 = vst.msk [vmem:[#allocation3 + $0x28] sm:$0x3f] %vm213, 0.0
      %v220 = vld [vmem:[#allocation2] sm:$0x3f]
      %v221 = vld [vmem:[#allocation2 + $0x8] sm:$0x3f]
      %v222 = vld [vmem:[#allocation2 + $0x10] sm:$0x3f]
      %v223 = vld [vmem:[#allocation2 + $0x18] sm:$0x3f]
      %v224 = vld [vmem:[#allocation2 + $0x20] sm:$0x3f]
      %v225 = vld [vmem:[#allocation2 + $0x28] sm:$0x3f]
      %v226 = vld [vmem:[%s1] sm:$0xff]
      %v227 = vld [vmem:[%s1 + $0x8] sm:$0xff]
      %v228 = vld [vmem:[%s1 + $0x10] sm:$0xff]
      %v229 = vld [vmem:[%s1 + $0x18] sm:$0xff]
      %v230 = vld [vmem:[%s1 + $0x20] sm:$0xff]
      %v231 = vld [vmem:[%s1 + $0x28] sm:$0xff]
      %v232 = vld [vmem:[%s1 + $0x30] sm:$0xff]
      %v233 = vld [vmem:[%s1 + $0x38] sm:$0xff]
      %v234 = vld [vmem:[%s1 + $0x40] sm:$0xff]
      %v235 = vld [vmem:[%s1 + $0x48] sm:$0xff]
      %v236 = vld [vmem:[%s1 + $0x50] sm:$0xff]
      %v237 = vld [vmem:[%s1 + $0x58] sm:$0xff]
      %v238 = vld [vmem:[%s1 + $0x60] sm:$0xff]
      %v239 = vld [vmem:[%s1 + $0x68] sm:$0xff]
      %v240 = vld [vmem:[%s1 + $0x70] sm:$0xff]
      %v241 = vld [vmem:[%s1 + $0x78] sm:$0xff]
      %v242 = vld [vmem:[%s1 + $0x80] sm:$0xff]
      %v243 = vld [vmem:[%s1 + $0x88] sm:$0xff]
      %v244 = vld [vmem:[%s1 + $0x90] sm:$0xff]
      %v245 = vld [vmem:[%s1 + $0x98] sm:$0xff]
      %v246 = vld [vmem:[%s1 + $0xa0] sm:$0xff]
      %v247 = vld [vmem:[%s1 + $0xa8] sm:$0xff]
      %v248 = vld [vmem:[%s1 + $0xb0] sm:$0xff]
      %v249 = vld [vmem:[%s1 + $0xb8] sm:$0xff]
      %v250 = vld [vmem:[%s1 + $0xc0] sm:$0xff]
      %v251 = vld [vmem:[%s1 + $0xc8] sm:$0xff]
      %v252 = vld [vmem:[%s1 + $0xd0] sm:$0xff]
      %v253 = vld [vmem:[%s1 + $0xd8] sm:$0xff]
      %v254 = vld [vmem:[%s1 + $0xe0] sm:$0xff]
      %v255 = vld [vmem:[%s1 + $0xe8] sm:$0xff]
      %v256 = vld [vmem:[%s1 + $0xf0] sm:$0xff]
      %v257 = vld [vmem:[%s1 + $0xf8] sm:$0xff]
      %v258 = vld [vmem:[%s1 + $0x100] sm:$0xff]
      %v259 = vld [vmem:[%s1 + $0x108] sm:$0xff]
      %v260 = vld [vmem:[%s1 + $0x110] sm:$0xff]
      %v261 = vld [vmem:[%s1 + $0x118] sm:$0xff]
      %v262 = vpack.c.bf16 %v227, %v226
      %v263 = vpack.c.bf16 %v229, %v228
      %v264 = vpack.c.bf16 %v231, %v230
      %v265 = vpack.c.bf16 %v233, %v232
      %v266 = vpack.c.bf16 %v235, %v234
      %v267 = vpack.c.bf16 %v237, %v236
      %v268 = vpack.c.bf16 %v239, %v238
      %v269 = vpack.c.bf16 %v241, %v240
      %v270 = vpack.c.bf16 %v243, %v242
      %v271 = vpack.c.bf16 %v245, %v244
      %v272 = vpack.c.bf16 %v247, %v246
      %v273 = vpack.c.bf16 %v249, %v248
      %v274 = vpack.c.bf16 %v251, %v250
      %v275 = vpack.c.bf16 %v253, %v252
      %v276 = vpack.c.bf16 %v255, %v254
      %v277 = vpack.c.bf16 %v257, %v256
      %v278 = vpack.c.bf16 %v259, %v258
      %v279 = vpack.c.bf16 %v261, %v260
      %v281 = vrot.slane %v220, 1
      %282 = vrot.lane.b32.xlu0 %v281, 32
      %v283 = vpop.permute.xlu0 %282
      %v285 = vrot.slane %v220, 2
      %286 = vrot.lane.b32.xlu0 %v285, 64
      %v287 = vpop.permute.xlu0 %286
      %290 = vrot.lane.b32.xlu0 %v221, 96
      %v291 = vpop.permute.xlu0 %290
      %v293 = vrot.slane %v221, 1
      %v295 = vrot.slane %v221, 2
      %296 = vrot.lane.b32.xlu0 %v295, 32
      %v297 = vpop.permute.xlu0 %296
      %300 = vrot.lane.b32.xlu0 %v222, 64
      %v301 = vpop.permute.xlu0 %300
      %v303 = vrot.slane %v222, 1
      %304 = vrot.lane.b32.xlu0 %v303, 96
      %v305 = vpop.permute.xlu0 %304
      %v307 = vrot.slane %v222, 2
      %vm309 = vcmask 261120
      %v310 = vsel %vm309, %v220, %v283
      %vm311 = vcmask 523264
      %v312 = vsel %vm311, %v310, %v287
      %vm313 = vcmask 785408
      %v314 = vsel %vm313, %v312, %v291
      %v315 = vsel %vm309, %v293, %v297
      %v316 = vsel %vm311, %v315, %v301
      %v317 = vsel %vm313, %v316, %v305
      %v318 = vpack.c.bf16 %v314, %v314
      %v319 = vpack.c.bf16 %v317, %v317
      %v320 = vpack.c.bf16 %v307, %v307
      %v322 = vsel %vm309, %v320, 0
      %324 = vmatprep.subr.bf16.mxu0 0
      %325 = vmatpush1.bf16.msra.mxu0 %v262
      %326 = vmatprep.subr.bf16.mxu0 0
      %327 = vmatpush1.bf16.msra.mxu0 %v263
      %328 = vmatprep.subr.bf16.mxu0 0
      %329 = vmatpush1.bf16.msra.mxu0 %v264
      %330 = vmatprep.subr.bf16.mxu0 0
      %331 = vmatpush1.bf16.msra.mxu0 %v265
      %332 = vmatprep.subr.bf16.mxu0 0
      %333 = vmatpush1.bf16.msra.mxu0 %v266
      %334 = vmatprep.subr.bf16.mxu0 0
      %335 = vmatpush1.bf16.msra.mxu0 %v267
      %336 = vmatprep.subr.bf16.mxu0 0
      %337 = vmatpush1.bf16.msra.mxu0 %v268
      %338 = vmatprep.subr.bf16.mxu0 0
      %339 = vmatpush1.bf16.msra.mxu0 %v269
      %340 = vmatprep.subr.bf16.mxu0 0
      %341 = vmatpush1.bf16.msra.mxu0 %v270
      %342 = vmatprep.subr.bf16.mxu0 0
      %343 = vmatpush1.bf16.msra.mxu0 %v271
      %344 = vmatprep.subr.bf16.mxu0 0
      %345 = vmatpush1.bf16.msra.mxu0 %v272
      %346 = vmatprep.subr.bf16.mxu0 0
      %347 = vmatpush1.bf16.msra.mxu0 %v273
      %348 = vmatprep.subr.bf16.mxu0 0
      %349 = vmatpush1.bf16.msra.mxu0 %v274
      %350 = vmatprep.subr.bf16.mxu0 0
      %351 = vmatpush1.bf16.msra.mxu0 %v275
      %352 = vmatprep.subr.bf16.mxu0 0
      %353 = vmatpush1.bf16.msra.mxu0 %v276
      %354 = vmatprep.subr.bf16.mxu0 0
      %355 = vmatpush1.bf16.msra.mxu0 %v277
      %356 = vmatprep.mubr.bf16.mxu0 %v319
      %357 = vmatmul.mubr.bf16.gmra.mrb[0].mxu0 %v318
      %v358 = vpop.f32.mrb[0].mxu0
      %v359 = vadd.f32 0.0, %v358
      %v360 = vpop.f32.mrb[0].mxu0
      %v361 = vpop.f32.mrb[0].mxu0
      %v362 = vpop.f32.mrb[0].mxu0
      %363 = vdwg.mxu0
      %364 = vmatprep.subr.bf16.mxu0 0
      %365 = vmatpush1.bf16.msra.mxu0 %v278
      %366 = vmatprep.subr.bf16.mxu0 0
      %367 = vmatpush1.bf16.msra.mxu0 %v279
      %368 = vmatprep.subr.bf16.mxu0 0
      %369 = vmatpush1.bf16.msra.mxu0 0
      %370 = vmatprep.subr.bf16.mxu0 0
      %371 = vmatpush1.bf16.msra.mxu0 0
      %372 = vmatprep.subr.bf16.mxu0 0
      %373 = vmatpush1.bf16.msra.mxu0 0
      %374 = vmatprep.subr.bf16.mxu0 0
      %375 = vmatpush1.bf16.msra.mxu0 0
      %376 = vmatprep.subr.bf16.mxu0 0
      %377 = vmatpush1.bf16.msra.mxu0 0
      %378 = vmatprep.subr.bf16.mxu0 0
      %379 = vmatpush1.bf16.msra.mxu0 0
      %380 = vmatprep.subr.bf16.mxu0 0
      %381 = vmatpush1.bf16.msra.mxu0 0
      %382 = vmatprep.subr.bf16.mxu0 0
      %383 = vmatpush1.bf16.msra.mxu0 0
      %384 = vmatprep.subr.bf16.mxu0 0
      %385 = vmatpush1.bf16.msra.mxu0 0
      %386 = vmatprep.subr.bf16.mxu0 0
      %387 = vmatpush1.bf16.msra.mxu0 0
      %388 = vmatprep.subr.bf16.mxu0 0
      %389 = vmatpush1.bf16.msra.mxu0 0
      %390 = vmatprep.subr.bf16.mxu0 0
      %391 = vmatpush1.bf16.msra.mxu0 0
      %392 = vmatprep.subr.bf16.mxu0 0
      %393 = vmatpush1.bf16.msra.mxu0 0
      %394 = vmatprep.subr.bf16.mxu0 0
      %395 = vmatpush1.bf16.msra.mxu0 0
      %396 = vmatprep.mubr.bf16.mxu0 0
      %397 = vmatmul.mubr.bf16.gmra.mrb[0].mxu0 %v322
      %v398 = vpop.f32.mrb[0].mxu0
      %v399 = vadd.f32 %v359, %v398
      %v400 = vpop.f32.mrb[0].mxu0
      %v401 = vpop.f32.mrb[0].mxu0
      %v402 = vpop.f32.mrb[0].mxu0
      %403 = vdwg.mxu0
      %v404 = vmax.f32 %v399, 0.0
      %s405 = scalar_lea.vmem [#allocation3], 8
      %vm406 = vcmask 519168
      %407 = vst.msk [vmem:[%s405 + $0x1] sm:$0xf] %vm406, %v404
      %408 = vrot.lane.b32.xlu0 %v293, 32
      %v409 = vpop.permute.xlu0 %408
      %411 = vrot.lane.b32.xlu0 %v295, 64
      %v412 = vpop.permute.xlu0 %411
      %414 = vrot.lane.b32.xlu0 %v222, 96
      %v415 = vpop.permute.xlu0 %414
      %418 = vrot.lane.b32.xlu0 %v307, 32
      %v419 = vpop.permute.xlu0 %418
      %422 = vrot.lane.b32.xlu0 %v223, 64
      %v423 = vpop.permute.xlu0 %422
      %v425 = vrot.slane %v223, 1
      %426 = vrot.lane.b32.xlu0 %v425, 96
      %v427 = vpop.permute.xlu0 %426
      %v429 = vrot.slane %v223, 2
      %v431 = vsel %vm309, %v221, %v409
      %v432 = vsel %vm311, %v431, %v412
      %v433 = vsel %vm313, %v432, %v415
      %v434 = vsel %vm309, %v303, %v419
      %v435 = vsel %vm311, %v434, %v423
      %v436 = vsel %vm313, %v435, %v427
      %v437 = vpack.c.bf16 %v433, %v433
      %v438 = vpack.c.bf16 %v436, %v436
      %v439 = vpack.c.bf16 %v429, %v429
      %v441 = vsel %vm309, %v439, 0
      %443 = vmatprep.subr.bf16.mxu0 0
      %444 = vmatpush1.bf16.msra.mxu0 %v262
      %445 = vmatprep.subr.bf16.mxu0 0
      %446 = vmatpush1.bf16.msra.mxu0 %v263
      %447 = vmatprep.subr.bf16.mxu0 0
      %448 = vmatpush1.bf16.msra.mxu0 %v264
      %449 = vmatprep.subr.bf16.mxu0 0
      %450 = vmatpush1.bf16.msra.mxu0 %v265
      %451 = vmatprep.subr.bf16.mxu0 0
      %452 = vmatpush1.bf16.msra.mxu0 %v266
      %453 = vmatprep.subr.bf16.mxu0 0
      %454 = vmatpush1.bf16.msra.mxu0 %v267
      %455 = vmatprep.subr.bf16.mxu0 0
      %456 = vmatpush1.bf16.msra.mxu0 %v268
      %457 = vmatprep.subr.bf16.mxu0 0
      %458 = vmatpush1.bf16.msra.mxu0 %v269
      %459 = vmatprep.subr.bf16.mxu0 0
      %460 = vmatpush1.bf16.msra.mxu0 %v270
      %461 = vmatprep.subr.bf16.mxu0 0
      %462 = vmatpush1.bf16.msra.mxu0 %v271
      %463 = vmatprep.subr.bf16.mxu0 0
      %464 = vmatpush1.bf16.msra.mxu0 %v272
      %465 = vmatprep.subr.bf16.mxu0 0
      %466 = vmatpush1.bf16.msra.mxu0 %v273
      %467 = vmatprep.subr.bf16.mxu0 0
      %468 = vmatpush1.bf16.msra.mxu0 %v274
      %469 = vmatprep.subr.bf16.mxu0 0
      %470 = vmatpush1.bf16.msra.mxu0 %v275
      %471 = vmatprep.subr.bf16.mxu0 0
      %472 = vmatpush1.bf16.msra.mxu0 %v276
      %473 = vmatprep.subr.bf16.mxu0 0
      %474 = vmatpush1.bf16.msra.mxu0 %v277
      %475 = vmatprep.mubr.bf16.mxu0 %v438
      %476 = vmatmul.mubr.bf16.gmra.mrb[0].mxu0 %v437
      %v477 = vpop.f32.mrb[0].mxu0
      %v478 = vadd.f32 0.0, %v477
      %v479 = vpop.f32.mrb[0].mxu0
      %v480 = vpop.f32.mrb[0].mxu0
      %v481 = vpop.f32.mrb[0].mxu0
      %482 = vdwg.mxu0
      %483 = vmatprep.subr.bf16.mxu0 0
      %484 = vmatpush1.bf16.msra.mxu0 %v278
      %485 = vmatprep.subr.bf16.mxu0 0
      %486 = vmatpush1.bf16.msra.mxu0 %v279
      %487 = vmatprep.subr.bf16.mxu0 0
      %488 = vmatpush1.bf16.msra.mxu0 0
      %489 = vmatprep.subr.bf16.mxu0 0
      %490 = vmatpush1.bf16.msra.mxu0 0
      %491 = vmatprep.subr.bf16.mxu0 0
      %492 = vmatpush1.bf16.msra.mxu0 0
      %493 = vmatprep.subr.bf16.mxu0 0
      %494 = vmatpush1.bf16.msra.mxu0 0
      %495 = vmatprep.subr.bf16.mxu0 0
      %496 = vmatpush1.bf16.msra.mxu0 0
      %497 = vmatprep.subr.bf16.mxu0 0
      %498 = vmatpush1.bf16.msra.mxu0 0
      %499 = vmatprep.subr.bf16.mxu0 0
      %500 = vmatpush1.bf16.msra.mxu0 0
      %501 = vmatprep.subr.bf16.mxu0 0
      %502 = vmatpush1.bf16.msra.mxu0 0
      %503 = vmatprep.subr.bf16.mxu0 0
      %504 = vmatpush1.bf16.msra.mxu0 0
      %505 = vmatprep.subr.bf16.mxu0 0
      %506 = vmatpush1.bf16.msra.mxu0 0
      %507 = vmatprep.subr.bf16.mxu0 0
      %508 = vmatpush1.bf16.msra.mxu0 0
      %509 = vmatprep.subr.bf16.mxu0 0
      %510 = vmatpush1.bf16.msra.mxu0 0
      %511 = vmatprep.subr.bf16.mxu0 0
      %512 = vmatpush1.bf16.msra.mxu0 0
      %513 = vmatprep.subr.bf16.mxu0 0
      %514 = vmatpush1.bf16.msra.mxu0 0
      %515 = vmatprep.mubr.bf16.mxu0 0
      %516 = vmatmul.mubr.bf16.gmra.mrb[0].mxu0 %v441
      %v517 = vpop.f32.mrb[0].mxu0
      %v518 = vadd.f32 %v478, %v517
      %v519 = vpop.f32.mrb[0].mxu0
      %v520 = vpop.f32.mrb[0].mxu0
      %v521 = vpop.f32.mrb[0].mxu0
      %522 = vdwg.mxu0
      %v523 = vmax.f32 %v518, 0.0
      %s524 = scalar_lea.vmem [#allocation3], 16
      %525 = vst.msk [vmem:[%s524 + $0x1] sm:$0xf] %vm406, %v523
      %526 = vrot.lane.b32.xlu0 %v303, 32
      %v527 = vpop.permute.xlu0 %526
      %529 = vrot.lane.b32.xlu0 %v307, 64
      %v530 = vpop.permute.xlu0 %529
      %532 = vrot.lane.b32.xlu0 %v223, 96
      %v533 = vpop.permute.xlu0 %532
      %536 = vrot.lane.b32.xlu0 %v429, 32
      %v537 = vpop.permute.xlu0 %536
      %540 = vrot.lane.b32.xlu0 %v224, 64
      %v541 = vpop.permute.xlu0 %540
      %v543 = vrot.slane %v224, 1
      %544 = vrot.lane.b32.xlu0 %v543, 96
      %v545 = vpop.permute.xlu0 %544
      %v547 = vrot.slane %v224, 2
      %v549 = vsel %vm309, %v222, %v527
      %v550 = vsel %vm311, %v549, %v530
      %v551 = vsel %vm313, %v550, %v533
      %v552 = vsel %vm309, %v425, %v537
      %v553 = vsel %vm311, %v552, %v541
      %v554 = vsel %vm313, %v553, %v545
      %v555 = vpack.c.bf16 %v551, %v551
      %v556 = vpack.c.bf16 %v554, %v554
      %v557 = vpack.c.bf16 %v547, %v547
      %v559 = vsel %vm309, %v557, 0
      %561 = vmatprep.subr.bf16.mxu0 0
      %562 = vmatpush1.bf16.msra.mxu0 %v262
      %563 = vmatprep.subr.bf16.mxu0 0
      %564 = vmatpush1.bf16.msra.mxu0 %v263
      %565 = vmatprep.subr.bf16.mxu0 0
      %566 = vmatpush1.bf16.msra.mxu0 %v264
      %567 = vmatprep.subr.bf16.mxu0 0
      %568 = vmatpush1.bf16.msra.mxu0 %v265
      %569 = vmatprep.subr.bf16.mxu0 0
      %570 = vmatpush1.bf16.msra.mxu0 %v266
      %571 = vmatprep.subr.bf16.mxu0 0
      %572 = vmatpush1.bf16.msra.mxu0 %v267
      %573 = vmatprep.subr.bf16.mxu0 0
      %574 = vmatpush1.bf16.msra.mxu0 %v268
      %575 = vmatprep.subr.bf16.mxu0 0
      %576 = vmatpush1.bf16.msra.mxu0 %v269
      %577 = vmatprep.subr.bf16.mxu0 0
      %578 = vmatpush1.bf16.msra.mxu0 %v270
      %579 = vmatprep.subr.bf16.mxu0 0
      %580 = vmatpush1.bf16.msra.mxu0 %v271
      %581 = vmatprep.subr.bf16.mxu0 0
      %582 = vmatpush1.bf16.msra.mxu0 %v272
      %583 = vmatprep.subr.bf16.mxu0 0
      %584 = vmatpush1.bf16.msra.mxu0 %v273
      %585 = vmatprep.subr.bf16.mxu0 0
      %586 = vmatpush1.bf16.msra.mxu0 %v274
      %587 = vmatprep.subr.bf16.mxu0 0
      %588 = vmatpush1.bf16.msra.mxu0 %v275
      %589 = vmatprep.subr.bf16.mxu0 0
      %590 = vmatpush1.bf16.msra.mxu0 %v276
      %591 = vmatprep.subr.bf16.mxu0 0
      %592 = vmatpush1.bf16.msra.mxu0 %v277
      %593 = vmatprep.mubr.bf16.mxu0 %v556
      %594 = vmatmul.mubr.bf16.gmra.mrb[0].mxu0 %v555
      %v595 = vpop.f32.mrb[0].mxu0
      %v596 = vadd.f32 0.0, %v595
      %v597 = vpop.f32.mrb[0].mxu0
      %v598 = vpop.f32.mrb[0].mxu0
      %v599 = vpop.f32.mrb[0].mxu0
      %600 = vdwg.mxu0
      %601 = vmatprep.subr.bf16.mxu0 0
      %602 = vmatpush1.bf16.msra.mxu0 %v278
      %603 = vmatprep.subr.bf16.mxu0 0
      %604 = vmatpush1.bf16.msra.mxu0 %v279
      %605 = vmatprep.subr.bf16.mxu0 0
      %606 = vmatpush1.bf16.msra.mxu0 0
      %607 = vmatprep.subr.bf16.mxu0 0
      %608 = vmatpush1.bf16.msra.mxu0 0
      %609 = vmatprep.subr.bf16.mxu0 0
      %610 = vmatpush1.bf16.msra.mxu0 0
      %611 = vmatprep.subr.bf16.mxu0 0
      %612 = vmatpush1.bf16.msra.mxu0 0
      %613 = vmatprep.subr.bf16.mxu0 0
      %614 = vmatpush1.bf16.msra.mxu0 0
      %615 = vmatprep.subr.bf16.mxu0 0
      %616 = vmatpush1.bf16.msra.mxu0 0
      %617 = vmatprep.subr.bf16.mxu0 0
      %618 = vmatpush1.bf16.msra.mxu0 0
      %619 = vmatprep.subr.bf16.mxu0 0
      %620 = vmatpush1.bf16.msra.mxu0 0
      %621 = vmatprep.subr.bf16.mxu0 0
      %622 = vmatpush1.bf16.msra.mxu0 0
      %623 = vmatprep.subr.bf16.mxu0 0
      %624 = vmatpush1.bf16.msra.mxu0 0
      %625 = vmatprep.subr.bf16.mxu0 0
      %626 = vmatpush1.bf16.msra.mxu0 0
      %627 = vmatprep.subr.bf16.mxu0 0
      %628 = vmatpush1.bf16.msra.mxu0 0
      %629 = vmatprep.subr.bf16.mxu0 0
      %630 = vmatpush1.bf16.msra.mxu0 0
      %631 = vmatprep.subr.bf16.mxu0 0
      %632 = vmatpush1.bf16.msra.mxu0 0
      %633 = vmatprep.mubr.bf16.mxu0 0
      %634 = vmatmul.mubr.bf16.gmra.mrb[0].mxu0 %v559
      %v635 = vpop.f32.mrb[0].mxu0
      %v636 = vadd.f32 %v596, %v635
      %v637 = vpop.f32.mrb[0].mxu0
      %v638 = vpop.f32.mrb[0].mxu0
      %v639 = vpop.f32.mrb[0].mxu0
      %640 = vdwg.mxu0
      %v641 = vmax.f32 %v636, 0.0
      %s642 = scalar_lea.vmem [#allocation3], 24
      %643 = vst.msk [vmem:[%s642 + $0x1] sm:$0xf] %vm406, %v641
      %644 = vrot.lane.b32.xlu0 %v425, 32
      %v645 = vpop.permute.xlu0 %644
      %647 = vrot.lane.b32.xlu0 %v429, 64
      %v648 = vpop.permute.xlu0 %647
      %650 = vrot.lane.b32.xlu0 %v224, 96
      %v651 = vpop.permute.xlu0 %650
      %654 = vrot.lane.b32.xlu0 %v547, 32
      %v655 = vpop.permute.xlu0 %654
      %658 = vrot.lane.b32.xlu0 %v225, 64
      %v659 = vpop.permute.xlu0 %658
      %v661 = vrot.slane %v225, 1
      %662 = vrot.lane.b32.xlu0 %v661, 96
      %v663 = vpop.permute.xlu0 %662
      %v665 = vrot.slane %v225, 2
      %v667 = vsel %vm309, %v223, %v645
      %v668 = vsel %vm311, %v667, %v648
      %v669 = vsel %vm313, %v668, %v651
      %v670 = vsel %vm309, %v543, %v655
      %v671 = vsel %vm311, %v670, %v659
      %v672 = vsel %vm313, %v671, %v663
      %v673 = vpack.c.bf16 %v669, %v669
      %v674 = vpack.c.bf16 %v672, %v672
      %v675 = vpack.c.bf16 %v665, %v665
      %v677 = vsel %vm309, %v675, 0
      %679 = vmatprep.subr.bf16.mxu0 0
      %680 = vmatpush1.bf16.msra.mxu0 %v262
      %681 = vmatprep.subr.bf16.mxu0 0
      %682 = vmatpush1.bf16.msra.mxu0 %v263
      %683 = vmatprep.subr.bf16.mxu0 0
      %684 = vmatpush1.bf16.msra.mxu0 %v264
      %685 = vmatprep.subr.bf16.mxu0 0
      %686 = vmatpush1.bf16.msra.mxu0 %v265
      %687 = vmatprep.subr.bf16.mxu0 0
      %688 = vmatpush1.bf16.msra.mxu0 %v266
      %689 = vmatprep.subr.bf16.mxu0 0
      %690 = vmatpush1.bf16.msra.mxu0 %v267
      %691 = vmatprep.subr.bf16.mxu0 0
      %692 = vmatpush1.bf16.msra.mxu0 %v268
      %693 = vmatprep.subr.bf16.mxu0 0
      %694 = vmatpush1.bf16.msra.mxu0 %v269
      %695 = vmatprep.subr.bf16.mxu0 0
      %696 = vmatpush1.bf16.msra.mxu0 %v270
      %697 = vmatprep.subr.bf16.mxu0 0
      %698 = vmatpush1.bf16.msra.mxu0 %v271
      %699 = vmatprep.subr.bf16.mxu0 0
      %700 = vmatpush1.bf16.msra.mxu0 %v272
      %701 = vmatprep.subr.bf16.mxu0 0
      %702 = vmatpush1.bf16.msra.mxu0 %v273
      %703 = vmatprep.subr.bf16.mxu0 0
      %704 = vmatpush1.bf16.msra.mxu0 %v274
      %705 = vmatprep.subr.bf16.mxu0 0
      %706 = vmatpush1.bf16.msra.mxu0 %v275
      %707 = vmatprep.subr.bf16.mxu0 0
      %708 = vmatpush1.bf16.msra.mxu0 %v276
      %709 = vmatprep.subr.bf16.mxu0 0
      %710 = vmatpush1.bf16.msra.mxu0 %v277
      %711 = vmatprep.mubr.bf16.mxu0 %v674
      %712 = vmatmul.mubr.bf16.gmra.mrb[0].mxu0 %v673
      %v713 = vpop.f32.mrb[0].mxu0
      %v714 = vadd.f32 0.0, %v713
      %v715 = vpop.f32.mrb[0].mxu0
      %v716 = vpop.f32.mrb[0].mxu0
      %v717 = vpop.f32.mrb[0].mxu0
      %718 = vdwg.mxu0
      %719 = vmatprep.subr.bf16.mxu0 0
      %720 = vmatpush1.bf16.msra.mxu0 %v278
      %721 = vmatprep.subr.bf16.mxu0 0
      %722 = vmatpush1.bf16.msra.mxu0 %v279
      %723 = vmatprep.subr.bf16.mxu0 0
      %724 = vmatpush1.bf16.msra.mxu0 0
      %725 = vmatprep.subr.bf16.mxu0 0
      %726 = vmatpush1.bf16.msra.mxu0 0
      %727 = vmatprep.subr.bf16.mxu0 0
      %728 = vmatpush1.bf16.msra.mxu0 0
      %729 = vmatprep.subr.bf16.mxu0 0
      %730 = vmatpush1.bf16.msra.mxu0 0
      %731 = vmatprep.subr.bf16.mxu0 0
      %732 = vmatpush1.bf16.msra.mxu0 0
      %733 = vmatprep.subr.bf16.mxu0 0
      %734 = vmatpush1.bf16.msra.mxu0 0
      %735 = vmatprep.subr.bf16.mxu0 0
      %736 = vmatpush1.bf16.msra.mxu0 0
      %737 = vmatprep.subr.bf16.mxu0 0
      %738 = vmatpush1.bf16.msra.mxu0 0
      %739 = vmatprep.subr.bf16.mxu0 0
      %740 = vmatpush1.bf16.msra.mxu0 0
      %741 = vmatprep.subr.bf16.mxu0 0
      %742 = vmatpush1.bf16.msra.mxu0 0
      %743 = vmatprep.subr.bf16.mxu0 0
      %744 = vmatpush1.bf16.msra.mxu0 0
      %745 = vmatprep.subr.bf16.mxu0 0
      %746 = vmatpush1.bf16.msra.mxu0 0
      %747 = vmatprep.subr.bf16.mxu0 0
      %748 = vmatpush1.bf16.msra.mxu0 0
      %749 = vmatprep.subr.bf16.mxu0 0
      %750 = vmatpush1.bf16.msra.mxu0 0
      %751 = vmatprep.mubr.bf16.mxu0 0
      %752 = vmatmul.mubr.bf16.gmra.mrb[0].mxu0 %v677
      %v753 = vpop.f32.mrb[0].mxu0
      %v754 = vadd.f32 %v714, %v753
      %v755 = vpop.f32.mrb[0].mxu0
      %v756 = vpop.f32.mrb[0].mxu0
      %v757 = vpop.f32.mrb[0].mxu0
      %758 = vdwg.mxu0
      %v759 = vmax.f32 %v754, 0.0
      %s760 = scalar_lea.vmem [#allocation3], 32
      %761 = vst.msk [vmem:[%s760 + $0x1] sm:$0xf] %vm406, %v759
      %v762 = vld [vmem:[#allocation3] sm:$0x3f]
      %v763 = vld [vmem:[#allocation3 + $0x8] sm:$0x3f]
      %v764 = vld [vmem:[#allocation3 + $0x10] sm:$0x3f]
      %v765 = vld [vmem:[#allocation3 + $0x18] sm:$0x3f]
      %v766 = vld [vmem:[#allocation3 + $0x20] sm:$0x3f]
      %v767 = vld [vmem:[#allocation3 + $0x28] sm:$0x3f]
      %v768 = vld [vmem:[%s2] sm:$0xff]
      %v769 = vld [vmem:[%s2 + $0x8] sm:$0xff]
      %v770 = vld [vmem:[%s2 + $0x10] sm:$0xff]
      %v771 = vld [vmem:[%s2 + $0x18] sm:$0xff]
      %v772 = vld [vmem:[%s2 + $0x20] sm:$0xff]
      %v773 = vld [vmem:[%s2 + $0x28] sm:$0xff]
      %v774 = vld [vmem:[%s2 + $0x30] sm:$0xff]
      %v775 = vld [vmem:[%s2 + $0x38] sm:$0xff]
      %v776 = vld [vmem:[%s2 + $0x40] sm:$0xff]
      %v777 = vld [vmem:[%s2 + $0x48] sm:$0xff]
      %v778 = vld [vmem:[%s2 + $0x50] sm:$0xff]
      %v779 = vld [vmem:[%s2 + $0x58] sm:$0xff]
      %v780 = vld [vmem:[%s2 + $0x60] sm:$0xff]
      %v781 = vld [vmem:[%s2 + $0x68] sm:$0xff]
      %v782 = vld [vmem:[%s2 + $0x70] sm:$0xff]
      %v783 = vld [vmem:[%s2 + $0x78] sm:$0xff]
      %v784 = vld [vmem:[%s2 + $0x80] sm:$0xff]
      %v785 = vld [vmem:[%s2 + $0x88] sm:$0xff]
      %v786 = vld [vmem:[%s2 + $0x90] sm:$0xff]
      %v787 = vld [vmem:[%s2 + $0x98] sm:$0xff]
      %v788 = vld [vmem:[%s2 + $0xa0] sm:$0xff]
      %v789 = vld [vmem:[%s2 + $0xa8] sm:$0xff]
      %v790 = vld [vmem:[%s2 + $0xb0] sm:$0xff]
      %v791 = vld [vmem:[%s2 + $0xb8] sm:$0xff]
      %v792 = vld [vmem:[%s2 + $0xc0] sm:$0xff]
      %v793 = vld [vmem:[%s2 + $0xc8] sm:$0xff]
      %v794 = vld [vmem:[%s2 + $0xd0] sm:$0xff]
      %v795 = vld [vmem:[%s2 + $0xd8] sm:$0xff]
      %v796 = vld [vmem:[%s2 + $0xe0] sm:$0xff]
      %v797 = vld [vmem:[%s2 + $0xe8] sm:$0xff]
      %v798 = vld [vmem:[%s2 + $0xf0] sm:$0xff]
      %v799 = vld [vmem:[%s2 + $0xf8] sm:$0xff]
      %v800 = vld [vmem:[%s2 + $0x100] sm:$0xff]
      %v801 = vld [vmem:[%s2 + $0x108] sm:$0xff]
      %v802 = vld [vmem:[%s2 + $0x110] sm:$0xff]
      %v803 = vld [vmem:[%s2 + $0x118] sm:$0xff]
      %v804 = vld [vmem:[%s2 + $0x120] sm:$0xff]
      %v805 = vld [vmem:[%s2 + $0x128] sm:$0xff]
      %v806 = vld [vmem:[%s2 + $0x130] sm:$0xff]
      %v807 = vld [vmem:[%s2 + $0x138] sm:$0xff]
      %v808 = vld [vmem:[%s2 + $0x140] sm:$0xff]
      %v809 = vld [vmem:[%s2 + $0x148] sm:$0xff]
      %v810 = vld [vmem:[%s2 + $0x150] sm:$0xff]
      %v811 = vld [vmem:[%s2 + $0x158] sm:$0xff]
      %v812 = vld [vmem:[%s2 + $0x160] sm:$0xff]
      %v813 = vld [vmem:[%s2 + $0x168] sm:$0xff]
      %v814 = vld [vmem:[%s2 + $0x170] sm:$0xff]
      %v815 = vld [vmem:[%s2 + $0x178] sm:$0xff]
      %v816 = vld [vmem:[%s2 + $0x180] sm:$0xff]
      %v817 = vld [vmem:[%s2 + $0x188] sm:$0xff]
      %v818 = vld [vmem:[%s2 + $0x190] sm:$0xff]
      %v819 = vld [vmem:[%s2 + $0x198] sm:$0xff]
      %v820 = vld [vmem:[%s2 + $0x1a0] sm:$0xff]
      %v821 = vld [vmem:[%s2 + $0x1a8] sm:$0xff]
      %v822 = vld [vmem:[%s2 + $0x1b0] sm:$0xff]
      %v823 = vld [vmem:[%s2 + $0x1b8] sm:$0xff]
      %v824 = vld [vmem:[%s2 + $0x1c0] sm:$0xff]
      %v825 = vld [vmem:[%s2 + $0x1c8] sm:$0xff]
      %v826 = vld [vmem:[%s2 + $0x1d0] sm:$0xff]
      %v827 = vld [vmem:[%s2 + $0x1d8] sm:$0xff]
      %v828 = vld [vmem:[%s2 + $0x1e0] sm:$0xff]
      %v829 = vld [vmem:[%s2 + $0x1e8] sm:$0xff]
      %v830 = vld [vmem:[%s2 + $0x1f0] sm:$0xff]
      %v831 = vld [vmem:[%s2 + $0x1f8] sm:$0xff]
      %v832 = vld [vmem:[%s2 + $0x200] sm:$0xff]
      %v833 = vld [vmem:[%s2 + $0x208] sm:$0xff]
      %v834 = vld [vmem:[%s2 + $0x210] sm:$0xff]
      %v835 = vld [vmem:[%s2 + $0x218] sm:$0xff]
      %v836 = vld [vmem:[%s2 + $0x220] sm:$0xff]
      %v837 = vld [vmem:[%s2 + $0x228] sm:$0xff]
      %v838 = vld [vmem:[%s2 + $0x230] sm:$0xff]
      %v839 = vld [vmem:[%s2 + $0x238] sm:$0xff]
      %v840 = vpack.c.bf16 %v769, %v768
      %v841 = vpack.c.bf16 %v771, %v770
      %v842 = vpack.c.bf16 %v773, %v772
      %v843 = vpack.c.bf16 %v775, %v774
      %v844 = vpack.c.bf16 %v777, %v776
      %v845 = vpack.c.bf16 %v779, %v778
      %v846 = vpack.c.bf16 %v781, %v780
      %v847 = vpack.c.bf16 %v783, %v782
      %v848 = vpack.c.bf16 %v785, %v784
      %v849 = vpack.c.bf16 %v787, %v786
      %v850 = vpack.c.bf16 %v789, %v788
      %v851 = vpack.c.bf16 %v791, %v790
      %v852 = vpack.c.bf16 %v793, %v792
      %v853 = vpack.c.bf16 %v795, %v794
      %v854 = vpack.c.bf16 %v797, %v796
      %v855 = vpack.c.bf16 %v799, %v798
      %v856 = vpack.c.bf16 %v801, %v800
      %v857 = vpack.c.bf16 %v803, %v802
      %v858 = vpack.c.bf16 %v805, %v804
      %v859 = vpack.c.bf16 %v807, %v806
      %v860 = vpack.c.bf16 %v809, %v808
      %v861 = vpack.c.bf16 %v811, %v810
      %v862 = vpack.c.bf16 %v813, %v812
      %v863 = vpack.c.bf16 %v815, %v814
      %v864 = vpack.c.bf16 %v817, %v816
      %v865 = vpack.c.bf16 %v819, %v818
      %v866 = vpack.c.bf16 %v821, %v820
      %v867 = vpack.c.bf16 %v823, %v822
      %v868 = vpack.c.bf16 %v825, %v824
      %v869 = vpack.c.bf16 %v827, %v826
      %v870 = vpack.c.bf16 %v829, %v828
      %v871 = vpack.c.bf16 %v831, %v830
      %v872 = vpack.c.bf16 %v833, %v832
      %v873 = vpack.c.bf16 %v835, %v834
      %v874 = vpack.c.bf16 %v837, %v836
      %v875 = vpack.c.bf16 %v839, %v838
      %v877 = vrot.slane %v762, 1
      %878 = vrot.lane.b32.xlu0 %v877, 64
      %v879 = vpop.permute.xlu0 %878
      %v881 = vrot.slane %v762, 2
      %884 = vrot.lane.b32.xlu0 %v763, 64
      %v885 = vpop.permute.xlu0 %884
      %v887 = vrot.slane %v763, 1
      %v889 = vrot.slane %v763, 2
      %890 = vrot.lane.b32.xlu0 %v889, 64
      %v891 = vpop.permute.xlu0 %890
      %v894 = vrot.slane %v764, 1
      %895 = vrot.lane.b32.xlu0 %v894, 64
      %v896 = vpop.permute.xlu0 %895
      %v898 = vrot.slane %v764, 2
      %v900 = vsel %vm311, %v762, %v879
      %v901 = vsel %vm311, %v881, %v885
      %v902 = vsel %vm311, %v887, %v891
      %v903 = vsel %vm311, %v764, %v896
      %v904 = vpack.c.bf16 %v900, %v900
      %v905 = vpack.c.bf16 %v901, %v901
      %v906 = vpack.c.bf16 %v902, %v902
      %v907 = vpack.c.bf16 %v903, %v903
      %v908 = vpack.c.bf16 %v898, %v898
      %v910 = vsel %vm311, %v908, 0
      %912 = vmatprep.subr.bf16.mxu0 0
      %913 = vmatpush1.bf16.msra.mxu0 %v840
      %914 = vmatprep.subr.bf16.mxu0 0
      %915 = vmatpush1.bf16.msra.mxu0 %v841
      %916 = vmatprep.subr.bf16.mxu0 0
      %917 = vmatpush1.bf16.msra.mxu0 %v842
      %918 = vmatprep.subr.bf16.mxu0 0
      %919 = vmatpush1.bf16.msra.mxu0 %v843
      %920 = vmatprep.subr.bf16.mxu0 0
      %921 = vmatpush1.bf16.msra.mxu0 %v844
      %922 = vmatprep.subr.bf16.mxu0 0
      %923 = vmatpush1.bf16.msra.mxu0 %v845
      %924 = vmatprep.subr.bf16.mxu0 0
      %925 = vmatpush1.bf16.msra.mxu0 %v846
      %926 = vmatprep.subr.bf16.mxu0 0
      %927 = vmatpush1.bf16.msra.mxu0 %v847
      %928 = vmatprep.subr.bf16.mxu0 0
      %929 = vmatpush1.bf16.msra.mxu0 %v848
      %930 = vmatprep.subr.bf16.mxu0 0
      %931 = vmatpush1.bf16.msra.mxu0 %v849
      %932 = vmatprep.subr.bf16.mxu0 0
      %933 = vmatpush1.bf16.msra.mxu0 %v850
      %934 = vmatprep.subr.bf16.mxu0 0
      %935 = vmatpush1.bf16.msra.mxu0 %v851
      %936 = vmatprep.subr.bf16.mxu0 0
      %937 = vmatpush1.bf16.msra.mxu0 %v852
      %938 = vmatprep.subr.bf16.mxu0 0
      %939 = vmatpush1.bf16.msra.mxu0 %v853
      %940 = vmatprep.subr.bf16.mxu0 0
      %941 = vmatpush1.bf16.msra.mxu0 %v854
      %942 = vmatprep.subr.bf16.mxu0 0
      %943 = vmatpush1.bf16.msra.mxu0 %v855
      %944 = vmatprep.mubr.bf16.mxu0 %v905
      %945 = vmatmul.mubr.bf16.gmra.mrb[0].mxu0 %v904
      %v946 = vpop.f32.mrb[0].mxu0
      %v947 = vadd.f32 0.0, %v946
      %v948 = vpop.f32.mrb[0].mxu0
      %v949 = vpop.f32.mrb[0].mxu0
      %v950 = vpop.f32.mrb[0].mxu0
      %951 = vdwg.mxu0
      %952 = vmatprep.subr.bf16.mxu0 0
      %953 = vmatpush1.bf16.msra.mxu0 %v856
      %954 = vmatprep.subr.bf16.mxu0 0
      %955 = vmatpush1.bf16.msra.mxu0 %v857
      %956 = vmatprep.subr.bf16.mxu0 0
      %957 = vmatpush1.bf16.msra.mxu0 %v858
      %958 = vmatprep.subr.bf16.mxu0 0
      %959 = vmatpush1.bf16.msra.mxu0 %v859
      %960 = vmatprep.subr.bf16.mxu0 0
      %961 = vmatpush1.bf16.msra.mxu0 %v860
      %962 = vmatprep.subr.bf16.mxu0 0
      %963 = vmatpush1.bf16.msra.mxu0 %v861
      %964 = vmatprep.subr.bf16.mxu0 0
      %965 = vmatpush1.bf16.msra.mxu0 %v862
      %966 = vmatprep.subr.bf16.mxu0 0
      %967 = vmatpush1.bf16.msra.mxu0 %v863
      %968 = vmatprep.subr.bf16.mxu0 0
      %969 = vmatpush1.bf16.msra.mxu0 %v864
      %970 = vmatprep.subr.bf16.mxu0 0
      %971 = vmatpush1.bf16.msra.mxu0 %v865
      %972 = vmatprep.subr.bf16.mxu0 0
      %973 = vmatpush1.bf16.msra.mxu0 %v866
      %974 = vmatprep.subr.bf16.mxu0 0
      %975 = vmatpush1.bf16.msra.mxu0 %v867
      %976 = vmatprep.subr.bf16.mxu0 0
      %977 = vmatpush1.bf16.msra.mxu0 %v868
      %978 = vmatprep.subr.bf16.mxu0 0
      %979 = vmatpush1.bf16.msra.mxu0 %v869
      %980 = vmatprep.subr.bf16.mxu0 0
      %981 = vmatpush1.bf16.msra.mxu0 %v870
      %982 = vmatprep.subr.bf16.mxu0 0
      %983 = vmatpush1.bf16.msra.mxu0 %v871
      %984 = vmatprep.mubr.bf16.mxu0 %v907
      %985 = vmatmul.mubr.bf16.gmra.mrb[0].mxu0 %v906
      %v986 = vpop.f32.mrb[0].mxu0
      %v987 = vadd.f32 %v947, %v986
      %v988 = vpop.f32.mrb[0].mxu0
      %v989 = vpop.f32.mrb[0].mxu0
      %v990 = vpop.f32.mrb[0].mxu0
      %991 = vdwg.mxu0
      %992 = vmatprep.subr.bf16.mxu0 0
      %993 = vmatpush1.bf16.msra.mxu0 %v872
      %994 = vmatprep.subr.bf16.mxu0 0
      %995 = vmatpush1.bf16.msra.mxu0 %v873
      %996 = vmatprep.subr.bf16.mxu0 0
      %997 = vmatpush1.bf16.msra.mxu0 %v874
      %998 = vmatprep.subr.bf16.mxu0 0
      %999 = vmatpush1.bf16.msra.mxu0 %v875
      %1000 = vmatprep.subr.bf16.mxu0 0
      %1001 = vmatpush1.bf16.msra.mxu0 0
      %1002 = vmatprep.subr.bf16.mxu0 0
      %1003 = vmatpush1.bf16.msra.mxu0 0
      %1004 = vmatprep.subr.bf16.mxu0 0
      %1005 = vmatpush1.bf16.msra.mxu0 0
      %1006 = vmatprep.subr.bf16.mxu0 0
      %1007 = vmatpush1.bf16.msra.mxu0 0
      %1008 = vmatprep.subr.bf16.mxu0 0
      %1009 = vmatpush1.bf16.msra.mxu0 0
      %1010 = vmatprep.subr.bf16.mxu0 0
      %1011 = vmatpush1.bf16.msra.mxu0 0
      %1012 = vmatprep.subr.bf16.mxu0 0
      %1013 = vmatpush1.bf16.msra.mxu0 0
      %1014 = vmatprep.subr.bf16.mxu0 0
      %1015 = vmatpush1.bf16.msra.mxu0 0
      %1016 = vmatprep.subr.bf16.mxu0 0
      %1017 = vmatpush1.bf16.msra.mxu0 0
      %1018 = vmatprep.subr.bf16.mxu0 0
      %1019 = vmatpush1.bf16.msra.mxu0 0
      %1020 = vmatprep.subr.bf16.mxu0 0
      %1021 = vmatpush1.bf16.msra.mxu0 0
      %1022 = vmatprep.subr.bf16.mxu0 0
      %1023 = vmatpush1.bf16.msra.mxu0 0
      %1024 = vmatprep.mubr.bf16.mxu0 0
      %1025 = vmatmul.mubr.bf16.gmra.mrb[0].mxu0 %v910
      %v1026 = vpop.f32.mrb[0].mxu0
      %v1027 = vadd.f32 %v987, %v1026
      %v1028 = vpop.f32.mrb[0].mxu0
      %v1029 = vpop.f32.mrb[0].mxu0
      %v1030 = vpop.f32.mrb[0].mxu0
      %1031 = vdwg.mxu0
      %v1032 = vmax.f32 %v1027, 0.0
      %1033 = vst.msk [vmem:[%s170] sm:$0xf] %vm406, %v1032
      %1034 = vrot.lane.b32.xlu0 %v887, 64
      %v1035 = vpop.permute.xlu0 %1034
      %1038 = vrot.lane.b32.xlu0 %v764, 64
      %v1039 = vpop.permute.xlu0 %1038
      %1042 = vrot.lane.b32.xlu0 %v898, 64
      %v1043 = vpop.permute.xlu0 %1042
      %v1046 = vrot.slane %v765, 1
      %1047 = vrot.lane.b32.xlu0 %v1046, 64
      %v1048 = vpop.permute.xlu0 %1047
      %v1050 = vrot.slane %v765, 2
      %v1052 = vsel %vm311, %v763, %v1035
      %v1053 = vsel %vm311, %v889, %v1039
      %v1054 = vsel %vm311, %v894, %v1043
      %v1055 = vsel %vm311, %v765, %v1048
      %v1056 = vpack.c.bf16 %v1052, %v1052
      %v1057 = vpack.c.bf16 %v1053, %v1053
      %v1058 = vpack.c.bf16 %v1054, %v1054
      %v1059 = vpack.c.bf16 %v1055, %v1055
      %v1060 = vpack.c.bf16 %v1050, %v1050
      %v1062 = vsel %vm311, %v1060, 0
      %1064 = vmatprep.subr.bf16.mxu0 0
      %1065 = vmatpush1.bf16.msra.mxu0 %v840
      %1066 = vmatprep.subr.bf16.mxu0 0
      %1067 = vmatpush1.bf16.msra.mxu0 %v841
      %1068 = vmatprep.subr.bf16.mxu0 0
      %1069 = vmatpush1.bf16.msra.mxu0 %v842
      %1070 = vmatprep.subr.bf16.mxu0 0
      %1071 = vmatpush1.bf16.msra.mxu0 %v843
      %1072 = vmatprep.subr.bf16.mxu0 0
      %1073 = vmatpush1.bf16.msra.mxu0 %v844
      %1074 = vmatprep.subr.bf16.mxu0 0
      %1075 = vmatpush1.bf16.msra.mxu0 %v845
      %1076 = vmatprep.subr.bf16.mxu0 0
      %1077 = vmatpush1.bf16.msra.mxu0 %v846
      %1078 = vmatprep.subr.bf16.mxu0 0
      %1079 = vmatpush1.bf16.msra.mxu0 %v847
      %1080 = vmatprep.subr.bf16.mxu0 0
      %1081 = vmatpush1.bf16.msra.mxu0 %v848
      %1082 = vmatprep.subr.bf16.mxu0 0
      %1083 = vmatpush1.bf16.msra.mxu0 %v849
      %1084 = vmatprep.subr.bf16.mxu0 0
      %1085 = vmatpush1.bf16.msra.mxu0 %v850
      %1086 = vmatprep.subr.bf16.mxu0 0
      %1087 = vmatpush1.bf16.msra.mxu0 %v851
      %1088 = vmatprep.subr.bf16.mxu0 0
      %1089 = vmatpush1.bf16.msra.mxu0 %v852
      %1090 = vmatprep.subr.bf16.mxu0 0
      %1091 = vmatpush1.bf16.msra.mxu0 %v853
      %1092 = vmatprep.subr.bf16.mxu0 0
      %1093 = vmatpush1.bf16.msra.mxu0 %v854
      %1094 = vmatprep.subr.bf16.mxu0 0
      %1095 = vmatpush1.bf16.msra.mxu0 %v855
      %1096 = vmatprep.mubr.bf16.mxu0 %v1057
      %1097 = vmatmul.mubr.bf16.gmra.mrb[0].mxu0 %v1056
      %v1098 = vpop.f32.mrb[0].mxu0
      %v1099 = vadd.f32 0.0, %v1098
      %v1100 = vpop.f32.mrb[0].mxu0
      %v1101 = vpop.f32.mrb[0].mxu0
      %v1102 = vpop.f32.mrb[0].mxu0
      %1103 = vdwg.mxu0
      %1104 = vmatprep.subr.bf16.mxu0 0
      %1105 = vmatpush1.bf16.msra.mxu0 %v856
      %1106 = vmatprep.subr.bf16.mxu0 0
      %1107 = vmatpush1.bf16.msra.mxu0 %v857
      %1108 = vmatprep.subr.bf16.mxu0 0
      %1109 = vmatpush1.bf16.msra.mxu0 %v858
      %1110 = vmatprep.subr.bf16.mxu0 0
      %1111 = vmatpush1.bf16.msra.mxu0 %v859
      %1112 = vmatprep.subr.bf16.mxu0 0
      %1113 = vmatpush1.bf16.msra.mxu0 %v860
      %1114 = vmatprep.subr.bf16.mxu0 0
      %1115 = vmatpush1.bf16.msra.mxu0 %v861
      %1116 = vmatprep.subr.bf16.mxu0 0
      %1117 = vmatpush1.bf16.msra.mxu0 %v862
      %1118 = vmatprep.subr.bf16.mxu0 0
      %1119 = vmatpush1.bf16.msra.mxu0 %v863
      %1120 = vmatprep.subr.bf16.mxu0 0
      %1121 = vmatpush1.bf16.msra.mxu0 %v864
      %1122 = vmatprep.subr.bf16.mxu0 0
      %1123 = vmatpush1.bf16.msra.mxu0 %v865
      %1124 = vmatprep.subr.bf16.mxu0 0
      %1125 = vmatpush1.bf16.msra.mxu0 %v866
      %1126 = vmatprep.subr.bf16.mxu0 0
      %1127 = vmatpush1.bf16.msra.mxu0 %v867
      %1128 = vmatprep.subr.bf16.mxu0 0
      %1129 = vmatpush1.bf16.msra.mxu0 %v868
      %1130 = vmatprep.subr.bf16.mxu0 0
      %1131 = vmatpush1.bf16.msra.mxu0 %v869
      %1132 = vmatprep.subr.bf16.mxu0 0
      %1133 = vmatpush1.bf16.msra.mxu0 %v870
      %1134 = vmatprep.subr.bf16.mxu0 0
      %1135 = vmatpush1.bf16.msra.mxu0 %v871
      %1136 = vmatprep.mubr.bf16.mxu0 %v1059
      %1137 = vmatmul.mubr.bf16.gmra.mrb[0].mxu0 %v1058
      %v1138 = vpop.f32.mrb[0].mxu0
      %v1139 = vadd.f32 %v1099, %v1138
      %v1140 = vpop.f32.mrb[0].mxu0
      %v1141 = vpop.f32.mrb[0].mxu0
      %v1142 = vpop.f32.mrb[0].mxu0
      %1143 = vdwg.mxu0
      %1144 = vmatprep.subr.bf16.mxu0 0
      %1145 = vmatpush1.bf16.msra.mxu0 %v872
      %1146 = vmatprep.subr.bf16.mxu0 0
      %1147 = vmatpush1.bf16.msra.mxu0 %v873
      %1148 = vmatprep.subr.bf16.mxu0 0
      %1149 = vmatpush1.bf16.msra.mxu0 %v874
      %1150 = vmatprep.subr.bf16.mxu0 0
      %1151 = vmatpush1.bf16.msra.mxu0 %v875
      %1152 = vmatprep.subr.bf16.mxu0 0
      %1153 = vmatpush1.bf16.msra.mxu0 0
      %1154 = vmatprep.subr.bf16.mxu0 0
      %1155 = vmatpush1.bf16.msra.mxu0 0
      %1156 = vmatprep.subr.bf16.mxu0 0
      %1157 = vmatpush1.bf16.msra.mxu0 0
      %1158 = vmatprep.subr.bf16.mxu0 0
      %1159 = vmatpush1.bf16.msra.mxu0 0
      %1160 = vmatprep.subr.bf16.mxu0 0
      %1161 = vmatpush1.bf16.msra.mxu0 0
      %1162 = vmatprep.subr.bf16.mxu0 0
      %1163 = vmatpush1.bf16.msra.mxu0 0
      %1164 = vmatprep.subr.bf16.mxu0 0
      %1165 = vmatpush1.bf16.msra.mxu0 0
      %1166 = vmatprep.subr.bf16.mxu0 0
      %1167 = vmatpush1.bf16.msra.mxu0 0
      %1168 = vmatprep.subr.bf16.mxu0 0
      %1169 = vmatpush1.bf16.msra.mxu0 0
      %1170 = vmatprep.subr.bf16.mxu0 0
      %1171 = vmatpush1.bf16.msra.mxu0 0
      %1172 = vmatprep.subr.bf16.mxu0 0
      %1173 = vmatpush1.bf16.msra.mxu0 0
      %1174 = vmatprep.subr.bf16.mxu0 0
      %1175 = vmatpush1.bf16.msra.mxu0 0
      %1176 = vmatprep.mubr.bf16.mxu0 0
      %1177 = vmatmul.mubr.bf16.gmra.mrb[0].mxu0 %v1062
      %v1178 = vpop.f32.mrb[0].mxu0
      %v1179 = vadd.f32 %v1139, %v1178
      %v1180 = vpop.f32.mrb[0].mxu0
      %v1181 = vpop.f32.mrb[0].mxu0
      %v1182 = vpop.f32.mrb[0].mxu0
      %1183 = vdwg.mxu0
      %v1184 = vmax.f32 %v1179, 0.0
      %s1185 = scalar_lea.vmem %s170, 4
      %1186 = vst.msk [vmem:[%s1185] sm:$0xf] %vm406, %v1184
      %1187 = vrot.lane.b32.xlu0 %v765, 64
      %v1188 = vpop.permute.xlu0 %1187
      %1191 = vrot.lane.b32.xlu0 %v1050, 64
      %v1192 = vpop.permute.xlu0 %1191
      %v1195 = vrot.slane %v766, 1
      %1196 = vrot.lane.b32.xlu0 %v1195, 64
      %v1197 = vpop.permute.xlu0 %1196
      %v1199 = vrot.slane %v766, 2
      %v1201 = vsel %vm311, %v898, %v1188
      %v1202 = vsel %vm311, %v1046, %v1192
      %v1203 = vsel %vm311, %v766, %v1197
      %v1204 = vpack.c.bf16 %v1201, %v1201
      %v1205 = vpack.c.bf16 %v1202, %v1202
      %v1206 = vpack.c.bf16 %v1203, %v1203
      %v1207 = vpack.c.bf16 %v1199, %v1199
      %v1209 = vsel %vm311, %v1207, 0
      %1211 = vmatprep.subr.bf16.mxu0 0
      %1212 = vmatpush1.bf16.msra.mxu0 %v840
      %1213 = vmatprep.subr.bf16.mxu0 0
      %1214 = vmatpush1.bf16.msra.mxu0 %v841
      %1215 = vmatprep.subr.bf16.mxu0 0
      %1216 = vmatpush1.bf16.msra.mxu0 %v842
      %1217 = vmatprep.subr.bf16.mxu0 0
      %1218 = vmatpush1.bf16.msra.mxu0 %v843
      %1219 = vmatprep.subr.bf16.mxu0 0
      %1220 = vmatpush1.bf16.msra.mxu0 %v844
      %1221 = vmatprep.subr.bf16.mxu0 0
      %1222 = vmatpush1.bf16.msra.mxu0 %v845
      %1223 = vmatprep.subr.bf16.mxu0 0
      %1224 = vmatpush1.bf16.msra.mxu0 %v846
      %1225 = vmatprep.subr.bf16.mxu0 0
      %1226 = vmatpush1.bf16.msra.mxu0 %v847
      %1227 = vmatprep.subr.bf16.mxu0 0
      %1228 = vmatpush1.bf16.msra.mxu0 %v848
      %1229 = vmatprep.subr.bf16.mxu0 0
      %1230 = vmatpush1.bf16.msra.mxu0 %v849
      %1231 = vmatprep.subr.bf16.mxu0 0
      %1232 = vmatpush1.bf16.msra.mxu0 %v850
      %1233 = vmatprep.subr.bf16.mxu0 0
      %1234 = vmatpush1.bf16.msra.mxu0 %v851
      %1235 = vmatprep.subr.bf16.mxu0 0
      %1236 = vmatpush1.bf16.msra.mxu0 %v852
      %1237 = vmatprep.subr.bf16.mxu0 0
      %1238 = vmatpush1.bf16.msra.mxu0 %v853
      %1239 = vmatprep.subr.bf16.mxu0 0
      %1240 = vmatpush1.bf16.msra.mxu0 %v854
      %1241 = vmatprep.subr.bf16.mxu0 0
      %1242 = vmatpush1.bf16.msra.mxu0 %v855
      %1243 = vmatprep.mubr.bf16.mxu0 %v1204
      %1244 = vmatmul.mubr.bf16.gmra.mrb[0].mxu0 %v907
      %v1245 = vpop.f32.mrb[0].mxu0
      %v1246 = vadd.f32 0.0, %v1245
      %v1247 = vpop.f32.mrb[0].mxu0
      %v1248 = vpop.f32.mrb[0].mxu0
      %v1249 = vpop.f32.mrb[0].mxu0
      %1250 = vdwg.mxu0
      %1251 = vmatprep.subr.bf16.mxu0 0
      %1252 = vmatpush1.bf16.msra.mxu0 %v856
      %1253 = vmatprep.subr.bf16.mxu0 0
      %1254 = vmatpush1.bf16.msra.mxu0 %v857
      %1255 = vmatprep.subr.bf16.mxu0 0
      %1256 = vmatpush1.bf16.msra.mxu0 %v858
      %1257 = vmatprep.subr.bf16.mxu0 0
      %1258 = vmatpush1.bf16.msra.mxu0 %v859
      %1259 = vmatprep.subr.bf16.mxu0 0
      %1260 = vmatpush1.bf16.msra.mxu0 %v860
      %1261 = vmatprep.subr.bf16.mxu0 0
      %1262 = vmatpush1.bf16.msra.mxu0 %v861
      %1263 = vmatprep.subr.bf16.mxu0 0
      %1264 = vmatpush1.bf16.msra.mxu0 %v862
      %1265 = vmatprep.subr.bf16.mxu0 0
      %1266 = vmatpush1.bf16.msra.mxu0 %v863
      %1267 = vmatprep.subr.bf16.mxu0 0
      %1268 = vmatpush1.bf16.msra.mxu0 %v864
      %1269 = vmatprep.subr.bf16.mxu0 0
      %1270 = vmatpush1.bf16.msra.mxu0 %v865
      %1271 = vmatprep.subr.bf16.mxu0 0
      %1272 = vmatpush1.bf16.msra.mxu0 %v866
      %1273 = vmatprep.subr.bf16.mxu0 0
      %1274 = vmatpush1.bf16.msra.mxu0 %v867
      %1275 = vmatprep.subr.bf16.mxu0 0
      %1276 = vmatpush1.bf16.msra.mxu0 %v868
      %1277 = vmatprep.subr.bf16.mxu0 0
      %1278 = vmatpush1.bf16.msra.mxu0 %v869
      %1279 = vmatprep.subr.bf16.mxu0 0
      %1280 = vmatpush1.bf16.msra.mxu0 %v870
      %1281 = vmatprep.subr.bf16.mxu0 0
      %1282 = vmatpush1.bf16.msra.mxu0 %v871
      %1283 = vmatprep.mubr.bf16.mxu0 %v1206
      %1284 = vmatmul.mubr.bf16.gmra.mrb[0].mxu0 %v1205
      %v1285 = vpop.f32.mrb[0].mxu0
      %v1286 = vadd.f32 %v1246, %v1285
      %v1287 = vpop.f32.mrb[0].mxu0
      %v1288 = vpop.f32.mrb[0].mxu0
      %v1289 = vpop.f32.mrb[0].mxu0
      %1290 = vdwg.mxu0
      %1291 = vmatprep.subr.bf16.mxu0 0
      %1292 = vmatpush1.bf16.msra.mxu0 %v872
      %1293 = vmatprep.subr.bf16.mxu0 0
      %1294 = vmatpush1.bf16.msra.mxu0 %v873
      %1295 = vmatprep.subr.bf16.mxu0 0
      %1296 = vmatpush1.bf16.msra.mxu0 %v874
      %1297 = vmatprep.subr.bf16.mxu0 0
      %1298 = vmatpush1.bf16.msra.mxu0 %v875
      %1299 = vmatprep.subr.bf16.mxu0 0
      %1300 = vmatpush1.bf16.msra.mxu0 0
      %1301 = vmatprep.subr.bf16.mxu0 0
      %1302 = vmatpush1.bf16.msra.mxu0 0
      %1303 = vmatprep.subr.bf16.mxu0 0
      %1304 = vmatpush1.bf16.msra.mxu0 0
      %1305 = vmatprep.subr.bf16.mxu0 0
      %1306 = vmatpush1.bf16.msra.mxu0 0
      %1307 = vmatprep.subr.bf16.mxu0 0
      %1308 = vmatpush1.bf16.msra.mxu0 0
      %1309 = vmatprep.subr.bf16.mxu0 0
      %1310 = vmatpush1.bf16.msra.mxu0 0
      %1311 = vmatprep.subr.bf16.mxu0 0
      %1312 = vmatpush1.bf16.msra.mxu0 0
      %1313 = vmatprep.subr.bf16.mxu0 0
      %1314 = vmatpush1.bf16.msra.mxu0 0
      %1315 = vmatprep.subr.bf16.mxu0 0
      %1316 = vmatpush1.bf16.msra.mxu0 0
      %1317 = vmatprep.subr.bf16.mxu0 0
      %1318 = vmatpush1.bf16.msra.mxu0 0
      %1319 = vmatprep.subr.bf16.mxu0 0
      %1320 = vmatpush1.bf16.msra.mxu0 0
      %1321 = vmatprep.subr.bf16.mxu0 0
      %1322 = vmatpush1.bf16.msra.mxu0 0
      %1323 = vmatprep.mubr.bf16.mxu0 0
      %1324 = vmatmul.mubr.bf16.gmra.mrb[0].mxu0 %v1209
      %v1325 = vpop.f32.mrb[0].mxu0
      %v1326 = vadd.f32 %v1286, %v1325
      %v1327 = vpop.f32.mrb[0].mxu0
      %v1328 = vpop.f32.mrb[0].mxu0
      %v1329 = vpop.f32.mrb[0].mxu0
      %1330 = vdwg.mxu0
      %v1331 = vmax.f32 %v1326, 0.0
      %s1332 = scalar_lea.vmem %s170, 8
      %1333 = vst.msk [vmem:[%s1332] sm:$0xf] %vm406, %v1331
      %1334 = vrot.lane.b32.xlu0 %v766, 64
      %v1335 = vpop.permute.xlu0 %1334
      %1338 = vrot.lane.b32.xlu0 %v1199, 64
      %v1339 = vpop.permute.xlu0 %1338
      %v1342 = vrot.slane %v767, 1
      %1343 = vrot.lane.b32.xlu0 %v1342, 64
      %v1344 = vpop.permute.xlu0 %1343
      %v1346 = vrot.slane %v767, 2
      %v1348 = vsel %vm311, %v1050, %v1335
      %v1349 = vsel %vm311, %v1195, %v1339
      %v1350 = vsel %vm311, %v767, %v1344
      %v1351 = vpack.c.bf16 %v1348, %v1348
      %v1352 = vpack.c.bf16 %v1349, %v1349
      %v1353 = vpack.c.bf16 %v1350, %v1350
      %v1354 = vpack.c.bf16 %v1346, %v1346
      %v1356 = vsel %vm311, %v1354, 0
      %1358 = vmatprep.subr.bf16.mxu0 0
      %1359 = vmatpush1.bf16.msra.mxu0 %v840
      %1360 = vmatprep.subr.bf16.mxu0 0
      %1361 = vmatpush1.bf16.msra.mxu0 %v841
      %1362 = vmatprep.subr.bf16.mxu0 0
      %1363 = vmatpush1.bf16.msra.mxu0 %v842
      %1364 = vmatprep.subr.bf16.mxu0 0
      %1365 = vmatpush1.bf16.msra.mxu0 %v843
      %1366 = vmatprep.subr.bf16.mxu0 0
      %1367 = vmatpush1.bf16.msra.mxu0 %v844
      %1368 = vmatprep.subr.bf16.mxu0 0
      %1369 = vmatpush1.bf16.msra.mxu0 %v845
      %1370 = vmatprep.subr.bf16.mxu0 0
      %1371 = vmatpush1.bf16.msra.mxu0 %v846
      %1372 = vmatprep.subr.bf16.mxu0 0
      %1373 = vmatpush1.bf16.msra.mxu0 %v847
      %1374 = vmatprep.subr.bf16.mxu0 0
      %1375 = vmatpush1.bf16.msra.mxu0 %v848
      %1376 = vmatprep.subr.bf16.mxu0 0
      %1377 = vmatpush1.bf16.msra.mxu0 %v849
      %1378 = vmatprep.subr.bf16.mxu0 0
      %1379 = vmatpush1.bf16.msra.mxu0 %v850
      %1380 = vmatprep.subr.bf16.mxu0 0
      %1381 = vmatpush1.bf16.msra.mxu0 %v851
      %1382 = vmatprep.subr.bf16.mxu0 0
      %1383 = vmatpush1.bf16.msra.mxu0 %v852
      %1384 = vmatprep.subr.bf16.mxu0 0
      %1385 = vmatpush1.bf16.msra.mxu0 %v853
      %1386 = vmatprep.subr.bf16.mxu0 0
      %1387 = vmatpush1.bf16.msra.mxu0 %v854
      %1388 = vmatprep.subr.bf16.mxu0 0
      %1389 = vmatpush1.bf16.msra.mxu0 %v855
      %1390 = vmatprep.mubr.bf16.mxu0 %v1351
      %1391 = vmatmul.mubr.bf16.gmra.mrb[0].mxu0 %v1059
      %v1392 = vpop.f32.mrb[0].mxu0
      %v1393 = vadd.f32 0.0, %v1392
      %v1394 = vpop.f32.mrb[0].mxu0
      %v1395 = vpop.f32.mrb[0].mxu0
      %v1396 = vpop.f32.mrb[0].mxu0
      %1397 = vdwg.mxu0
      %1398 = vmatprep.subr.bf16.mxu0 0
      %1399 = vmatpush1.bf16.msra.mxu0 %v856
      %1400 = vmatprep.subr.bf16.mxu0 0
      %1401 = vmatpush1.bf16.msra.mxu0 %v857
      %1402 = vmatprep.subr.bf16.mxu0 0
      %1403 = vmatpush1.bf16.msra.mxu0 %v858
      %1404 = vmatprep.subr.bf16.mxu0 0
      %1405 = vmatpush1.bf16.msra.mxu0 %v859
      %1406 = vmatprep.subr.bf16.mxu0 0
      %1407 = vmatpush1.bf16.msra.mxu0 %v860
      %1408 = vmatprep.subr.bf16.mxu0 0
      %1409 = vmatpush1.bf16.msra.mxu0 %v861
      %1410 = vmatprep.subr.bf16.mxu0 0
      %1411 = vmatpush1.bf16.msra.mxu0 %v862
      %1412 = vmatprep.subr.bf16.mxu0 0
      %1413 = vmatpush1.bf16.msra.mxu0 %v863
      %1414 = vmatprep.subr.bf16.mxu0 0
      %1415 = vmatpush1.bf16.msra.mxu0 %v864
      %1416 = vmatprep.subr.bf16.mxu0 0
      %1417 = vmatpush1.bf16.msra.mxu0 %v865
      %1418 = vmatprep.subr.bf16.mxu0 0
      %1419 = vmatpush1.bf16.msra.mxu0 %v866
      %1420 = vmatprep.subr.bf16.mxu0 0
      %1421 = vmatpush1.bf16.msra.mxu0 %v867
      %1422 = vmatprep.subr.bf16.mxu0 0
      %1423 = vmatpush1.bf16.msra.mxu0 %v868
      %1424 = vmatprep.subr.bf16.mxu0 0
      %1425 = vmatpush1.bf16.msra.mxu0 %v869
      %1426 = vmatprep.subr.bf16.mxu0 0
      %1427 = vmatpush1.bf16.msra.mxu0 %v870
      %1428 = vmatprep.subr.bf16.mxu0 0
      %1429 = vmatpush1.bf16.msra.mxu0 %v871
      %1430 = vmatprep.mubr.bf16.mxu0 %v1353
      %1431 = vmatmul.mubr.bf16.gmra.mrb[0].mxu0 %v1352
      %v1432 = vpop.f32.mrb[0].mxu0
      %v1433 = vadd.f32 %v1393, %v1432
      %v1434 = vpop.f32.mrb[0].mxu0
      %v1435 = vpop.f32.mrb[0].mxu0
      %v1436 = vpop.f32.mrb[0].mxu0
      %1437 = vdwg.mxu0
      %1438 = vmatprep.subr.bf16.mxu0 0
      %1439 = vmatpush1.bf16.msra.mxu0 %v872
      %1440 = vmatprep.subr.bf16.mxu0 0
      %1441 = vmatpush1.bf16.msra.mxu0 %v873
      %1442 = vmatprep.subr.bf16.mxu0 0
      %1443 = vmatpush1.bf16.msra.mxu0 %v874
      %1444 = vmatprep.subr.bf16.mxu0 0
      %1445 = vmatpush1.bf16.msra.mxu0 %v875
      %1446 = vmatprep.subr.bf16.mxu0 0
      %1447 = vmatpush1.bf16.msra.mxu0 0
      %1448 = vmatprep.subr.bf16.mxu0 0
      %1449 = vmatpush1.bf16.msra.mxu0 0
      %1450 = vmatprep.subr.bf16.mxu0 0
      %1451 = vmatpush1.bf16.msra.mxu0 0
      %1452 = vmatprep.subr.bf16.mxu0 0
      %1453 = vmatpush1.bf16.msra.mxu0 0
      %1454 = vmatprep.subr.bf16.mxu0 0
      %1455 = vmatpush1.bf16.msra.mxu0 0
      %1456 = vmatprep.subr.bf16.mxu0 0
      %1457 = vmatpush1.bf16.msra.mxu0 0
      %1458 = vmatprep.subr.bf16.mxu0 0
      %1459 = vmatpush1.bf16.msra.mxu0 0
      %1460 = vmatprep.subr.bf16.mxu0 0
      %1461 = vmatpush1.bf16.msra.mxu0 0
      %1462 = vmatprep.subr.bf16.mxu0 0
      %1463 = vmatpush1.bf16.msra.mxu0 0
      %1464 = vmatprep.subr.bf16.mxu0 0
      %1465 = vmatpush1.bf16.msra.mxu0 0
      %1466 = vmatprep.subr.bf16.mxu0 0
      %1467 = vmatpush1.bf16.msra.mxu0 0
      %1468 = vmatprep.subr.bf16.mxu0 0
      %1469 = vmatpush1.bf16.msra.mxu0 0
      %1470 = vmatprep.mubr.bf16.mxu0 0
      %1471 = vmatmul.mubr.bf16.gmra.mrb[0].mxu0 %v1356
      %v1472 = vpop.f32.mrb[0].mxu0
      %v1473 = vadd.f32 %v1433, %v1472
      %v1474 = vpop.f32.mrb[0].mxu0
      %v1475 = vpop.f32.mrb[0].mxu0
      %v1476 = vpop.f32.mrb[0].mxu0
      %1477 = vdwg.mxu0
      %v1478 = vmax.f32 %v1473, 0.0
      %s1479 = scalar_lea.vmem %s170, 12
      %1480 = vst.msk [vmem:[%s1479] sm:$0xf] %vm406, %v1478
      %p1481 = scmp.lt.s32.totalorder %s14, 1
      %s1482 = scalar_select %p1481, %s14, 1
      %s1483 = smul.addr %s1482, 4
      %s1484 = smul.addr %s1483, 4
      %s1485 = scalar_lea.vmem %s3, %s1484
      // Predicated region
      $region33: #{unet_encoder.6} parent=31 // pred_check
        %p1486 = pneg %p100
      $region34: #{unet_encoder.6} parent=31 // pred_check_branch
        %1488 = sbr.rel (%p1486) target = $region36
      $region35: #{unet_encoder.6} parent=31 // pred_region
        _
      $region36: #{unet_encoder.6} parent=31 // pred_fallthru
        _
    $region32: #{unet_encoder.6} parent=5 // pred_fallthru
      _
    %p1489 = scmp.le.s32.totalorder 2, %s9
    // Predicated region
    $region37: #{unet_encoder.6} parent=5 // pred_check
      %p1490 = pneg %p1489
    $region38: #{unet_encoder.6} parent=5 // pred_check_branch
      %1492 = sbr.rel (%p1490) target = $region40
    $region39: #{unet_encoder.6} parent=5 // pred_region
      %s1493 = ssub.s32 %s9, 2
      // Predicated region
      $region41: #{unet_encoder.6} parent=39 // pred_check
        %p1494 = pneg %p106
      $region42: #{unet_encoder.6} parent=39 // pred_check_branch
        %1496 = sbr.rel (%p1494) target = $region44
      $region43: #{unet_encoder.6} parent=39 // pred_region
        %p1497 = scmp.lt.s32.totalorder %s15, 1
        %s1498 = scalar_select %p1497, %s15, 1
        %s1499 = smul.addr %s1498, 4
        %s1500 = smul.addr %s1499, 4
        %s1501 = scalar_lea.vmem %s3, %s1500
      $region44: #{unet_encoder.6} parent=39 // pred_fallthru
        _
    $region40: #{unet_encoder.6} parent=5 // pred_fallthru
      _
  $region6: #{unet_encoder.6} parent=0 // loop_footer
    %s13 = sadd.s32 1, %s9
  $region7: #{unet_encoder.6} parent=0 // loop_footer_branch
    %8 = sbr.rel target = $region3
  $region8: #{unet_encoder.6} parent=0 // loop_exit
    _

// kernel: unet_encoder.7
$region0: #{unet_encoder.7}
  #allocation0 [shape = 'u32[]', space=smem, size = 0x4, offset = 0x4, fixed_abs, tag = 'smem constant byte address 0x4 - core index']
  #allocation1 [shape = 'u32[144,128]{1,0:T(1,128)}', space=vmem, size = 0x12000, scoped, tag = 'internal scratch']
  #allocation2 [shape = 'f32[4,4,64]{2,1,0:T(4,128)}', space=vmem, size = 0x2000, scoped, tag = 'scratch operand']
  #allocation3 [shape = 'f32[4,4,128]{2,1,0:T(4,128)}', space=vmem, size = 0x2000, scoped, tag = 'scratch operand']
  %s0 = inlined_call_operand.vmem [shape: f32[2,2,2,2,2,64], index: 0, kind: input, shape index: {}]
  %s1 = inlined_call_operand.vmem [shape: f32[576,128], index: 1, kind: input, shape index: {}]
  %s2 = inlined_call_operand.vmem [shape: f32[1152,128], index: 2, kind: input, shape index: {}]
  %s3 = inlined_call_operand.hbm [shape: f32[2,2,2,128], index: 3, kind: output, shape index: {}]
  %s4 = sld [smem:[#allocation0]]
  $region45: #{unet_encoder.7} parent=0
    _
  %s6 = ssub.s32 1, %s4
  %s7 = scalar_select 0, %s6, %s4
  $region1: #{unet_encoder.7} parent=0
    #allocation4 [shape = 'u8[4096]{0}', space=vmem, size = 0x1000, scoped, tag = 'output window, operand 0']
    #allocation5 [shape = 's32[2]{0}', space=sflag, size = 0x8, scoped, tag = 'scoped memory for unet_encoder.7']
    %8 = vsyncpa [#allocation5], 0
    %s9 = scalar_lea.sflag [#allocation5], 1
    %10 = vsyncpa %s9, 0
    loop: start=0, step=1, limit=4
    $region2: #{unet_encoder.7} parent=1 // loop_pre_header
      _
    $region3: #{unet_encoder.7} parent=1 // loop_header
      %s12 = sphi 0, %s16
      %p13 = scmp.ge.s32.totalorder %s12, 4
      %s22 = sphi 0, %s24
      %s25 = sphi 0, %s22
      %s26 = sphi 0, %s25
      %s42 = sphi 0, %s26
      %s46 = sphi 0, %s46
      %s48 = sphi 0, %s46
      %s49 = sphi 0, %s48
      %s63 = sphi 0, %s49
      %s67 = sphi 0, %s67
      %s69 = sphi 0, %s67
      %s70 = sphi 0, %s69
      %s84 = sphi 0, %s70
      %s90 = sphi 0, %s92
      %s93 = sphi 0, %s90
      %s94 = sphi 0, %s93
      %s110 = sphi 0, %s94
    $region4: #{unet_encoder.7} parent=1 // loop_header_branch
      %15 = sbr.rel (%p13) target = $region8
    $region5: #{unet_encoder.7} parent=1 // loop_body
      %s17 = ssub.s32 %s12, 1
      %s18 = ssub.s32 %s12, 2
      %s19 = sadd.s32 %s12, 1
      %s20 = ssub.s32 %s12, %s19
      %p21 = scmp.eq.s32.totalorder %s20, 0
      %s23 = sadd.s32 %s22, 1
      %s24 = scalar_select %p21, %s22, %s23
      %p27 = pneg %p21
      %p28 = scmp.eq.s32.totalorder %s12, 1
      %p29 = por %p27, %p28
      %p30 = scmp.ne.s32.totalorder %s22, %s25
      %p31 = scmp.eq.s32.totalorder %s12, 0
      %p32 = por %p30, %p31
      %p33 = scmp.ne.s32.totalorder %s22, %s25
      %p34 = scmp.eq.s32.totalorder %s17, 1
      %p35 = por %p33, %p34
      %p36 = scmp.ne.s32.totalorder %s25, %s26
      %p37 = scmp.eq.s32.totalorder %s17, 0
      %p38 = por %p36, %p37
      %p39 = scmp.ne.s32.totalorder %s25, %s26
      %p40 = scmp.eq.s32.totalorder %s18, 1
      %p41 = por %p39, %p40
      %p43 = scmp.ne.s32.totalorder %s26, %s42
      %p44 = scmp.eq.s32.totalorder %s18, 0
      %p45 = por %p43, %p44
      %s47 = sadd.s32 %s46, 1
      %p50 = scmp.eq.s32.totalorder %s12, 1
      %p51 = scmp.ne.s32.totalorder %s46, %s48
      %p52 = scmp.eq.s32.totalorder %s12, 0
      %p53 = por %p51, %p52
      %p54 = scmp.ne.s32.totalorder %s46, %s48
      %p55 = scmp.eq.s32.totalorder %s17, 1
      %p56 = por %p54, %p55
      %p57 = scmp.ne.s32.totalorder %s48, %s49
      %p58 = scmp.eq.s32.totalorder %s17, 0
      %p59 = por %p57, %p58
      %p60 = scmp.ne.s32.totalorder %s48, %s49
      %p61 = scmp.eq.s32.totalorder %s18, 1
      %p62 = por %p60, %p61
      %p64 = scmp.ne.s32.totalorder %s49, %s63
      %p65 = scmp.eq.s32.totalorder %s18, 0
      %p66 = por %p64, %p65
      %s68 = sadd.s32 %s67, 1
      %p71 = scmp.eq.s32.totalorder %s12, 1
      %p72 = scmp.ne.s32.totalorder %s67, %s69
      %p73 = scmp.eq.s32.totalorder %s12, 0
      %p74 = por %p72, %p73
      %p75 = scmp.ne.s32.totalorder %s67, %s69
      %p76 = scmp.eq.s32.totalorder %s17, 1
      %p77 = por %p75, %p76
      %p78 = scmp.ne.s32.totalorder %s69, %s70
      %p79 = scmp.eq.s32.totalorder %s17, 0
      %p80 = por %p78, %p79
      %p81 = scmp.ne.s32.totalorder %s69, %s70
      %p82 = scmp.eq.s32.totalorder %s18, 1
      %p83 = por %p81, %p82
      %p85 = scmp.ne.s32.totalorder %s70, %s84
      %p86 = scmp.eq.s32.totalorder %s18, 0
      %p87 = por %p85, %p86
      %s88 = ssub.s32 %s12, %s19
      %p89 = scmp.eq.s32.totalorder %s88, 0
      %s91 = sadd.s32 %s90, 1
      %s92 = scalar_select %p89, %s90, %s91
      %p95 = pneg %p89
      %p96 = scmp.eq.s32.totalorder %s12, 1
      %p97 = por %p95, %p96
      %p98 = scmp.ne.s32.totalorder %s90, %s93
      %p99 = scmp.eq.s32.totalorder %s12, 0
      %p100 = por %p98, %p99
      %p101 = scmp.ne.s32.totalorder %s90, %s93
      %p102 = scmp.eq.s32.totalorder %s17, 1
      %p103 = por %p101, %p102
      %p104 = scmp.ne.s32.totalorder %s93, %s94
      %p105 = scmp.eq.s32.totalorder %s17, 0
      %p106 = por %p104, %p105
      %p107 = scmp.ne.s32.totalorder %s93, %s94
      %p108 = scmp.eq.s32.totalorder %s18, 1
      %p109 = por %p107, %p108
      %p111 = scmp.ne.s32.totalorder %s94, %s110
      %p112 = scmp.eq.s32.totalorder %s18, 0
      %p113 = por %p111, %p112
      %p114 = scmp.le.s32.totalorder 1, %s12
      %p115 = scmp.lt.s32.totalorder %s12, 3
      %p116 = pnand %p114, %p115
      %p117 = pneg %p116
      // Predicated region
      $region9: #{unet_encoder.7} parent=5 // pred_check
        _
      $region10: #{unet_encoder.7} parent=5 // pred_check_branch
        %119 = sbr.rel (%p116) target = $region12
      $region11: #{unet_encoder.7} parent=5 // pred_region
        %s120 = ssub.s32 %s12, 1
        // Predicated region
        $region13: #{unet_encoder.7} parent=11 // pred_check
          %p121 = pneg %p59
        $region14: #{unet_encoder.7} parent=11 // pred_check_branch
          %123 = sbr.rel (%p121) target = $region16
        $region15: #{unet_encoder.7} parent=11 // pred_region
          _
        $region16: #{unet_encoder.7} parent=11 // pred_fallthru
          _
        // Predicated region
        $region17: #{unet_encoder.7} parent=11 // pred_check
          %p124 = pneg %p80
        $region18: #{unet_encoder.7} parent=11 // pred_check_branch
          %126 = sbr.rel (%p124) target = $region20
        $region19: #{unet_encoder.7} parent=11 // pred_region
          _
        $region20: #{unet_encoder.7} parent=11 // pred_fallthru
          _
      $region12: #{unet_encoder.7} parent=5 // pred_fallthru
        _
      %p127 = scmp.lt.s32.totalorder %s12, 2
      // Predicated region
      $region21: #{unet_encoder.7} parent=5 // pred_check
        %p128 = pneg %p127
      $region22: #{unet_encoder.7} parent=5 // pred_check_branch
        %130 = sbr.rel (%p128) target = $region24
      $region23: #{unet_encoder.7} parent=5 // pred_region
        // Predicated region
        $region25: #{unet_encoder.7} parent=23 // pred_check
          %p131 = pneg %p32
        $region26: #{unet_encoder.7} parent=23 // pred_check_branch
          %133 = sbr.rel (%p131) target = $region28
        $region27: #{unet_encoder.7} parent=23 // pred_region
          %p134 = scmp.lt.s32.totalorder %s12, 1
          %s135 = scalar_select %p134, %s12, 1
          %s136 = smul.addr %s135, 8
          %s137 = smul.addr %s136, 2
          %s138 = scalar_lea.vmem %s0, %s137
        $region28: #{unet_encoder.7} parent=23 // pred_fallthru
          _
      $region24: #{unet_encoder.7} parent=5 // pred_fallthru
        _
      %p139 = scmp.le.s32.totalorder 1, %s12
      %p140 = scmp.lt.s32.totalorder %s12, 3
      %p141 = pnand %p139, %p140
      %p142 = pneg %p141
      // Predicated region
      $region29: #{unet_encoder.7} parent=5 // pred_check
        _
      $region30: #{unet_encoder.7} parent=5 // pred_check_branch
        %144 = sbr.rel (%p141) target = $region32
      $region31: #{unet_encoder.7} parent=5 // pred_region
        %s145 = ssub.s32 %s12, 1
        %p146 = scmp.lt.s32.totalorder %s17, 1
        %s147 = scalar_select %p146, %s17, 1
        %s148 = smul.addr %s147, 8
        %s149 = smul.addr %s148, 2
        %s150 = scalar_lea.vmem %s0, %s149
        %p151 = pneg %p38
        %p152 = pneg %p35
        %p153 = pneg %p59
        %p154 = pneg %p56
        %p155 = pneg %p80
        %p156 = pneg %p77
        %p157 = pneg %p106
        %p158 = pneg %p103
        %s159 = sand.u32 %s93, 1
        %s160 = scalar_lea.sflag [#allocation5], %s159
        %s161 = sand.u32 %s93, 1
        %s162 = smul.addr %s161, 4
        %s163 = scalar_lea.vmem [#allocation4], %s162
        %p164 = scmp.lt.s32.totalorder %s17, 1
        %s165 = scalar_select %p164, %s17, 1
        %s166 = smul.addr %s165, 8
        %s167 = smul.addr %s166, 2
        %s168 = scalar_lea.vmem %s0, %s167
        %v170 = vld [vmem:[%s168] sm:$0x3]
        %v171 = vld [vmem:[%s168 + $0x2] sm:$0x3]
        %v172 = vld [vmem:[%s168 + $0x4] sm:$0x3]
        %v173 = vld [vmem:[%s168 + $0x6] sm:$0x3]
        %v174 = vld [vmem:[%s168 + $0x8] sm:$0x3]
        %v175 = vld [vmem:[%s168 + $0xa] sm:$0x3]
        %v176 = vld [vmem:[%s168 + $0xc] sm:$0x3]
        %v177 = vld [vmem:[%s168 + $0xe] sm:$0x3]
        %v178 = vmax.f32 %v170, %v172
        %v179 = vmax.f32 %v171, %v173
        %v180 = vmax.f32 %v174, %v176
        %v181 = vmax.f32 %v175, %v177
        %v182 = vmax.f32 %v178, %v180
        %v183 = vmax.f32 %v179, %v181
        %vm184 = vcmask 519168
        %185 = vst.msk [vmem:[#allocation2] sm:$0xf] %vm184, 0.0
        %186 = vst.msk [vmem:[#allocation2 + $0x4] sm:$0xf] %vm184, 0.0
        %187 = vst.msk [vmem:[#allocation2 + $0x8] sm:$0xf] %vm184, 0.0
        %188 = vst.msk [vmem:[#allocation2 + $0xc] sm:$0xf] %vm184, 0.0
        %s189 = scalar_lea.vmem [#allocation2], 4
        %vm190 = vcmask 517120
        %191 = vst.msk [vmem:[%s189 + $0x1] sm:$0x3] %vm190, %v182
        %192 = vst.msk [vmem:[%s189 + $0x5] sm:$0x3] %vm190, %v183
        %193 = vst [vmem:[#allocation3] sm:$0xf] 0.0
        %194 = vst [vmem:[#allocation3 + $0x4] sm:$0xf] 0.0
        %195 = vst [vmem:[#allocation3 + $0x8] sm:$0xf] 0.0
        %196 = vst [vmem:[#allocation3 + $0xc] sm:$0xf] 0.0
        %v197 = vld [vmem:[#allocation2] sm:$0xf]
        %v198 = vld [vmem:[#allocation2 + $0x4] sm:$0xf]
        %v199 = vld [vmem:[#allocation2 + $0x8] sm:$0xf]
        %v200 = vld [vmem:[#allocation2 + $0xc] sm:$0xf]
        %v201 = vld [vmem:[%s1] sm:$0xff]
        %v202 = vld [vmem:[%s1 + $0x8] sm:$0xff]
        %v203 = vld [vmem:[%s1 + $0x10] sm:$0xff]
        %v204 = vld [vmem:[%s1 + $0x18] sm:$0xff]
        %v205 = vld [vmem:[%s1 + $0x20] sm:$0xff]
        %v206 = vld [vmem:[%s1 + $0x28] sm:$0xff]
        %v207 = vld [vmem:[%s1 + $0x30] sm:$0xff]
        %v208 = vld [vmem:[%s1 + $0x38] sm:$0xff]
        %v209 = vld [vmem:[%s1 + $0x40] sm:$0xff]
        %v210 = vld [vmem:[%s1 + $0x48] sm:$0xff]
        %v211 = vld [vmem:[%s1 + $0x50] sm:$0xff]
        %v212 = vld [vmem:[%s1 + $0x58] sm:$0xff]
        %v213 = vld [vmem:[%s1 + $0x60] sm:$0xff]
        %v214 = vld [vmem:[%s1 + $0x68] sm:$0xff]
        %v215 = vld [vmem:[%s1 + $0x70] sm:$0xff]
        %v216 = vld [vmem:[%s1 + $0x78] sm:$0xff]
        %v217 = vld [vmem:[%s1 + $0x80] sm:$0xff]
        %v218 = vld [vmem:[%s1 + $0x88] sm:$0xff]
        %v219 = vld [vmem:[%s1 + $0x90] sm:$0xff]
        %v220 = vld [vmem:[%s1 + $0x98] sm:$0xff]
        %v221 = vld [vmem:[%s1 + $0xa0] sm:$0xff]
        %v222 = vld [vmem:[%s1 + $0xa8] sm:$0xff]
        %v223 = vld [vmem:[%s1 + $0xb0] sm:$0xff]
        %v224 = vld [vmem:[%s1 + $0xb8] sm:$0xff]
        %v225 = vld [vmem:[%s1 + $0xc0] sm:$0xff]
        %v226 = vld [vmem:[%s1 + $0xc8] sm:$0xff]
        %v227 = vld [vmem:[%s1 + $0xd0] sm:$0xff]
        %v228 = vld [vmem:[%s1 + $0xd8] sm:$0xff]
        %v229 = vld [vmem:[%s1 + $0xe0] sm:$0xff]
        %v230 = vld [vmem:[%s1 + $0xe8] sm:$0xff]
        %v231 = vld [vmem:[%s1 + $0xf0] sm:$0xff]
        %v232 = vld [vmem:[%s1 + $0xf8] sm:$0xff]
        %v233 = vld [vmem:[%s1 + $0x100] sm:$0xff]
        %v234 = vld [vmem:[%s1 + $0x108] sm:$0xff]
        %v235 = vld [vmem:[%s1 + $0x110] sm:$0xff]
        %v236 = vld [vmem:[%s1 + $0x118] sm:$0xff]
        %v237 = vld [vmem:[%s1 + $0x120] sm:$0xff]
        %v238 = vld [vmem:[%s1 + $0x128] sm:$0xff]
        %v239 = vld [vmem:[%s1 + $0x130] sm:$0xff]
        %v240 = vld [vmem:[%s1 + $0x138] sm:$0xff]
        %v241 = vld [vmem:[%s1 + $0x140] sm:$0xff]
        %v242 = vld [vmem:[%s1 + $0x148] sm:$0xff]
        %v243 = vld [vmem:[%s1 + $0x150] sm:$0xff]
        %v244 = vld [vmem:[%s1 + $0x158] sm:$0xff]
        %v245 = vld [vmem:[%s1 + $0x160] sm:$0xff]
        %v246 = vld [vmem:[%s1 + $0x168] sm:$0xff]
        %v247 = vld [vmem:[%s1 + $0x170] sm:$0xff]
        %v248 = vld [vmem:[%s1 + $0x178] sm:$0xff]
        %v249 = vld [vmem:[%s1 + $0x180] sm:$0xff]
        %v250 = vld [vmem:[%s1 + $0x188] sm:$0xff]
        %v251 = vld [vmem:[%s1 + $0x190] sm:$0xff]
        %v252 = vld [vmem:[%s1 + $0x198] sm:$0xff]
        %v253 = vld [vmem:[%s1 + $0x1a0] sm:$0xff]
        %v254 = vld [vmem:[%s1 + $0x1a8] sm:$0xff]
        %v255 = vld [vmem:[%s1 + $0x1b0] sm:$0xff]
        %v256 = vld [vmem:[%s1 + $0x1b8] sm:$0xff]
        %v257 = vld [vmem:[%s1 + $0x1c0] sm:$0xff]
        %v258 = vld [vmem:[%s1 + $0x1c8] sm:$0xff]
        %v259 = vld [vmem:[%s1 + $0x1d0] sm:$0xff]
        %v260 = vld [vmem:[%s1 + $0x1d8] sm:$0xff]
        %v261 = vld [vmem:[%s1 + $0x1e0] sm:$0xff]
        %v262 = vld [vmem:[%s1 + $0x1e8] sm:$0xff]
        %v263 = vld [vmem:[%s1 + $0x1f0] sm:$0xff]
        %v264 = vld [vmem:[%s1 + $0x1f8] sm:$0xff]
        %v265 = vld [vmem:[%s1 + $0x200] sm:$0xff]
        %v266 = vld [vmem:[%s1 + $0x208] sm:$0xff]
        %v267 = vld [vmem:[%s1 + $0x210] sm:$0xff]
        %v268 = vld [vmem:[%s1 + $0x218] sm:$0xff]
        %v269 = vld [vmem:[%s1 + $0x220] sm:$0xff]
        %v270 = vld [vmem:[%s1 + $0x228] sm:$0xff]
        %v271 = vld [vmem:[%s1 + $0x230] sm:$0xff]
        %v272 = vld [vmem:[%s1 + $0x238] sm:$0xff]
        %v273 = vpack.c.bf16 %v202, %v201
        %v274 = vpack.c.bf16 %v204, %v203
        %v275 = vpack.c.bf16 %v206, %v205
        %v276 = vpack.c.bf16 %v208, %v207
        %v277 = vpack.c.bf16 %v210, %v209
        %v278 = vpack.c.bf16 %v212, %v211
        %v279 = vpack.c.bf16 %v214, %v213
        %v280 = vpack.c.bf16 %v216, %v215
        %v281 = vpack.c.bf16 %v218, %v217
        %v282 = vpack.c.bf16 %v220, %v219
        %v283 = vpack.c.bf16 %v222, %v221
        %v284 = vpack.c.bf16 %v224, %v223
        %v285 = vpack.c.bf16 %v226, %v225
        %v286 = vpack.c.bf16 %v228, %v227
        %v287 = vpack.c.bf16 %v230, %v229
        %v288 = vpack.c.bf16 %v232, %v231
        %v289 = vpack.c.bf16 %v234, %v233
        %v290 = vpack.c.bf16 %v236, %v235
        %v291 = vpack.c.bf16 %v238, %v237
        %v292 = vpack.c.bf16 %v240, %v239
        %v293 = vpack.c.bf16 %v242, %v241
        %v294 = vpack.c.bf16 %v244, %v243
        %v295 = vpack.c.bf16 %v246, %v245
        %v296 = vpack.c.bf16 %v248, %v247
        %v297 = vpack.c.bf16 %v250, %v249
        %v298 = vpack.c.bf16 %v252, %v251
        %v299 = vpack.c.bf16 %v254, %v253
        %v300 = vpack.c.bf16 %v256, %v255
        %v301 = vpack.c.bf16 %v258, %v257
        %v302 = vpack.c.bf16 %v260, %v259
        %v303 = vpack.c.bf16 %v262, %v261
        %v304 = vpack.c.bf16 %v264, %v263
        %v305 = vpack.c.bf16 %v266, %v265
        %v306 = vpack.c.bf16 %v268, %v267
        %v307 = vpack.c.bf16 %v270, %v269
        %v308 = vpack.c.bf16 %v272, %v271
        %v310 = vrot.slane %v197, 1
        %311 = vrot.lane.b32.xlu0 %v310, 64
        %v312 = vpop.permute.xlu0 %311
        %v314 = vrot.slane %v197, 2
        %317 = vrot.lane.b32.xlu0 %v198, 64
        %v318 = vpop.permute.xlu0 %317
        %v320 = vrot.slane %v198, 1
        %v322 = vrot.slane %v198, 2
        %323 = vrot.lane.b32.xlu0 %v322, 64
        %v324 = vpop.permute.xlu0 %323
        %v327 = vrot.slane %v199, 1
        %328 = vrot.lane.b32.xlu0 %v327, 64
        %v329 = vpop.permute.xlu0 %328
        %v331 = vrot.slane %v199, 2
        %vm333 = vcmask 523264
        %v334 = vsel %vm333, %v197, %v312
        %v335 = vsel %vm333, %v314, %v318
        %v336 = vsel %vm333, %v320, %v324
        %v337 = vsel %vm333, %v199, %v329
        %v338 = vpack.c.bf16 %v334, %v334
        %v339 = vpack.c.bf16 %v335, %v335
        %v340 = vpack.c.bf16 %v336, %v336
        %v341 = vpack.c.bf16 %v337, %v337
        %v342 = vpack.c.bf16 %v331, %v331
        %v344 = vsel %vm333, %v342, 0
        %346 = vmatprep.subr.bf16.mxu0 0
        %347 = vmatpush1.bf16.msra.mxu0 %v273
        %348 = vmatprep.subr.bf16.mxu0 0
        %349 = vmatpush1.bf16.msra.mxu0 %v274
        %350 = vmatprep.subr.bf16.mxu0 0
        %351 = vmatpush1.bf16.msra.mxu0 %v275
        %352 = vmatprep.subr.bf16.mxu0 0
        %353 = vmatpush1.bf16.msra.mxu0 %v276
        %354 = vmatprep.subr.bf16.mxu0 0
        %355 = vmatpush1.bf16.msra.mxu0 %v277
        %356 = vmatprep.subr.bf16.mxu0 0
        %357 = vmatpush1.bf16.msra.mxu0 %v278
        %358 = vmatprep.subr.bf16.mxu0 0
        %359 = vmatpush1.bf16.msra.mxu0 %v279
        %360 = vmatprep.subr.bf16.mxu0 0
        %361 = vmatpush1.bf16.msra.mxu0 %v280
        %362 = vmatprep.subr.bf16.mxu0 0
        %363 = vmatpush1.bf16.msra.mxu0 %v281
        %364 = vmatprep.subr.bf16.mxu0 0
        %365 = vmatpush1.bf16.msra.mxu0 %v282
        %366 = vmatprep.subr.bf16.mxu0 0
        %367 = vmatpush1.bf16.msra.mxu0 %v283
        %368 = vmatprep.subr.bf16.mxu0 0
        %369 = vmatpush1.bf16.msra.mxu0 %v284
        %370 = vmatprep.subr.bf16.mxu0 0
        %371 = vmatpush1.bf16.msra.mxu0 %v285
        %372 = vmatprep.subr.bf16.mxu0 0
        %373 = vmatpush1.bf16.msra.mxu0 %v286
        %374 = vmatprep.subr.bf16.mxu0 0
        %375 = vmatpush1.bf16.msra.mxu0 %v287
        %376 = vmatprep.subr.bf16.mxu0 0
        %377 = vmatpush1.bf16.msra.mxu0 %v288
        %378 = vmatprep.mubr.bf16.mxu0 %v339
        %379 = vmatmul.mubr.bf16.gmra.mrb[0].mxu0 %v338
        %v380 = vpop.f32.mrb[0].mxu0
        %v381 = vadd.f32 0.0, %v380
        %v382 = vpop.f32.mrb[0].mxu0
        %v383 = vpop.f32.mrb[0].mxu0
        %v384 = vpop.f32.mrb[0].mxu0
        %385 = vdwg.mxu0
        %386 = vmatprep.subr.bf16.mxu0 0
        %387 = vmatpush1.bf16.msra.mxu0 %v289
        %388 = vmatprep.subr.bf16.mxu0 0
        %389 = vmatpush1.bf16.msra.mxu0 %v290
        %390 = vmatprep.subr.bf16.mxu0 0
        %391 = vmatpush1.bf16.msra.mxu0 %v291
        %392 = vmatprep.subr.bf16.mxu0 0
        %393 = vmatpush1.bf16.msra.mxu0 %v292
        %394 = vmatprep.subr.bf16.mxu0 0
        %395 = vmatpush1.bf16.msra.mxu0 %v293
        %396 = vmatprep.subr.bf16.mxu0 0
        %397 = vmatpush1.bf16.msra.mxu0 %v294
        %398 = vmatprep.subr.bf16.mxu0 0
        %399 = vmatpush1.bf16.msra.mxu0 %v295
        %400 = vmatprep.subr.bf16.mxu0 0
        %401 = vmatpush1.bf16.msra.mxu0 %v296
        %402 = vmatprep.subr.bf16.mxu0 0
        %403 = vmatpush1.bf16.msra.mxu0 %v297
        %404 = vmatprep.subr.bf16.mxu0 0
        %405 = vmatpush1.bf16.msra.mxu0 %v298
        %406 = vmatprep.subr.bf16.mxu0 0
        %407 = vmatpush1.bf16.msra.mxu0 %v299
        %408 = vmatprep.subr.bf16.mxu0 0
        %409 = vmatpush1.bf16.msra.mxu0 %v300
        %410 = vmatprep.subr.bf16.mxu0 0
        %411 = vmatpush1.bf16.msra.mxu0 %v301
        %412 = vmatprep.subr.bf16.mxu0 0
        %413 = vmatpush1.bf16.msra.mxu0 %v302
        %414 = vmatprep.subr.bf16.mxu0 0
        %415 = vmatpush1.bf16.msra.mxu0 %v303
        %416 = vmatprep.subr.bf16.mxu0 0
        %417 = vmatpush1.bf16.msra.mxu0 %v304
        %418 = vmatprep.mubr.bf16.mxu0 %v341
        %419 = vmatmul.mubr.bf16.gmra.mrb[0].mxu0 %v340
        %v420 = vpop.f32.mrb[0].mxu0
        %v421 = vadd.f32 %v381, %v420
        %v422 = vpop.f32.mrb[0].mxu0
        %v423 = vpop.f32.mrb[0].mxu0
        %v424 = vpop.f32.mrb[0].mxu0
        %425 = vdwg.mxu0
        %426 = vmatprep.subr.bf16.mxu0 0
        %427 = vmatpush1.bf16.msra.mxu0 %v305
        %428 = vmatprep.subr.bf16.mxu0 0
        %429 = vmatpush1.bf16.msra.mxu0 %v306
        %430 = vmatprep.subr.bf16.mxu0 0
        %431 = vmatpush1.bf16.msra.mxu0 %v307
        %432 = vmatprep.subr.bf16.mxu0 0
        %433 = vmatpush1.bf16.msra.mxu0 %v308
        %434 = vmatprep.subr.bf16.mxu0 0
        %435 = vmatpush1.bf16.msra.mxu0 0
        %436 = vmatprep.subr.bf16.mxu0 0
        %437 = vmatpush1.bf16.msra.mxu0 0
        %438 = vmatprep.subr.bf16.mxu0 0
        %439 = vmatpush1.bf16.msra.mxu0 0
        %440 = vmatprep.subr.bf16.mxu0 0
        %441 = vmatpush1.bf16.msra.mxu0 0
        %442 = vmatprep.subr.bf16.mxu0 0
        %443 = vmatpush1.bf16.msra.mxu0 0
        %444 = vmatprep.subr.bf16.mxu0 0
        %445 = vmatpush1.bf16.msra.mxu0 0
        %446 = vmatprep.subr.bf16.mxu0 0
        %447 = vmatpush1.bf16.msra.mxu0 0
        %448 = vmatprep.subr.bf16.mxu0 0
        %449 = vmatpush1.bf16.msra.mxu0 0
        %450 = vmatprep.subr.bf16.mxu0 0
        %451 = vmatpush1.bf16.msra.mxu0 0
        %452 = vmatprep.subr.bf16.mxu0 0
        %453 = vmatpush1.bf16.msra.mxu0 0
        %454 = vmatprep.subr.bf16.mxu0 0
        %455 = vmatpush1.bf16.msra.mxu0 0
        %456 = vmatprep.subr.bf16.mxu0 0
        %457 = vmatpush1.bf16.msra.mxu0 0
        %458 = vmatprep.mubr.bf16.mxu0 0
        %459 = vmatmul.mubr.bf16.gmra.mrb[0].mxu0 %v344
        %v460 = vpop.f32.mrb[0].mxu0
        %v461 = vadd.f32 %v421, %v460
        %v462 = vpop.f32.mrb[0].mxu0
        %v463 = vpop.f32.mrb[0].mxu0
        %v464 = vpop.f32.mrb[0].mxu0
        %465 = vdwg.mxu0
        %v466 = vmax.f32 %v461, 0.0
        %s467 = scalar_lea.vmem [#allocation3], 4
        %468 = vst [vmem:[%s467 + $0x1] sm:$0x3] %v466
        %469 = vrot.lane.b32.xlu0 %v320, 64
        %v470 = vpop.permute.xlu0 %469
        %473 = vrot.lane.b32.xlu0 %v199, 64
        %v474 = vpop.permute.xlu0 %473
        %477 = vrot.lane.b32.xlu0 %v331, 64
        %v478 = vpop.permute.xlu0 %477
        %v481 = vrot.slane %v200, 1
        %482 = vrot.lane.b32.xlu0 %v481, 64
        %v483 = vpop.permute.xlu0 %482
        %v485 = vrot.slane %v200, 2
        %v487 = vsel %vm333, %v198, %v470
        %v488 = vsel %vm333, %v322, %v474
        %v489 = vsel %vm333, %v327, %v478
        %v490 = vsel %vm333, %v200, %v483
        %v491 = vpack.c.bf16 %v487, %v487
        %v492 = vpack.c.bf16 %v488, %v488
        %v493 = vpack.c.bf16 %v489, %v489
        %v494 = vpack.c.bf16 %v490, %v490
        %v495 = vpack.c.bf16 %v485, %v485
        %v497 = vsel %vm333, %v495, 0
        %499 = vmatprep.subr.bf16.mxu0 0
        %500 = vmatpush1.bf16.msra.mxu0 %v273
        %501 = vmatprep.subr.bf16.mxu0 0
        %502 = vmatpush1.bf16.msra.mxu0 %v274
        %503 = vmatprep.subr.bf16.mxu0 0
        %504 = vmatpush1.bf16.msra.mxu0 %v275
        %505 = vmatprep.subr.bf16.mxu0 0
        %506 = vmatpush1.bf16.msra.mxu0 %v276
        %507 = vmatprep.subr.bf16.mxu0 0
        %508 = vmatpush1.bf16.msra.mxu0 %v277
        %509 = vmatprep.subr.bf16.mxu0 0
        %510 = vmatpush1.bf16.msra.mxu0 %v278
        %511 = vmatprep.subr.bf16.mxu0 0
        %512 = vmatpush1.bf16.msra.mxu0 %v279
        %513 = vmatprep.subr.bf16.mxu0 0
        %514 = vmatpush1.bf16.msra.mxu0 %v280
        %515 = vmatprep.subr.bf16.mxu0 0
        %516 = vmatpush1.bf16.msra.mxu0 %v281
        %517 = vmatprep.subr.bf16.mxu0 0
        %518 = vmatpush1.bf16.msra.mxu0 %v282
        %519 = vmatprep.subr.bf16.mxu0 0
        %520 = vmatpush1.bf16.msra.mxu0 %v283
        %521 = vmatprep.subr.bf16.mxu0 0
        %522 = vmatpush1.bf16.msra.mxu0 %v284
        %523 = vmatprep.subr.bf16.mxu0 0
        %524 = vmatpush1.bf16.msra.mxu0 %v285
        %525 = vmatprep.subr.bf16.mxu0 0
        %526 = vmatpush1.bf16.msra.mxu0 %v286
        %527 = vmatprep.subr.bf16.mxu0 0
        %528 = vmatpush1.bf16.msra.mxu0 %v287
        %529 = vmatprep.subr.bf16.mxu0 0
        %530 = vmatpush1.bf16.msra.mxu0 %v288
        %531 = vmatprep.mubr.bf16.mxu0 %v492
        %532 = vmatmul.mubr.bf16.gmra.mrb[0].mxu0 %v491
        %v533 = vpop.f32.mrb[0].mxu0
        %v534 = vadd.f32 0.0, %v533
        %v535 = vpop.f32.mrb[0].mxu0
        %v536 = vpop.f32.mrb[0].mxu0
        %v537 = vpop.f32.mrb[0].mxu0
        %538 = vdwg.mxu0
        %539 = vmatprep.subr.bf16.mxu0 0
        %540 = vmatpush1.bf16.msra.mxu0 %v289
        %541 = vmatprep.subr.bf16.mxu0 0
        %542 = vmatpush1.bf16.msra.mxu0 %v290
        %543 = vmatprep.subr.bf16.mxu0 0
        %544 = vmatpush1.bf16.msra.mxu0 %v291
        %545 = vmatprep.subr.bf16.mxu0 0
        %546 = vmatpush1.bf16.msra.mxu0 %v292
        %547 = vmatprep.subr.bf16.mxu0 0
        %548 = vmatpush1.bf16.msra.mxu0 %v293
        %549 = vmatprep.subr.bf16.mxu0 0
        %550 = vmatpush1.bf16.msra.mxu0 %v294
        %551 = vmatprep.subr.bf16.mxu0 0
        %552 = vmatpush1.bf16.msra.mxu0 %v295
        %553 = vmatprep.subr.bf16.mxu0 0
        %554 = vmatpush1.bf16.msra.mxu0 %v296
        %555 = vmatprep.subr.bf16.mxu0 0
        %556 = vmatpush1.bf16.msra.mxu0 %v297
        %557 = vmatprep.subr.bf16.mxu0 0
        %558 = vmatpush1.bf16.msra.mxu0 %v298
        %559 = vmatprep.subr.bf16.mxu0 0
        %560 = vmatpush1.bf16.msra.mxu0 %v299
        %561 = vmatprep.subr.bf16.mxu0 0
        %562 = vmatpush1.bf16.msra.mxu0 %v300
        %563 = vmatprep.subr.bf16.mxu0 0
        %564 = vmatpush1.bf16.msra.mxu0 %v301
        %565 = vmatprep.subr.bf16.mxu0 0
        %566 = vmatpush1.bf16.msra.mxu0 %v302
        %567 = vmatprep.subr.bf16.mxu0 0
        %568 = vmatpush1.bf16.msra.mxu0 %v303
        %569 = vmatprep.subr.bf16.mxu0 0
        %570 = vmatpush1.bf16.msra.mxu0 %v304
        %571 = vmatprep.mubr.bf16.mxu0 %v494
        %572 = vmatmul.mubr.bf16.gmra.mrb[0].mxu0 %v493
        %v573 = vpop.f32.mrb[0].mxu0
        %v574 = vadd.f32 %v534, %v573
        %v575 = vpop.f32.mrb[0].mxu0
        %v576 = vpop.f32.mrb[0].mxu0
        %v577 = vpop.f32.mrb[0].mxu0
        %578 = vdwg.mxu0
        %579 = vmatprep.subr.bf16.mxu0 0
        %580 = vmatpush1.bf16.msra.mxu0 %v305
        %581 = vmatprep.subr.bf16.mxu0 0
        %582 = vmatpush1.bf16.msra.mxu0 %v306
        %583 = vmatprep.subr.bf16.mxu0 0
        %584 = vmatpush1.bf16.msra.mxu0 %v307
        %585 = vmatprep.subr.bf16.mxu0 0
        %586 = vmatpush1.bf16.msra.mxu0 %v308
        %587 = vmatprep.subr.bf16.mxu0 0
        %588 = vmatpush1.bf16.msra.mxu0 0
        %589 = vmatprep.subr.bf16.mxu0 0
        %590 = vmatpush1.bf16.msra.mxu0 0
        %591 = vmatprep.subr.bf16.mxu0 0
        %592 = vmatpush1.bf16.msra.mxu0 0
        %593 = vmatprep.subr.bf16.mxu0 0
        %594 = vmatpush1.bf16.msra.mxu0 0
        %595 = vmatprep.subr.bf16.mxu0 0
        %596 = vmatpush1.bf16.msra.mxu0 0
        %597 = vmatprep.subr.bf16.mxu0 0
        %598 = vmatpush1.bf16.msra.mxu0 0
        %599 = vmatprep.subr.bf16.mxu0 0
        %600 = vmatpush1.bf16.msra.mxu0 0
        %601 = vmatprep.subr.bf16.mxu0 0
        %602 = vmatpush1.bf16.msra.mxu0 0
        %603 = vmatprep.subr.bf16.mxu0 0
        %604 = vmatpush1.bf16.msra.mxu0 0
        %605 = vmatprep.subr.bf16.mxu0 0
        %606 = vmatpush1.bf16.msra.mxu0 0
        %607 = vmatprep.subr.bf16.mxu0 0
        %608 = vmatpush1.bf16.msra.mxu0 0
        %609 = vmatprep.subr.bf16.mxu0 0
        %610 = vmatpush1.bf16.msra.mxu0 0
        %611 = vmatprep.mubr.bf16.mxu0 0
        %612 = vmatmul.mubr.bf16.gmra.mrb[0].mxu0 %v497
        %v613 = vpop.f32.mrb[0].mxu0
        %v614 = vadd.f32 %v574, %v613
        %v615 = vpop.f32.mrb[0].mxu0
        %v616 = vpop.f32.mrb[0].mxu0
        %v617 = vpop.f32.mrb[0].mxu0
        %618 = vdwg.mxu0
        %v619 = vmax.f32 %v614, 0.0
        %s620 = scalar_lea.vmem [#allocation3], 8
        %621 = vst [vmem:[%s620 + $0x1] sm:$0x3] %v619
        %v622 = vld [vmem:[#allocation3] sm:$0xf]
        %v623 = vld [vmem:[#allocation3 + $0x4] sm:$0xf]
        %v624 = vld [vmem:[#allocation3 + $0x8] sm:$0xf]
        %v625 = vld [vmem:[#allocation3 + $0xc] sm:$0xf]
        %v626 = vld [vmem:[%s2] sm:$0xff]
        %v627 = vld [vmem:[%s2 + $0x8] sm:$0xff]
        %v628 = vld [vmem:[%s2 + $0x10] sm:$0xff]
        %v629 = vld [vmem:[%s2 + $0x18] sm:$0xff]
        %v630 = vld [vmem:[%s2 + $0x20] sm:$0xff]
        %v631 = vld [vmem:[%s2 + $0x28] sm:$0xff]
        %v632 = vld [vmem:[%s2 + $0x30] sm:$0xff]
        %v633 = vld [vmem:[%s2 + $0x38] sm:$0xff]
        %v634 = vld [vmem:[%s2 + $0x40] sm:$0xff]
        %v635 = vld [vmem:[%s2 + $0x48] sm:$0xff]
        %v636 = vld [vmem:[%s2 + $0x50] sm:$0xff]
        %v637 = vld [vmem:[%s2 + $0x58] sm:$0xff]
        %v638 = vld [vmem:[%s2 + $0x60] sm:$0xff]
        %v639 = vld [vmem:[%s2 + $0x68] sm:$0xff]
        %v640 = vld [vmem:[%s2 + $0x70] sm:$0xff]
        %v641 = vld [vmem:[%s2 + $0x78] sm:$0xff]
        %v642 = vld [vmem:[%s2 + $0x80] sm:$0xff]
        %v643 = vld [vmem:[%s2 + $0x88] sm:$0xff]
        %v644 = vld [vmem:[%s2 + $0x90] sm:$0xff]
        %v645 = vld [vmem:[%s2 + $0x98] sm:$0xff]
        %v646 = vld [vmem:[%s2 + $0xa0] sm:$0xff]
        %v647 = vld [vmem:[%s2 + $0xa8] sm:$0xff]
        %v648 = vld [vmem:[%s2 + $0xb0] sm:$0xff]
        %v649 = vld [vmem:[%s2 + $0xb8] sm:$0xff]
        %v650 = vld [vmem:[%s2 + $0xc0] sm:$0xff]
        %v651 = vld [vmem:[%s2 + $0xc8] sm:$0xff]
        %v652 = vld [vmem:[%s2 + $0xd0] sm:$0xff]
        %v653 = vld [vmem:[%s2 + $0xd8] sm:$0xff]
        %v654 = vld [vmem:[%s2 + $0xe0] sm:$0xff]
        %v655 = vld [vmem:[%s2 + $0xe8] sm:$0xff]
        %v656 = vld [vmem:[%s2 + $0xf0] sm:$0xff]
        %v657 = vld [vmem:[%s2 + $0xf8] sm:$0xff]
        %v658 = vld [vmem:[%s2 + $0x100] sm:$0xff]
        %v659 = vld [vmem:[%s2 + $0x108] sm:$0xff]
        %v660 = vld [vmem:[%s2 + $0x110] sm:$0xff]
        %v661 = vld [vmem:[%s2 + $0x118] sm:$0xff]
        %v662 = vld [vmem:[%s2 + $0x120] sm:$0xff]
        %v663 = vld [vmem:[%s2 + $0x128] sm:$0xff]
        %v664 = vld [vmem:[%s2 + $0x130] sm:$0xff]
        %v665 = vld [vmem:[%s2 + $0x138] sm:$0xff]
        %v666 = vld [vmem:[%s2 + $0x140] sm:$0xff]
        %v667 = vld [vmem:[%s2 + $0x148] sm:$0xff]
        %v668 = vld [vmem:[%s2 + $0x150] sm:$0xff]
        %v669 = vld [vmem:[%s2 + $0x158] sm:$0xff]
        %v670 = vld [vmem:[%s2 + $0x160] sm:$0xff]
        %v671 = vld [vmem:[%s2 + $0x168] sm:$0xff]
        %v672 = vld [vmem:[%s2 + $0x170] sm:$0xff]
        %v673 = vld [vmem:[%s2 + $0x178] sm:$0xff]
        %v674 = vld [vmem:[%s2 + $0x180] sm:$0xff]
        %v675 = vld [vmem:[%s2 + $0x188] sm:$0xff]
        %v676 = vld [vmem:[%s2 + $0x190] sm:$0xff]
        %v677 = vld [vmem:[%s2 + $0x198] sm:$0xff]
        %v678 = vld [vmem:[%s2 + $0x1a0] sm:$0xff]
        %v679 = vld [vmem:[%s2 + $0x1a8] sm:$0xff]
        %v680 = vld [vmem:[%s2 + $0x1b0] sm:$0xff]
        %v681 = vld [vmem:[%s2 + $0x1b8] sm:$0xff]
        %v682 = vld [vmem:[%s2 + $0x1c0] sm:$0xff]
        %v683 = vld [vmem:[%s2 + $0x1c8] sm:$0xff]
        %v684 = vld [vmem:[%s2 + $0x1d0] sm:$0xff]
        %v685 = vld [vmem:[%s2 + $0x1d8] sm:$0xff]
        %v686 = vld [vmem:[%s2 + $0x1e0] sm:$0xff]
        %v687 = vld [vmem:[%s2 + $0x1e8] sm:$0xff]
        %v688 = vld [vmem:[%s2 + $0x1f0] sm:$0xff]
        %v689 = vld [vmem:[%s2 + $0x1f8] sm:$0xff]
        %v690 = vld [vmem:[%s2 + $0x200] sm:$0xff]
        %v691 = vld [vmem:[%s2 + $0x208] sm:$0xff]
        %v692 = vld [vmem:[%s2 + $0x210] sm:$0xff]
        %v693 = vld [vmem:[%s2 + $0x218] sm:$0xff]
        %v694 = vld [vmem:[%s2 + $0x220] sm:$0xff]
        %v695 = vld [vmem:[%s2 + $0x228] sm:$0xff]
        %v696 = vld [vmem:[%s2 + $0x230] sm:$0xff]
        %v697 = vld [vmem:[%s2 + $0x238] sm:$0xff]
        %v698 = vld [vmem:[%s2 + $0x240] sm:$0xff]
        %v699 = vld [vmem:[%s2 + $0x248] sm:$0xff]
        %v700 = vld [vmem:[%s2 + $0x250] sm:$0xff]
        %v701 = vld [vmem:[%s2 + $0x258] sm:$0xff]
        %v702 = vld [vmem:[%s2 + $0x260] sm:$0xff]
        %v703 = vld [vmem:[%s2 + $0x268] sm:$0xff]
        %v704 = vld [vmem:[%s2 + $0x270] sm:$0xff]
        %v705 = vld [vmem:[%s2 + $0x278] sm:$0xff]
        %v706 = vld [vmem:[%s2 + $0x280] sm:$0xff]
        %v707 = vld [vmem:[%s2 + $0x288] sm:$0xff]
        %v708 = vld [vmem:[%s2 + $0x290] sm:$0xff]
        %v709 = vld [vmem:[%s2 + $0x298] sm:$0xff]
        %v710 = vld [vmem:[%s2 + $0x2a0] sm:$0xff]
        %v711 = vld [vmem:[%s2 + $0x2a8] sm:$0xff]
        %v712 = vld [vmem:[%s2 + $0x2b0] sm:$0xff]
        %v713 = vld [vmem:[%s2 + $0x2b8] sm:$0xff]
        %v714 = vld [vmem:[%s2 + $0x2c0] sm:$0xff]
        %v715 = vld [vmem:[%s2 + $0x2c8] sm:$0xff]
        %v716 = vld [vmem:[%s2 + $0x2d0] sm:$0xff]
        %v717 = vld [vmem:[%s2 + $0x2d8] sm:$0xff]
        %v718 = vld [vmem:[%s2 + $0x2e0] sm:$0xff]
        %v719 = vld [vmem:[%s2 + $0x2e8] sm:$0xff]
        %v720 = vld [vmem:[%s2 + $0x2f0] sm:$0xff]
        %v721 = vld [vmem:[%s2 + $0x2f8] sm:$0xff]
        %v722 = vld [vmem:[%s2 + $0x300] sm:$0xff]
        %v723 = vld [vmem:[%s2 + $0x308] sm:$0xff]
        %v724 = vld [vmem:[%s2 + $0x310] sm:$0xff]
        %v725 = vld [vmem:[%s2 + $0x318] sm:$0xff]
        %v726 = vld [vmem:[%s2 + $0x320] sm:$0xff]
        %v727 = vld [vmem:[%s2 + $0x328] sm:$0xff]
        %v728 = vld [vmem:[%s2 + $0x330] sm:$0xff]
        %v729 = vld [vmem:[%s2 + $0x338] sm:$0xff]
        %v730 = vld [vmem:[%s2 + $0x340] sm:$0xff]
        %v731 = vld [vmem:[%s2 + $0x348] sm:$0xff]
        %v732 = vld [vmem:[%s2 + $0x350] sm:$0xff]
        %v733 = vld [vmem:[%s2 + $0x358] sm:$0xff]
        %v734 = vld [vmem:[%s2 + $0x360] sm:$0xff]
        %v735 = vld [vmem:[%s2 + $0x368] sm:$0xff]
        %v736 = vld [vmem:[%s2 + $0x370] sm:$0xff]
        %v737 = vld [vmem:[%s2 + $0x378] sm:$0xff]
        %v738 = vld [vmem:[%s2 + $0x380] sm:$0xff]
        %v739 = vld [vmem:[%s2 + $0x388] sm:$0xff]
        %v740 = vld [vmem:[%s2 + $0x390] sm:$0xff]
        %v741 = vld [vmem:[%s2 + $0x398] sm:$0xff]
        %v742 = vld [vmem:[%s2 + $0x3a0] sm:$0xff]
        %v743 = vld [vmem:[%s2 + $0x3a8] sm:$0xff]
        %v744 = vld [vmem:[%s2 + $0x3b0] sm:$0xff]
        %v745 = vld [vmem:[%s2 + $0x3b8] sm:$0xff]
        %v746 = vld [vmem:[%s2 + $0x3c0] sm:$0xff]
        %v747 = vld [vmem:[%s2 + $0x3c8] sm:$0xff]
        %v748 = vld [vmem:[%s2 + $0x3d0] sm:$0xff]
        %v749 = vld [vmem:[%s2 + $0x3d8] sm:$0xff]
        %v750 = vld [vmem:[%s2 + $0x3e0] sm:$0xff]
        %v751 = vld [vmem:[%s2 + $0x3e8] sm:$0xff]
        %v752 = vld [vmem:[%s2 + $0x3f0] sm:$0xff]
        %v753 = vld [vmem:[%s2 + $0x3f8] sm:$0xff]
        %v754 = vld [vmem:[%s2 + $0x400] sm:$0xff]
        %v755 = vld [vmem:[%s2 + $0x408] sm:$0xff]
        %v756 = vld [vmem:[%s2 + $0x410] sm:$0xff]
        %v757 = vld [vmem:[%s2 + $0x418] sm:$0xff]
        %v758 = vld [vmem:[%s2 + $0x420] sm:$0xff]
        %v759 = vld [vmem:[%s2 + $0x428] sm:$0xff]
        %v760 = vld [vmem:[%s2 + $0x430] sm:$0xff]
        %v761 = vld [vmem:[%s2 + $0x438] sm:$0xff]
        %v762 = vld [vmem:[%s2 + $0x440] sm:$0xff]
        %v763 = vld [vmem:[%s2 + $0x448] sm:$0xff]
        %v764 = vld [vmem:[%s2 + $0x450] sm:$0xff]
        %v765 = vld [vmem:[%s2 + $0x458] sm:$0xff]
        %v766 = vld [vmem:[%s2 + $0x460] sm:$0xff]
        %v767 = vld [vmem:[%s2 + $0x468] sm:$0xff]
        %v768 = vld [vmem:[%s2 + $0x470] sm:$0xff]
        %v769 = vld [vmem:[%s2 + $0x478] sm:$0xff]
        %v770 = vpack.c.bf16 %v627, %v626
        %v771 = vpack.c.bf16 %v629, %v628
        %v772 = vpack.c.bf16 %v631, %v630
        %v773 = vpack.c.bf16 %v633, %v632
        %v774 = vpack.c.bf16 %v635, %v634
        %v775 = vpack.c.bf16 %v637, %v636
        %v776 = vpack.c.bf16 %v639, %v638
        %v777 = vpack.c.bf16 %v641, %v640
        %v778 = vpack.c.bf16 %v643, %v642
        %v779 = vpack.c.bf16 %v645, %v644
        %v780 = vpack.c.bf16 %v647, %v646
        %v781 = vpack.c.bf16 %v649, %v648
        %v782 = vpack.c.bf16 %v651, %v650
        %v783 = vpack.c.bf16 %v653, %v652
        %v784 = vpack.c.bf16 %v655, %v654
        %v785 = vpack.c.bf16 %v657, %v656
        %v786 = vpack.c.bf16 %v659, %v658
        %v787 = vpack.c.bf16 %v661, %v660
        %v788 = vpack.c.bf16 %v663, %v662
        %v789 = vpack.c.bf16 %v665, %v664
        %v790 = vpack.c.bf16 %v667, %v666
        %v791 = vpack.c.bf16 %v669, %v668
        %v792 = vpack.c.bf16 %v671, %v670
        %v793 = vpack.c.bf16 %v673, %v672
        %v794 = vpack.c.bf16 %v675, %v674
        %v795 = vpack.c.bf16 %v677, %v676
        %v796 = vpack.c.bf16 %v679, %v678
        %v797 = vpack.c.bf16 %v681, %v680
        %v798 = vpack.c.bf16 %v683, %v682
        %v799 = vpack.c.bf16 %v685, %v684
        %v800 = vpack.c.bf16 %v687, %v686
        %v801 = vpack.c.bf16 %v689, %v688
        %v802 = vpack.c.bf16 %v691, %v690
        %v803 = vpack.c.bf16 %v693, %v692
        %v804 = vpack.c.bf16 %v695, %v694
        %v805 = vpack.c.bf16 %v697, %v696
        %v806 = vpack.c.bf16 %v699, %v698
        %v807 = vpack.c.bf16 %v701, %v700
        %v808 = vpack.c.bf16 %v703, %v702
        %v809 = vpack.c.bf16 %v705, %v704
        %v810 = vpack.c.bf16 %v707, %v706
        %v811 = vpack.c.bf16 %v709, %v708
        %v812 = vpack.c.bf16 %v711, %v710
        %v813 = vpack.c.bf16 %v713, %v712
        %v814 = vpack.c.bf16 %v715, %v714
        %v815 = vpack.c.bf16 %v717, %v716
        %v816 = vpack.c.bf16 %v719, %v718
        %v817 = vpack.c.bf16 %v721, %v720
        %v818 = vpack.c.bf16 %v723, %v722
        %v819 = vpack.c.bf16 %v725, %v724
        %v820 = vpack.c.bf16 %v727, %v726
        %v821 = vpack.c.bf16 %v729, %v728
        %v822 = vpack.c.bf16 %v731, %v730
        %v823 = vpack.c.bf16 %v733, %v732
        %v824 = vpack.c.bf16 %v735, %v734
        %v825 = vpack.c.bf16 %v737, %v736
        %v826 = vpack.c.bf16 %v739, %v738
        %v827 = vpack.c.bf16 %v741, %v740
        %v828 = vpack.c.bf16 %v743, %v742
        %v829 = vpack.c.bf16 %v745, %v744
        %v830 = vpack.c.bf16 %v747, %v746
        %v831 = vpack.c.bf16 %v749, %v748
        %v832 = vpack.c.bf16 %v751, %v750
        %v833 = vpack.c.bf16 %v753, %v752
        %v834 = vpack.c.bf16 %v755, %v754
        %v835 = vpack.c.bf16 %v757, %v756
        %v836 = vpack.c.bf16 %v759, %v758
        %v837 = vpack.c.bf16 %v761, %v760
        %v838 = vpack.c.bf16 %v763, %v762
        %v839 = vpack.c.bf16 %v765, %v764
        %v840 = vpack.c.bf16 %v767, %v766
        %v841 = vpack.c.bf16 %v769, %v768
        %v843 = vrot.slane %v622, 1
        %v845 = vrot.slane %v622, 2
        %v848 = vrot.slane %v623, 1
        %v850 = vrot.slane %v623, 2
        %v853 = vrot.slane %v624, 1
        %v855 = vrot.slane %v624, 2
        %v857 = vpack.c.bf16 %v622, %v622
        %v858 = vpack.c.bf16 %v843, %v843
        %v859 = vpack.c.bf16 %v845, %v845
        %v860 = vpack.c.bf16 %v623, %v623
        %v861 = vpack.c.bf16 %v848, %v848
        %v862 = vpack.c.bf16 %v850, %v850
        %v863 = vpack.c.bf16 %v624, %v624
        %v864 = vpack.c.bf16 %v853, %v853
        %v865 = vpack.c.bf16 %v855, %v855
        %866 = vmatprep.subr.bf16.mxu0 0
        %867 = vmatpush1.bf16.msra.mxu0 %v770
        %868 = vmatprep.subr.bf16.mxu0 0
        %869 = vmatpush1.bf16.msra.mxu0 %v771
        %870 = vmatprep.subr.bf16.mxu0 0
        %871 = vmatpush1.bf16.msra.mxu0 %v772
        %872 = vmatprep.subr.bf16.mxu0 0
        %873 = vmatpush1.bf16.msra.mxu0 %v773
        %874 = vmatprep.subr.bf16.mxu0 0
        %875 = vmatpush1.bf16.msra.mxu0 %v774
        %876 = vmatprep.subr.bf16.mxu0 0
        %877 = vmatpush1.bf16.msra.mxu0 %v775
        %878 = vmatprep.subr.bf16.mxu0 0
        %879 = vmatpush1.bf16.msra.mxu0 %v776
        %880 = vmatprep.subr.bf16.mxu0 0
        %881 = vmatpush1.bf16.msra.mxu0 %v777
        %882 = vmatprep.subr.bf16.mxu0 0
        %883 = vmatpush1.bf16.msra.mxu0 %v778
        %884 = vmatprep.subr.bf16.mxu0 0
        %885 = vmatpush1.bf16.msra.mxu0 %v779
        %886 = vmatprep.subr.bf16.mxu0 0
        %887 = vmatpush1.bf16.msra.mxu0 %v780
        %888 = vmatprep.subr.bf16.mxu0 0
        %889 = vmatpush1.bf16.msra.mxu0 %v781
        %890 = vmatprep.subr.bf16.mxu0 0
        %891 = vmatpush1.bf16.msra.mxu0 %v782
        %892 = vmatprep.subr.bf16.mxu0 0
        %893 = vmatpush1.bf16.msra.mxu0 %v783
        %894 = vmatprep.subr.bf16.mxu0 0
        %895 = vmatpush1.bf16.msra.mxu0 %v784
        %896 = vmatprep.subr.bf16.mxu0 0
        %897 = vmatpush1.bf16.msra.mxu0 %v785
        %898 = vmatprep.mubr.bf16.mxu0 %v858
        %899 = vmatmul.mubr.bf16.gmra.mrb[0].mxu0 %v857
        %v900 = vpop.f32.mrb[0].mxu0
        %v901 = vadd.f32 0.0, %v900
        %v902 = vpop.f32.mrb[0].mxu0
        %v903 = vpop.f32.mrb[0].mxu0
        %v904 = vpop.f32.mrb[0].mxu0
        %905 = vdwg.mxu0
        %906 = vmatprep.subr.bf16.mxu0 0
        %907 = vmatpush1.bf16.msra.mxu0 %v786
        %908 = vmatprep.subr.bf16.mxu0 0
        %909 = vmatpush1.bf16.msra.mxu0 %v787
        %910 = vmatprep.subr.bf16.mxu0 0
        %911 = vmatpush1.bf16.msra.mxu0 %v788
        %912 = vmatprep.subr.bf16.mxu0 0
        %913 = vmatpush1.bf16.msra.mxu0 %v789
        %914 = vmatprep.subr.bf16.mxu0 0
        %915 = vmatpush1.bf16.msra.mxu0 %v790
        %916 = vmatprep.subr.bf16.mxu0 0
        %917 = vmatpush1.bf16.msra.mxu0 %v791
        %918 = vmatprep.subr.bf16.mxu0 0
        %919 = vmatpush1.bf16.msra.mxu0 %v792
        %920 = vmatprep.subr.bf16.mxu0 0
        %921 = vmatpush1.bf16.msra.mxu0 %v793
        %922 = vmatprep.subr.bf16.mxu0 0
        %923 = vmatpush1.bf16.msra.mxu0 %v794
        %924 = vmatprep.subr.bf16.mxu0 0
        %925 = vmatpush1.bf16.msra.mxu0 %v795
        %926 = vmatprep.subr.bf16.mxu0 0
        %927 = vmatpush1.bf16.msra.mxu0 %v796
        %928 = vmatprep.subr.bf16.mxu0 0
        %929 = vmatpush1.bf16.msra.mxu0 %v797
        %930 = vmatprep.subr.bf16.mxu0 0
        %931 = vmatpush1.bf16.msra.mxu0 %v798
        %932 = vmatprep.subr.bf16.mxu0 0
        %933 = vmatpush1.bf16.msra.mxu0 %v799
        %934 = vmatprep.subr.bf16.mxu0 0
        %935 = vmatpush1.bf16.msra.mxu0 %v800
        %936 = vmatprep.subr.bf16.mxu0 0
        %937 = vmatpush1.bf16.msra.mxu0 %v801
        %938 = vmatprep.mubr.bf16.mxu0 %v860
        %939 = vmatmul.mubr.bf16.gmra.mrb[0].mxu0 %v859
        %v940 = vpop.f32.mrb[0].mxu0
        %v941 = vadd.f32 %v901, %v940
        %v942 = vpop.f32.mrb[0].mxu0
        %v943 = vpop.f32.mrb[0].mxu0
        %v944 = vpop.f32.mrb[0].mxu0
        %945 = vdwg.mxu0
        %946 = vmatprep.subr.bf16.mxu0 0
        %947 = vmatpush1.bf16.msra.mxu0 %v802
        %948 = vmatprep.subr.bf16.mxu0 0
        %949 = vmatpush1.bf16.msra.mxu0 %v803
        %950 = vmatprep.subr.bf16.mxu0 0
        %951 = vmatpush1.bf16.msra.mxu0 %v804
        %952 = vmatprep.subr.bf16.mxu0 0
        %953 = vmatpush1.bf16.msra.mxu0 %v805
        %954 = vmatprep.subr.bf16.mxu0 0
        %955 = vmatpush1.bf16.msra.mxu0 %v806
        %956 = vmatprep.subr.bf16.mxu0 0
        %957 = vmatpush1.bf16.msra.mxu0 %v807
        %958 = vmatprep.subr.bf16.mxu0 0
        %959 = vmatpush1.bf16.msra.mxu0 %v808
        %960 = vmatprep.subr.bf16.mxu0 0
        %961 = vmatpush1.bf16.msra.mxu0 %v809
        %962 = vmatprep.subr.bf16.mxu0 0
        %963 = vmatpush1.bf16.msra.mxu0 %v810
        %964 = vmatprep.subr.bf16.mxu0 0
        %965 = vmatpush1.bf16.msra.mxu0 %v811
        %966 = vmatprep.subr.bf16.mxu0 0
        %967 = vmatpush1.bf16.msra.mxu0 %v812
        %968 = vmatprep.subr.bf16.mxu0 0
        %969 = vmatpush1.bf16.msra.mxu0 %v813
        %970 = vmatprep.subr.bf16.mxu0 0
        %971 = vmatpush1.bf16.msra.mxu0 %v814
        %972 = vmatprep.subr.bf16.mxu0 0
        %973 = vmatpush1.bf16.msra.mxu0 %v815
        %974 = vmatprep.subr.bf16.mxu0 0
        %975 = vmatpush1.bf16.msra.mxu0 %v816
        %976 = vmatprep.subr.bf16.mxu0 0
        %977 = vmatpush1.bf16.msra.mxu0 %v817
        %978 = vmatprep.mubr.bf16.mxu0 %v862
        %979 = vmatmul.mubr.bf16.gmra.mrb[0].mxu0 %v861
        %v980 = vpop.f32.mrb[0].mxu0
        %v981 = vadd.f32 %v941, %v980
        %v982 = vpop.f32.mrb[0].mxu0
        %v983 = vpop.f32.mrb[0].mxu0
        %v984 = vpop.f32.mrb[0].mxu0
        %985 = vdwg.mxu0
        %986 = vmatprep.subr.bf16.mxu0 0
        %987 = vmatpush1.bf16.msra.mxu0 %v818
        %988 = vmatprep.subr.bf16.mxu0 0
        %989 = vmatpush1.bf16.msra.mxu0 %v819
        %990 = vmatprep.subr.bf16.mxu0 0
        %991 = vmatpush1.bf16.msra.mxu0 %v820
        %992 = vmatprep.subr.bf16.mxu0 0
        %993 = vmatpush1.bf16.msra.mxu0 %v821
        %994 = vmatprep.subr.bf16.mxu0 0
        %995 = vmatpush1.bf16.msra.mxu0 %v822
        %996 = vmatprep.subr.bf16.mxu0 0
        %997 = vmatpush1.bf16.msra.mxu0 %v823
        %998 = vmatprep.subr.bf16.mxu0 0
        %999 = vmatpush1.bf16.msra.mxu0 %v824
        %1000 = vmatprep.subr.bf16.mxu0 0
        %1001 = vmatpush1.bf16.msra.mxu0 %v825
        %1002 = vmatprep.subr.bf16.mxu0 0
        %1003 = vmatpush1.bf16.msra.mxu0 %v826
        %1004 = vmatprep.subr.bf16.mxu0 0
        %1005 = vmatpush1.bf16.msra.mxu0 %v827
        %1006 = vmatprep.subr.bf16.mxu0 0
        %1007 = vmatpush1.bf16.msra.mxu0 %v828
        %1008 = vmatprep.subr.bf16.mxu0 0
        %1009 = vmatpush1.bf16.msra.mxu0 %v829
        %1010 = vmatprep.subr.bf16.mxu0 0
        %1011 = vmatpush1.bf16.msra.mxu0 %v830
        %1012 = vmatprep.subr.bf16.mxu0 0
        %1013 = vmatpush1.bf16.msra.mxu0 %v831
        %1014 = vmatprep.subr.bf16.mxu0 0
        %1015 = vmatpush1.bf16.msra.mxu0 %v832
        %1016 = vmatprep.subr.bf16.mxu0 0
        %1017 = vmatpush1.bf16.msra.mxu0 %v833
        %1018 = vmatprep.mubr.bf16.mxu0 %v864
        %1019 = vmatmul.mubr.bf16.gmra.mrb[0].mxu0 %v863
        %v1020 = vpop.f32.mrb[0].mxu0
        %v1021 = vadd.f32 %v981, %v1020
        %v1022 = vpop.f32.mrb[0].mxu0
        %v1023 = vpop.f32.mrb[0].mxu0
        %v1024 = vpop.f32.mrb[0].mxu0
        %1025 = vdwg.mxu0
        %1026 = vmatprep.subr.bf16.mxu0 0
        %1027 = vmatpush1.bf16.msra.mxu0 %v834
        %1028 = vmatprep.subr.bf16.mxu0 0
        %1029 = vmatpush1.bf16.msra.mxu0 %v835
        %1030 = vmatprep.subr.bf16.mxu0 0
        %1031 = vmatpush1.bf16.msra.mxu0 %v836
        %1032 = vmatprep.subr.bf16.mxu0 0
        %1033 = vmatpush1.bf16.msra.mxu0 %v837
        %1034 = vmatprep.subr.bf16.mxu0 0
        %1035 = vmatpush1.bf16.msra.mxu0 %v838
        %1036 = vmatprep.subr.bf16.mxu0 0
        %1037 = vmatpush1.bf16.msra.mxu0 %v839
        %1038 = vmatprep.subr.bf16.mxu0 0
        %1039 = vmatpush1.bf16.msra.mxu0 %v840
        %1040 = vmatprep.subr.bf16.mxu0 0
        %1041 = vmatpush1.bf16.msra.mxu0 %v841
        %1042 = vmatprep.subr.bf16.mxu0 0
        %1043 = vmatpush1.bf16.msra.mxu0 0
        %1044 = vmatprep.subr.bf16.mxu0 0
        %1045 = vmatpush1.bf16.msra.mxu0 0
        %1046 = vmatprep.subr.bf16.mxu0 0
        %1047 = vmatpush1.bf16.msra.mxu0 0
        %1048 = vmatprep.subr.bf16.mxu0 0
        %1049 = vmatpush1.bf16.msra.mxu0 0
        %1050 = vmatprep.subr.bf16.mxu0 0
        %1051 = vmatpush1.bf16.msra.mxu0 0
        %1052 = vmatprep.subr.bf16.mxu0 0
        %1053 = vmatpush1.bf16.msra.mxu0 0
        %1054 = vmatprep.subr.bf16.mxu0 0
        %1055 = vmatpush1.bf16.msra.mxu0 0
        %1056 = vmatprep.subr.bf16.mxu0 0
        %1057 = vmatpush1.bf16.msra.mxu0 0
        %1058 = vmatprep.mubr.bf16.mxu0 0
        %1059 = vmatmul.mubr.bf16.gmra.mrb[0].mxu0 %v865
        %v1060 = vpop.f32.mrb[0].mxu0
        %v1061 = vadd.f32 %v1021, %v1060
        %v1062 = vpop.f32.mrb[0].mxu0
        %v1063 = vpop.f32.mrb[0].mxu0
        %v1064 = vpop.f32.mrb[0].mxu0
        %1065 = vdwg.mxu0
        %v1066 = vmax.f32 %v1061, 0.0
        %1067 = vst [vmem:[%s163] sm:$0x3] %v1066
        %v1069 = vrot.slane %v625, 1
        %v1071 = vrot.slane %v625, 2
        %v1073 = vpack.c.bf16 %v625, %v625
        %v1074 = vpack.c.bf16 %v1069, %v1069
        %v1075 = vpack.c.bf16 %v1071, %v1071
        %1076 = vmatprep.subr.bf16.mxu0 0
        %1077 = vmatpush1.bf16.msra.mxu0 %v770
        %1078 = vmatprep.subr.bf16.mxu0 0
        %1079 = vmatpush1.bf16.msra.mxu0 %v771
        %1080 = vmatprep.subr.bf16.mxu0 0
        %1081 = vmatpush1.bf16.msra.mxu0 %v772
        %1082 = vmatprep.subr.bf16.mxu0 0
        %1083 = vmatpush1.bf16.msra.mxu0 %v773
        %1084 = vmatprep.subr.bf16.mxu0 0
        %1085 = vmatpush1.bf16.msra.mxu0 %v774
        %1086 = vmatprep.subr.bf16.mxu0 0
        %1087 = vmatpush1.bf16.msra.mxu0 %v775
        %1088 = vmatprep.subr.bf16.mxu0 0
        %1089 = vmatpush1.bf16.msra.mxu0 %v776
        %1090 = vmatprep.subr.bf16.mxu0 0
        %1091 = vmatpush1.bf16.msra.mxu0 %v777
        %1092 = vmatprep.subr.bf16.mxu0 0
        %1093 = vmatpush1.bf16.msra.mxu0 %v778
        %1094 = vmatprep.subr.bf16.mxu0 0
        %1095 = vmatpush1.bf16.msra.mxu0 %v779
        %1096 = vmatprep.subr.bf16.mxu0 0
        %1097 = vmatpush1.bf16.msra.mxu0 %v780
        %1098 = vmatprep.subr.bf16.mxu0 0
        %1099 = vmatpush1.bf16.msra.mxu0 %v781
        %1100 = vmatprep.subr.bf16.mxu0 0
        %1101 = vmatpush1.bf16.msra.mxu0 %v782
        %1102 = vmatprep.subr.bf16.mxu0 0
        %1103 = vmatpush1.bf16.msra.mxu0 %v783
        %1104 = vmatprep.subr.bf16.mxu0 0
        %1105 = vmatpush1.bf16.msra.mxu0 %v784
        %1106 = vmatprep.subr.bf16.mxu0 0
        %1107 = vmatpush1.bf16.msra.mxu0 %v785
        %1108 = vmatprep.mubr.bf16.mxu0 %v861
        %1109 = vmatmul.mubr.bf16.gmra.mrb[0].mxu0 %v860
        %v1110 = vpop.f32.mrb[0].mxu0
        %v1111 = vadd.f32 0.0, %v1110
        %v1112 = vpop.f32.mrb[0].mxu0
        %v1113 = vpop.f32.mrb[0].mxu0
        %v1114 = vpop.f32.mrb[0].mxu0
        %1115 = vdwg.mxu0
        %1116 = vmatprep.subr.bf16.mxu0 0
        %1117 = vmatpush1.bf16.msra.mxu0 %v786
        %1118 = vmatprep.subr.bf16.mxu0 0
        %1119 = vmatpush1.bf16.msra.mxu0 %v787
        %1120 = vmatprep.subr.bf16.mxu0 0
        %1121 = vmatpush1.bf16.msra.mxu0 %v788
        %1122 = vmatprep.subr.bf16.mxu0 0
        %1123 = vmatpush1.bf16.msra.mxu0 %v789
        %1124 = vmatprep.subr.bf16.mxu0 0
        %1125 = vmatpush1.bf16.msra.mxu0 %v790
        %1126 = vmatprep.subr.bf16.mxu0 0
        %1127 = vmatpush1.bf16.msra.mxu0 %v791
        %1128 = vmatprep.subr.bf16.mxu0 0
        %1129 = vmatpush1.bf16.msra.mxu0 %v792
        %1130 = vmatprep.subr.bf16.mxu0 0
        %1131 = vmatpush1.bf16.msra.mxu0 %v793
        %1132 = vmatprep.subr.bf16.mxu0 0
        %1133 = vmatpush1.bf16.msra.mxu0 %v794
        %1134 = vmatprep.subr.bf16.mxu0 0
        %1135 = vmatpush1.bf16.msra.mxu0 %v795
        %1136 = vmatprep.subr.bf16.mxu0 0
        %1137 = vmatpush1.bf16.msra.mxu0 %v796
        %1138 = vmatprep.subr.bf16.mxu0 0
        %1139 = vmatpush1.bf16.msra.mxu0 %v797
        %1140 = vmatprep.subr.bf16.mxu0 0
        %1141 = vmatpush1.bf16.msra.mxu0 %v798
        %1142 = vmatprep.subr.bf16.mxu0 0
        %1143 = vmatpush1.bf16.msra.mxu0 %v799
        %1144 = vmatprep.subr.bf16.mxu0 0
        %1145 = vmatpush1.bf16.msra.mxu0 %v800
        %1146 = vmatprep.subr.bf16.mxu0 0
        %1147 = vmatpush1.bf16.msra.mxu0 %v801
        %1148 = vmatprep.mubr.bf16.mxu0 %v863
        %1149 = vmatmul.mubr.bf16.gmra.mrb[0].mxu0 %v862
        %v1150 = vpop.f32.mrb[0].mxu0
        %v1151 = vadd.f32 %v1111, %v1150
        %v1152 = vpop.f32.mrb[0].mxu0
        %v1153 = vpop.f32.mrb[0].mxu0
        %v1154 = vpop.f32.mrb[0].mxu0
        %1155 = vdwg.mxu0
        %1156 = vmatprep.subr.bf16.mxu0 0
        %1157 = vmatpush1.bf16.msra.mxu0 %v802
        %1158 = vmatprep.subr.bf16.mxu0 0
        %1159 = vmatpush1.bf16.msra.mxu0 %v803
        %1160 = vmatprep.subr.bf16.mxu0 0
        %1161 = vmatpush1.bf16.msra.mxu0 %v804
        %1162 = vmatprep.subr.bf16.mxu0 0
        %1163 = vmatpush1.bf16.msra.mxu0 %v805
        %1164 = vmatprep.subr.bf16.mxu0 0
        %1165 = vmatpush1.bf16.msra.mxu0 %v806
        %1166 = vmatprep.subr.bf16.mxu0 0
        %1167 = vmatpush1.bf16.msra.mxu0 %v807
        %1168 = vmatprep.subr.bf16.mxu0 0
        %1169 = vmatpush1.bf16.msra.mxu0 %v808
        %1170 = vmatprep.subr.bf16.mxu0 0
        %1171 = vmatpush1.bf16.msra.mxu0 %v809
        %1172 = vmatprep.subr.bf16.mxu0 0
        %1173 = vmatpush1.bf16.msra.mxu0 %v810
        %1174 = vmatprep.subr.bf16.mxu0 0
        %1175 = vmatpush1.bf16.msra.mxu0 %v811
        %1176 = vmatprep.subr.bf16.mxu0 0
        %1177 = vmatpush1.bf16.msra.mxu0 %v812
        %1178 = vmatprep.subr.bf16.mxu0 0
        %1179 = vmatpush1.bf16.msra.mxu0 %v813
        %1180 = vmatprep.subr.bf16.mxu0 0
        %1181 = vmatpush1.bf16.msra.mxu0 %v814
        %1182 = vmatprep.subr.bf16.mxu0 0
        %1183 = vmatpush1.bf16.msra.mxu0 %v815
        %1184 = vmatprep.subr.bf16.mxu0 0
        %1185 = vmatpush1.bf16.msra.mxu0 %v816
        %1186 = vmatprep.subr.bf16.mxu0 0
        %1187 = vmatpush1.bf16.msra.mxu0 %v817
        %1188 = vmatprep.mubr.bf16.mxu0 %v865
        %1189 = vmatmul.mubr.bf16.gmra.mrb[0].mxu0 %v864
        %v1190 = vpop.f32.mrb[0].mxu0
        %v1191 = vadd.f32 %v1151, %v1190
        %v1192 = vpop.f32.mrb[0].mxu0
        %v1193 = vpop.f32.mrb[0].mxu0
        %v1194 = vpop.f32.mrb[0].mxu0
        %1195 = vdwg.mxu0
        %1196 = vmatprep.subr.bf16.mxu0 0
        %1197 = vmatpush1.bf16.msra.mxu0 %v818
        %1198 = vmatprep.subr.bf16.mxu0 0
        %1199 = vmatpush1.bf16.msra.mxu0 %v819
        %1200 = vmatprep.subr.bf16.mxu0 0
        %1201 = vmatpush1.bf16.msra.mxu0 %v820
        %1202 = vmatprep.subr.bf16.mxu0 0
        %1203 = vmatpush1.bf16.msra.mxu0 %v821
        %1204 = vmatprep.subr.bf16.mxu0 0
        %1205 = vmatpush1.bf16.msra.mxu0 %v822
        %1206 = vmatprep.subr.bf16.mxu0 0
        %1207 = vmatpush1.bf16.msra.mxu0 %v823
        %1208 = vmatprep.subr.bf16.mxu0 0
        %1209 = vmatpush1.bf16.msra.mxu0 %v824
        %1210 = vmatprep.subr.bf16.mxu0 0
        %1211 = vmatpush1.bf16.msra.mxu0 %v825
        %1212 = vmatprep.subr.bf16.mxu0 0
        %1213 = vmatpush1.bf16.msra.mxu0 %v826
        %1214 = vmatprep.subr.bf16.mxu0 0
        %1215 = vmatpush1.bf16.msra.mxu0 %v827
        %1216 = vmatprep.subr.bf16.mxu0 0
        %1217 = vmatpush1.bf16.msra.mxu0 %v828
        %1218 = vmatprep.subr.bf16.mxu0 0
        %1219 = vmatpush1.bf16.msra.mxu0 %v829
        %1220 = vmatprep.subr.bf16.mxu0 0
        %1221 = vmatpush1.bf16.msra.mxu0 %v830
        %1222 = vmatprep.subr.bf16.mxu0 0
        %1223 = vmatpush1.bf16.msra.mxu0 %v831
        %1224 = vmatprep.subr.bf16.mxu0 0
        %1225 = vmatpush1.bf16.msra.mxu0 %v832
        %1226 = vmatprep.subr.bf16.mxu0 0
        %1227 = vmatpush1.bf16.msra.mxu0 %v833
        %1228 = vmatprep.mubr.bf16.mxu0 %v1074
        %1229 = vmatmul.mubr.bf16.gmra.mrb[0].mxu0 %v1073
        %v1230 = vpop.f32.mrb[0].mxu0
        %v1231 = vadd.f32 %v1191, %v1230
        %v1232 = vpop.f32.mrb[0].mxu0
        %v1233 = vpop.f32.mrb[0].mxu0
        %v1234 = vpop.f32.mrb[0].mxu0
        %1235 = vdwg.mxu0
        %1236 = vmatprep.subr.bf16.mxu0 0
        %1237 = vmatpush1.bf16.msra.mxu0 %v834
        %1238 = vmatprep.subr.bf16.mxu0 0
        %1239 = vmatpush1.bf16.msra.mxu0 %v835
        %1240 = vmatprep.subr.bf16.mxu0 0
        %1241 = vmatpush1.bf16.msra.mxu0 %v836
        %1242 = vmatprep.subr.bf16.mxu0 0
        %1243 = vmatpush1.bf16.msra.mxu0 %v837
        %1244 = vmatprep.subr.bf16.mxu0 0
        %1245 = vmatpush1.bf16.msra.mxu0 %v838
        %1246 = vmatprep.subr.bf16.mxu0 0
        %1247 = vmatpush1.bf16.msra.mxu0 %v839
        %1248 = vmatprep.subr.bf16.mxu0 0
        %1249 = vmatpush1.bf16.msra.mxu0 %v840
        %1250 = vmatprep.subr.bf16.mxu0 0
        %1251 = vmatpush1.bf16.msra.mxu0 %v841
        %1252 = vmatprep.subr.bf16.mxu0 0
        %1253 = vmatpush1.bf16.msra.mxu0 0
        %1254 = vmatprep.subr.bf16.mxu0 0
        %1255 = vmatpush1.bf16.msra.mxu0 0
        %1256 = vmatprep.subr.bf16.mxu0 0
        %1257 = vmatpush1.bf16.msra.mxu0 0
        %1258 = vmatprep.subr.bf16.mxu0 0
        %1259 = vmatpush1.bf16.msra.mxu0 0
        %1260 = vmatprep.subr.bf16.mxu0 0
        %1261 = vmatpush1.bf16.msra.mxu0 0
        %1262 = vmatprep.subr.bf16.mxu0 0
        %1263 = vmatpush1.bf16.msra.mxu0 0
        %1264 = vmatprep.subr.bf16.mxu0 0
        %1265 = vmatpush1.bf16.msra.mxu0 0
        %1266 = vmatprep.subr.bf16.mxu0 0
        %1267 = vmatpush1.bf16.msra.mxu0 0
        %1268 = vmatprep.mubr.bf16.mxu0 0
        %1269 = vmatmul.mubr.bf16.gmra.mrb[0].mxu0 %v1075
        %v1270 = vpop.f32.mrb[0].mxu0
        %v1271 = vadd.f32 %v1231, %v1270
        %v1272 = vpop.f32.mrb[0].mxu0
        %v1273 = vpop.f32.mrb[0].mxu0
        %v1274 = vpop.f32.mrb[0].mxu0
        %1275 = vdwg.mxu0
        %v1276 = vmax.f32 %v1271, 0.0
        %s1277 = scalar_lea.vmem %s163, 2 [#allocation4]
        %1278 = vst [vmem:[%s1277] sm:$0x3] %v1276
        %s1279 = sand.u32 %s93, 1
        %s1280 = scalar_lea.sflag [#allocation5], %s1279
        %s1281 = sand.u32 %s93, 1
        %s1282 = smul.addr %s1281, 4
        %s1283 = scalar_lea.vmem [#allocation4], %s1282
        // Predicated region
        $region33: #{unet_encoder.7} parent=31 // pred_check
          %p1284 = pneg %p103
        $region34: #{unet_encoder.7} parent=31 // pred_check_branch
          %1286 = sbr.rel (%p1284) target = $region36
        $region35: #{unet_encoder.7} parent=31 // pred_region
          %s1288 = ssub.s32 64, 64
          %1289 = vsyncadd %s1280, %s1288
          %s1290 = smul.addr %s17, 2
          %s1291 = smul.addr %s1290, 32
          %s1292 = scalar_lea.hbm %s3, %s1291
          %s1293 = sshll.u32 %s1283, 4
          %s1294 = int_to_ptr.vmem [resolvable:$true] %s1293
          %1299 = dma.vmem_to_hbm [thread:$0]  %s1294, 64, %s1292, %s1280, 32, 32, 2
        $region36: #{unet_encoder.7} parent=31 // pred_fallthru
          _
      $region32: #{unet_encoder.7} parent=5 // pred_fallthru
        _
      %p1300 = scmp.le.s32.totalorder 2, %s12
      // Predicated region
      $region37: #{unet_encoder.7} parent=5 // pred_check
        %p1301 = pneg %p1300
      $region38: #{unet_encoder.7} parent=5 // pred_check_branch
        %1303 = sbr.rel (%p1301) target = $region40
      $region39: #{unet_encoder.7} parent=5 // pred_region
        %s1304 = ssub.s32 %s12, 2
        // Predicated region
        $region41: #{unet_encoder.7} parent=39 // pred_check
          %p1305 = pneg %p109
        $region42: #{unet_encoder.7} parent=39 // pred_check_branch
          %1307 = sbr.rel (%p1305) target = $region44
        $region43: #{unet_encoder.7} parent=39 // pred_region
          %s1308 = sand.u32 %s94, 1
          %s1309 = scalar_lea.sflag [#allocation5], %s1308
          %s1310 = sand.u32 %s94, 1
          %s1311 = smul.addr %s1310, 4
          %s1312 = scalar_lea.vmem [#allocation4], %s1311
          %1313 = dma.done %s1309, 64
        $region44: #{unet_encoder.7} parent=39 // pred_fallthru
          _
      $region40: #{unet_encoder.7} parent=5 // pred_fallthru
        _
    $region6: #{unet_encoder.7} parent=1 // loop_footer
      %s16 = sadd.s32 1, %s12
    $region7: #{unet_encoder.7} parent=1 // loop_footer_branch
      %11 = sbr.rel target = $region3
    $region8: #{unet_encoder.7} parent=1 // loop_exit
      _
    %1314 = vsyncpa [#allocation5], 1
    %s1315 = scalar_lea.sflag [#allocation5], 1
    %1316 = vsyncpa %s1315, 1

// kernel: unet_encoder.4
$region0: #{unet_encoder.4}
  #allocation0 [shape = 'u32[]', space=smem, size = 0x4, offset = 0x4, fixed_abs, tag = 'smem constant byte address 0x4 - core index']
  #allocation1 [shape = 'u32[144,128]{1,0:T(1,128)}', space=vmem, size = 0x12000, scoped, tag = 'internal scratch']
  #allocation2 [shape = 'f32[18,18,1]{2,1,0:T(8,128)}', space=vmem, size = 0x36000, scoped, tag = 'scratch operand']
  #allocation3 [shape = 'f32[18,18,16]{2,1,0:T(8,128)}', space=vmem, size = 0x36000, scoped, tag = 'scratch operand']
  %s0 = inlined_call_operand.vmem [shape: f32[2,16,16,1], index: 0, kind: input, shape index: {}]
  %s1 = inlined_call_operand.vmem [shape: f32[9,16], index: 1, kind: input, shape index: {}]
  %s2 = inlined_call_operand.vmem [shape: f32[144,16], index: 2, kind: input, shape index: {}]
  %s3 = inlined_call_operand.vmem [shape: f32[2,16,16,16], index: 3, kind: output, shape index: {}]
  %s4 = sld [smem:[#allocation0]]
  $region45: #{unet_encoder.4} parent=0
    _
  %s6 = ssub.s32 1, %s4
  %s7 = scalar_select 0, %s6, %s4
  loop: start=0, step=1, limit=4
  $region2: #{unet_encoder.4} parent=0 // loop_pre_header
    _
  $region3: #{unet_encoder.4} parent=0 // loop_header
    %s9 = sphi 0, %s13
    %p10 = scmp.ge.s32.totalorder %s9, 4
    %s19 = sphi 0, %s21
    %s22 = sphi 0, %s19
    %s23 = sphi 0, %s22
    %s39 = sphi 0, %s23
    %s43 = sphi 0, %s43
    %s45 = sphi 0, %s43
    %s46 = sphi 0, %s45
    %s60 = sphi 0, %s46
    %s64 = sphi 0, %s64
    %s66 = sphi 0, %s64
    %s67 = sphi 0, %s66
    %s81 = sphi 0, %s67
    %s87 = sphi 0, %s89
    %s90 = sphi 0, %s87
    %s91 = sphi 0, %s90
    %s107 = sphi 0, %s91
  $region4: #{unet_encoder.4} parent=0 // loop_header_branch
    %12 = sbr.rel (%p10) target = $region8
  $region5: #{unet_encoder.4} parent=0 // loop_body
    %s14 = ssub.s32 %s9, 1
    %s15 = ssub.s32 %s9, 2
    %s16 = sadd.s32 %s9, 1
    %s17 = ssub.s32 %s9, %s16
    %p18 = scmp.eq.s32.totalorder %s17, 0
    %s20 = sadd.s32 %s19, 1
    %s21 = scalar_select %p18, %s19, %s20
    %p24 = pneg %p18
    %p25 = scmp.eq.s32.totalorder %s9, 1
    %p26 = por %p24, %p25
    %p27 = scmp.ne.s32.totalorder %s19, %s22
    %p28 = scmp.eq.s32.totalorder %s9, 0
    %p29 = por %p27, %p28
    %p30 = scmp.ne.s32.totalorder %s19, %s22
    %p31 = scmp.eq.s32.totalorder %s14, 1
    %p32 = por %p30, %p31
    %p33 = scmp.ne.s32.totalorder %s22, %s23
    %p34 = scmp.eq.s32.totalorder %s14, 0
    %p35 = por %p33, %p34
    %p36 = scmp.ne.s32.totalorder %s22, %s23
    %p37 = scmp.eq.s32.totalorder %s15, 1
    %p38 = por %p36, %p37
    %p40 = scmp.ne.s32.totalorder %s23, %s39
    %p41 = scmp.eq.s32.totalorder %s15, 0
    %p42 = por %p40, %p41
    %s44 = sadd.s32 %s43, 1
    %p47 = scmp.eq.s32.totalorder %s9, 1
    %p48 = scmp.ne.s32.totalorder %s43, %s45
    %p49 = scmp.eq.s32.totalorder %s9, 0
    %p50 = por %p48, %p49
    %p51 = scmp.ne.s32.totalorder %s43, %s45
    %p52 = scmp.eq.s32.totalorder %s14, 1
    %p53 = por %p51, %p52
    %p54 = scmp.ne.s32.totalorder %s45, %s46
    %p55 = scmp.eq.s32.totalorder %s14, 0
    %p56 = por %p54, %p55
    %p57 = scmp.ne.s32.totalorder %s45, %s46
    %p58 = scmp.eq.s32.totalorder %s15, 1
    %p59 = por %p57, %p58
    %p61 = scmp.ne.s32.totalorder %s46, %s60
    %p62 = scmp.eq.s32.totalorder %s15, 0
    %p63 = por %p61, %p62
    %s65 = sadd.s32 %s64, 1
    %p68 = scmp.eq.s32.totalorder %s9, 1
    %p69 = scmp.ne.s32.totalorder %s64, %s66
    %p70 = scmp.eq.s32.totalorder %s9, 0
    %p71 = por %p69, %p70
    %p72 = scmp.ne.s32.totalorder %s64, %s66
    %p73 = scmp.eq.s32.totalorder %s14, 1
    %p74 = por %p72, %p73
    %p75 = scmp.ne.s32.totalorder %s66, %s67
    %p76 = scmp.eq.s32.totalorder %s14, 0
    %p77 = por %p75, %p76
    %p78 = scmp.ne.s32.totalorder %s66, %s67
    %p79 = scmp.eq.s32.totalorder %s15, 1
    %p80 = por %p78, %p79
    %p82 = scmp.ne.s32.totalorder %s67, %s81
    %p83 = scmp.eq.s32.totalorder %s15, 0
    %p84 = por %p82, %p83
    %s85 = ssub.s32 %s9, %s16
    %p86 = scmp.eq.s32.totalorder %s85, 0
    %s88 = sadd.s32 %s87, 1
    %s89 = scalar_select %p86, %s87, %s88
    %p92 = pneg %p86
    %p93 = scmp.eq.s32.totalorder %s9, 1
    %p94 = por %p92, %p93
    %p95 = scmp.ne.s32.totalorder %s87, %s90
    %p96 = scmp.eq.s32.totalorder %s9, 0
    %p97 = por %p95, %p96
    %p98 = scmp.ne.s32.totalorder %s87, %s90
    %p99 = scmp.eq.s32.totalorder %s14, 1
    %p100 = por %p98, %p99
    %p101 = scmp.ne.s32.totalorder %s90, %s91
    %p102 = scmp.eq.s32.totalorder %s14, 0
    %p103 = por %p101, %p102
    %p104 = scmp.ne.s32.totalorder %s90, %s91
    %p105 = scmp.eq.s32.totalorder %s15, 1
    %p106 = por %p104, %p105
    %p108 = scmp.ne.s32.totalorder %s91, %s107
    %p109 = scmp.eq.s32.totalorder %s15, 0
    %p110 = por %p108, %p109
    %p111 = scmp.le.s32.totalorder 1, %s9
    %p112 = scmp.lt.s32.totalorder %s9, 3
    %p113 = pnand %p111, %p112
    %p114 = pneg %p113
    // Predicated region
    $region9: #{unet_encoder.4} parent=5 // pred_check
      _
    $region10: #{unet_encoder.4} parent=5 // pred_check_branch
      %116 = sbr.rel (%p113) target = $region12
    $region11: #{unet_encoder.4} parent=5 // pred_region
      %s117 = ssub.s32 %s9, 1
      // Predicated region
      $region13: #{unet_encoder.4} parent=11 // pred_check
        %p118 = pneg %p56
      $region14: #{unet_encoder.4} parent=11 // pred_check_branch
        %120 = sbr.rel (%p118) target = $region16
      $region15: #{unet_encoder.4} parent=11 // pred_region
        _
      $region16: #{unet_encoder.4} parent=11 // pred_fallthru
        _
      // Predicated region
      $region17: #{unet_encoder.4} parent=11 // pred_check
        %p121 = pneg %p77
      $region18: #{unet_encoder.4} parent=11 // pred_check_branch
        %123 = sbr.rel (%p121) target = $region20
      $region19: #{unet_encoder.4} parent=11 // pred_region
        _
      $region20: #{unet_encoder.4} parent=11 // pred_fallthru
        _
    $region12: #{unet_encoder.4} parent=5 // pred_fallthru
      _
    %p124 = scmp.lt.s32.totalorder %s9, 2
    // Predicated region
    $region21: #{unet_encoder.4} parent=5 // pred_check
      %p125 = pneg %p124
    $region22: #{unet_encoder.4} parent=5 // pred_check_branch
      %127 = sbr.rel (%p125) target = $region24
    $region23: #{unet_encoder.4} parent=5 // pred_region
      // Predicated region
      $region25: #{unet_encoder.4} parent=23 // pred_check
        %p128 = pneg %p29
      $region26: #{unet_encoder.4} parent=23 // pred_check_branch
        %130 = sbr.rel (%p128) target = $region28
      $region27: #{unet_encoder.4} parent=23 // pred_region
        %p131 = scmp.lt.s32.totalorder %s9, 1
        %s132 = scalar_select %p131, %s9, 1
        %s133 = smul.addr %s132, 32
        %s134 = smul.addr %s133, 8
        %s135 = scalar_lea.vmem %s0, %s134
      $region28: #{unet_encoder.4} parent=23 // pred_fallthru
        _
    $region24: #{unet_encoder.4} parent=5 // pred_fallthru
      _
    %p136 = scmp.le.s32.totalorder 1, %s9
    %p137 = scmp.lt.s32.totalorder %s9, 3
    %p138 = pnand %p136, %p137
    %p139 = pneg %p138
    // Predicated region
    $region29: #{unet_encoder.4} parent=5 // pred_check
      _
    $region30: #{unet_encoder.4} parent=5 // pred_check_branch
      %141 = sbr.rel (%p138) target = $region32
    $region31: #{unet_encoder.4} parent=5 // pred_region
      %s142 = ssub.s32 %s9, 1
      %p143 = scmp.lt.s32.totalorder %s14, 1
      %s144 = scalar_select %p143, %s14, 1
      %s145 = smul.addr %s144, 32
      %s146 = smul.addr %s145, 8
      %s147 = scalar_lea.vmem %s0, %s146
      %p148 = pneg %p35
      %p149 = pneg %p32
      %p150 = pneg %p56
      %p151 = pneg %p53
      %p152 = pneg %p77
      %p153 = pneg %p74
      %p154 = pneg %p103
      %p155 = pneg %p100
      %p156 = scmp.lt.s32.totalorder %s14, 1
      %s157 = scalar_select %p156, %s14, 1
      %s158 = smul.addr %s157, 32
      %s159 = smul.addr %s158, 8
      %s160 = scalar_lea.vmem %s3, %s159
      %p161 = scmp.lt.s32.totalorder %s14, 1
      %s162 = scalar_select %p161, %s14, 1
      %s163 = smul.addr %s162, 32
      %s164 = smul.addr %s163, 8
      %s165 = scalar_lea.vmem %s0, %s164
      %p166 = scmp.lt.s32.totalorder %s14, 1
      %s167 = scalar_select %p166, %s14, 1
      %s168 = smul.addr %s167, 32
      %s169 = smul.addr %s168, 8
      %s170 = scalar_lea.vmem %s3, %s169
      %v172 = vld [vmem:[%s165] sm:$0xff]
      %v173 = vld [vmem:[%s165 + $0x8] sm:$0xff]
      %v174 = vld [vmem:[%s165 + $0x10] sm:$0xff]
      %v175 = vld [vmem:[%s165 + $0x18] sm:$0xff]
      %v176 = vld [vmem:[%s165 + $0x20] sm:$0xff]
      %v177 = vld [vmem:[%s165 + $0x28] sm:$0xff]
      %v178 = vld [vmem:[%s165 + $0x30] sm:$0xff]
      %v179 = vld [vmem:[%s165 + $0x38] sm:$0xff]
      %v180 = vld [vmem:[%s165 + $0x40] sm:$0xff]
      %v181 = vld [vmem:[%s165 + $0x48] sm:$0xff]
      %v182 = vld [vmem:[%s165 + $0x50] sm:$0xff]
      %v183 = vld [vmem:[%s165 + $0x58] sm:$0xff]
      %v184 = vld [vmem:[%s165 + $0x60] sm:$0xff]
      %v185 = vld [vmem:[%s165 + $0x68] sm:$0xff]
      %v186 = vld [vmem:[%s165 + $0x70] sm:$0xff]
      %v187 = vld [vmem:[%s165 + $0x78] sm:$0xff]
      %v188 = vld [vmem:[%s165 + $0x80] sm:$0xff]
      %v189 = vld [vmem:[%s165 + $0x88] sm:$0xff]
      %v190 = vld [vmem:[%s165 + $0x90] sm:$0xff]
      %v191 = vld [vmem:[%s165 + $0x98] sm:$0xff]
      %v192 = vld [vmem:[%s165 + $0xa0] sm:$0xff]
      %v193 = vld [vmem:[%s165 + $0xa8] sm:$0xff]
      %v194 = vld [vmem:[%s165 + $0xb0] sm:$0xff]
      %v195 = vld [vmem:[%s165 + $0xb8] sm:$0xff]
      %v196 = vld [vmem:[%s165 + $0xc0] sm:$0xff]
      %v197 = vld [vmem:[%s165 + $0xc8] sm:$0xff]
      %v198 = vld [vmem:[%s165 + $0xd0] sm:$0xff]
      %v199 = vld [vmem:[%s165 + $0xd8] sm:$0xff]
      %v200 = vld [vmem:[%s165 + $0xe0] sm:$0xff]
      %v201 = vld [vmem:[%s165 + $0xe8] sm:$0xff]
      %v202 = vld [vmem:[%s165 + $0xf0] sm:$0xff]
      %v203 = vld [vmem:[%s165 + $0xf8] sm:$0xff]
      %vm204 = vcmask 7168
      %205 = vst.msk [vmem:[#allocation2] sm:$0xff] %vm204, 0.0
      %206 = vst.msk [vmem:[#allocation2 + $0x8] sm:$0xff] %vm204, 0.0
      %vm207 = vcmask 1024
      %208 = vst.msk [vmem:[#allocation2 + $0x10] sm:$0x3] %vm207, 0.0
      %209 = vst.msk [vmem:[#allocation2 + $0x18] sm:$0xff] %vm204, 0.0
      %210 = vst.msk [vmem:[#allocation2 + $0x20] sm:$0xff] %vm204, 0.0
      %211 = vst.msk [vmem:[#allocation2 + $0x28] sm:$0x3] %vm207, 0.0
      %212 = vst.msk [vmem:[#allocation2 + $0x30] sm:$0xff] %vm204, 0.0
      %213 = vst.msk [vmem:[#allocation2 + $0x38] sm:$0xff] %vm204, 0.0
      %214 = vst.msk [vmem:[#allocation2 + $0x40] sm:$0x3] %vm207, 0.0
      %215 = vst.msk [vmem:[#allocation2 + $0x48] sm:$0xff] %vm204, 0.0
      %216 = vst.msk [vmem:[#allocation2 + $0x50] sm:$0xff] %vm204, 0.0
      %217 = vst.msk [vmem:[#allocation2 + $0x58] sm:$0x3] %vm207, 0.0
      %218 = vst.msk [vmem:[#allocation2 + $0x60] sm:$0xff] %vm204, 0.0
      %219 = vst.msk [vmem:[#allocation2 + $0x68] sm:$0xff] %vm204, 0.0
      %220 = vst.msk [vmem:[#allocation2 + $0x70] sm:$0x3] %vm207, 0.0
      %221 = vst.msk [vmem:[#allocation2 + $0x78] sm:$0xff] %vm204, 0.0
      %222 = vst.msk [vmem:[#allocation2 + $0x80] sm:$0xff] %vm204, 0.0
      %223 = vst.msk [vmem:[#allocation2 + $0x88] sm:$0x3] %vm207, 0.0
      %224 = vst.msk [vmem:[#allocation2 + $0x90] sm:$0xff] %vm204, 0.0
      %225 = vst.msk [vmem:[#allocation2 + $0x98] sm:$0xff] %vm204, 0.0
      %226 = vst.msk [vmem:[#allocation2 + $0xa0] sm:$0x3] %vm207, 0.0
      %227 = vst.msk [vmem:[#allocation2 + $0xa8] sm:$0xff] %vm204, 0.0
      %228 = vst.msk [vmem:[#allocation2 + $0xb0] sm:$0xff] %vm204, 0.0
      %229 = vst.msk [vmem:[#allocation2 + $0xb8] sm:$0x3] %vm207, 0.0
      %230 = vst.msk [vmem:[#allocation2 + $0xc0] sm:$0xff] %vm204, 0.0
      %231 = vst.msk [vmem:[#allocation2 + $0xc8] sm:$0xff] %vm204, 0.0
      %232 = vst.msk [vmem:[#allocation2 + $0xd0] sm:$0x3] %vm207, 0.0
      %233 = vst.msk [vmem:[#allocation2 + $0xd8] sm:$0xff] %vm204, 0.0
      %234 = vst.msk [vmem:[#allocation2 + $0xe0] sm:$0xff] %vm204, 0.0
      %235 = vst.msk [vmem:[#allocation2 + $0xe8] sm:$0x3] %vm207, 0.0
      %236 = vst.msk [vmem:[#allocation2 + $0xf0] sm:$0xff] %vm204, 0.0
      %237 = vst.msk [vmem:[#allocation2 + $0xf8] sm:$0xff] %vm204, 0.0
      %238 = vst.msk [vmem:[#allocation2 + $0x100] sm:$0x3] %vm207, 0.0
      %239 = vst.msk [vmem:[#allocation2 + $0x108] sm:$0xff] %vm204, 0.0
      %240 = vst.msk [vmem:[#allocation2 + $0x110] sm:$0xff] %vm204, 0.0
      %241 = vst.msk [vmem:[#allocation2 + $0x118] sm:$0x3] %vm207, 0.0
      %242 = vst.msk [vmem:[#allocation2 + $0x120] sm:$0xff] %vm204, 0.0
      %243 = vst.msk [vmem:[#allocation2 + $0x128] sm:$0xff] %vm204, 0.0
      %244 = vst.msk [vmem:[#allocation2 + $0x130] sm:$0x3] %vm207, 0.0
      %245 = vst.msk [vmem:[#allocation2 + $0x138] sm:$0xff] %vm204, 0.0
      %246 = vst.msk [vmem:[#allocation2 + $0x140] sm:$0xff] %vm204, 0.0
      %247 = vst.msk [vmem:[#allocation2 + $0x148] sm:$0x3] %vm207, 0.0
      %248 = vst.msk [vmem:[#allocation2 + $0x150] sm:$0xff] %vm204, 0.0
      %249 = vst.msk [vmem:[#allocation2 + $0x158] sm:$0xff] %vm204, 0.0
      %250 = vst.msk [vmem:[#allocation2 + $0x160] sm:$0x3] %vm207, 0.0
      %251 = vst.msk [vmem:[#allocation2 + $0x168] sm:$0xff] %vm204, 0.0
      %252 = vst.msk [vmem:[#allocation2 + $0x170] sm:$0xff] %vm204, 0.0
      %253 = vst.msk [vmem:[#allocation2 + $0x178] sm:$0x3] %vm207, 0.0
      %254 = vst.msk [vmem:[#allocation2 + $0x180] sm:$0xff] %vm204, 0.0
      %255 = vst.msk [vmem:[#allocation2 + $0x188] sm:$0xff] %vm204, 0.0
      %256 = vst.msk [vmem:[#allocation2 + $0x190] sm:$0x3] %vm207, 0.0
      %257 = vst.msk [vmem:[#allocation2 + $0x198] sm:$0xff] %vm204, 0.0
      %258 = vst.msk [vmem:[#allocation2 + $0x1a0] sm:$0xff] %vm204, 0.0
      %259 = vst.msk [vmem:[#allocation2 + $0x1a8] sm:$0x3] %vm207, 0.0
      %s260 = scalar_lea.vmem [#allocation2], 24
      %261 = vst.msk [vmem:[%s260 + $0x1] sm:$0xff] %vm204, %v172
      %262 = vst.msk [vmem:[%s260 + $0x9] sm:$0xff] %vm204, %v173
      %263 = vst.msk [vmem:[%s260 + $0x19] sm:$0xff] %vm204, %v174
      %264 = vst.msk [vmem:[%s260 + $0x21] sm:$0xff] %vm204, %v175
      %265 = vst.msk [vmem:[%s260 + $0x31] sm:$0xff] %vm204, %v176
      %266 = vst.msk [vmem:[%s260 + $0x39] sm:$0xff] %vm204, %v177
      %267 = vst.msk [vmem:[%s260 + $0x49] sm:$0xff] %vm204, %v178
      %268 = vst.msk [vmem:[%s260 + $0x51] sm:$0xff] %vm204, %v179
      %269 = vst.msk [vmem:[%s260 + $0x61] sm:$0xff] %vm204, %v180
      %270 = vst.msk [vmem:[%s260 + $0x69] sm:$0xff] %vm204, %v181
      %271 = vst.msk [vmem:[%s260 + $0x79] sm:$0xff] %vm204, %v182
      %272 = vst.msk [vmem:[%s260 + $0x81] sm:$0xff] %vm204, %v183
      %273 = vst.msk [vmem:[%s260 + $0x91] sm:$0xff] %vm204, %v184
      %274 = vst.msk [vmem:[%s260 + $0x99] sm:$0xff] %vm204, %v185
      %275 = vst.msk [vmem:[%s260 + $0xa9] sm:$0xff] %vm204, %v186
      %276 = vst.msk [vmem:[%s260 + $0xb1] sm:$0xff] %vm204, %v187
      %277 = vst.msk [vmem:[%s260 + $0xc1] sm:$0xff] %vm204, %v188
      %278 = vst.msk [vmem:[%s260 + $0xc9] sm:$0xff] %vm204, %v189
      %279 = vst.msk [vmem:[%s260 + $0xd9] sm:$0xff] %vm204, %v190
      %280 = vst.msk [vmem:[%s260 + $0xe1] sm:$0xff] %vm204, %v191
      %281 = vst.msk [vmem:[%s260 + $0xf1] sm:$0xff] %vm204, %v192
      %282 = vst.msk [vmem:[%s260 + $0xf9] sm:$0xff] %vm204, %v193
      %283 = vst.msk [vmem:[%s260 + $0x109] sm:$0xff] %vm204, %v194
      %284 = vst.msk [vmem:[%s260 + $0x111] sm:$0xff] %vm204, %v195
      %285 = vst.msk [vmem:[%s260 + $0x121] sm:$0xff] %vm204, %v196
      %286 = vst.msk [vmem:[%s260 + $0x129] sm:$0xff] %vm204, %v197
      %287 = vst.msk [vmem:[%s260 + $0x139] sm:$0xff] %vm204, %v198
      %288 = vst.msk [vmem:[%s260 + $0x141] sm:$0xff] %vm204, %v199
      %289 = vst.msk [vmem:[%s260 + $0x151] sm:$0xff] %vm204, %v200
      %290 = vst.msk [vmem:[%s260 + $0x159] sm:$0xff] %vm204, %v201
      %291 = vst.msk [vmem:[%s260 + $0x169] sm:$0xff] %vm204, %v202
      %292 = vst.msk [vmem:[%s260 + $0x171] sm:$0xff] %vm204, %v203
      %vm293 = vcmask 130048
      %294 = vst.msk [vmem:[#allocation3] sm:$0xff] %vm293, 0.0
      %295 = vst.msk [vmem:[#allocation3 + $0x8] sm:$0xff] %vm293, 0.0
      %vm296 = vcmask 123904
      %297 = vst.msk [vmem:[#allocation3 + $0x10] sm:$0x3] %vm296, 0.0
      %298 = vst.msk [vmem:[#allocation3 + $0x18] sm:$0xff] %vm293, 0.0
      %299 = vst.msk [vmem:[#allocation3 + $0x20] sm:$0xff] %vm293, 0.0
      %300 = vst.msk [vmem:[#allocation3 + $0x28] sm:$0x3] %vm296, 0.0
      %301 = vst.msk [vmem:[#allocation3 + $0x30] sm:$0xff] %vm293, 0.0
      %302 = vst.msk [vmem:[#allocation3 + $0x38] sm:$0xff] %vm293, 0.0
      %303 = vst.msk [vmem:[#allocation3 + $0x40] sm:$0x3] %vm296, 0.0
      %304 = vst.msk [vmem:[#allocation3 + $0x48] sm:$0xff] %vm293, 0.0
      %305 = vst.msk [vmem:[#allocation3 + $0x50] sm:$0xff] %vm293, 0.0
      %306 = vst.msk [vmem:[#allocation3 + $0x58] sm:$0x3] %vm296, 0.0
      %307 = vst.msk [vmem:[#allocation3 + $0x60] sm:$0xff] %vm293, 0.0
      %308 = vst.msk [vmem:[#allocation3 + $0x68] sm:$0xff] %vm293, 0.0
      %309 = vst.msk [vmem:[#allocation3 + $0x70] sm:$0x3] %vm296, 0.0
      %310 = vst.msk [vmem:[#allocation3 + $0x78] sm:$0xff] %vm293, 0.0
      %311 = vst.msk [vmem:[#allocation3 + $0x80] sm:$0xff] %vm293, 0.0
      %312 = vst.msk [vmem:[#allocation3 + $0x88] sm:$0x3] %vm296, 0.0
      %313 = vst.msk [vmem:[#allocation3 + $0x90] sm:$0xff] %vm293, 0.0
      %314 = vst.msk [vmem:[#allocation3 + $0x98] sm:$0xff] %vm293, 0.0
      %315 = vst.msk [vmem:[#allocation3 + $0xa0] sm:$0x3] %vm296, 0.0
      %316 = vst.msk [vmem:[#allocation3 + $0xa8] sm:$0xff] %vm293, 0.0
      %317 = vst.msk [vmem:[#allocation3 + $0xb0] sm:$0xff] %vm293, 0.0
      %318 = vst.msk [vmem:[#allocation3 + $0xb8] sm:$0x3] %vm296, 0.0
      %319 = vst.msk [vmem:[#allocation3 + $0xc0] sm:$0xff] %vm293, 0.0
      %320 = vst.msk [vmem:[#allocation3 + $0xc8] sm:$0xff] %vm293, 0.0
      %321 = vst.msk [vmem:[#allocation3 + $0xd0] sm:$0x3] %vm296, 0.0
      %322 = vst.msk [vmem:[#allocation3 + $0xd8] sm:$0xff] %vm293, 0.0
      %323 = vst.msk [vmem:[#allocation3 + $0xe0] sm:$0xff] %vm293, 0.0
      %324 = vst.msk [vmem:[#allocation3 + $0xe8] sm:$0x3] %vm296, 0.0
      %325 = vst.msk [vmem:[#allocation3 + $0xf0] sm:$0xff] %vm293, 0.0
      %326 = vst.msk [vmem:[#allocation3 + $0xf8] sm:$0xff] %vm293, 0.0
      %327 = vst.msk [vmem:[#allocation3 + $0x100] sm:$0x3] %vm296, 0.0
      %328 = vst.msk [vmem:[#allocation3 + $0x108] sm:$0xff] %vm293, 0.0
      %329 = vst.msk [vmem:[#allocation3 + $0x110] sm:$0xff] %vm293, 0.0
      %330 = vst.msk [vmem:[#allocation3 + $0x118] sm:$0x3] %vm296, 0.0
      %331 = vst.msk [vmem:[#allocation3 + $0x120] sm:$0xff] %vm293, 0.0
      %332 = vst.msk [vmem:[#allocation3 + $0x128] sm:$0xff] %vm293, 0.0
      %333 = vst.msk [vmem:[#allocation3 + $0x130] sm:$0x3] %vm296, 0.0
      %334 = vst.msk [vmem:[#allocation3 + $0x138] sm:$0xff] %vm293, 0.0
      %335 = vst.msk [vmem:[#allocation3 + $0x140] sm:$0xff] %vm293, 0.0
      %336 = vst.msk [vmem:[#allocation3 + $0x148] sm:$0x3] %vm296, 0.0
      %337 = vst.msk [vmem:[#allocation3 + $0x150] sm:$0xff] %vm293, 0.0
      %338 = vst.msk [vmem:[#allocation3 + $0x158] sm:$0xff] %vm293, 0.0
      %339 = vst.msk [vmem:[#allocation3 + $0x160] sm:$0x3] %vm296, 0.0
      %340 = vst.msk [vmem:[#allocation3 + $0x168] sm:$0xff] %vm293, 0.0
      %341 = vst.msk [vmem:[#allocation3 + $0x170] sm:$0xff] %vm293, 0.0
      %342 = vst.msk [vmem:[#allocation3 + $0x178] sm:$0x3] %vm296, 0.0
      %343 = vst.msk [vmem:[#allocation3 + $0x180] sm:$0xff] %vm293, 0.0
      %344 = vst.msk [vmem:[#allocation3 + $0x188] sm:$0xff] %vm293, 0.0
      %345 = vst.msk [vmem:[#allocation3 + $0x190] sm:$0x3] %vm296, 0.0
      %346 = vst.msk [vmem:[#allocation3 + $0x198] sm:$0xff] %vm293, 0.0
      %347 = vst.msk [vmem:[#allocation3 + $0x1a0] sm:$0xff] %vm293, 0.0
      %348 = vst.msk [vmem:[#allocation3 + $0x1a8] sm:$0x3] %vm296, 0.0
      %v349 = vld [vmem:[#allocation2] sm:$0xff]
      %v350 = vld [vmem:[#allocation2 + $0x8] sm:$0xff]
      %v351 = vld [vmem:[#allocation2 + $0x10] sm:$0x3]
      %v352 = vld [vmem:[#allocation2 + $0x18] sm:$0xff]
      %v353 = vld [vmem:[#allocation2 + $0x20] sm:$0xff]
      %v354 = vld [vmem:[#allocation2 + $0x28] sm:$0x3]
      %v355 = vld [vmem:[#allocation2 + $0x30] sm:$0xff]
      %v356 = vld [vmem:[#allocation2 + $0x38] sm:$0xff]
      %v357 = vld [vmem:[#allocation2 + $0x40] sm:$0x3]
      %v358 = vld [vmem:[#allocation2 + $0x48] sm:$0xff]
      %v359 = vld [vmem:[#allocation2 + $0x50] sm:$0xff]
      %v360 = vld [vmem:[#allocation2 + $0x58] sm:$0x3]
      %v361 = vld [vmem:[#allocation2 + $0x60] sm:$0xff]
      %v362 = vld [vmem:[#allocation2 + $0x68] sm:$0xff]
      %v363 = vld [vmem:[#allocation2 + $0x70] sm:$0x3]
      %v364 = vld [vmem:[#allocation2 + $0x78] sm:$0xff]
      %v365 = vld [vmem:[#allocation2 + $0x80] sm:$0xff]
      %v366 = vld [vmem:[#allocation2 + $0x88] sm:$0x3]
      %v367 = vld [vmem:[#allocation2 + $0x90] sm:$0xff]
      %v368 = vld [vmem:[#allocation2 + $0x98] sm:$0xff]
      %v369 = vld [vmem:[#allocation2 + $0xa0] sm:$0x3]
      %v370 = vld [vmem:[#allocation2 + $0xa8] sm:$0xff]
      %v371 = vld [vmem:[#allocation2 + $0xb0] sm:$0xff]
      %v372 = vld [vmem:[#allocation2 + $0xb8] sm:$0x3]
      %v373 = vld [vmem:[#allocation2 + $0xc0] sm:$0xff]
      %v374 = vld [vmem:[#allocation2 + $0xc8] sm:$0xff]
      %v375 = vld [vmem:[#allocation2 + $0xd0] sm:$0x3]
      %v376 = vld [vmem:[#allocation2 + $0xd8] sm:$0xff]
      %v377 = vld [vmem:[#allocation2 + $0xe0] sm:$0xff]
      %v378 = vld [vmem:[#allocation2 + $0xe8] sm:$0x3]
      %v379 = vld [vmem:[#allocation2 + $0xf0] sm:$0xff]
      %v380 = vld [vmem:[#allocation2 + $0xf8] sm:$0xff]
      %v381 = vld [vmem:[#allocation2 + $0x100] sm:$0x3]
      %v382 = vld [vmem:[#allocation2 + $0x108] sm:$0xff]
      %v383 = vld [vmem:[#allocation2 + $0x110] sm:$0xff]
      %v384 = vld [vmem:[#allocation2 + $0x118] sm:$0x3]
      %v385 = vld [vmem:[#allocation2 + $0x120] sm:$0xff]
      %v386 = vld [vmem:[#allocation2 + $0x128] sm:$0xff]
      %v387 = vld [vmem:[#allocation2 + $0x130] sm:$0x3]
      %v388 = vld [vmem:[#allocation2 + $0x138] sm:$0xff]
      %v389 = vld [vmem:[#allocation2 + $0x140] sm:$0xff]
      %v390 = vld [vmem:[#allocation2 + $0x148] sm:$0x3]
      %v391 = vld [vmem:[#allocation2 + $0x150] sm:$0xff]
      %v392 = vld [vmem:[#allocation2 + $0x158] sm:$0xff]
      %v393 = vld [vmem:[#allocation2 + $0x160] sm:$0x3]
      %v394 = vld [vmem:[#allocation2 + $0x168] sm:$0xff]
      %v395 = vld [vmem:[#allocation2 + $0x170] sm:$0xff]
      %v396 = vld [vmem:[#allocation2 + $0x178] sm:$0x3]
      %v397 = vld [vmem:[#allocation2 + $0x180] sm:$0xff]
      %v398 = vld [vmem:[#allocation2 + $0x188] sm:$0xff]
      %v399 = vld [vmem:[#allocation2 + $0x190] sm:$0x3]
      %v400 = vld [vmem:[#allocation2 + $0x198] sm:$0xff]
      %v401 = vld [vmem:[#allocation2 + $0x1a0] sm:$0xff]
      %v402 = vld [vmem:[#allocation2 + $0x1a8] sm:$0x3]
      %v403 = vld [vmem:[%s1] sm:$0xff]
      %v404 = vld [vmem:[%s1 + $0x8] sm:$0x1]
      %406 = vset.pattern.permute.xlu0 0
      %407 = vperm.xlu0 %406, %v349
      %v408 = vpop.permute.xlu0 %407
      %411 = vset.pattern.permute.xlu0 0
      %412 = vperm.xlu0 %411, %v350
      %v413 = vpop.permute.xlu0 %412
      %416 = vset.pattern.permute.xlu0 0
      %417 = vperm.xlu0 %416, %v352
      %v418 = vpop.permute.xlu0 %417
      %421 = vset.pattern.permute.xlu0 0
      %422 = vperm.xlu0 %421, %v353
      %v423 = vpop.permute.xlu0 %422
      %426 = vset.pattern.permute.xlu0 0
      %427 = vperm.xlu0 %426, %v355
      %v428 = vpop.permute.xlu0 %427
      %431 = vset.pattern.permute.xlu0 0
      %432 = vperm.xlu0 %431, %v356
      %v433 = vpop.permute.xlu0 %432
      %436 = vset.pattern.permute.xlu0 0
      %437 = vperm.xlu0 %436, %v358
      %v438 = vpop.permute.xlu0 %437
      %441 = vset.pattern.permute.xlu0 0
      %442 = vperm.xlu0 %441, %v359
      %v443 = vpop.permute.xlu0 %442
      %446 = vset.pattern.permute.xlu0 0
      %447 = vperm.xlu0 %446, %v361
      %v448 = vpop.permute.xlu0 %447
      %451 = vset.pattern.permute.xlu0 0
      %452 = vperm.xlu0 %451, %v362
      %v453 = vpop.permute.xlu0 %452
      %456 = vset.pattern.permute.xlu0 0
      %457 = vperm.xlu0 %456, %v364
      %v458 = vpop.permute.xlu0 %457
      %461 = vset.pattern.permute.xlu0 0
      %462 = vperm.xlu0 %461, %v365
      %v463 = vpop.permute.xlu0 %462
      %466 = vset.pattern.permute.xlu0 0
      %467 = vperm.xlu0 %466, %v367
      %v468 = vpop.permute.xlu0 %467
      %471 = vset.pattern.permute.xlu0 0
      %472 = vperm.xlu0 %471, %v368
      %v473 = vpop.permute.xlu0 %472
      %476 = vset.pattern.permute.xlu0 0
      %477 = vperm.xlu0 %476, %v370
      %v478 = vpop.permute.xlu0 %477
      %481 = vset.pattern.permute.xlu0 0
      %482 = vperm.xlu0 %481, %v371
      %v483 = vpop.permute.xlu0 %482
      %486 = vset.pattern.permute.xlu0 0
      %487 = vperm.xlu0 %486, %v373
      %v488 = vpop.permute.xlu0 %487
      %491 = vset.pattern.permute.xlu0 0
      %492 = vperm.xlu0 %491, %v374
      %v493 = vpop.permute.xlu0 %492
      %496 = vset.pattern.permute.xlu0 0
      %497 = vperm.xlu0 %496, %v376
      %v498 = vpop.permute.xlu0 %497
      %501 = vset.pattern.permute.xlu0 0
      %502 = vperm.xlu0 %501, %v377
      %v503 = vpop.permute.xlu0 %502
      %506 = vset.pattern.permute.xlu0 0
      %507 = vperm.xlu0 %506, %v379
      %v508 = vpop.permute.xlu0 %507
      %511 = vset.pattern.permute.xlu0 0
      %512 = vperm.xlu0 %511, %v380
      %v513 = vpop.permute.xlu0 %512
      %516 = vset.pattern.permute.xlu0 0
      %517 = vperm.xlu0 %516, %v382
      %v518 = vpop.permute.xlu0 %517
      %521 = vset.pattern.permute.xlu0 0
      %522 = vperm.xlu0 %521, %v383
      %v523 = vpop.permute.xlu0 %522
      %526 = vset.pattern.permute.xlu0 0
      %527 = vperm.xlu0 %526, %v385
      %v528 = vpop.permute.xlu0 %527
      %531 = vset.pattern.permute.xlu0 0
      %532 = vperm.xlu0 %531, %v386
      %v533 = vpop.permute.xlu0 %532
      %536 = vset.pattern.permute.xlu0 0
      %537 = vperm.xlu0 %536, %v388
      %v538 = vpop.permute.xlu0 %537
      %541 = vset.pattern.permute.xlu0 0
      %542 = vperm.xlu0 %541, %v389
      %v543 = vpop.permute.xlu0 %542
      %546 = vset.pattern.permute.xlu0 0
      %547 = vperm.xlu0 %546, %v391
      %v548 = vpop.permute.xlu0 %547
      %551 = vset.pattern.permute.xlu0 0
      %552 = vperm.xlu0 %551, %v392
      %v553 = vpop.permute.xlu0 %552
      %556 = vset.pattern.permute.xlu0 0
      %557 = vperm.xlu0 %556, %v394
      %v558 = vpop.permute.xlu0 %557
      %561 = vset.pattern.permute.xlu0 0
      %562 = vperm.xlu0 %561, %v395
      %v563 = vpop.permute.xlu0 %562
      %v565 = vlaneseq
      %v566 = vshrl.u32 %v565, 7
      %v567 = vsub.s32 0, %v566
      %v568 = vrot.slane %v403, %v567
      %v569 = vmul.f32 %v408, %v568
      %v570 = vmul.f32 %v413, %v568
      %v571 = vmul.f32 %v418, %v568
      %v572 = vmul.f32 %v423, %v568
      %v573 = vmul.f32 %v428, %v568
      %v574 = vmul.f32 %v433, %v568
      %v575 = vmul.f32 %v438, %v568
      %v576 = vmul.f32 %v443, %v568
      %v577 = vmul.f32 %v448, %v568
      %v578 = vmul.f32 %v453, %v568
      %v579 = vmul.f32 %v458, %v568
      %v580 = vmul.f32 %v463, %v568
      %v581 = vmul.f32 %v468, %v568
      %v582 = vmul.f32 %v473, %v568
      %v583 = vmul.f32 %v478, %v568
      %v584 = vmul.f32 %v483, %v568
      %v585 = vmul.f32 %v488, %v568
      %v586 = vmul.f32 %v493, %v568
      %v587 = vmul.f32 %v498, %v568
      %v588 = vmul.f32 %v503, %v568
      %v589 = vmul.f32 %v508, %v568
      %v590 = vmul.f32 %v513, %v568
      %v591 = vmul.f32 %v518, %v568
      %v592 = vmul.f32 %v523, %v568
      %v593 = vmul.f32 %v528, %v568
      %v594 = vmul.f32 %v533, %v568
      %v595 = vmul.f32 %v538, %v568
      %v596 = vmul.f32 %v543, %v568
      %v597 = vmul.f32 %v548, %v568
      %v598 = vmul.f32 %v553, %v568
      %v599 = vmul.f32 %v558, %v568
      %v600 = vmul.f32 %v563, %v568
      %v601 = vadd.f32 %v569, 0.0
      %v602 = vadd.f32 %v570, 0.0
      %v603 = vadd.f32 %v571, 0.0
      %v604 = vadd.f32 %v572, 0.0
      %v605 = vadd.f32 %v573, 0.0
      %v606 = vadd.f32 %v574, 0.0
      %v607 = vadd.f32 %v575, 0.0
      %v608 = vadd.f32 %v576, 0.0
      %v609 = vadd.f32 %v577, 0.0
      %v610 = vadd.f32 %v578, 0.0
      %v611 = vadd.f32 %v579, 0.0
      %v612 = vadd.f32 %v580, 0.0
      %v613 = vadd.f32 %v581, 0.0
      %v614 = vadd.f32 %v582, 0.0
      %v615 = vadd.f32 %v583, 0.0
      %v616 = vadd.f32 %v584, 0.0
      %v617 = vadd.f32 %v585, 0.0
      %v618 = vadd.f32 %v586, 0.0
      %v619 = vadd.f32 %v587, 0.0
      %v620 = vadd.f32 %v588, 0.0
      %v621 = vadd.f32 %v589, 0.0
      %v622 = vadd.f32 %v590, 0.0
      %v623 = vadd.f32 %v591, 0.0
      %v624 = vadd.f32 %v592, 0.0
      %v625 = vadd.f32 %v593, 0.0
      %v626 = vadd.f32 %v594, 0.0
      %v627 = vadd.f32 %v595, 0.0
      %v628 = vadd.f32 %v596, 0.0
      %v629 = vadd.f32 %v597, 0.0
      %v630 = vadd.f32 %v598, 0.0
      %v631 = vadd.f32 %v599, 0.0
      %v632 = vadd.f32 %v600, 0.0
      %vm649 = vcmask 1046528
      %v650 = vrot.slane %v349, 1
      %v651 = vrot.slane %v350, 1
      %v652 = vsel %vm649, %v650, %v651
      %v653 = vrot.slane %v351, 1
      %v654 = vsel %vm649, %v651, %v653
      %v655 = vrot.slane %v352, 1
      %v656 = vrot.slane %v353, 1
      %v657 = vsel %vm649, %v655, %v656
      %v658 = vrot.slane %v354, 1
      %v659 = vsel %vm649, %v656, %v658
      %v660 = vrot.slane %v355, 1
      %v661 = vrot.slane %v356, 1
      %v662 = vsel %vm649, %v660, %v661
      %v663 = vrot.slane %v357, 1
      %v664 = vsel %vm649, %v661, %v663
      %v665 = vrot.slane %v358, 1
      %v666 = vrot.slane %v359, 1
      %v667 = vsel %vm649, %v665, %v666
      %v668 = vrot.slane %v360, 1
      %v669 = vsel %vm649, %v666, %v668
      %v670 = vrot.slane %v361, 1
      %v671 = vrot.slane %v362, 1
      %v672 = vsel %vm649, %v670, %v671
      %v673 = vrot.slane %v363, 1
      %v674 = vsel %vm649, %v671, %v673
      %v675 = vrot.slane %v364, 1
      %v676 = vrot.slane %v365, 1
      %v677 = vsel %vm649, %v675, %v676
      %v678 = vrot.slane %v366, 1
      %v679 = vsel %vm649, %v676, %v678
      %v680 = vrot.slane %v367, 1
      %v681 = vrot.slane %v368, 1
      %v682 = vsel %vm649, %v680, %v681
      %v683 = vrot.slane %v369, 1
      %v684 = vsel %vm649, %v681, %v683
      %v685 = vrot.slane %v370, 1
      %v686 = vrot.slane %v371, 1
      %v687 = vsel %vm649, %v685, %v686
      %v688 = vrot.slane %v372, 1
      %v689 = vsel %vm649, %v686, %v688
      %v690 = vrot.slane %v373, 1
      %v691 = vrot.slane %v374, 1
      %v692 = vsel %vm649, %v690, %v691
      %v693 = vrot.slane %v375, 1
      %v694 = vsel %vm649, %v691, %v693
      %v695 = vrot.slane %v376, 1
      %v696 = vrot.slane %v377, 1
      %v697 = vsel %vm649, %v695, %v696
      %v698 = vrot.slane %v378, 1
      %v699 = vsel %vm649, %v696, %v698
      %v700 = vrot.slane %v379, 1
      %v701 = vrot.slane %v380, 1
      %v702 = vsel %vm649, %v700, %v701
      %v703 = vrot.slane %v381, 1
      %v704 = vsel %vm649, %v701, %v703
      %v705 = vrot.slane %v382, 1
      %v706 = vrot.slane %v383, 1
      %v707 = vsel %vm649, %v705, %v706
      %v708 = vrot.slane %v384, 1
      %v709 = vsel %vm649, %v706, %v708
      %v710 = vrot.slane %v385, 1
      %v711 = vrot.slane %v386, 1
      %v712 = vsel %vm649, %v710, %v711
      %v713 = vrot.slane %v387, 1
      %v714 = vsel %vm649, %v711, %v713
      %v715 = vrot.slane %v388, 1
      %v716 = vrot.slane %v389, 1
      %v717 = vsel %vm649, %v715, %v716
      %v718 = vrot.slane %v390, 1
      %v719 = vsel %vm649, %v716, %v718
      %v720 = vrot.slane %v391, 1
      %v721 = vrot.slane %v392, 1
      %v722 = vsel %vm649, %v720, %v721
      %v723 = vrot.slane %v393, 1
      %v724 = vsel %vm649, %v721, %v723
      %v725 = vrot.slane %v394, 1
      %v726 = vrot.slane %v395, 1
      %v727 = vsel %vm649, %v725, %v726
      %v728 = vrot.slane %v396, 1
      %v729 = vsel %vm649, %v726, %v728
      %730 = vset.pattern.permute.xlu0 0
      %731 = vperm.xlu0 %730, %v652
      %v732 = vpop.permute.xlu0 %731
      %734 = vset.pattern.permute.xlu0 0
      %735 = vperm.xlu0 %734, %v654
      %v736 = vpop.permute.xlu0 %735
      %738 = vset.pattern.permute.xlu0 0
      %739 = vperm.xlu0 %738, %v657
      %v740 = vpop.permute.xlu0 %739
      %742 = vset.pattern.permute.xlu0 0
      %743 = vperm.xlu0 %742, %v659
      %v744 = vpop.permute.xlu0 %743
      %746 = vset.pattern.permute.xlu0 0
      %747 = vperm.xlu0 %746, %v662
      %v748 = vpop.permute.xlu0 %747
      %750 = vset.pattern.permute.xlu0 0
      %751 = vperm.xlu0 %750, %v664
      %v752 = vpop.permute.xlu0 %751
      %754 = vset.pattern.permute.xlu0 0
      %755 = vperm.xlu0 %754, %v667
      %v756 = vpop.permute.xlu0 %755
      %758 = vset.pattern.permute.xlu0 0
      %759 = vperm.xlu0 %758, %v669
      %v760 = vpop.permute.xlu0 %759
      %762 = vset.pattern.permute.xlu0 0
      %763 = vperm.xlu0 %762, %v672
      %v764 = vpop.permute.xlu0 %763
      %766 = vset.pattern.permute.xlu0 0
      %767 = vperm.xlu0 %766, %v674
      %v768 = vpop.permute.xlu0 %767
      %770 = vset.pattern.permute.xlu0 0
      %771 = vperm.xlu0 %770, %v677
      %v772 = vpop.permute.xlu0 %771
      %774 = vset.pattern.permute.xlu0 0
      %775 = vperm.xlu0 %774, %v679
      %v776 = vpop.permute.xlu0 %775
      %778 = vset.pattern.permute.xlu0 0
      %779 = vperm.xlu0 %778, %v682
      %v780 = vpop.permute.xlu0 %779
      %782 = vset.pattern.permute.xlu0 0
      %783 = vperm.xlu0 %782, %v684
      %v784 = vpop.permute.xlu0 %783
      %786 = vset.pattern.permute.xlu0 0
      %787 = vperm.xlu0 %786, %v687
      %v788 = vpop.permute.xlu0 %787
      %790 = vset.pattern.permute.xlu0 0
      %791 = vperm.xlu0 %790, %v689
      %v792 = vpop.permute.xlu0 %791
      %794 = vset.pattern.permute.xlu0 0
      %795 = vperm.xlu0 %794, %v692
      %v796 = vpop.permute.xlu0 %795
      %798 = vset.pattern.permute.xlu0 0
      %799 = vperm.xlu0 %798, %v694
      %v800 = vpop.permute.xlu0 %799
      %802 = vset.pattern.permute.xlu0 0
      %803 = vperm.xlu0 %802, %v697
      %v804 = vpop.permute.xlu0 %803
      %806 = vset.pattern.permute.xlu0 0
      %807 = vperm.xlu0 %806, %v699
      %v808 = vpop.permute.xlu0 %807
      %810 = vset.pattern.permute.xlu0 0
      %811 = vperm.xlu0 %810, %v702
      %v812 = vpop.permute.xlu0 %811
      %814 = vset.pattern.permute.xlu0 0
      %815 = vperm.xlu0 %814, %v704
      %v816 = vpop.permute.xlu0 %815
      %818 = vset.pattern.permute.xlu0 0
      %819 = vperm.xlu0 %818, %v707
      %v820 = vpop.permute.xlu0 %819
      %822 = vset.pattern.permute.xlu0 0
      %823 = vperm.xlu0 %822, %v709
      %v824 = vpop.permute.xlu0 %823
      %826 = vset.pattern.permute.xlu0 0
      %827 = vperm.xlu0 %826, %v712
      %v828 = vpop.permute.xlu0 %827
      %830 = vset.pattern.permute.xlu0 0
      %831 = vperm.xlu0 %830, %v714
      %v832 = vpop.permute.xlu0 %831
      %834 = vset.pattern.permute.xlu0 0
      %835 = vperm.xlu0 %834, %v717
      %v836 = vpop.permute.xlu0 %835
      %838 = vset.pattern.permute.xlu0 0
      %839 = vperm.xlu0 %838, %v719
      %v840 = vpop.permute.xlu0 %839
      %842 = vset.pattern.permute.xlu0 0
      %843 = vperm.xlu0 %842, %v722
      %v844 = vpop.permute.xlu0 %843
      %846 = vset.pattern.permute.xlu0 0
      %847 = vperm.xlu0 %846, %v724
      %v848 = vpop.permute.xlu0 %847
      %850 = vset.pattern.permute.xlu0 0
      %851 = vperm.xlu0 %850, %v727
      %v852 = vpop.permute.xlu0 %851
      %854 = vset.pattern.permute.xlu0 0
      %855 = vperm.xlu0 %854, %v729
      %v856 = vpop.permute.xlu0 %855
      %v858 = vlaneseq
      %v859 = vshrl.u32 %v858, 7
      %v860 = vsub.s32 1, %v859
      %v861 = vrot.slane %v403, %v860
      %v862 = vmul.f32 %v732, %v861
      %v863 = vmul.f32 %v736, %v861
      %v864 = vmul.f32 %v740, %v861
      %v865 = vmul.f32 %v744, %v861
      %v866 = vmul.f32 %v748, %v861
      %v867 = vmul.f32 %v752, %v861
      %v868 = vmul.f32 %v756, %v861
      %v869 = vmul.f32 %v760, %v861
      %v870 = vmul.f32 %v764, %v861
      %v871 = vmul.f32 %v768, %v861
      %v872 = vmul.f32 %v772, %v861
      %v873 = vmul.f32 %v776, %v861
      %v874 = vmul.f32 %v780, %v861
      %v875 = vmul.f32 %v784, %v861
      %v876 = vmul.f32 %v788, %v861
      %v877 = vmul.f32 %v792, %v861
      %v878 = vmul.f32 %v796, %v861
      %v879 = vmul.f32 %v800, %v861
      %v880 = vmul.f32 %v804, %v861
      %v881 = vmul.f32 %v808, %v861
      %v882 = vmul.f32 %v812, %v861
      %v883 = vmul.f32 %v816, %v861
      %v884 = vmul.f32 %v820, %v861
      %v885 = vmul.f32 %v824, %v861
      %v886 = vmul.f32 %v828, %v861
      %v887 = vmul.f32 %v832, %v861
      %v888 = vmul.f32 %v836, %v861
      %v889 = vmul.f32 %v840, %v861
      %v890 = vmul.f32 %v844, %v861
      %v891 = vmul.f32 %v848, %v861
      %v892 = vmul.f32 %v852, %v861
      %v893 = vmul.f32 %v856, %v861
      %v894 = vadd.f32 %v601, %v862
      %v895 = vadd.f32 %v602, %v863
      %v896 = vadd.f32 %v603, %v864
      %v897 = vadd.f32 %v604, %v865
      %v898 = vadd.f32 %v605, %v866
      %v899 = vadd.f32 %v606, %v867
      %v900 = vadd.f32 %v607, %v868
      %v901 = vadd.f32 %v608, %v869
      %v902 = vadd.f32 %v609, %v870
      %v903 = vadd.f32 %v610, %v871
      %v904 = vadd.f32 %v611, %v872
      %v905 = vadd.f32 %v612, %v873
      %v906 = vadd.f32 %v613, %v874
      %v907 = vadd.f32 %v614, %v875
      %v908 = vadd.f32 %v615, %v876
      %v909 = vadd.f32 %v616, %v877
      %v910 = vadd.f32 %v617, %v878
      %v911 = vadd.f32 %v618, %v879
      %v912 = vadd.f32 %v619, %v880
      %v913 = vadd.f32 %v620, %v881
      %v914 = vadd.f32 %v621, %v882
      %v915 = vadd.f32 %v622, %v883
      %v916 = vadd.f32 %v623, %v884
      %v917 = vadd.f32 %v624, %v885
      %v918 = vadd.f32 %v625, %v886
      %v919 = vadd.f32 %v626, %v887
      %v920 = vadd.f32 %v627, %v888
      %v921 = vadd.f32 %v628, %v889
      %v922 = vadd.f32 %v629, %v890
      %v923 = vadd.f32 %v630, %v891
      %v924 = vadd.f32 %v631, %v892
      %v925 = vadd.f32 %v632, %v893
      %vm926 = vcmask 1045504
      %v927 = vrot.slane %v349, 2
      %v928 = vrot.slane %v350, 2
      %v929 = vsel %vm926, %v927, %v928
      %v930 = vrot.slane %v351, 2
      %v931 = vsel %vm926, %v928, %v930
      %v932 = vrot.slane %v352, 2
      %v933 = vrot.slane %v353, 2
      %v934 = vsel %vm926, %v932, %v933
      %v935 = vrot.slane %v354, 2
      %v936 = vsel %vm926, %v933, %v935
      %v937 = vrot.slane %v355, 2
      %v938 = vrot.slane %v356, 2
      %v939 = vsel %vm926, %v937, %v938
      %v940 = vrot.slane %v357, 2
      %v941 = vsel %vm926, %v938, %v940
      %v942 = vrot.slane %v358, 2
      %v943 = vrot.slane %v359, 2
      %v944 = vsel %vm926, %v942, %v943
      %v945 = vrot.slane %v360, 2
      %v946 = vsel %vm926, %v943, %v945
      %v947 = vrot.slane %v361, 2
      %v948 = vrot.slane %v362, 2
      %v949 = vsel %vm926, %v947, %v948
      %v950 = vrot.slane %v363, 2
      %v951 = vsel %vm926, %v948, %v950
      %v952 = vrot.slane %v364, 2
      %v953 = vrot.slane %v365, 2
      %v954 = vsel %vm926, %v952, %v953
      %v955 = vrot.slane %v366, 2
      %v956 = vsel %vm926, %v953, %v955
      %v957 = vrot.slane %v367, 2
      %v958 = vrot.slane %v368, 2
      %v959 = vsel %vm926, %v957, %v958
      %v960 = vrot.slane %v369, 2
      %v961 = vsel %vm926, %v958, %v960
      %v962 = vrot.slane %v370, 2
      %v963 = vrot.slane %v371, 2
      %v964 = vsel %vm926, %v962, %v963
      %v965 = vrot.slane %v372, 2
      %v966 = vsel %vm926, %v963, %v965
      %v967 = vrot.slane %v373, 2
      %v968 = vrot.slane %v374, 2
      %v969 = vsel %vm926, %v967, %v968
      %v970 = vrot.slane %v375, 2
      %v971 = vsel %vm926, %v968, %v970
      %v972 = vrot.slane %v376, 2
      %v973 = vrot.slane %v377, 2
      %v974 = vsel %vm926, %v972, %v973
      %v975 = vrot.slane %v378, 2
      %v976 = vsel %vm926, %v973, %v975
      %v977 = vrot.slane %v379, 2
      %v978 = vrot.slane %v380, 2
      %v979 = vsel %vm926, %v977, %v978
      %v980 = vrot.slane %v381, 2
      %v981 = vsel %vm926, %v978, %v980
      %v982 = vrot.slane %v382, 2
      %v983 = vrot.slane %v383, 2
      %v984 = vsel %vm926, %v982, %v983
      %v985 = vrot.slane %v384, 2
      %v986 = vsel %vm926, %v983, %v985
      %v987 = vrot.slane %v385, 2
      %v988 = vrot.slane %v386, 2
      %v989 = vsel %vm926, %v987, %v988
      %v990 = vrot.slane %v387, 2
      %v991 = vsel %vm926, %v988, %v990
      %v992 = vrot.slane %v388, 2
      %v993 = vrot.slane %v389, 2
      %v994 = vsel %vm926, %v992, %v993
      %v995 = vrot.slane %v390, 2
      %v996 = vsel %vm926, %v993, %v995
      %v997 = vrot.slane %v391, 2
      %v998 = vrot.slane %v392, 2
      %v999 = vsel %vm926, %v997, %v998
      %v1000 = vrot.slane %v393, 2
      %v1001 = vsel %vm926, %v998, %v1000
      %v1002 = vrot.slane %v394, 2
      %v1003 = vrot.slane %v395, 2
      %v1004 = vsel %vm926, %v1002, %v1003
      %v1005 = vrot.slane %v396, 2
      %v1006 = vsel %vm926, %v1003, %v1005
      %1007 = vset.pattern.permute.xlu0 0
      %1008 = vperm.xlu0 %1007, %v929
      %v1009 = vpop.permute.xlu0 %1008
      %1011 = vset.pattern.permute.xlu0 0
      %1012 = vperm.xlu0 %1011, %v931
      %v1013 = vpop.permute.xlu0 %1012
      %1015 = vset.pattern.permute.xlu0 0
      %1016 = vperm.xlu0 %1015, %v934
      %v1017 = vpop.permute.xlu0 %1016
      %1019 = vset.pattern.permute.xlu0 0
      %1020 = vperm.xlu0 %1019, %v936
      %v1021 = vpop.permute.xlu0 %1020
      %1023 = vset.pattern.permute.xlu0 0
      %1024 = vperm.xlu0 %1023, %v939
      %v1025 = vpop.permute.xlu0 %1024
      %1027 = vset.pattern.permute.xlu0 0
      %1028 = vperm.xlu0 %1027, %v941
      %v1029 = vpop.permute.xlu0 %1028
      %1031 = vset.pattern.permute.xlu0 0
      %1032 = vperm.xlu0 %1031, %v944
      %v1033 = vpop.permute.xlu0 %1032
      %1035 = vset.pattern.permute.xlu0 0
      %1036 = vperm.xlu0 %1035, %v946
      %v1037 = vpop.permute.xlu0 %1036
      %1039 = vset.pattern.permute.xlu0 0
      %1040 = vperm.xlu0 %1039, %v949
      %v1041 = vpop.permute.xlu0 %1040
      %1043 = vset.pattern.permute.xlu0 0
      %1044 = vperm.xlu0 %1043, %v951
      %v1045 = vpop.permute.xlu0 %1044
      %1047 = vset.pattern.permute.xlu0 0
      %1048 = vperm.xlu0 %1047, %v954
      %v1049 = vpop.permute.xlu0 %1048
      %1051 = vset.pattern.permute.xlu0 0
      %1052 = vperm.xlu0 %1051, %v956
      %v1053 = vpop.permute.xlu0 %1052
      %1055 = vset.pattern.permute.xlu0 0
      %1056 = vperm.xlu0 %1055, %v959
      %v1057 = vpop.permute.xlu0 %1056
      %1059 = vset.pattern.permute.xlu0 0
      %1060 = vperm.xlu0 %1059, %v961
      %v1061 = vpop.permute.xlu0 %1060
      %1063 = vset.pattern.permute.xlu0 0
      %1064 = vperm.xlu0 %1063, %v964
      %v1065 = vpop.permute.xlu0 %1064
      %1067 = vset.pattern.permute.xlu0 0
      %1068 = vperm.xlu0 %1067, %v966
      %v1069 = vpop.permute.xlu0 %1068
      %1071 = vset.pattern.permute.xlu0 0
      %1072 = vperm.xlu0 %1071, %v969
      %v1073 = vpop.permute.xlu0 %1072
      %1075 = vset.pattern.permute.xlu0 0
      %1076 = vperm.xlu0 %1075, %v971
      %v1077 = vpop.permute.xlu0 %1076
      %1079 = vset.pattern.permute.xlu0 0
      %1080 = vperm.xlu0 %1079, %v974
      %v1081 = vpop.permute.xlu0 %1080
      %1083 = vset.pattern.permute.xlu0 0
      %1084 = vperm.xlu0 %1083, %v976
      %v1085 = vpop.permute.xlu0 %1084
      %1087 = vset.pattern.permute.xlu0 0
      %1088 = vperm.xlu0 %1087, %v979
      %v1089 = vpop.permute.xlu0 %1088
      %1091 = vset.pattern.permute.xlu0 0
      %1092 = vperm.xlu0 %1091, %v981
      %v1093 = vpop.permute.xlu0 %1092
      %1095 = vset.pattern.permute.xlu0 0
      %1096 = vperm.xlu0 %1095, %v984
      %v1097 = vpop.permute.xlu0 %1096
      %1099 = vset.pattern.permute.xlu0 0
      %1100 = vperm.xlu0 %1099, %v986
      %v1101 = vpop.permute.xlu0 %1100
      %1103 = vset.pattern.permute.xlu0 0
      %1104 = vperm.xlu0 %1103, %v989
      %v1105 = vpop.permute.xlu0 %1104
      %1107 = vset.pattern.permute.xlu0 0
      %1108 = vperm.xlu0 %1107, %v991
      %v1109 = vpop.permute.xlu0 %1108
      %1111 = vset.pattern.permute.xlu0 0
      %1112 = vperm.xlu0 %1111, %v994
      %v1113 = vpop.permute.xlu0 %1112
      %1115 = vset.pattern.permute.xlu0 0
      %1116 = vperm.xlu0 %1115, %v996
      %v1117 = vpop.permute.xlu0 %1116
      %1119 = vset.pattern.permute.xlu0 0
      %1120 = vperm.xlu0 %1119, %v999
      %v1121 = vpop.permute.xlu0 %1120
      %1123 = vset.pattern.permute.xlu0 0
      %1124 = vperm.xlu0 %1123, %v1001
      %v1125 = vpop.permute.xlu0 %1124
      %1127 = vset.pattern.permute.xlu0 0
      %1128 = vperm.xlu0 %1127, %v1004
      %v1129 = vpop.permute.xlu0 %1128
      %1131 = vset.pattern.permute.xlu0 0
      %1132 = vperm.xlu0 %1131, %v1006
      %v1133 = vpop.permute.xlu0 %1132
      %v1135 = vlaneseq
      %v1136 = vshrl.u32 %v1135, 7
      %v1137 = vsub.s32 2, %v1136
      %v1138 = vrot.slane %v403, %v1137
      %v1139 = vmul.f32 %v1009, %v1138
      %v1140 = vmul.f32 %v1013, %v1138
      %v1141 = vmul.f32 %v1017, %v1138
      %v1142 = vmul.f32 %v1021, %v1138
      %v1143 = vmul.f32 %v1025, %v1138
      %v1144 = vmul.f32 %v1029, %v1138
      %v1145 = vmul.f32 %v1033, %v1138
      %v1146 = vmul.f32 %v1037, %v1138
      %v1147 = vmul.f32 %v1041, %v1138
      %v1148 = vmul.f32 %v1045, %v1138
      %v1149 = vmul.f32 %v1049, %v1138
      %v1150 = vmul.f32 %v1053, %v1138
      %v1151 = vmul.f32 %v1057, %v1138
      %v1152 = vmul.f32 %v1061, %v1138
      %v1153 = vmul.f32 %v1065, %v1138
      %v1154 = vmul.f32 %v1069, %v1138
      %v1155 = vmul.f32 %v1073, %v1138
      %v1156 = vmul.f32 %v1077, %v1138
      %v1157 = vmul.f32 %v1081, %v1138
      %v1158 = vmul.f32 %v1085, %v1138
      %v1159 = vmul.f32 %v1089, %v1138
      %v1160 = vmul.f32 %v1093, %v1138
      %v1161 = vmul.f32 %v1097, %v1138
      %v1162 = vmul.f32 %v1101, %v1138
      %v1163 = vmul.f32 %v1105, %v1138
      %v1164 = vmul.f32 %v1109, %v1138
      %v1165 = vmul.f32 %v1113, %v1138
      %v1166 = vmul.f32 %v1117, %v1138
      %v1167 = vmul.f32 %v1121, %v1138
      %v1168 = vmul.f32 %v1125, %v1138
      %v1169 = vmul.f32 %v1129, %v1138
      %v1170 = vmul.f32 %v1133, %v1138
      %v1171 = vadd.f32 %v894, %v1139
      %v1172 = vadd.f32 %v895, %v1140
      %v1173 = vadd.f32 %v896, %v1141
      %v1174 = vadd.f32 %v897, %v1142
      %v1175 = vadd.f32 %v898, %v1143
      %v1176 = vadd.f32 %v899, %v1144
      %v1177 = vadd.f32 %v900, %v1145
      %v1178 = vadd.f32 %v901, %v1146
      %v1179 = vadd.f32 %v902, %v1147
      %v1180 = vadd.f32 %v903, %v1148
      %v1181 = vadd.f32 %v904, %v1149
      %v1182 = vadd.f32 %v905, %v1150
      %v1183 = vadd.f32 %v906, %v1151
      %v1184 = vadd.f32 %v907, %v1152
      %v1185 = vadd.f32 %v908, %v1153
      %v1186 = vadd.f32 %v909, %v1154
      %v1187 = vadd.f32 %v910, %v1155
      %v1188 = vadd.f32 %v911, %v1156
      %v1189 = vadd.f32 %v912, %v1157
      %v1190 = vadd.f32 %v913, %v1158
      %v1191 = vadd.f32 %v914, %v1159
      %v1192 = vadd.f32 %v915, %v1160
      %v1193 = vadd.f32 %v916, %v1161
      %v1194 = vadd.f32 %v917, %v1162
      %v1195 = vadd.f32 %v918, %v1163
      %v1196 = vadd.f32 %v919, %v1164
      %v1197 = vadd.f32 %v920, %v1165
      %v1198 = vadd.f32 %v921, %v1166
      %v1199 = vadd.f32 %v922, %v1167
      %v1200 = vadd.f32 %v923, %v1168
      %v1201 = vadd.f32 %v924, %v1169
      %v1202 = vadd.f32 %v925, %v1170
      %1204 = vset.pattern.permute.xlu0 0
      %1205 = vperm.xlu0 %1204, %v397
      %v1206 = vpop.permute.xlu0 %1205
      %1209 = vset.pattern.permute.xlu0 0
      %1210 = vperm.xlu0 %1209, %v398
      %v1211 = vpop.permute.xlu0 %1210
      %v1213 = vlaneseq
      %v1214 = vshrl.u32 %v1213, 7
      %v1215 = vsub.s32 3, %v1214
      %v1216 = vrot.slane %v403, %v1215
      %v1217 = vmul.f32 %v418, %v1216
      %v1218 = vmul.f32 %v423, %v1216
      %v1219 = vmul.f32 %v428, %v1216
      %v1220 = vmul.f32 %v433, %v1216
      %v1221 = vmul.f32 %v438, %v1216
      %v1222 = vmul.f32 %v443, %v1216
      %v1223 = vmul.f32 %v448, %v1216
      %v1224 = vmul.f32 %v453, %v1216
      %v1225 = vmul.f32 %v458, %v1216
      %v1226 = vmul.f32 %v463, %v1216
      %v1227 = vmul.f32 %v468, %v1216
      %v1228 = vmul.f32 %v473, %v1216
      %v1229 = vmul.f32 %v478, %v1216
      %v1230 = vmul.f32 %v483, %v1216
      %v1231 = vmul.f32 %v488, %v1216
      %v1232 = vmul.f32 %v493, %v1216
      %v1233 = vmul.f32 %v498, %v1216
      %v1234 = vmul.f32 %v503, %v1216
      %v1235 = vmul.f32 %v508, %v1216
      %v1236 = vmul.f32 %v513, %v1216
      %v1237 = vmul.f32 %v518, %v1216
      %v1238 = vmul.f32 %v523, %v1216
      %v1239 = vmul.f32 %v528, %v1216
      %v1240 = vmul.f32 %v533, %v1216
      %v1241 = vmul.f32 %v538, %v1216
      %v1242 = vmul.f32 %v543, %v1216
      %v1243 = vmul.f32 %v548, %v1216
      %v1244 = vmul.f32 %v553, %v1216
      %v1245 = vmul.f32 %v558, %v1216
      %v1246 = vmul.f32 %v563, %v1216
      %v1247 = vmul.f32 %v1206, %v1216
      %v1248 = vmul.f32 %v1211, %v1216
      %v1249 = vadd.f32 %v1171, %v1217
      %v1250 = vadd.f32 %v1172, %v1218
      %v1251 = vadd.f32 %v1173, %v1219
      %v1252 = vadd.f32 %v1174, %v1220
      %v1253 = vadd.f32 %v1175, %v1221
      %v1254 = vadd.f32 %v1176, %v1222
      %v1255 = vadd.f32 %v1177, %v1223
      %v1256 = vadd.f32 %v1178, %v1224
      %v1257 = vadd.f32 %v1179, %v1225
      %v1258 = vadd.f32 %v1180, %v1226
      %v1259 = vadd.f32 %v1181, %v1227
      %v1260 = vadd.f32 %v1182, %v1228
      %v1261 = vadd.f32 %v1183, %v1229
      %v1262 = vadd.f32 %v1184, %v1230
      %v1263 = vadd.f32 %v1185, %v1231
      %v1264 = vadd.f32 %v1186, %v1232
      %v1265 = vadd.f32 %v1187, %v1233
      %v1266 = vadd.f32 %v1188, %v1234
      %v1267 = vadd.f32 %v1189, %v1235
      %v1268 = vadd.f32 %v1190, %v1236
      %v1269 = vadd.f32 %v1191, %v1237
      %v1270 = vadd.f32 %v1192, %v1238
      %v1271 = vadd.f32 %v1193, %v1239
      %v1272 = vadd.f32 %v1194, %v1240
      %v1273 = vadd.f32 %v1195, %v1241
      %v1274 = vadd.f32 %v1196, %v1242
      %v1275 = vadd.f32 %v1197, %v1243
      %v1276 = vadd.f32 %v1198, %v1244
      %v1277 = vadd.f32 %v1199, %v1245
      %v1278 = vadd.f32 %v1200, %v1246
      %v1279 = vadd.f32 %v1201, %v1247
      %v1280 = vadd.f32 %v1202, %v1248
      %v1282 = vrot.slane %v397, 1
      %v1283 = vrot.slane %v398, 1
      %v1284 = vsel %vm649, %v1282, %v1283
      %v1285 = vrot.slane %v399, 1
      %v1286 = vsel %vm649, %v1283, %v1285
      %1287 = vset.pattern.permute.xlu0 0
      %1288 = vperm.xlu0 %1287, %v1284
      %v1289 = vpop.permute.xlu0 %1288
      %1291 = vset.pattern.permute.xlu0 0
      %1292 = vperm.xlu0 %1291, %v1286
      %v1293 = vpop.permute.xlu0 %1292
      %v1295 = vlaneseq
      %v1296 = vshrl.u32 %v1295, 7
      %v1297 = vsub.s32 4, %v1296
      %v1298 = vrot.slane %v403, %v1297
      %v1299 = vmul.f32 %v740, %v1298
      %v1300 = vmul.f32 %v744, %v1298
      %v1301 = vmul.f32 %v748, %v1298
      %v1302 = vmul.f32 %v752, %v1298
      %v1303 = vmul.f32 %v756, %v1298
      %v1304 = vmul.f32 %v760, %v1298
      %v1305 = vmul.f32 %v764, %v1298
      %v1306 = vmul.f32 %v768, %v1298
      %v1307 = vmul.f32 %v772, %v1298
      %v1308 = vmul.f32 %v776, %v1298
      %v1309 = vmul.f32 %v780, %v1298
      %v1310 = vmul.f32 %v784, %v1298
      %v1311 = vmul.f32 %v788, %v1298
      %v1312 = vmul.f32 %v792, %v1298
      %v1313 = vmul.f32 %v796, %v1298
      %v1314 = vmul.f32 %v800, %v1298
      %v1315 = vmul.f32 %v804, %v1298
      %v1316 = vmul.f32 %v808, %v1298
      %v1317 = vmul.f32 %v812, %v1298
      %v1318 = vmul.f32 %v816, %v1298
      %v1319 = vmul.f32 %v820, %v1298
      %v1320 = vmul.f32 %v824, %v1298
      %v1321 = vmul.f32 %v828, %v1298
      %v1322 = vmul.f32 %v832, %v1298
      %v1323 = vmul.f32 %v836, %v1298
      %v1324 = vmul.f32 %v840, %v1298
      %v1325 = vmul.f32 %v844, %v1298
      %v1326 = vmul.f32 %v848, %v1298
      %v1327 = vmul.f32 %v852, %v1298
      %v1328 = vmul.f32 %v856, %v1298
      %v1329 = vmul.f32 %v1289, %v1298
      %v1330 = vmul.f32 %v1293, %v1298
      %v1331 = vadd.f32 %v1249, %v1299
      %v1332 = vadd.f32 %v1250, %v1300
      %v1333 = vadd.f32 %v1251, %v1301
      %v1334 = vadd.f32 %v1252, %v1302
      %v1335 = vadd.f32 %v1253, %v1303
      %v1336 = vadd.f32 %v1254, %v1304
      %v1337 = vadd.f32 %v1255, %v1305
      %v1338 = vadd.f32 %v1256, %v1306
      %v1339 = vadd.f32 %v1257, %v1307
      %v1340 = vadd.f32 %v1258, %v1308
      %v1341 = vadd.f32 %v1259, %v1309
      %v1342 = vadd.f32 %v1260, %v1310
      %v1343 = vadd.f32 %v1261, %v1311
      %v1344 = vadd.f32 %v1262, %v1312
      %v1345 = vadd.f32 %v1263, %v1313
      %v1346 = vadd.f32 %v1264, %v1314
      %v1347 = vadd.f32 %v1265, %v1315
      %v1348 = vadd.f32 %v1266, %v1316
      %v1349 = vadd.f32 %v1267, %v1317
      %v1350 = vadd.f32 %v1268, %v1318
      %v1351 = vadd.f32 %v1269, %v1319
      %v1352 = vadd.f32 %v1270, %v1320
      %v1353 = vadd.f32 %v1271, %v1321
      %v1354 = vadd.f32 %v1272, %v1322
      %v1355 = vadd.f32 %v1273, %v1323
      %v1356 = vadd.f32 %v1274, %v1324
      %v1357 = vadd.f32 %v1275, %v1325
      %v1358 = vadd.f32 %v1276, %v1326
      %v1359 = vadd.f32 %v1277, %v1327
      %v1360 = vadd.f32 %v1278, %v1328
      %v1361 = vadd.f32 %v1279, %v1329
      %v1362 = vadd.f32 %v1280, %v1330
      %v1363 = vrot.slane %v397, 2
      %v1364 = vrot.slane %v398, 2
      %v1365 = vsel %vm926, %v1363, %v1364
      %v1366 = vrot.slane %v399, 2
      %v1367 = vsel %vm926, %v1364, %v1366
      %1368 = vset.pattern.permute.xlu0 0
      %1369 = vperm.xlu0 %1368, %v1365
      %v1370 = vpop.permute.xlu0 %1369
      %1372 = vset.pattern.permute.xlu0 0
      %1373 = vperm.xlu0 %1372, %v1367
      %v1374 = vpop.permute.xlu0 %1373
      %v1376 = vlaneseq
      %v1377 = vshrl.u32 %v1376, 7
      %v1378 = vsub.s32 5, %v1377
      %v1379 = vrot.slane %v403, %v1378
      %v1380 = vmul.f32 %v1017, %v1379
      %v1381 = vmul.f32 %v1021, %v1379
      %v1382 = vmul.f32 %v1025, %v1379
      %v1383 = vmul.f32 %v1029, %v1379
      %v1384 = vmul.f32 %v1033, %v1379
      %v1385 = vmul.f32 %v1037, %v1379
      %v1386 = vmul.f32 %v1041, %v1379
      %v1387 = vmul.f32 %v1045, %v1379
      %v1388 = vmul.f32 %v1049, %v1379
      %v1389 = vmul.f32 %v1053, %v1379
      %v1390 = vmul.f32 %v1057, %v1379
      %v1391 = vmul.f32 %v1061, %v1379
      %v1392 = vmul.f32 %v1065, %v1379
      %v1393 = vmul.f32 %v1069, %v1379
      %v1394 = vmul.f32 %v1073, %v1379
      %v1395 = vmul.f32 %v1077, %v1379
      %v1396 = vmul.f32 %v1081, %v1379
      %v1397 = vmul.f32 %v1085, %v1379
      %v1398 = vmul.f32 %v1089, %v1379
      %v1399 = vmul.f32 %v1093, %v1379
      %v1400 = vmul.f32 %v1097, %v1379
      %v1401 = vmul.f32 %v1101, %v1379
      %v1402 = vmul.f32 %v1105, %v1379
      %v1403 = vmul.f32 %v1109, %v1379
      %v1404 = vmul.f32 %v1113, %v1379
      %v1405 = vmul.f32 %v1117, %v1379
      %v1406 = vmul.f32 %v1121, %v1379
      %v1407 = vmul.f32 %v1125, %v1379
      %v1408 = vmul.f32 %v1129, %v1379
      %v1409 = vmul.f32 %v1133, %v1379
      %v1410 = vmul.f32 %v1370, %v1379
      %v1411 = vmul.f32 %v1374, %v1379
      %v1412 = vadd.f32 %v1331, %v1380
      %v1413 = vadd.f32 %v1332, %v1381
      %v1414 = vadd.f32 %v1333, %v1382
      %v1415 = vadd.f32 %v1334, %v1383
      %v1416 = vadd.f32 %v1335, %v1384
      %v1417 = vadd.f32 %v1336, %v1385
      %v1418 = vadd.f32 %v1337, %v1386
      %v1419 = vadd.f32 %v1338, %v1387
      %v1420 = vadd.f32 %v1339, %v1388
      %v1421 = vadd.f32 %v1340, %v1389
      %v1422 = vadd.f32 %v1341, %v1390
      %v1423 = vadd.f32 %v1342, %v1391
      %v1424 = vadd.f32 %v1343, %v1392
      %v1425 = vadd.f32 %v1344, %v1393
      %v1426 = vadd.f32 %v1345, %v1394
      %v1427 = vadd.f32 %v1346, %v1395
      %v1428 = vadd.f32 %v1347, %v1396
      %v1429 = vadd.f32 %v1348, %v1397
      %v1430 = vadd.f32 %v1349, %v1398
      %v1431 = vadd.f32 %v1350, %v1399
      %v1432 = vadd.f32 %v1351, %v1400
      %v1433 = vadd.f32 %v1352, %v1401
      %v1434 = vadd.f32 %v1353, %v1402
      %v1435 = vadd.f32 %v1354, %v1403
      %v1436 = vadd.f32 %v1355, %v1404
      %v1437 = vadd.f32 %v1356, %v1405
      %v1438 = vadd.f32 %v1357, %v1406
      %v1439 = vadd.f32 %v1358, %v1407
      %v1440 = vadd.f32 %v1359, %v1408
      %v1441 = vadd.f32 %v1360, %v1409
      %v1442 = vadd.f32 %v1361, %v1410
      %v1443 = vadd.f32 %v1362, %v1411
      %1445 = vset.pattern.permute.xlu0 0
      %1446 = vperm.xlu0 %1445, %v400
      %v1447 = vpop.permute.xlu0 %1446
      %1450 = vset.pattern.permute.xlu0 0
      %1451 = vperm.xlu0 %1450, %v401
      %v1452 = vpop.permute.xlu0 %1451
      %v1454 = vlaneseq
      %v1455 = vshrl.u32 %v1454, 7
      %v1456 = vsub.s32 6, %v1455
      %v1457 = vrot.slane %v403, %v1456
      %v1458 = vmul.f32 %v428, %v1457
      %v1459 = vmul.f32 %v433, %v1457
      %v1460 = vmul.f32 %v438, %v1457
      %v1461 = vmul.f32 %v443, %v1457
      %v1462 = vmul.f32 %v448, %v1457
      %v1463 = vmul.f32 %v453, %v1457
      %v1464 = vmul.f32 %v458, %v1457
      %v1465 = vmul.f32 %v463, %v1457
      %v1466 = vmul.f32 %v468, %v1457
      %v1467 = vmul.f32 %v473, %v1457
      %v1468 = vmul.f32 %v478, %v1457
      %v1469 = vmul.f32 %v483, %v1457
      %v1470 = vmul.f32 %v488, %v1457
      %v1471 = vmul.f32 %v493, %v1457
      %v1472 = vmul.f32 %v498, %v1457
      %v1473 = vmul.f32 %v503, %v1457
      %v1474 = vmul.f32 %v508, %v1457
      %v1475 = vmul.f32 %v513, %v1457
      %v1476 = vmul.f32 %v518, %v1457
      %v1477 = vmul.f32 %v523, %v1457
      %v1478 = vmul.f32 %v528, %v1457
      %v1479 = vmul.f32 %v533, %v1457
      %v1480 = vmul.f32 %v538, %v1457
      %v1481 = vmul.f32 %v543, %v1457
      %v1482 = vmul.f32 %v548, %v1457
      %v1483 = vmul.f32 %v553, %v1457
      %v1484 = vmul.f32 %v558, %v1457
      %v1485 = vmul.f32 %v563, %v1457
      %v1486 = vmul.f32 %v1206, %v1457
      %v1487 = vmul.f32 %v1211, %v1457
      %v1488 = vmul.f32 %v1447, %v1457
      %v1489 = vmul.f32 %v1452, %v1457
      %v1490 = vadd.f32 %v1412, %v1458
      %v1491 = vadd.f32 %v1413, %v1459
      %v1492 = vadd.f32 %v1414, %v1460
      %v1493 = vadd.f32 %v1415, %v1461
      %v1494 = vadd.f32 %v1416, %v1462
      %v1495 = vadd.f32 %v1417, %v1463
      %v1496 = vadd.f32 %v1418, %v1464
      %v1497 = vadd.f32 %v1419, %v1465
      %v1498 = vadd.f32 %v1420, %v1466
      %v1499 = vadd.f32 %v1421, %v1467
      %v1500 = vadd.f32 %v1422, %v1468
      %v1501 = vadd.f32 %v1423, %v1469
      %v1502 = vadd.f32 %v1424, %v1470
      %v1503 = vadd.f32 %v1425, %v1471
      %v1504 = vadd.f32 %v1426, %v1472
      %v1505 = vadd.f32 %v1427, %v1473
      %v1506 = vadd.f32 %v1428, %v1474
      %v1507 = vadd.f32 %v1429, %v1475
      %v1508 = vadd.f32 %v1430, %v1476
      %v1509 = vadd.f32 %v1431, %v1477
      %v1510 = vadd.f32 %v1432, %v1478
      %v1511 = vadd.f32 %v1433, %v1479
      %v1512 = vadd.f32 %v1434, %v1480
      %v1513 = vadd.f32 %v1435, %v1481
      %v1514 = vadd.f32 %v1436, %v1482
      %v1515 = vadd.f32 %v1437, %v1483
      %v1516 = vadd.f32 %v1438, %v1484
      %v1517 = vadd.f32 %v1439, %v1485
      %v1518 = vadd.f32 %v1440, %v1486
      %v1519 = vadd.f32 %v1441, %v1487
      %v1520 = vadd.f32 %v1442, %v1488
      %v1521 = vadd.f32 %v1443, %v1489
      %v1523 = vrot.slane %v400, 1
      %v1524 = vrot.slane %v401, 1
      %v1525 = vsel %vm649, %v1523, %v1524
      %v1526 = vrot.slane %v402, 1
      %v1527 = vsel %vm649, %v1524, %v1526
      %1528 = vset.pattern.permute.xlu0 0
      %1529 = vperm.xlu0 %1528, %v1525
      %v1530 = vpop.permute.xlu0 %1529
      %1532 = vset.pattern.permute.xlu0 0
      %1533 = vperm.xlu0 %1532, %v1527
      %v1534 = vpop.permute.xlu0 %1533
      %v1536 = vlaneseq
      %v1537 = vshrl.u32 %v1536, 7
      %v1538 = vsub.s32 7, %v1537
      %v1539 = vrot.slane %v403, %v1538
      %v1540 = vmul.f32 %v748, %v1539
      %v1541 = vmul.f32 %v752, %v1539
      %v1542 = vmul.f32 %v756, %v1539
      %v1543 = vmul.f32 %v760, %v1539
      %v1544 = vmul.f32 %v764, %v1539
      %v1545 = vmul.f32 %v768, %v1539
      %v1546 = vmul.f32 %v772, %v1539
      %v1547 = vmul.f32 %v776, %v1539
      %v1548 = vmul.f32 %v780, %v1539
      %v1549 = vmul.f32 %v784, %v1539
      %v1550 = vmul.f32 %v788, %v1539
      %v1551 = vmul.f32 %v792, %v1539
      %v1552 = vmul.f32 %v796, %v1539
      %v1553 = vmul.f32 %v800, %v1539
      %v1554 = vmul.f32 %v804, %v1539
      %v1555 = vmul.f32 %v808, %v1539
      %v1556 = vmul.f32 %v812, %v1539
      %v1557 = vmul.f32 %v816, %v1539
      %v1558 = vmul.f32 %v820, %v1539
      %v1559 = vmul.f32 %v824, %v1539
      %v1560 = vmul.f32 %v828, %v1539
      %v1561 = vmul.f32 %v832, %v1539
      %v1562 = vmul.f32 %v836, %v1539
      %v1563 = vmul.f32 %v840, %v1539
      %v1564 = vmul.f32 %v844, %v1539
      %v1565 = vmul.f32 %v848, %v1539
      %v1566 = vmul.f32 %v852, %v1539
      %v1567 = vmul.f32 %v856, %v1539
      %v1568 = vmul.f32 %v1289, %v1539
      %v1569 = vmul.f32 %v1293, %v1539
      %v1570 = vmul.f32 %v1530, %v1539
      %v1571 = vmul.f32 %v1534, %v1539
      %v1572 = vadd.f32 %v1490, %v1540
      %v1573 = vadd.f32 %v1491, %v1541
      %v1574 = vadd.f32 %v1492, %v1542
      %v1575 = vadd.f32 %v1493, %v1543
      %v1576 = vadd.f32 %v1494, %v1544
      %v1577 = vadd.f32 %v1495, %v1545
      %v1578 = vadd.f32 %v1496, %v1546
      %v1579 = vadd.f32 %v1497, %v1547
      %v1580 = vadd.f32 %v1498, %v1548
      %v1581 = vadd.f32 %v1499, %v1549
      %v1582 = vadd.f32 %v1500, %v1550
      %v1583 = vadd.f32 %v1501, %v1551
      %v1584 = vadd.f32 %v1502, %v1552
      %v1585 = vadd.f32 %v1503, %v1553
      %v1586 = vadd.f32 %v1504, %v1554
      %v1587 = vadd.f32 %v1505, %v1555
      %v1588 = vadd.f32 %v1506, %v1556
      %v1589 = vadd.f32 %v1507, %v1557
      %v1590 = vadd.f32 %v1508, %v1558
      %v1591 = vadd.f32 %v1509, %v1559
      %v1592 = vadd.f32 %v1510, %v1560
      %v1593 = vadd.f32 %v1511, %v1561
      %v1594 = vadd.f32 %v1512, %v1562
      %v1595 = vadd.f32 %v1513, %v1563
      %v1596 = vadd.f32 %v1514, %v1564
      %v1597 = vadd.f32 %v1515, %v1565
      %v1598 = vadd.f32 %v1516, %v1566
      %v1599 = vadd.f32 %v1517, %v1567
      %v1600 = vadd.f32 %v1518, %v1568
      %v1601 = vadd.f32 %v1519, %v1569
      %v1602 = vadd.f32 %v1520, %v1570
      %v1603 = vadd.f32 %v1521, %v1571
      %v1604 = vrot.slane %v400, 2
      %v1605 = vrot.slane %v401, 2
      %v1606 = vsel %vm926, %v1604, %v1605
      %v1607 = vrot.slane %v402, 2
      %v1608 = vsel %vm926, %v1605, %v1607
      %1609 = vset.pattern.permute.xlu0 0
      %1610 = vperm.xlu0 %1609, %v1606
      %v1611 = vpop.permute.xlu0 %1610
      %1613 = vset.pattern.permute.xlu0 0
      %1614 = vperm.xlu0 %1613, %v1608
      %v1615 = vpop.permute.xlu0 %1614
      %v1617 = vlaneseq
      %v1618 = vshrl.u32 %v1617, 7
      %v1619 = vsub.s32 0, %v1618
      %v1620 = vrot.slane %v404, %v1619
      %v1621 = vmul.f32 %v1025, %v1620
      %v1622 = vmul.f32 %v1029, %v1620
      %v1623 = vmul.f32 %v1033, %v1620
      %v1624 = vmul.f32 %v1037, %v1620
      %v1625 = vmul.f32 %v1041, %v1620
      %v1626 = vmul.f32 %v1045, %v1620
      %v1627 = vmul.f32 %v1049, %v1620
      %v1628 = vmul.f32 %v1053, %v1620
      %v1629 = vmul.f32 %v1057, %v1620
      %v1630 = vmul.f32 %v1061, %v1620
      %v1631 = vmul.f32 %v1065, %v1620
      %v1632 = vmul.f32 %v1069, %v1620
      %v1633 = vmul.f32 %v1073, %v1620
      %v1634 = vmul.f32 %v1077, %v1620
      %v1635 = vmul.f32 %v1081, %v1620
      %v1636 = vmul.f32 %v1085, %v1620
      %v1637 = vmul.f32 %v1089, %v1620
      %v1638 = vmul.f32 %v1093, %v1620
      %v1639 = vmul.f32 %v1097, %v1620
      %v1640 = vmul.f32 %v1101, %v1620
      %v1641 = vmul.f32 %v1105, %v1620
      %v1642 = vmul.f32 %v1109, %v1620
      %v1643 = vmul.f32 %v1113, %v1620
      %v1644 = vmul.f32 %v1117, %v1620
      %v1645 = vmul.f32 %v1121, %v1620
      %v1646 = vmul.f32 %v1125, %v1620
      %v1647 = vmul.f32 %v1129, %v1620
      %v1648 = vmul.f32 %v1133, %v1620
      %v1649 = vmul.f32 %v1370, %v1620
      %v1650 = vmul.f32 %v1374, %v1620
      %v1651 = vmul.f32 %v1611, %v1620
      %v1652 = vmul.f32 %v1615, %v1620
      %v1653 = vadd.f32 %v1572, %v1621
      %v1654 = vadd.f32 %v1573, %v1622
      %v1655 = vadd.f32 %v1574, %v1623
      %v1656 = vadd.f32 %v1575, %v1624
      %v1657 = vadd.f32 %v1576, %v1625
      %v1658 = vadd.f32 %v1577, %v1626
      %v1659 = vadd.f32 %v1578, %v1627
      %v1660 = vadd.f32 %v1579, %v1628
      %v1661 = vadd.f32 %v1580, %v1629
      %v1662 = vadd.f32 %v1581, %v1630
      %v1663 = vadd.f32 %v1582, %v1631
      %v1664 = vadd.f32 %v1583, %v1632
      %v1665 = vadd.f32 %v1584, %v1633
      %v1666 = vadd.f32 %v1585, %v1634
      %v1667 = vadd.f32 %v1586, %v1635
      %v1668 = vadd.f32 %v1587, %v1636
      %v1669 = vadd.f32 %v1588, %v1637
      %v1670 = vadd.f32 %v1589, %v1638
      %v1671 = vadd.f32 %v1590, %v1639
      %v1672 = vadd.f32 %v1591, %v1640
      %v1673 = vadd.f32 %v1592, %v1641
      %v1674 = vadd.f32 %v1593, %v1642
      %v1675 = vadd.f32 %v1594, %v1643
      %v1676 = vadd.f32 %v1595, %v1644
      %v1677 = vadd.f32 %v1596, %v1645
      %v1678 = vadd.f32 %v1597, %v1646
      %v1679 = vadd.f32 %v1598, %v1647
      %v1680 = vadd.f32 %v1599, %v1648
      %v1681 = vadd.f32 %v1600, %v1649
      %v1682 = vadd.f32 %v1601, %v1650
      %v1683 = vadd.f32 %v1602, %v1651
      %v1684 = vadd.f32 %v1603, %v1652
      %v1685 = vmax.f32 %v1653, 0.0
      %v1686 = vmax.f32 %v1654, 0.0
      %v1687 = vmax.f32 %v1655, 0.0
      %v1688 = vmax.f32 %v1656, 0.0
      %v1689 = vmax.f32 %v1657, 0.0
      %v1690 = vmax.f32 %v1658, 0.0
      %v1691 = vmax.f32 %v1659, 0.0
      %v1692 = vmax.f32 %v1660, 0.0
      %v1693 = vmax.f32 %v1661, 0.0
      %v1694 = vmax.f32 %v1662, 0.0
      %v1695 = vmax.f32 %v1663, 0.0
      %v1696 = vmax.f32 %v1664, 0.0
      %v1697 = vmax.f32 %v1665, 0.0
      %v1698 = vmax.f32 %v1666, 0.0
      %v1699 = vmax.f32 %v1667, 0.0
      %v1700 = vmax.f32 %v1668, 0.0
      %v1701 = vmax.f32 %v1669, 0.0
      %v1702 = vmax.f32 %v1670, 0.0
      %v1703 = vmax.f32 %v1671, 0.0
      %v1704 = vmax.f32 %v1672, 0.0
      %v1705 = vmax.f32 %v1673, 0.0
      %v1706 = vmax.f32 %v1674, 0.0
      %v1707 = vmax.f32 %v1675, 0.0
      %v1708 = vmax.f32 %v1676, 0.0
      %v1709 = vmax.f32 %v1677, 0.0
      %v1710 = vmax.f32 %v1678, 0.0
      %v1711 = vmax.f32 %v1679, 0.0
      %v1712 = vmax.f32 %v1680, 0.0
      %v1713 = vmax.f32 %v1681, 0.0
      %v1714 = vmax.f32 %v1682, 0.0
      %v1715 = vmax.f32 %v1683, 0.0
      %v1716 = vmax.f32 %v1684, 0.0
      %s1717 = scalar_lea.vmem [#allocation3], 24
      %1718 = vst.msk [vmem:[%s1717 + $0x1] sm:$0xff] %vm293, %v1685
      %1719 = vst.msk [vmem:[%s1717 + $0x9] sm:$0xff] %vm293, %v1686
      %1720 = vst.msk [vmem:[%s1717 + $0x19] sm:$0xff] %vm293, %v1687
      %1721 = vst.msk [vmem:[%s1717 + $0x21] sm:$0xff] %vm293, %v1688
      %1722 = vst.msk [vmem:[%s1717 + $0x31] sm:$0xff] %vm293, %v1689
      %1723 = vst.msk [vmem:[%s1717 + $0x39] sm:$0xff] %vm293, %v1690
      %1724 = vst.msk [vmem:[%s1717 + $0x49] sm:$0xff] %vm293, %v1691
      %1725 = vst.msk [vmem:[%s1717 + $0x51] sm:$0xff] %vm293, %v1692
      %1726 = vst.msk [vmem:[%s1717 + $0x61] sm:$0xff] %vm293, %v1693
      %1727 = vst.msk [vmem:[%s1717 + $0x69] sm:$0xff] %vm293, %v1694
      %1728 = vst.msk [vmem:[%s1717 + $0x79] sm:$0xff] %vm293, %v1695
      %1729 = vst.msk [vmem:[%s1717 + $0x81] sm:$0xff] %vm293, %v1696
      %1730 = vst.msk [vmem:[%s1717 + $0x91] sm:$0xff] %vm293, %v1697
      %1731 = vst.msk [vmem:[%s1717 + $0x99] sm:$0xff] %vm293, %v1698
      %1732 = vst.msk [vmem:[%s1717 + $0xa9] sm:$0xff] %vm293, %v1699
      %1733 = vst.msk [vmem:[%s1717 + $0xb1] sm:$0xff] %vm293, %v1700
      %1734 = vst.msk [vmem:[%s1717 + $0xc1] sm:$0xff] %vm293, %v1701
      %1735 = vst.msk [vmem:[%s1717 + $0xc9] sm:$0xff] %vm293, %v1702
      %1736 = vst.msk [vmem:[%s1717 + $0xd9] sm:$0xff] %vm293, %v1703
      %1737 = vst.msk [vmem:[%s1717 + $0xe1] sm:$0xff] %vm293, %v1704
      %1738 = vst.msk [vmem:[%s1717 + $0xf1] sm:$0xff] %vm293, %v1705
      %1739 = vst.msk [vmem:[%s1717 + $0xf9] sm:$0xff] %vm293, %v1706
      %1740 = vst.msk [vmem:[%s1717 + $0x109] sm:$0xff] %vm293, %v1707
      %1741 = vst.msk [vmem:[%s1717 + $0x111] sm:$0xff] %vm293, %v1708
      %1742 = vst.msk [vmem:[%s1717 + $0x121] sm:$0xff] %vm293, %v1709
      %1743 = vst.msk [vmem:[%s1717 + $0x129] sm:$0xff] %vm293, %v1710
      %1744 = vst.msk [vmem:[%s1717 + $0x139] sm:$0xff] %vm293, %v1711
      %1745 = vst.msk [vmem:[%s1717 + $0x141] sm:$0xff] %vm293, %v1712
      %1746 = vst.msk [vmem:[%s1717 + $0x151] sm:$0xff] %vm293, %v1713
      %1747 = vst.msk [vmem:[%s1717 + $0x159] sm:$0xff] %vm293, %v1714
      %1748 = vst.msk [vmem:[%s1717 + $0x169] sm:$0xff] %vm293, %v1715
      %1749 = vst.msk [vmem:[%s1717 + $0x171] sm:$0xff] %vm293, %v1716
      %v1750 = vld [vmem:[#allocation3] sm:$0xff]
      %v1751 = vld [vmem:[#allocation3 + $0x8] sm:$0xff]
      %v1752 = vld [vmem:[#allocation3 + $0x10] sm:$0x3]
      %v1753 = vld [vmem:[#allocation3 + $0x18] sm:$0xff]
      %v1754 = vld [vmem:[#allocation3 + $0x20] sm:$0xff]
      %v1755 = vld [vmem:[#allocation3 + $0x28] sm:$0x3]
      %v1756 = vld [vmem:[#allocation3 + $0x30] sm:$0xff]
      %v1757 = vld [vmem:[#allocation3 + $0x38] sm:$0xff]
      %v1758 = vld [vmem:[#allocation3 + $0x40] sm:$0x3]
      %v1759 = vld [vmem:[#allocation3 + $0x48] sm:$0xff]
      %v1760 = vld [vmem:[#allocation3 + $0x50] sm:$0xff]
      %v1761 = vld [vmem:[#allocation3 + $0x58] sm:$0x3]
      %v1762 = vld [vmem:[#allocation3 + $0x60] sm:$0xff]
      %v1763 = vld [vmem:[#allocation3 + $0x68] sm:$0xff]
      %v1764 = vld [vmem:[#allocation3 + $0x70] sm:$0x3]
      %v1765 = vld [vmem:[#allocation3 + $0x78] sm:$0xff]
      %v1766 = vld [vmem:[#allocation3 + $0x80] sm:$0xff]
      %v1767 = vld [vmem:[#allocation3 + $0x88] sm:$0x3]
      %v1768 = vld [vmem:[#allocation3 + $0x90] sm:$0xff]
      %v1769 = vld [vmem:[#allocation3 + $0x98] sm:$0xff]
      %v1770 = vld [vmem:[#allocation3 + $0xa0] sm:$0x3]
      %v1771 = vld [vmem:[#allocation3 + $0xa8] sm:$0xff]
      %v1772 = vld [vmem:[#allocation3 + $0xb0] sm:$0xff]
      %v1773 = vld [vmem:[#allocation3 + $0xb8] sm:$0x3]
      %v1774 = vld [vmem:[#allocation3 + $0xc0] sm:$0xff]
      %v1775 = vld [vmem:[#allocation3 + $0xc8] sm:$0xff]
      %v1776 = vld [vmem:[#allocation3 + $0xd0] sm:$0x3]
      %v1777 = vld [vmem:[#allocation3 + $0xd8] sm:$0xff]
      %v1778 = vld [vmem:[#allocation3 + $0xe0] sm:$0xff]
      %v1779 = vld [vmem:[#allocation3 + $0xe8] sm:$0x3]
      %v1780 = vld [vmem:[#allocation3 + $0xf0] sm:$0xff]
      %v1781 = vld [vmem:[#allocation3 + $0xf8] sm:$0xff]
      %v1782 = vld [vmem:[#allocation3 + $0x100] sm:$0x3]
      %v1783 = vld [vmem:[#allocation3 + $0x108] sm:$0xff]
      %v1784 = vld [vmem:[#allocation3 + $0x110] sm:$0xff]
      %v1785 = vld [vmem:[#allocation3 + $0x118] sm:$0x3]
      %v1786 = vld [vmem:[#allocation3 + $0x120] sm:$0xff]
      %v1787 = vld [vmem:[#allocation3 + $0x128] sm:$0xff]
      %v1788 = vld [vmem:[#allocation3 + $0x130] sm:$0x3]
      %v1789 = vld [vmem:[#allocation3 + $0x138] sm:$0xff]
      %v1790 = vld [vmem:[#allocation3 + $0x140] sm:$0xff]
      %v1791 = vld [vmem:[#allocation3 + $0x148] sm:$0x3]
      %v1792 = vld [vmem:[#allocation3 + $0x150] sm:$0xff]
      %v1793 = vld [vmem:[#allocation3 + $0x158] sm:$0xff]
      %v1794 = vld [vmem:[#allocation3 + $0x160] sm:$0x3]
      %v1795 = vld [vmem:[#allocation3 + $0x168] sm:$0xff]
      %v1796 = vld [vmem:[#allocation3 + $0x170] sm:$0xff]
      %v1797 = vld [vmem:[#allocation3 + $0x178] sm:$0x3]
      %v1798 = vld [vmem:[#allocation3 + $0x180] sm:$0xff]
      %v1799 = vld [vmem:[#allocation3 + $0x188] sm:$0xff]
      %v1800 = vld [vmem:[#allocation3 + $0x190] sm:$0x3]
      %v1801 = vld [vmem:[#allocation3 + $0x198] sm:$0xff]
      %v1802 = vld [vmem:[#allocation3 + $0x1a0] sm:$0xff]
      %v1803 = vld [vmem:[#allocation3 + $0x1a8] sm:$0x3]
      %v1804 = vld [vmem:[%s2] sm:$0xff]
      %v1805 = vld [vmem:[%s2 + $0x8] sm:$0xff]
      %v1806 = vld [vmem:[%s2 + $0x10] sm:$0xff]
      %v1807 = vld [vmem:[%s2 + $0x18] sm:$0xff]
      %v1808 = vld [vmem:[%s2 + $0x20] sm:$0xff]
      %v1809 = vld [vmem:[%s2 + $0x28] sm:$0xff]
      %v1810 = vld [vmem:[%s2 + $0x30] sm:$0xff]
      %v1811 = vld [vmem:[%s2 + $0x38] sm:$0xff]
      %v1812 = vld [vmem:[%s2 + $0x40] sm:$0xff]
      %v1813 = vld [vmem:[%s2 + $0x48] sm:$0xff]
      %v1814 = vld [vmem:[%s2 + $0x50] sm:$0xff]
      %v1815 = vld [vmem:[%s2 + $0x58] sm:$0xff]
      %v1816 = vld [vmem:[%s2 + $0x60] sm:$0xff]
      %v1817 = vld [vmem:[%s2 + $0x68] sm:$0xff]
      %v1818 = vld [vmem:[%s2 + $0x70] sm:$0xff]
      %v1819 = vld [vmem:[%s2 + $0x78] sm:$0xff]
      %v1820 = vld [vmem:[%s2 + $0x80] sm:$0xff]
      %v1821 = vld [vmem:[%s2 + $0x88] sm:$0xff]
      %v1822 = vpack.c.bf16 %v1805, %v1804
      %v1823 = vpack.c.bf16 %v1807, %v1806
      %v1824 = vpack.c.bf16 %v1809, %v1808
      %v1825 = vpack.c.bf16 %v1811, %v1810
      %v1826 = vpack.c.bf16 %v1813, %v1812
      %v1827 = vpack.c.bf16 %v1815, %v1814
      %v1828 = vpack.c.bf16 %v1817, %v1816
      %v1829 = vpack.c.bf16 %v1819, %v1818
      %v1830 = vpack.c.bf16 %v1821, %v1820
      %v1879 = vrot.slane %v1750, 1
      %v1880 = vrot.slane %v1751, 1
      %v1881 = vsel %vm649, %v1879, %v1880
      %v1882 = vrot.slane %v1752, 1
      %v1883 = vsel %vm649, %v1880, %v1882
      %v1884 = vrot.slane %v1753, 1
      %v1885 = vrot.slane %v1754, 1
      %v1886 = vsel %vm649, %v1884, %v1885
      %v1887 = vrot.slane %v1755, 1
      %v1888 = vsel %vm649, %v1885, %v1887
      %v1889 = vrot.slane %v1756, 1
      %v1890 = vrot.slane %v1757, 1
      %v1891 = vsel %vm649, %v1889, %v1890
      %v1892 = vrot.slane %v1758, 1
      %v1893 = vsel %vm649, %v1890, %v1892
      %v1894 = vrot.slane %v1759, 1
      %v1895 = vrot.slane %v1760, 1
      %v1896 = vsel %vm649, %v1894, %v1895
      %v1897 = vrot.slane %v1761, 1
      %v1898 = vsel %vm649, %v1895, %v1897
      %v1899 = vrot.slane %v1762, 1
      %v1900 = vrot.slane %v1763, 1
      %v1901 = vsel %vm649, %v1899, %v1900
      %v1902 = vrot.slane %v1764, 1
      %v1903 = vsel %vm649, %v1900, %v1902
      %v1904 = vrot.slane %v1765, 1
      %v1905 = vrot.slane %v1766, 1
      %v1906 = vsel %vm649, %v1904, %v1905
      %v1907 = vrot.slane %v1767, 1
      %v1908 = vsel %vm649, %v1905, %v1907
      %v1909 = vrot.slane %v1768, 1
      %v1910 = vrot.slane %v1769, 1
      %v1911 = vsel %vm649, %v1909, %v1910
      %v1912 = vrot.slane %v1770, 1
      %v1913 = vsel %vm649, %v1910, %v1912
      %v1914 = vrot.slane %v1771, 1
      %v1915 = vrot.slane %v1772, 1
      %v1916 = vsel %vm649, %v1914, %v1915
      %v1917 = vrot.slane %v1773, 1
      %v1918 = vsel %vm649, %v1915, %v1917
      %v1919 = vrot.slane %v1774, 1
      %v1920 = vrot.slane %v1775, 1
      %v1921 = vsel %vm649, %v1919, %v1920
      %v1922 = vrot.slane %v1776, 1
      %v1923 = vsel %vm649, %v1920, %v1922
      %v1924 = vrot.slane %v1777, 1
      %v1925 = vrot.slane %v1778, 1
      %v1926 = vsel %vm649, %v1924, %v1925
      %v1927 = vrot.slane %v1779, 1
      %v1928 = vsel %vm649, %v1925, %v1927
      %v1929 = vrot.slane %v1780, 1
      %v1930 = vrot.slane %v1781, 1
      %v1931 = vsel %vm649, %v1929, %v1930
      %v1932 = vrot.slane %v1782, 1
      %v1933 = vsel %vm649, %v1930, %v1932
      %v1934 = vrot.slane %v1783, 1
      %v1935 = vrot.slane %v1784, 1
      %v1936 = vsel %vm649, %v1934, %v1935
      %v1937 = vrot.slane %v1785, 1
      %v1938 = vsel %vm649, %v1935, %v1937
      %v1939 = vrot.slane %v1786, 1
      %v1940 = vrot.slane %v1787, 1
      %v1941 = vsel %vm649, %v1939, %v1940
      %v1942 = vrot.slane %v1788, 1
      %v1943 = vsel %vm649, %v1940, %v1942
      %v1944 = vrot.slane %v1789, 1
      %v1945 = vrot.slane %v1790, 1
      %v1946 = vsel %vm649, %v1944, %v1945
      %v1947 = vrot.slane %v1791, 1
      %v1948 = vsel %vm649, %v1945, %v1947
      %v1949 = vrot.slane %v1792, 1
      %v1950 = vrot.slane %v1793, 1
      %v1951 = vsel %vm649, %v1949, %v1950
      %v1952 = vrot.slane %v1794, 1
      %v1953 = vsel %vm649, %v1950, %v1952
      %v1954 = vrot.slane %v1795, 1
      %v1955 = vrot.slane %v1796, 1
      %v1956 = vsel %vm649, %v1954, %v1955
      %v1957 = vrot.slane %v1797, 1
      %v1958 = vsel %vm649, %v1955, %v1957
      %v1959 = vrot.slane %v1750, 2
      %v1960 = vrot.slane %v1751, 2
      %v1961 = vsel %vm926, %v1959, %v1960
      %v1962 = vrot.slane %v1752, 2
      %v1963 = vsel %vm926, %v1960, %v1962
      %v1964 = vrot.slane %v1753, 2
      %v1965 = vrot.slane %v1754, 2
      %v1966 = vsel %vm926, %v1964, %v1965
      %v1967 = vrot.slane %v1755, 2
      %v1968 = vsel %vm926, %v1965, %v1967
      %v1969 = vrot.slane %v1756, 2
      %v1970 = vrot.slane %v1757, 2
      %v1971 = vsel %vm926, %v1969, %v1970
      %v1972 = vrot.slane %v1758, 2
      %v1973 = vsel %vm926, %v1970, %v1972
      %v1974 = vrot.slane %v1759, 2
      %v1975 = vrot.slane %v1760, 2
      %v1976 = vsel %vm926, %v1974, %v1975
      %v1977 = vrot.slane %v1761, 2
      %v1978 = vsel %vm926, %v1975, %v1977
      %v1979 = vrot.slane %v1762, 2
      %v1980 = vrot.slane %v1763, 2
      %v1981 = vsel %vm926, %v1979, %v1980
      %v1982 = vrot.slane %v1764, 2
      %v1983 = vsel %vm926, %v1980, %v1982
      %v1984 = vrot.slane %v1765, 2
      %v1985 = vrot.slane %v1766, 2
      %v1986 = vsel %vm926, %v1984, %v1985
      %v1987 = vrot.slane %v1767, 2
      %v1988 = vsel %vm926, %v1985, %v1987
      %v1989 = vrot.slane %v1768, 2
      %v1990 = vrot.slane %v1769, 2
      %v1991 = vsel %vm926, %v1989, %v1990
      %v1992 = vrot.slane %v1770, 2
      %v1993 = vsel %vm926, %v1990, %v1992
      %v1994 = vrot.slane %v1771, 2
      %v1995 = vrot.slane %v1772, 2
      %v1996 = vsel %vm926, %v1994, %v1995
      %v1997 = vrot.slane %v1773, 2
      %v1998 = vsel %vm926, %v1995, %v1997
      %v1999 = vrot.slane %v1774, 2
      %v2000 = vrot.slane %v1775, 2
      %v2001 = vsel %vm926, %v1999, %v2000
      %v2002 = vrot.slane %v1776, 2
      %v2003 = vsel %vm926, %v2000, %v2002
      %v2004 = vrot.slane %v1777, 2
      %v2005 = vrot.slane %v1778, 2
      %v2006 = vsel %vm926, %v2004, %v2005
      %v2007 = vrot.slane %v1779, 2
      %v2008 = vsel %vm926, %v2005, %v2007
      %v2009 = vrot.slane %v1780, 2
      %v2010 = vrot.slane %v1781, 2
      %v2011 = vsel %vm926, %v2009, %v2010
      %v2012 = vrot.slane %v1782, 2
      %v2013 = vsel %vm926, %v2010, %v2012
      %v2014 = vrot.slane %v1783, 2
      %v2015 = vrot.slane %v1784, 2
      %v2016 = vsel %vm926, %v2014, %v2015
      %v2017 = vrot.slane %v1785, 2
      %v2018 = vsel %vm926, %v2015, %v2017
      %v2019 = vrot.slane %v1786, 2
      %v2020 = vrot.slane %v1787, 2
      %v2021 = vsel %vm926, %v2019, %v2020
      %v2022 = vrot.slane %v1788, 2
      %v2023 = vsel %vm926, %v2020, %v2022
      %v2024 = vrot.slane %v1789, 2
      %v2025 = vrot.slane %v1790, 2
      %v2026 = vsel %vm926, %v2024, %v2025
      %v2027 = vrot.slane %v1791, 2
      %v2028 = vsel %vm926, %v2025, %v2027
      %v2029 = vrot.slane %v1792, 2
      %v2030 = vrot.slane %v1793, 2
      %v2031 = vsel %vm926, %v2029, %v2030
      %v2032 = vrot.slane %v1794, 2
      %v2033 = vsel %vm926, %v2030, %v2032
      %v2034 = vrot.slane %v1795, 2
      %v2035 = vrot.slane %v1796, 2
      %v2036 = vsel %vm926, %v2034, %v2035
      %v2037 = vrot.slane %v1797, 2
      %v2038 = vsel %vm926, %v2035, %v2037
      %v2042 = vrot.slane %v1798, 1
      %v2043 = vrot.slane %v1799, 1
      %v2044 = vsel %vm649, %v2042, %v2043
      %v2045 = vrot.slane %v1800, 1
      %v2046 = vsel %vm649, %v2043, %v2045
      %v2047 = vrot.slane %v1798, 2
      %v2048 = vrot.slane %v1799, 2
      %v2049 = vsel %vm926, %v2047, %v2048
      %v2050 = vrot.slane %v1800, 2
      %v2051 = vsel %vm926, %v2048, %v2050
      %v2055 = vrot.slane %v1801, 1
      %v2056 = vrot.slane %v1802, 1
      %v2057 = vsel %vm649, %v2055, %v2056
      %v2058 = vrot.slane %v1803, 1
      %v2059 = vsel %vm649, %v2056, %v2058
      %v2060 = vrot.slane %v1801, 2
      %v2061 = vrot.slane %v1802, 2
      %v2062 = vsel %vm926, %v2060, %v2061
      %v2063 = vrot.slane %v1803, 2
      %v2064 = vsel %vm926, %v2061, %v2063
      %2097 = vrot.lane.b32.xlu0 %v1881, 16
      %v2098 = vpop.permute.xlu0 %2097
      %2099 = vrot.lane.b32.xlu0 %v1883, 16
      %v2100 = vpop.permute.xlu0 %2099
      %2101 = vrot.lane.b32.xlu0 %v1886, 16
      %v2102 = vpop.permute.xlu0 %2101
      %2103 = vrot.lane.b32.xlu0 %v1888, 16
      %v2104 = vpop.permute.xlu0 %2103
      %2105 = vrot.lane.b32.xlu0 %v1891, 16
      %v2106 = vpop.permute.xlu0 %2105
      %2107 = vrot.lane.b32.xlu0 %v1893, 16
      %v2108 = vpop.permute.xlu0 %2107
      %2109 = vrot.lane.b32.xlu0 %v1896, 16
      %v2110 = vpop.permute.xlu0 %2109
      %2111 = vrot.lane.b32.xlu0 %v1898, 16
      %v2112 = vpop.permute.xlu0 %2111
      %2113 = vrot.lane.b32.xlu0 %v1901, 16
      %v2114 = vpop.permute.xlu0 %2113
      %2115 = vrot.lane.b32.xlu0 %v1903, 16
      %v2116 = vpop.permute.xlu0 %2115
      %2117 = vrot.lane.b32.xlu0 %v1906, 16
      %v2118 = vpop.permute.xlu0 %2117
      %2119 = vrot.lane.b32.xlu0 %v1908, 16
      %v2120 = vpop.permute.xlu0 %2119
      %2121 = vrot.lane.b32.xlu0 %v1911, 16
      %v2122 = vpop.permute.xlu0 %2121
      %2123 = vrot.lane.b32.xlu0 %v1913, 16
      %v2124 = vpop.permute.xlu0 %2123
      %2125 = vrot.lane.b32.xlu0 %v1916, 16
      %v2126 = vpop.permute.xlu0 %2125
      %2127 = vrot.lane.b32.xlu0 %v1918, 16
      %v2128 = vpop.permute.xlu0 %2127
      %2129 = vrot.lane.b32.xlu0 %v1921, 16
      %v2130 = vpop.permute.xlu0 %2129
      %2131 = vrot.lane.b32.xlu0 %v1923, 16
      %v2132 = vpop.permute.xlu0 %2131
      %2133 = vrot.lane.b32.xlu0 %v1926, 16
      %v2134 = vpop.permute.xlu0 %2133
      %2135 = vrot.lane.b32.xlu0 %v1928, 16
      %v2136 = vpop.permute.xlu0 %2135
      %2137 = vrot.lane.b32.xlu0 %v1931, 16
      %v2138 = vpop.permute.xlu0 %2137
      %2139 = vrot.lane.b32.xlu0 %v1933, 16
      %v2140 = vpop.permute.xlu0 %2139
      %2141 = vrot.lane.b32.xlu0 %v1936, 16
      %v2142 = vpop.permute.xlu0 %2141
      %2143 = vrot.lane.b32.xlu0 %v1938, 16
      %v2144 = vpop.permute.xlu0 %2143
      %2145 = vrot.lane.b32.xlu0 %v1941, 16
      %v2146 = vpop.permute.xlu0 %2145
      %2147 = vrot.lane.b32.xlu0 %v1943, 16
      %v2148 = vpop.permute.xlu0 %2147
      %2149 = vrot.lane.b32.xlu0 %v1946, 16
      %v2150 = vpop.permute.xlu0 %2149
      %2151 = vrot.lane.b32.xlu0 %v1948, 16
      %v2152 = vpop.permute.xlu0 %2151
      %2153 = vrot.lane.b32.xlu0 %v1951, 16
      %v2154 = vpop.permute.xlu0 %2153
      %2155 = vrot.lane.b32.xlu0 %v1953, 16
      %v2156 = vpop.permute.xlu0 %2155
      %2157 = vrot.lane.b32.xlu0 %v1956, 16
      %v2158 = vpop.permute.xlu0 %2157
      %2159 = vrot.lane.b32.xlu0 %v1958, 16
      %v2160 = vpop.permute.xlu0 %2159
      %2193 = vrot.lane.b32.xlu0 %v1961, 32
      %v2194 = vpop.permute.xlu0 %2193
      %2195 = vrot.lane.b32.xlu0 %v1963, 32
      %v2196 = vpop.permute.xlu0 %2195
      %2197 = vrot.lane.b32.xlu0 %v1966, 32
      %v2198 = vpop.permute.xlu0 %2197
      %2199 = vrot.lane.b32.xlu0 %v1968, 32
      %v2200 = vpop.permute.xlu0 %2199
      %2201 = vrot.lane.b32.xlu0 %v1971, 32
      %v2202 = vpop.permute.xlu0 %2201
      %2203 = vrot.lane.b32.xlu0 %v1973, 32
      %v2204 = vpop.permute.xlu0 %2203
      %2205 = vrot.lane.b32.xlu0 %v1976, 32
      %v2206 = vpop.permute.xlu0 %2205
      %2207 = vrot.lane.b32.xlu0 %v1978, 32
      %v2208 = vpop.permute.xlu0 %2207
      %2209 = vrot.lane.b32.xlu0 %v1981, 32
      %v2210 = vpop.permute.xlu0 %2209
      %2211 = vrot.lane.b32.xlu0 %v1983, 32
      %v2212 = vpop.permute.xlu0 %2211
      %2213 = vrot.lane.b32.xlu0 %v1986, 32
      %v2214 = vpop.permute.xlu0 %2213
      %2215 = vrot.lane.b32.xlu0 %v1988, 32
      %v2216 = vpop.permute.xlu0 %2215
      %2217 = vrot.lane.b32.xlu0 %v1991, 32
      %v2218 = vpop.permute.xlu0 %2217
      %2219 = vrot.lane.b32.xlu0 %v1993, 32
      %v2220 = vpop.permute.xlu0 %2219
      %2221 = vrot.lane.b32.xlu0 %v1996, 32
      %v2222 = vpop.permute.xlu0 %2221
      %2223 = vrot.lane.b32.xlu0 %v1998, 32
      %v2224 = vpop.permute.xlu0 %2223
      %2225 = vrot.lane.b32.xlu0 %v2001, 32
      %v2226 = vpop.permute.xlu0 %2225
      %2227 = vrot.lane.b32.xlu0 %v2003, 32
      %v2228 = vpop.permute.xlu0 %2227
      %2229 = vrot.lane.b32.xlu0 %v2006, 32
      %v2230 = vpop.permute.xlu0 %2229
      %2231 = vrot.lane.b32.xlu0 %v2008, 32
      %v2232 = vpop.permute.xlu0 %2231
      %2233 = vrot.lane.b32.xlu0 %v2011, 32
      %v2234 = vpop.permute.xlu0 %2233
      %2235 = vrot.lane.b32.xlu0 %v2013, 32
      %v2236 = vpop.permute.xlu0 %2235
      %2237 = vrot.lane.b32.xlu0 %v2016, 32
      %v2238 = vpop.permute.xlu0 %2237
      %2239 = vrot.lane.b32.xlu0 %v2018, 32
      %v2240 = vpop.permute.xlu0 %2239
      %2241 = vrot.lane.b32.xlu0 %v2021, 32
      %v2242 = vpop.permute.xlu0 %2241
      %2243 = vrot.lane.b32.xlu0 %v2023, 32
      %v2244 = vpop.permute.xlu0 %2243
      %2245 = vrot.lane.b32.xlu0 %v2026, 32
      %v2246 = vpop.permute.xlu0 %2245
      %2247 = vrot.lane.b32.xlu0 %v2028, 32
      %v2248 = vpop.permute.xlu0 %2247
      %2249 = vrot.lane.b32.xlu0 %v2031, 32
      %v2250 = vpop.permute.xlu0 %2249
      %2251 = vrot.lane.b32.xlu0 %v2033, 32
      %v2252 = vpop.permute.xlu0 %2251
      %2253 = vrot.lane.b32.xlu0 %v2036, 32
      %v2254 = vpop.permute.xlu0 %2253
      %2255 = vrot.lane.b32.xlu0 %v2038, 32
      %v2256 = vpop.permute.xlu0 %2255
      %2289 = vrot.lane.b32.xlu0 %v1753, 48
      %v2290 = vpop.permute.xlu0 %2289
      %2291 = vrot.lane.b32.xlu0 %v1754, 48
      %v2292 = vpop.permute.xlu0 %2291
      %2293 = vrot.lane.b32.xlu0 %v1756, 48
      %v2294 = vpop.permute.xlu0 %2293
      %2295 = vrot.lane.b32.xlu0 %v1757, 48
      %v2296 = vpop.permute.xlu0 %2295
      %2297 = vrot.lane.b32.xlu0 %v1759, 48
      %v2298 = vpop.permute.xlu0 %2297
      %2299 = vrot.lane.b32.xlu0 %v1760, 48
      %v2300 = vpop.permute.xlu0 %2299
      %2301 = vrot.lane.b32.xlu0 %v1762, 48
      %v2302 = vpop.permute.xlu0 %2301
      %2303 = vrot.lane.b32.xlu0 %v1763, 48
      %v2304 = vpop.permute.xlu0 %2303
      %2305 = vrot.lane.b32.xlu0 %v1765, 48
      %v2306 = vpop.permute.xlu0 %2305
      %2307 = vrot.lane.b32.xlu0 %v1766, 48
      %v2308 = vpop.permute.xlu0 %2307
      %2309 = vrot.lane.b32.xlu0 %v1768, 48
      %v2310 = vpop.permute.xlu0 %2309
      %2311 = vrot.lane.b32.xlu0 %v1769, 48
      %v2312 = vpop.permute.xlu0 %2311
      %2313 = vrot.lane.b32.xlu0 %v1771, 48
      %v2314 = vpop.permute.xlu0 %2313
      %2315 = vrot.lane.b32.xlu0 %v1772, 48
      %v2316 = vpop.permute.xlu0 %2315
      %2317 = vrot.lane.b32.xlu0 %v1774, 48
      %v2318 = vpop.permute.xlu0 %2317
      %2319 = vrot.lane.b32.xlu0 %v1775, 48
      %v2320 = vpop.permute.xlu0 %2319
      %2321 = vrot.lane.b32.xlu0 %v1777, 48
      %v2322 = vpop.permute.xlu0 %2321
      %2323 = vrot.lane.b32.xlu0 %v1778, 48
      %v2324 = vpop.permute.xlu0 %2323
      %2325 = vrot.lane.b32.xlu0 %v1780, 48
      %v2326 = vpop.permute.xlu0 %2325
      %2327 = vrot.lane.b32.xlu0 %v1781, 48
      %v2328 = vpop.permute.xlu0 %2327
      %2329 = vrot.lane.b32.xlu0 %v1783, 48
      %v2330 = vpop.permute.xlu0 %2329
      %2331 = vrot.lane.b32.xlu0 %v1784, 48
      %v2332 = vpop.permute.xlu0 %2331
      %2333 = vrot.lane.b32.xlu0 %v1786, 48
      %v2334 = vpop.permute.xlu0 %2333
      %2335 = vrot.lane.b32.xlu0 %v1787, 48
      %v2336 = vpop.permute.xlu0 %2335
      %2337 = vrot.lane.b32.xlu0 %v1789, 48
      %v2338 = vpop.permute.xlu0 %2337
      %2339 = vrot.lane.b32.xlu0 %v1790, 48
      %v2340 = vpop.permute.xlu0 %2339
      %2341 = vrot.lane.b32.xlu0 %v1792, 48
      %v2342 = vpop.permute.xlu0 %2341
      %2343 = vrot.lane.b32.xlu0 %v1793, 48
      %v2344 = vpop.permute.xlu0 %2343
      %2345 = vrot.lane.b32.xlu0 %v1795, 48
      %v2346 = vpop.permute.xlu0 %2345
      %2347 = vrot.lane.b32.xlu0 %v1796, 48
      %v2348 = vpop.permute.xlu0 %2347
      %2349 = vrot.lane.b32.xlu0 %v1798, 48
      %v2350 = vpop.permute.xlu0 %2349
      %2351 = vrot.lane.b32.xlu0 %v1799, 48
      %v2352 = vpop.permute.xlu0 %2351
      %2385 = vrot.lane.b32.xlu0 %v1886, 64
      %v2386 = vpop.permute.xlu0 %2385
      %2387 = vrot.lane.b32.xlu0 %v1888, 64
      %v2388 = vpop.permute.xlu0 %2387
      %2389 = vrot.lane.b32.xlu0 %v1891, 64
      %v2390 = vpop.permute.xlu0 %2389
      %2391 = vrot.lane.b32.xlu0 %v1893, 64
      %v2392 = vpop.permute.xlu0 %2391
      %2393 = vrot.lane.b32.xlu0 %v1896, 64
      %v2394 = vpop.permute.xlu0 %2393
      %2395 = vrot.lane.b32.xlu0 %v1898, 64
      %v2396 = vpop.permute.xlu0 %2395
      %2397 = vrot.lane.b32.xlu0 %v1901, 64
      %v2398 = vpop.permute.xlu0 %2397
      %2399 = vrot.lane.b32.xlu0 %v1903, 64
      %v2400 = vpop.permute.xlu0 %2399
      %2401 = vrot.lane.b32.xlu0 %v1906, 64
      %v2402 = vpop.permute.xlu0 %2401
      %2403 = vrot.lane.b32.xlu0 %v1908, 64
      %v2404 = vpop.permute.xlu0 %2403
      %2405 = vrot.lane.b32.xlu0 %v1911, 64
      %v2406 = vpop.permute.xlu0 %2405
      %2407 = vrot.lane.b32.xlu0 %v1913, 64
      %v2408 = vpop.permute.xlu0 %2407
      %2409 = vrot.lane.b32.xlu0 %v1916, 64
      %v2410 = vpop.permute.xlu0 %2409
      %2411 = vrot.lane.b32.xlu0 %v1918, 64
      %v2412 = vpop.permute.xlu0 %2411
      %2413 = vrot.lane.b32.xlu0 %v1921, 64
      %v2414 = vpop.permute.xlu0 %2413
      %2415 = vrot.lane.b32.xlu0 %v1923, 64
      %v2416 = vpop.permute.xlu0 %2415
      %2417 = vrot.lane.b32.xlu0 %v1926, 64
      %v2418 = vpop.permute.xlu0 %2417
      %2419 = vrot.lane.b32.xlu0 %v1928, 64
      %v2420 = vpop.permute.xlu0 %2419
      %2421 = vrot.lane.b32.xlu0 %v1931, 64
      %v2422 = vpop.permute.xlu0 %2421
      %2423 = vrot.lane.b32.xlu0 %v1933, 64
      %v2424 = vpop.permute.xlu0 %2423
      %2425 = vrot.lane.b32.xlu0 %v1936, 64
      %v2426 = vpop.permute.xlu0 %2425
      %2427 = vrot.lane.b32.xlu0 %v1938, 64
      %v2428 = vpop.permute.xlu0 %2427
      %2429 = vrot.lane.b32.xlu0 %v1941, 64
      %v2430 = vpop.permute.xlu0 %2429
      %2431 = vrot.lane.b32.xlu0 %v1943, 64
      %v2432 = vpop.permute.xlu0 %2431
      %2433 = vrot.lane.b32.xlu0 %v1946, 64
      %v2434 = vpop.permute.xlu0 %2433
      %2435 = vrot.lane.b32.xlu0 %v1948, 64
      %v2436 = vpop.permute.xlu0 %2435
      %2437 = vrot.lane.b32.xlu0 %v1951, 64
      %v2438 = vpop.permute.xlu0 %2437
      %2439 = vrot.lane.b32.xlu0 %v1953, 64
      %v2440 = vpop.permute.xlu0 %2439
      %2441 = vrot.lane.b32.xlu0 %v1956, 64
      %v2442 = vpop.permute.xlu0 %2441
      %2443 = vrot.lane.b32.xlu0 %v1958, 64
      %v2444 = vpop.permute.xlu0 %2443
      %2445 = vrot.lane.b32.xlu0 %v2044, 64
      %v2446 = vpop.permute.xlu0 %2445
      %2447 = vrot.lane.b32.xlu0 %v2046, 64
      %v2448 = vpop.permute.xlu0 %2447
      %2481 = vrot.lane.b32.xlu0 %v1966, 80
      %v2482 = vpop.permute.xlu0 %2481
      %2483 = vrot.lane.b32.xlu0 %v1968, 80
      %v2484 = vpop.permute.xlu0 %2483
      %2485 = vrot.lane.b32.xlu0 %v1971, 80
      %v2486 = vpop.permute.xlu0 %2485
      %2487 = vrot.lane.b32.xlu0 %v1973, 80
      %v2488 = vpop.permute.xlu0 %2487
      %2489 = vrot.lane.b32.xlu0 %v1976, 80
      %v2490 = vpop.permute.xlu0 %2489
      %2491 = vrot.lane.b32.xlu0 %v1978, 80
      %v2492 = vpop.permute.xlu0 %2491
      %2493 = vrot.lane.b32.xlu0 %v1981, 80
      %v2494 = vpop.permute.xlu0 %2493
      %2495 = vrot.lane.b32.xlu0 %v1983, 80
      %v2496 = vpop.permute.xlu0 %2495
      %2497 = vrot.lane.b32.xlu0 %v1986, 80
      %v2498 = vpop.permute.xlu0 %2497
      %2499 = vrot.lane.b32.xlu0 %v1988, 80
      %v2500 = vpop.permute.xlu0 %2499
      %2501 = vrot.lane.b32.xlu0 %v1991, 80
      %v2502 = vpop.permute.xlu0 %2501
      %2503 = vrot.lane.b32.xlu0 %v1993, 80
      %v2504 = vpop.permute.xlu0 %2503
      %2505 = vrot.lane.b32.xlu0 %v1996, 80
      %v2506 = vpop.permute.xlu0 %2505
      %2507 = vrot.lane.b32.xlu0 %v1998, 80
      %v2508 = vpop.permute.xlu0 %2507
      %2509 = vrot.lane.b32.xlu0 %v2001, 80
      %v2510 = vpop.permute.xlu0 %2509
      %2511 = vrot.lane.b32.xlu0 %v2003, 80
      %v2512 = vpop.permute.xlu0 %2511
      %2513 = vrot.lane.b32.xlu0 %v2006, 80
      %v2514 = vpop.permute.xlu0 %2513
      %2515 = vrot.lane.b32.xlu0 %v2008, 80
      %v2516 = vpop.permute.xlu0 %2515
      %2517 = vrot.lane.b32.xlu0 %v2011, 80
      %v2518 = vpop.permute.xlu0 %2517
      %2519 = vrot.lane.b32.xlu0 %v2013, 80
      %v2520 = vpop.permute.xlu0 %2519
      %2521 = vrot.lane.b32.xlu0 %v2016, 80
      %v2522 = vpop.permute.xlu0 %2521
      %2523 = vrot.lane.b32.xlu0 %v2018, 80
      %v2524 = vpop.permute.xlu0 %2523
      %2525 = vrot.lane.b32.xlu0 %v2021, 80
      %v2526 = vpop.permute.xlu0 %2525
      %2527 = vrot.lane.b32.xlu0 %v2023, 80
      %v2528 = vpop.permute.xlu0 %2527
      %2529 = vrot.lane.b32.xlu0 %v2026, 80
      %v2530 = vpop.permute.xlu0 %2529
      %2531 = vrot.lane.b32.xlu0 %v2028, 80
      %v2532 = vpop.permute.xlu0 %2531
      %2533 = vrot.lane.b32.xlu0 %v2031, 80
      %v2534 = vpop.permute.xlu0 %2533
      %2535 = vrot.lane.b32.xlu0 %v2033, 80
      %v2536 = vpop.permute.xlu0 %2535
      %2537 = vrot.lane.b32.xlu0 %v2036, 80
      %v2538 = vpop.permute.xlu0 %2537
      %2539 = vrot.lane.b32.xlu0 %v2038, 80
      %v2540 = vpop.permute.xlu0 %2539
      %2541 = vrot.lane.b32.xlu0 %v2049, 80
      %v2542 = vpop.permute.xlu0 %2541
      %2543 = vrot.lane.b32.xlu0 %v2051, 80
      %v2544 = vpop.permute.xlu0 %2543
      %2577 = vrot.lane.b32.xlu0 %v1756, 96
      %v2578 = vpop.permute.xlu0 %2577
      %2579 = vrot.lane.b32.xlu0 %v1757, 96
      %v2580 = vpop.permute.xlu0 %2579
      %2581 = vrot.lane.b32.xlu0 %v1759, 96
      %v2582 = vpop.permute.xlu0 %2581
      %2583 = vrot.lane.b32.xlu0 %v1760, 96
      %v2584 = vpop.permute.xlu0 %2583
      %2585 = vrot.lane.b32.xlu0 %v1762, 96
      %v2586 = vpop.permute.xlu0 %2585
      %2587 = vrot.lane.b32.xlu0 %v1763, 96
      %v2588 = vpop.permute.xlu0 %2587
      %2589 = vrot.lane.b32.xlu0 %v1765, 96
      %v2590 = vpop.permute.xlu0 %2589
      %2591 = vrot.lane.b32.xlu0 %v1766, 96
      %v2592 = vpop.permute.xlu0 %2591
      %2593 = vrot.lane.b32.xlu0 %v1768, 96
      %v2594 = vpop.permute.xlu0 %2593
      %2595 = vrot.lane.b32.xlu0 %v1769, 96
      %v2596 = vpop.permute.xlu0 %2595
      %2597 = vrot.lane.b32.xlu0 %v1771, 96
      %v2598 = vpop.permute.xlu0 %2597
      %2599 = vrot.lane.b32.xlu0 %v1772, 96
      %v2600 = vpop.permute.xlu0 %2599
      %2601 = vrot.lane.b32.xlu0 %v1774, 96
      %v2602 = vpop.permute.xlu0 %2601
      %2603 = vrot.lane.b32.xlu0 %v1775, 96
      %v2604 = vpop.permute.xlu0 %2603
      %2605 = vrot.lane.b32.xlu0 %v1777, 96
      %v2606 = vpop.permute.xlu0 %2605
      %2607 = vrot.lane.b32.xlu0 %v1778, 96
      %v2608 = vpop.permute.xlu0 %2607
      %2609 = vrot.lane.b32.xlu0 %v1780, 96
      %v2610 = vpop.permute.xlu0 %2609
      %2611 = vrot.lane.b32.xlu0 %v1781, 96
      %v2612 = vpop.permute.xlu0 %2611
      %2613 = vrot.lane.b32.xlu0 %v1783, 96
      %v2614 = vpop.permute.xlu0 %2613
      %2615 = vrot.lane.b32.xlu0 %v1784, 96
      %v2616 = vpop.permute.xlu0 %2615
      %2617 = vrot.lane.b32.xlu0 %v1786, 96
      %v2618 = vpop.permute.xlu0 %2617
      %2619 = vrot.lane.b32.xlu0 %v1787, 96
      %v2620 = vpop.permute.xlu0 %2619
      %2621 = vrot.lane.b32.xlu0 %v1789, 96
      %v2622 = vpop.permute.xlu0 %2621
      %2623 = vrot.lane.b32.xlu0 %v1790, 96
      %v2624 = vpop.permute.xlu0 %2623
      %2625 = vrot.lane.b32.xlu0 %v1792, 96
      %v2626 = vpop.permute.xlu0 %2625
      %2627 = vrot.lane.b32.xlu0 %v1793, 96
      %v2628 = vpop.permute.xlu0 %2627
      %2629 = vrot.lane.b32.xlu0 %v1795, 96
      %v2630 = vpop.permute.xlu0 %2629
      %2631 = vrot.lane.b32.xlu0 %v1796, 96
      %v2632 = vpop.permute.xlu0 %2631
      %2633 = vrot.lane.b32.xlu0 %v1798, 96
      %v2634 = vpop.permute.xlu0 %2633
      %2635 = vrot.lane.b32.xlu0 %v1799, 96
      %v2636 = vpop.permute.xlu0 %2635
      %2637 = vrot.lane.b32.xlu0 %v1801, 96
      %v2638 = vpop.permute.xlu0 %2637
      %2639 = vrot.lane.b32.xlu0 %v1802, 96
      %v2640 = vpop.permute.xlu0 %2639
      %2673 = vrot.lane.b32.xlu0 %v1891, 112
      %v2674 = vpop.permute.xlu0 %2673
      %2675 = vrot.lane.b32.xlu0 %v1893, 112
      %v2676 = vpop.permute.xlu0 %2675
      %2677 = vrot.lane.b32.xlu0 %v1896, 112
      %v2678 = vpop.permute.xlu0 %2677
      %2679 = vrot.lane.b32.xlu0 %v1898, 112
      %v2680 = vpop.permute.xlu0 %2679
      %2681 = vrot.lane.b32.xlu0 %v1901, 112
      %v2682 = vpop.permute.xlu0 %2681
      %2683 = vrot.lane.b32.xlu0 %v1903, 112
      %v2684 = vpop.permute.xlu0 %2683
      %2685 = vrot.lane.b32.xlu0 %v1906, 112
      %v2686 = vpop.permute.xlu0 %2685
      %2687 = vrot.lane.b32.xlu0 %v1908, 112
      %v2688 = vpop.permute.xlu0 %2687
      %2689 = vrot.lane.b32.xlu0 %v1911, 112
      %v2690 = vpop.permute.xlu0 %2689
      %2691 = vrot.lane.b32.xlu0 %v1913, 112
      %v2692 = vpop.permute.xlu0 %2691
      %2693 = vrot.lane.b32.xlu0 %v1916, 112
      %v2694 = vpop.permute.xlu0 %2693
      %2695 = vrot.lane.b32.xlu0 %v1918, 112
      %v2696 = vpop.permute.xlu0 %2695
      %2697 = vrot.lane.b32.xlu0 %v1921, 112
      %v2698 = vpop.permute.xlu0 %2697
      %2699 = vrot.lane.b32.xlu0 %v1923, 112
      %v2700 = vpop.permute.xlu0 %2699
      %2701 = vrot.lane.b32.xlu0 %v1926, 112
      %v2702 = vpop.permute.xlu0 %2701
      %2703 = vrot.lane.b32.xlu0 %v1928, 112
      %v2704 = vpop.permute.xlu0 %2703
      %2705 = vrot.lane.b32.xlu0 %v1931, 112
      %v2706 = vpop.permute.xlu0 %2705
      %2707 = vrot.lane.b32.xlu0 %v1933, 112
      %v2708 = vpop.permute.xlu0 %2707
      %2709 = vrot.lane.b32.xlu0 %v1936, 112
      %v2710 = vpop.permute.xlu0 %2709
      %2711 = vrot.lane.b32.xlu0 %v1938, 112
      %v2712 = vpop.permute.xlu0 %2711
      %2713 = vrot.lane.b32.xlu0 %v1941, 112
      %v2714 = vpop.permute.xlu0 %2713
      %2715 = vrot.lane.b32.xlu0 %v1943, 112
      %v2716 = vpop.permute.xlu0 %2715
      %2717 = vrot.lane.b32.xlu0 %v1946, 112
      %v2718 = vpop.permute.xlu0 %2717
      %2719 = vrot.lane.b32.xlu0 %v1948, 112
      %v2720 = vpop.permute.xlu0 %2719
      %2721 = vrot.lane.b32.xlu0 %v1951, 112
      %v2722 = vpop.permute.xlu0 %2721
      %2723 = vrot.lane.b32.xlu0 %v1953, 112
      %v2724 = vpop.permute.xlu0 %2723
      %2725 = vrot.lane.b32.xlu0 %v1956, 112
      %v2726 = vpop.permute.xlu0 %2725
      %2727 = vrot.lane.b32.xlu0 %v1958, 112
      %v2728 = vpop.permute.xlu0 %2727
      %2729 = vrot.lane.b32.xlu0 %v2044, 112
      %v2730 = vpop.permute.xlu0 %2729
      %2731 = vrot.lane.b32.xlu0 %v2046, 112
      %v2732 = vpop.permute.xlu0 %2731
      %2733 = vrot.lane.b32.xlu0 %v2057, 112
      %v2734 = vpop.permute.xlu0 %2733
      %2735 = vrot.lane.b32.xlu0 %v2059, 112
      %v2736 = vpop.permute.xlu0 %2735
      %v2769 = vsel %vm293, %v1750, %v2098
      %v2770 = vsel %vm293, %v1751, %v2100
      %v2771 = vsel %vm293, %v1753, %v2102
      %v2772 = vsel %vm293, %v1754, %v2104
      %v2773 = vsel %vm293, %v1756, %v2106
      %v2774 = vsel %vm293, %v1757, %v2108
      %v2775 = vsel %vm293, %v1759, %v2110
      %v2776 = vsel %vm293, %v1760, %v2112
      %v2777 = vsel %vm293, %v1762, %v2114
      %v2778 = vsel %vm293, %v1763, %v2116
      %v2779 = vsel %vm293, %v1765, %v2118
      %v2780 = vsel %vm293, %v1766, %v2120
      %v2781 = vsel %vm293, %v1768, %v2122
      %v2782 = vsel %vm293, %v1769, %v2124
      %v2783 = vsel %vm293, %v1771, %v2126
      %v2784 = vsel %vm293, %v1772, %v2128
      %v2785 = vsel %vm293, %v1774, %v2130
      %v2786 = vsel %vm293, %v1775, %v2132
      %v2787 = vsel %vm293, %v1777, %v2134
      %v2788 = vsel %vm293, %v1778, %v2136
      %v2789 = vsel %vm293, %v1780, %v2138
      %v2790 = vsel %vm293, %v1781, %v2140
      %v2791 = vsel %vm293, %v1783, %v2142
      %v2792 = vsel %vm293, %v1784, %v2144
      %v2793 = vsel %vm293, %v1786, %v2146
      %v2794 = vsel %vm293, %v1787, %v2148
      %v2795 = vsel %vm293, %v1789, %v2150
      %v2796 = vsel %vm293, %v1790, %v2152
      %v2797 = vsel %vm293, %v1792, %v2154
      %v2798 = vsel %vm293, %v1793, %v2156
      %v2799 = vsel %vm293, %v1795, %v2158
      %v2800 = vsel %vm293, %v1796, %v2160
      %vm2801 = vcmask 261120
      %v2802 = vsel %vm2801, %v2769, %v2194
      %v2803 = vsel %vm2801, %v2770, %v2196
      %v2804 = vsel %vm2801, %v2771, %v2198
      %v2805 = vsel %vm2801, %v2772, %v2200
      %v2806 = vsel %vm2801, %v2773, %v2202
      %v2807 = vsel %vm2801, %v2774, %v2204
      %v2808 = vsel %vm2801, %v2775, %v2206
      %v2809 = vsel %vm2801, %v2776, %v2208
      %v2810 = vsel %vm2801, %v2777, %v2210
      %v2811 = vsel %vm2801, %v2778, %v2212
      %v2812 = vsel %vm2801, %v2779, %v2214
      %v2813 = vsel %vm2801, %v2780, %v2216
      %v2814 = vsel %vm2801, %v2781, %v2218
      %v2815 = vsel %vm2801, %v2782, %v2220
      %v2816 = vsel %vm2801, %v2783, %v2222
      %v2817 = vsel %vm2801, %v2784, %v2224
      %v2818 = vsel %vm2801, %v2785, %v2226
      %v2819 = vsel %vm2801, %v2786, %v2228
      %v2820 = vsel %vm2801, %v2787, %v2230
      %v2821 = vsel %vm2801, %v2788, %v2232
      %v2822 = vsel %vm2801, %v2789, %v2234
      %v2823 = vsel %vm2801, %v2790, %v2236
      %v2824 = vsel %vm2801, %v2791, %v2238
      %v2825 = vsel %vm2801, %v2792, %v2240
      %v2826 = vsel %vm2801, %v2793, %v2242
      %v2827 = vsel %vm2801, %v2794, %v2244
      %v2828 = vsel %vm2801, %v2795, %v2246
      %v2829 = vsel %vm2801, %v2796, %v2248
      %v2830 = vsel %vm2801, %v2797, %v2250
      %v2831 = vsel %vm2801, %v2798, %v2252
      %v2832 = vsel %vm2801, %v2799, %v2254
      %v2833 = vsel %vm2801, %v2800, %v2256
      %vm2834 = vcmask 392192
      %v2835 = vsel %vm2834, %v2802, %v2290
      %v2836 = vsel %vm2834, %v2803, %v2292
      %v2837 = vsel %vm2834, %v2804, %v2294
      %v2838 = vsel %vm2834, %v2805, %v2296
      %v2839 = vsel %vm2834, %v2806, %v2298
      %v2840 = vsel %vm2834, %v2807, %v2300
      %v2841 = vsel %vm2834, %v2808, %v2302
      %v2842 = vsel %vm2834, %v2809, %v2304
      %v2843 = vsel %vm2834, %v2810, %v2306
      %v2844 = vsel %vm2834, %v2811, %v2308
      %v2845 = vsel %vm2834, %v2812, %v2310
      %v2846 = vsel %vm2834, %v2813, %v2312
      %v2847 = vsel %vm2834, %v2814, %v2314
      %v2848 = vsel %vm2834, %v2815, %v2316
      %v2849 = vsel %vm2834, %v2816, %v2318
      %v2850 = vsel %vm2834, %v2817, %v2320
      %v2851 = vsel %vm2834, %v2818, %v2322
      %v2852 = vsel %vm2834, %v2819, %v2324
      %v2853 = vsel %vm2834, %v2820, %v2326
      %v2854 = vsel %vm2834, %v2821, %v2328
      %v2855 = vsel %vm2834, %v2822, %v2330
      %v2856 = vsel %vm2834, %v2823, %v2332
      %v2857 = vsel %vm2834, %v2824, %v2334
      %v2858 = vsel %vm2834, %v2825, %v2336
      %v2859 = vsel %vm2834, %v2826, %v2338
      %v2860 = vsel %vm2834, %v2827, %v2340
      %v2861 = vsel %vm2834, %v2828, %v2342
      %v2862 = vsel %vm2834, %v2829, %v2344
      %v2863 = vsel %vm2834, %v2830, %v2346
      %v2864 = vsel %vm2834, %v2831, %v2348
      %v2865 = vsel %vm2834, %v2832, %v2350
      %v2866 = vsel %vm2834, %v2833, %v2352
      %vm2867 = vcmask 523264
      %v2868 = vsel %vm2867, %v2835, %v2386
      %v2869 = vsel %vm2867, %v2836, %v2388
      %v2870 = vsel %vm2867, %v2837, %v2390
      %v2871 = vsel %vm2867, %v2838, %v2392
      %v2872 = vsel %vm2867, %v2839, %v2394
      %v2873 = vsel %vm2867, %v2840, %v2396
      %v2874 = vsel %vm2867, %v2841, %v2398
      %v2875 = vsel %vm2867, %v2842, %v2400
      %v2876 = vsel %vm2867, %v2843, %v2402
      %v2877 = vsel %vm2867, %v2844, %v2404
      %v2878 = vsel %vm2867, %v2845, %v2406
      %v2879 = vsel %vm2867, %v2846, %v2408
      %v2880 = vsel %vm2867, %v2847, %v2410
      %v2881 = vsel %vm2867, %v2848, %v2412
      %v2882 = vsel %vm2867, %v2849, %v2414
      %v2883 = vsel %vm2867, %v2850, %v2416
      %v2884 = vsel %vm2867, %v2851, %v2418
      %v2885 = vsel %vm2867, %v2852, %v2420
      %v2886 = vsel %vm2867, %v2853, %v2422
      %v2887 = vsel %vm2867, %v2854, %v2424
      %v2888 = vsel %vm2867, %v2855, %v2426
      %v2889 = vsel %vm2867, %v2856, %v2428
      %v2890 = vsel %vm2867, %v2857, %v2430
      %v2891 = vsel %vm2867, %v2858, %v2432
      %v2892 = vsel %vm2867, %v2859, %v2434
      %v2893 = vsel %vm2867, %v2860, %v2436
      %v2894 = vsel %vm2867, %v2861, %v2438
      %v2895 = vsel %vm2867, %v2862, %v2440
      %v2896 = vsel %vm2867, %v2863, %v2442
      %v2897 = vsel %vm2867, %v2864, %v2444
      %v2898 = vsel %vm2867, %v2865, %v2446
      %v2899 = vsel %vm2867, %v2866, %v2448
      %vm2900 = vcmask 654336
      %v2901 = vsel %vm2900, %v2868, %v2482
      %v2902 = vsel %vm2900, %v2869, %v2484
      %v2903 = vsel %vm2900, %v2870, %v2486
      %v2904 = vsel %vm2900, %v2871, %v2488
      %v2905 = vsel %vm2900, %v2872, %v2490
      %v2906 = vsel %vm2900, %v2873, %v2492
      %v2907 = vsel %vm2900, %v2874, %v2494
      %v2908 = vsel %vm2900, %v2875, %v2496
      %v2909 = vsel %vm2900, %v2876, %v2498
      %v2910 = vsel %vm2900, %v2877, %v2500
      %v2911 = vsel %vm2900, %v2878, %v2502
      %v2912 = vsel %vm2900, %v2879, %v2504
      %v2913 = vsel %vm2900, %v2880, %v2506
      %v2914 = vsel %vm2900, %v2881, %v2508
      %v2915 = vsel %vm2900, %v2882, %v2510
      %v2916 = vsel %vm2900, %v2883, %v2512
      %v2917 = vsel %vm2900, %v2884, %v2514
      %v2918 = vsel %vm2900, %v2885, %v2516
      %v2919 = vsel %vm2900, %v2886, %v2518
      %v2920 = vsel %vm2900, %v2887, %v2520
      %v2921 = vsel %vm2900, %v2888, %v2522
      %v2922 = vsel %vm2900, %v2889, %v2524
      %v2923 = vsel %vm2900, %v2890, %v2526
      %v2924 = vsel %vm2900, %v2891, %v2528
      %v2925 = vsel %vm2900, %v2892, %v2530
      %v2926 = vsel %vm2900, %v2893, %v2532
      %v2927 = vsel %vm2900, %v2894, %v2534
      %v2928 = vsel %vm2900, %v2895, %v2536
      %v2929 = vsel %vm2900, %v2896, %v2538
      %v2930 = vsel %vm2900, %v2897, %v2540
      %v2931 = vsel %vm2900, %v2898, %v2542
      %v2932 = vsel %vm2900, %v2899, %v2544
      %vm2933 = vcmask 785408
      %v2934 = vsel %vm2933, %v2901, %v2578
      %v2935 = vsel %vm2933, %v2902, %v2580
      %v2936 = vsel %vm2933, %v2903, %v2582
      %v2937 = vsel %vm2933, %v2904, %v2584
      %v2938 = vsel %vm2933, %v2905, %v2586
      %v2939 = vsel %vm2933, %v2906, %v2588
      %v2940 = vsel %vm2933, %v2907, %v2590
      %v2941 = vsel %vm2933, %v2908, %v2592
      %v2942 = vsel %vm2933, %v2909, %v2594
      %v2943 = vsel %vm2933, %v2910, %v2596
      %v2944 = vsel %vm2933, %v2911, %v2598
      %v2945 = vsel %vm2933, %v2912, %v2600
      %v2946 = vsel %vm2933, %v2913, %v2602
      %v2947 = vsel %vm2933, %v2914, %v2604
      %v2948 = vsel %vm2933, %v2915, %v2606
      %v2949 = vsel %vm2933, %v2916, %v2608
      %v2950 = vsel %vm2933, %v2917, %v2610
      %v2951 = vsel %vm2933, %v2918, %v2612
      %v2952 = vsel %vm2933, %v2919, %v2614
      %v2953 = vsel %vm2933, %v2920, %v2616
      %v2954 = vsel %vm2933, %v2921, %v2618
      %v2955 = vsel %vm2933, %v2922, %v2620
      %v2956 = vsel %vm2933, %v2923, %v2622
      %v2957 = vsel %vm2933, %v2924, %v2624
      %v2958 = vsel %vm2933, %v2925, %v2626
      %v2959 = vsel %vm2933, %v2926, %v2628
      %v2960 = vsel %vm2933, %v2927, %v2630
      %v2961 = vsel %vm2933, %v2928, %v2632
      %v2962 = vsel %vm2933, %v2929, %v2634
      %v2963 = vsel %vm2933, %v2930, %v2636
      %v2964 = vsel %vm2933, %v2931, %v2638
      %v2965 = vsel %vm2933, %v2932, %v2640
      %vm2966 = vcmask 916480
      %v2967 = vsel %vm2966, %v2934, %v2674
      %v2968 = vsel %vm2966, %v2935, %v2676
      %v2969 = vsel %vm2966, %v2936, %v2678
      %v2970 = vsel %vm2966, %v2937, %v2680
      %v2971 = vsel %vm2966, %v2938, %v2682
      %v2972 = vsel %vm2966, %v2939, %v2684
      %v2973 = vsel %vm2966, %v2940, %v2686
      %v2974 = vsel %vm2966, %v2941, %v2688
      %v2975 = vsel %vm2966, %v2942, %v2690
      %v2976 = vsel %vm2966, %v2943, %v2692
      %v2977 = vsel %vm2966, %v2944, %v2694
      %v2978 = vsel %vm2966, %v2945, %v2696
      %v2979 = vsel %vm2966, %v2946, %v2698
      %v2980 = vsel %vm2966, %v2947, %v2700
      %v2981 = vsel %vm2966, %v2948, %v2702
      %v2982 = vsel %vm2966, %v2949, %v2704
      %v2983 = vsel %vm2966, %v2950, %v2706
      %v2984 = vsel %vm2966, %v2951, %v2708
      %v2985 = vsel %vm2966, %v2952, %v2710
      %v2986 = vsel %vm2966, %v2953, %v2712
      %v2987 = vsel %vm2966, %v2954, %v2714
      %v2988 = vsel %vm2966, %v2955, %v2716
      %v2989 = vsel %vm2966, %v2956, %v2718
      %v2990 = vsel %vm2966, %v2957, %v2720
      %v2991 = vsel %vm2966, %v2958, %v2722
      %v2992 = vsel %vm2966, %v2959, %v2724
      %v2993 = vsel %vm2966, %v2960, %v2726
      %v2994 = vsel %vm2966, %v2961, %v2728
      %v2995 = vsel %vm2966, %v2962, %v2730
      %v2996 = vsel %vm2966, %v2963, %v2732
      %v2997 = vsel %vm2966, %v2964, %v2734
      %v2998 = vsel %vm2966, %v2965, %v2736
      %v2999 = vpack.c.bf16 %v2968, %v2967
      %v3000 = vpack.c.bf16 %v1973, %v1971
      %v3001 = vpack.c.bf16 %v2970, %v2969
      %v3002 = vpack.c.bf16 %v1978, %v1976
      %v3003 = vpack.c.bf16 %v2972, %v2971
      %v3004 = vpack.c.bf16 %v1983, %v1981
      %v3005 = vpack.c.bf16 %v2974, %v2973
      %v3006 = vpack.c.bf16 %v1988, %v1986
      %v3007 = vpack.c.bf16 %v2976, %v2975
      %v3008 = vpack.c.bf16 %v1993, %v1991
      %v3009 = vpack.c.bf16 %v2978, %v2977
      %v3010 = vpack.c.bf16 %v1998, %v1996
      %v3011 = vpack.c.bf16 %v2980, %v2979
      %v3012 = vpack.c.bf16 %v2003, %v2001
      %v3013 = vpack.c.bf16 %v2982, %v2981
      %v3014 = vpack.c.bf16 %v2008, %v2006
      %v3015 = vpack.c.bf16 %v2984, %v2983
      %v3016 = vpack.c.bf16 %v2013, %v2011
      %v3017 = vpack.c.bf16 %v2986, %v2985
      %v3018 = vpack.c.bf16 %v2018, %v2016
      %v3019 = vpack.c.bf16 %v2988, %v2987
      %v3020 = vpack.c.bf16 %v2023, %v2021
      %v3021 = vpack.c.bf16 %v2990, %v2989
      %v3022 = vpack.c.bf16 %v2028, %v2026
      %v3023 = vpack.c.bf16 %v2992, %v2991
      %v3024 = vpack.c.bf16 %v2033, %v2031
      %v3025 = vpack.c.bf16 %v2994, %v2993
      %v3026 = vpack.c.bf16 %v2038, %v2036
      %v3027 = vpack.c.bf16 %v2996, %v2995
      %v3028 = vpack.c.bf16 %v2051, %v2049
      %v3029 = vpack.c.bf16 %v2998, %v2997
      %v3030 = vpack.c.bf16 %v2064, %v2062
      %v3032 = vsel %vm293, %v3000, 0
      %v3035 = vsel %vm293, %v3002, 0
      %v3038 = vsel %vm293, %v3004, 0
      %v3041 = vsel %vm293, %v3006, 0
      %v3044 = vsel %vm293, %v3008, 0
      %v3047 = vsel %vm293, %v3010, 0
      %v3050 = vsel %vm293, %v3012, 0
      %v3053 = vsel %vm293, %v3014, 0
      %v3056 = vsel %vm293, %v3016, 0
      %v3059 = vsel %vm293, %v3018, 0
      %v3062 = vsel %vm293, %v3020, 0
      %v3065 = vsel %vm293, %v3022, 0
      %v3068 = vsel %vm293, %v3024, 0
      %v3071 = vsel %vm293, %v3026, 0
      %v3074 = vsel %vm293, %v3028, 0
      %v3077 = vsel %vm293, %v3030, 0
      %3079 = vmatprep.subr.bf16.mxu0 0
      %3080 = vmatpush1.bf16.msra.mxu0 %v1822
      %3081 = vmatprep.subr.bf16.mxu0 0
      %3082 = vmatpush1.bf16.msra.mxu0 %v1823
      %3083 = vmatprep.subr.bf16.mxu0 0
      %3084 = vmatpush1.bf16.msra.mxu0 %v1824
      %3085 = vmatprep.subr.bf16.mxu0 0
      %3086 = vmatpush1.bf16.msra.mxu0 %v1825
      %3087 = vmatprep.subr.bf16.mxu0 0
      %3088 = vmatpush1.bf16.msra.mxu0 %v1826
      %3089 = vmatprep.subr.bf16.mxu0 0
      %3090 = vmatpush1.bf16.msra.mxu0 %v1827
      %3091 = vmatprep.subr.bf16.mxu0 0
      %3092 = vmatpush1.bf16.msra.mxu0 %v1828
      %3093 = vmatprep.subr.bf16.mxu0 0
      %3094 = vmatpush1.bf16.msra.mxu0 %v1829
      %3095 = vmatprep.subr.bf16.mxu0 0
      %3096 = vmatpush1.bf16.msra.mxu0 %v1830
      %3097 = vmatprep.subr.bf16.mxu0 0
      %3098 = vmatpush1.bf16.msra.mxu0 0
      %3099 = vmatprep.subr.bf16.mxu0 0
      %3100 = vmatpush1.bf16.msra.mxu0 0
      %3101 = vmatprep.subr.bf16.mxu0 0
      %3102 = vmatpush1.bf16.msra.mxu0 0
      %3103 = vmatprep.subr.bf16.mxu0 0
      %3104 = vmatpush1.bf16.msra.mxu0 0
      %3105 = vmatprep.subr.bf16.mxu0 0
      %3106 = vmatpush1.bf16.msra.mxu0 0
      %3107 = vmatprep.subr.bf16.mxu0 0
      %3108 = vmatpush1.bf16.msra.mxu0 0
      %3109 = vmatprep.subr.bf16.mxu0 0
      %3110 = vmatpush1.bf16.msra.mxu0 0
      %3111 = vmatprep.mubr.bf16.mxu0 %v3032
      %3112 = vmatmul.mubr.bf16.gmra.mrb[0].mxu0 %v2999
      %v3113 = vpop.f32.mrb[0].mxu0
      %v3114 = vadd.f32 0.0, %v3113
      %v3115 = vpop.f32.mrb[0].mxu0
      %v3116 = vpop.f32.mrb[0].mxu0
      %v3117 = vadd.f32 0.0, %v3116
      %v3118 = vpop.f32.mrb[0].mxu0
      %3119 = vmatprep.mubr.bf16.mxu0 %v3035
      %3120 = vmatmul.mubr.bf16.gmra.mrb[0].mxu0 %v3001
      %v3121 = vpop.f32.mrb[0].mxu0
      %v3122 = vadd.f32 0.0, %v3121
      %v3123 = vpop.f32.mrb[0].mxu0
      %v3124 = vpop.f32.mrb[0].mxu0
      %v3125 = vadd.f32 0.0, %v3124
      %v3126 = vpop.f32.mrb[0].mxu0
      %3127 = vmatprep.mubr.bf16.mxu0 %v3038
      %3128 = vmatmul.mubr.bf16.gmra.mrb[0].mxu0 %v3003
      %v3129 = vpop.f32.mrb[0].mxu0
      %v3130 = vadd.f32 0.0, %v3129
      %v3131 = vpop.f32.mrb[0].mxu0
      %v3132 = vpop.f32.mrb[0].mxu0
      %v3133 = vadd.f32 0.0, %v3132
      %v3134 = vpop.f32.mrb[0].mxu0
      %3135 = vmatprep.mubr.bf16.mxu0 %v3041
      %3136 = vmatmul.mubr.bf16.gmra.mrb[0].mxu0 %v3005
      %v3137 = vpop.f32.mrb[0].mxu0
      %v3138 = vadd.f32 0.0, %v3137
      %v3139 = vpop.f32.mrb[0].mxu0
      %v3140 = vpop.f32.mrb[0].mxu0
      %v3141 = vadd.f32 0.0, %v3140
      %v3142 = vpop.f32.mrb[0].mxu0
      %3143 = vmatprep.mubr.bf16.mxu0 %v3044
      %3144 = vmatmul.mubr.bf16.gmra.mrb[0].mxu0 %v3007
      %v3145 = vpop.f32.mrb[0].mxu0
      %v3146 = vadd.f32 0.0, %v3145
      %v3147 = vpop.f32.mrb[0].mxu0
      %v3148 = vpop.f32.mrb[0].mxu0
      %v3149 = vadd.f32 0.0, %v3148
      %v3150 = vpop.f32.mrb[0].mxu0
      %3151 = vmatprep.mubr.bf16.mxu0 %v3047
      %3152 = vmatmul.mubr.bf16.gmra.mrb[0].mxu0 %v3009
      %v3153 = vpop.f32.mrb[0].mxu0
      %v3154 = vadd.f32 0.0, %v3153
      %v3155 = vpop.f32.mrb[0].mxu0
      %v3156 = vpop.f32.mrb[0].mxu0
      %v3157 = vadd.f32 0.0, %v3156
      %v3158 = vpop.f32.mrb[0].mxu0
      %3159 = vmatprep.mubr.bf16.mxu0 %v3050
      %3160 = vmatmul.mubr.bf16.gmra.mrb[0].mxu0 %v3011
      %v3161 = vpop.f32.mrb[0].mxu0
      %v3162 = vadd.f32 0.0, %v3161
      %v3163 = vpop.f32.mrb[0].mxu0
      %v3164 = vpop.f32.mrb[0].mxu0
      %v3165 = vadd.f32 0.0, %v3164
      %v3166 = vpop.f32.mrb[0].mxu0
      %3167 = vmatprep.mubr.bf16.mxu0 %v3053
      %3168 = vmatmul.mubr.bf16.gmra.mrb[0].mxu0 %v3013
      %v3169 = vpop.f32.mrb[0].mxu0
      %v3170 = vadd.f32 0.0, %v3169
      %v3171 = vpop.f32.mrb[0].mxu0
      %v3172 = vpop.f32.mrb[0].mxu0
      %v3173 = vadd.f32 0.0, %v3172
      %v3174 = vpop.f32.mrb[0].mxu0
      %3175 = vmatprep.mubr.bf16.mxu0 %v3056
      %3176 = vmatmul.mubr.bf16.gmra.mrb[0].mxu0 %v3015
      %v3177 = vpop.f32.mrb[0].mxu0
      %v3178 = vadd.f32 0.0, %v3177
      %v3179 = vpop.f32.mrb[0].mxu0
      %v3180 = vpop.f32.mrb[0].mxu0
      %v3181 = vadd.f32 0.0, %v3180
      %v3182 = vpop.f32.mrb[0].mxu0
      %3183 = vmatprep.mubr.bf16.mxu0 %v3059
      %3184 = vmatmul.mubr.bf16.gmra.mrb[0].mxu0 %v3017
      %v3185 = vpop.f32.mrb[0].mxu0
      %v3186 = vadd.f32 0.0, %v3185
      %v3187 = vpop.f32.mrb[0].mxu0
      %v3188 = vpop.f32.mrb[0].mxu0
      %v3189 = vadd.f32 0.0, %v3188
      %v3190 = vpop.f32.mrb[0].mxu0
      %3191 = vmatprep.mubr.bf16.mxu0 %v3062
      %3192 = vmatmul.mubr.bf16.gmra.mrb[0].mxu0 %v3019
      %v3193 = vpop.f32.mrb[0].mxu0
      %v3194 = vadd.f32 0.0, %v3193
      %v3195 = vpop.f32.mrb[0].mxu0
      %v3196 = vpop.f32.mrb[0].mxu0
      %v3197 = vadd.f32 0.0, %v3196
      %v3198 = vpop.f32.mrb[0].mxu0
      %3199 = vmatprep.mubr.bf16.mxu0 %v3065
      %3200 = vmatmul.mubr.bf16.gmra.mrb[0].mxu0 %v3021
      %v3201 = vpop.f32.mrb[0].mxu0
      %v3202 = vadd.f32 0.0, %v3201
      %v3203 = vpop.f32.mrb[0].mxu0
      %v3204 = vpop.f32.mrb[0].mxu0
      %v3205 = vadd.f32 0.0, %v3204
      %v3206 = vpop.f32.mrb[0].mxu0
      %3207 = vmatprep.mubr.bf16.mxu0 %v3068
      %3208 = vmatmul.mubr.bf16.gmra.mrb[0].mxu0 %v3023
      %v3209 = vpop.f32.mrb[0].mxu0
      %v3210 = vadd.f32 0.0, %v3209
      %v3211 = vpop.f32.mrb[0].mxu0
      %v3212 = vpop.f32.mrb[0].mxu0
      %v3213 = vadd.f32 0.0, %v3212
      %v3214 = vpop.f32.mrb[0].mxu0
      %3215 = vmatprep.mubr.bf16.mxu0 %v3071
      %3216 = vmatmul.mubr.bf16.gmra.mrb[0].mxu0 %v3025
      %v3217 = vpop.f32.mrb[0].mxu0
      %v3218 = vadd.f32 0.0, %v3217
      %v3219 = vpop.f32.mrb[0].mxu0
      %v3220 = vpop.f32.mrb[0].mxu0
      %v3221 = vadd.f32 0.0, %v3220
      %v3222 = vpop.f32.mrb[0].mxu0
      %3223 = vmatprep.mubr.bf16.mxu0 %v3074
      %3224 = vmatmul.mubr.bf16.gmra.mrb[0].mxu0 %v3027
      %v3225 = vpop.f32.mrb[0].mxu0
      %v3226 = vadd.f32 0.0, %v3225
      %v3227 = vpop.f32.mrb[0].mxu0
      %v3228 = vpop.f32.mrb[0].mxu0
      %v3229 = vadd.f32 0.0, %v3228
      %v3230 = vpop.f32.mrb[0].mxu0
      %3231 = vmatprep.mubr.bf16.mxu0 %v3077
      %3232 = vmatmul.mubr.bf16.gmra.mrb[0].mxu0 %v3029
      %v3233 = vpop.f32.mrb[0].mxu0
      %v3234 = vadd.f32 0.0, %v3233
      %v3235 = vpop.f32.mrb[0].mxu0
      %v3236 = vpop.f32.mrb[0].mxu0
      %v3237 = vadd.f32 0.0, %v3236
      %v3238 = vpop.f32.mrb[0].mxu0
      %3239 = vdwg.mxu0
      %v3240 = vmax.f32 %v3114, 0.0
      %v3241 = vmax.f32 %v3117, 0.0
      %v3242 = vmax.f32 %v3122, 0.0
      %v3243 = vmax.f32 %v3125, 0.0
      %v3244 = vmax.f32 %v3130, 0.0
      %v3245 = vmax.f32 %v3133, 0.0
      %v3246 = vmax.f32 %v3138, 0.0
      %v3247 = vmax.f32 %v3141, 0.0
      %v3248 = vmax.f32 %v3146, 0.0
      %v3249 = vmax.f32 %v3149, 0.0
      %v3250 = vmax.f32 %v3154, 0.0
      %v3251 = vmax.f32 %v3157, 0.0
      %v3252 = vmax.f32 %v3162, 0.0
      %v3253 = vmax.f32 %v3165, 0.0
      %v3254 = vmax.f32 %v3170, 0.0
      %v3255 = vmax.f32 %v3173, 0.0
      %v3256 = vmax.f32 %v3178, 0.0
      %v3257 = vmax.f32 %v3181, 0.0
      %v3258 = vmax.f32 %v3186, 0.0
      %v3259 = vmax.f32 %v3189, 0.0
      %v3260 = vmax.f32 %v3194, 0.0
      %v3261 = vmax.f32 %v3197, 0.0
      %v3262 = vmax.f32 %v3202, 0.0
      %v3263 = vmax.f32 %v3205, 0.0
      %v3264 = vmax.f32 %v3210, 0.0
      %v3265 = vmax.f32 %v3213, 0.0
      %v3266 = vmax.f32 %v3218, 0.0
      %v3267 = vmax.f32 %v3221, 0.0
      %v3268 = vmax.f32 %v3226, 0.0
      %v3269 = vmax.f32 %v3229, 0.0
      %v3270 = vmax.f32 %v3234, 0.0
      %v3271 = vmax.f32 %v3237, 0.0
      %3272 = vst.msk [vmem:[%s170] sm:$0xff] %vm293, %v3240
      %3273 = vst.msk [vmem:[%s170 + $0x8] sm:$0xff] %vm293, %v3241
      %3274 = vst.msk [vmem:[%s170 + $0x10] sm:$0xff] %vm293, %v3242
      %3275 = vst.msk [vmem:[%s170 + $0x18] sm:$0xff] %vm293, %v3243
      %3276 = vst.msk [vmem:[%s170 + $0x20] sm:$0xff] %vm293, %v3244
      %3277 = vst.msk [vmem:[%s170 + $0x28] sm:$0xff] %vm293, %v3245
      %3278 = vst.msk [vmem:[%s170 + $0x30] sm:$0xff] %vm293, %v3246
      %3279 = vst.msk [vmem:[%s170 + $0x38] sm:$0xff] %vm293, %v3247
      %3280 = vst.msk [vmem:[%s170 + $0x40] sm:$0xff] %vm293, %v3248
      %3281 = vst.msk [vmem:[%s170 + $0x48] sm:$0xff] %vm293, %v3249
      %3282 = vst.msk [vmem:[%s170 + $0x50] sm:$0xff] %vm293, %v3250
      %3283 = vst.msk [vmem:[%s170 + $0x58] sm:$0xff] %vm293, %v3251
      %3284 = vst.msk [vmem:[%s170 + $0x60] sm:$0xff] %vm293, %v3252
      %3285 = vst.msk [vmem:[%s170 + $0x68] sm:$0xff] %vm293, %v3253
      %3286 = vst.msk [vmem:[%s170 + $0x70] sm:$0xff] %vm293, %v3254
      %3287 = vst.msk [vmem:[%s170 + $0x78] sm:$0xff] %vm293, %v3255
      %3288 = vst.msk [vmem:[%s170 + $0x80] sm:$0xff] %vm293, %v3256
      %3289 = vst.msk [vmem:[%s170 + $0x88] sm:$0xff] %vm293, %v3257
      %3290 = vst.msk [vmem:[%s170 + $0x90] sm:$0xff] %vm293, %v3258
      %3291 = vst.msk [vmem:[%s170 + $0x98] sm:$0xff] %vm293, %v3259
      %3292 = vst.msk [vmem:[%s170 + $0xa0] sm:$0xff] %vm293, %v3260
      %3293 = vst.msk [vmem:[%s170 + $0xa8] sm:$0xff] %vm293, %v3261
      %3294 = vst.msk [vmem:[%s170 + $0xb0] sm:$0xff] %vm293, %v3262
      %3295 = vst.msk [vmem:[%s170 + $0xb8] sm:$0xff] %vm293, %v3263
      %3296 = vst.msk [vmem:[%s170 + $0xc0] sm:$0xff] %vm293, %v3264
      %3297 = vst.msk [vmem:[%s170 + $0xc8] sm:$0xff] %vm293, %v3265
      %3298 = vst.msk [vmem:[%s170 + $0xd0] sm:$0xff] %vm293, %v3266
      %3299 = vst.msk [vmem:[%s170 + $0xd8] sm:$0xff] %vm293, %v3267
      %3300 = vst.msk [vmem:[%s170 + $0xe0] sm:$0xff] %vm293, %v3268
      %3301 = vst.msk [vmem:[%s170 + $0xe8] sm:$0xff] %vm293, %v3269
      %3302 = vst.msk [vmem:[%s170 + $0xf0] sm:$0xff] %vm293, %v3270
      %3303 = vst.msk [vmem:[%s170 + $0xf8] sm:$0xff] %vm293, %v3271
      %p3304 = scmp.lt.s32.totalorder %s14, 1
      %s3305 = scalar_select %p3304, %s14, 1
      %s3306 = smul.addr %s3305, 32
      %s3307 = smul.addr %s3306, 8
      %s3308 = scalar_lea.vmem %s3, %s3307
      // Predicated region
      $region33: #{unet_encoder.4} parent=31 // pred_check
        %p3309 = pneg %p100
      $region34: #{unet_encoder.4} parent=31 // pred_check_branch
        %3311 = sbr.rel (%p3309) target = $region36
      $region35: #{unet_encoder.4} parent=31 // pred_region
        _
      $region36: #{unet_encoder.4} parent=31 // pred_fallthru
        _
    $region32: #{unet_encoder.4} parent=5 // pred_fallthru
      _
    %p3312 = scmp.le.s32.totalorder 2, %s9
    // Predicated region
    $region37: #{unet_encoder.4} parent=5 // pred_check
      %p3313 = pneg %p3312
    $region38: #{unet_encoder.4} parent=5 // pred_check_branch
      %3315 = sbr.rel (%p3313) target = $region40
    $region39: #{unet_encoder.4} parent=5 // pred_region
      %s3316 = ssub.s32 %s9, 2
      // Predicated region
      $region41: #{unet_encoder.4} parent=39 // pred_check
        %p3317 = pneg %p106
      $region42: #{unet_encoder.4} parent=39 // pred_check_branch
        %3319 = sbr.rel (%p3317) target = $region44
      $region43: #{unet_encoder.4} parent=39 // pred_region
        %p3320 = scmp.lt.s32.totalorder %s15, 1
        %s3321 = scalar_select %p3320, %s15, 1
        %s3322 = smul.addr %s3321, 32
        %s3323 = smul.addr %s3322, 8
        %s3324 = scalar_lea.vmem %s3, %s3323
      $region44: #{unet_encoder.4} parent=39 // pred_fallthru
        _
    $region40: #{unet_encoder.4} parent=5 // pred_fallthru
      _
  $region6: #{unet_encoder.4} parent=0 // loop_footer
    %s13 = sadd.s32 1, %s9
  $region7: #{unet_encoder.4} parent=0 // loop_footer_branch
    %8 = sbr.rel target = $region3
  $region8: #{unet_encoder.4} parent=0 // loop_exit
    _

</llo_original>
